<compile_context>
chip_gen: v7x
topology: tpu7x:2x2x1
jax: 0.10.0
libtpu: 0.0.40
codegen_flags: <defaults>
</compile_context>

<pallas_src>
import numpy as np

import jax
import jax.numpy as jnp
from jax.experimental import pallas as pl
from jax.experimental.pallas import tpu as pltpu

N_BOITES = 4


# ------------------------------ Pallas kernel -------------------------------

def _make_kernel(off128, off256, brow, in_channels):
    """Builds the fused kernel; slab offsets are static Python ints."""
    C = in_channels

    def kernel(img_ref, w128_ref, w256_ref, bias_ref, o_ref):
        f32, bf16 = jnp.float32, jnp.bfloat16

        def leaky(v):                       # nn.LeakyReLU() default slope 0.01
            return jnp.where(v > 0, v, 0.01 * v)

        def w128(name, rows, width=128):    # carve a block out of the 128-wide slab
            s = off128[name]
            return w128_ref[s:s + rows, 0:width]

        def w256(name, rows):               # carve a block out of the 256-wide slab
            s = off256[name]
            return w256_ref[s:s + rows, :]

        def bias(name, width):              # (1, width) f32 bias row
            r = brow[name]
            return bias_ref[r:r + 1, 0:width]

        def dense(x, w, b):                 # 1x1 conv + folded-BN bias + leaky
            return leaky(jnp.dot(x.astype(bf16), w, preferred_element_type=f32) + b)

        # ---- conv_rel_max1: 5x5 pad-2 conv, im2col built IN-KERNEL ----------
        # img_ref rows 2..97 = height-padded (12x8) image flattened (width 8),
        # channels tiled 25x along lanes (one copy per tap's lane group).
        lane = jax.lax.broadcasted_iota(jnp.int32, (64, 128), 1)
        oj = jax.lax.broadcasted_iota(jnp.int32, (64, 128), 0) & 7   # col index
        p0 = jnp.zeros((64, 128), f32)
        for di in range(5):
            for dj in range(5):
                t = di * 5 + dj
                start = di * 8 + dj                      # static row offset
                sl = img_ref[start:start + 64, :]        # (64, 128) f32
                keep = ((oj + (dj - 2) >= 0) & (oj + (dj - 2) <= 7) &
                        (lane >= C * t) & (lane < C * t + C))
                p0 = jnp.where(keep, sl, p0)
        y = leaky(jnp.dot(p0.astype(bf16), w128("w0", 128),
                          preferred_element_type=f32) + bias("b0", 128))   # (64,128)

        # ---- MaxPool 2x2 (8x8 -> 4x4): one selection matmul + max ----------
        q = jnp.dot(w128("s1", 64, 64), y.astype(bf16), preferred_element_type=f32)
        y = jnp.maximum(jnp.maximum(q[0:16], q[16:32]),
                        jnp.maximum(q[32:48], q[48:64]))                   # (16,128)

        g1 = w128("g1", 144, 16)             # stacked 3x3 gather, all 9 taps

        def conv3x3(x, wstk, b):
            # 1 gather matmul (all taps) + 1 K-stacked (K = 9*128) weight matmul
            xg = jnp.dot(g1, x.astype(bf16),
                         preferred_element_type=f32).astype(bf16)          # (144,128)
            xc = jnp.concatenate([xg[16 * t:16 * (t + 1), :] for t in range(9)],
                                 axis=1)                                   # (16,1152)
            return leaky(jnp.dot(xc, wstk, preferred_element_type=f32) + b)

        y = conv3x3(y, w128("w1", 1152), bias("b1", 128))    # conv_rel1      64 -> 32
        y = dense(y, w128("w2", 128), bias("b2", 128))       # conv_rel2      32 -> 64
        y = conv3x3(y, w128("w3", 1152), bias("b3", 128))    # conv_rel3      64 -> 32
        y = dense(y, w128("w4", 128), bias("b4", 128))       # conv_rel4      32 -> 64
        y = conv3x3(y, w256("w5", 1152), bias("b5", 256))    # conv_rel_max2  64 -> 256

        # ---- MaxPool 2x2 (4x4 -> 2x2, rows padded to 8) ---------------------
        q = jnp.dot(w128("s2", 32, 16), y.astype(bf16), preferred_element_type=f32)
        y = jnp.maximum(jnp.maximum(q[0:8], q[8:16]),
                        jnp.maximum(q[16:24], q[24:32]))                   # (8,256)

        y = dense(y, w128("w6", 256), bias("b6", 128))       # conv_rel5  256 -> 128

        # ---- conv_rel6: 3x3 stride-2 pad-1 on the 2x2 map -> 1x1 at row 0 ---
        # 4-tap gather matmul + one K=512 matmul (was 8 serial push/pop pairs).
        xg = jnp.dot(w128("g7", 32, 8), y.astype(bf16),
                     preferred_element_type=f32).astype(bf16)              # (32,128)
        xc = jnp.concatenate([xg[8 * p:8 * (p + 1), :] for p in range(4)], axis=1)
        y = leaky(jnp.dot(xc, w128("w7", 512), preferred_element_type=f32)
                  + bias("b7", 128))                                       # (8,128)
        # rows 1..7 of y are bias-only filler; only row 0 is ever consumed.

        y = dense(y, w128("w8", 128), bias("b8", 128))       # conv_rel7
        y = dense(y, w128("w9", 128), bias("b9", 128))       # conv_rel8
        y = dense(y, w128("w10", 128), bias("b10", 128))     # conv_rel9

        # ---- conv1 + folded BN + ReLU, then EXACT sigmoid -------------------
        z = jnp.dot(y.astype(bf16), w256("w11", 128),
                    preferred_element_type=f32) + bias("b11", 256)
        z = jnp.maximum(z, 0.0)
        o_ref[...] = 1.0 / (1.0 + jnp.exp(-z))

    return kernel


# --------------------- constant gather / selection matrices -----------------

def _pool_select(h, w, rows_pad):
    """Stacked (4*rows_pad, h*w) 0/1 matrices selecting the 4 pool sub-grids."""
    ho, wo = h // 2, w // 2
    mats = []
    for a in range(2):
        for b in range(2):
            m = np.zeros((rows_pad, h * w), np.float32)
            for oi in range(ho):
                for oj in range(wo):
                    m[oi * wo + oj, (2 * oi + a) * w + (2 * oj + b)] = 1.0
            mats.append(m)
    return jnp.asarray(np.concatenate(mats, 0), jnp.bfloat16)


def _gather3x3(h, w):
    """Stacked (9*h*w, h*w) gather matrices for a 3x3 / stride 1 / pad 1 conv."""
    mo = h * w
    mats = []
    for di in range(3):
        for dj in range(3):
            m = np.zeros((mo, h * w), np.float32)
            for oi in range(h):
                for oj in range(w):
                    ii, ij = oi + di - 1, oj + dj - 1
                    if 0 <= ii < h and 0 <= ij < w:
                        m[oi * w + oj, ii * w + ij] = 1.0
            mats.append(m)
    return jnp.asarray(np.concatenate(mats, 0), jnp.bfloat16)


def _rowselect4(rows_in_pad=8):
    """4 stacked (8, rows_in_pad) matrices selecting input row p into row 0."""
    mats = []
    for p in range(4):
        m = np.zeros((8, rows_in_pad), np.float32)
        m[0, p] = 1.0
        mats.append(m)
    return jnp.asarray(np.concatenate(mats, 0), jnp.bfloat16)


# ------------------------- parameters (synthetic) ----------------------------

def make_conv_bn_params(key, cin, cout, k):
    """Conv2d(bias=True) + BatchNorm2d(eval) params; BN folded into W and b."""
    kw_key, kb_key, g_key, be_key = jax.random.split(key, 4)
    w = jax.random.normal(kw_key, (k, k, cin, cout), jnp.float32) * 0.05
    b_conv = jax.random.normal(kb_key, (cout,), jnp.float32) * 0.05
    gamma = 1.0 + 0.1 * jax.random.normal(g_key, (cout,), jnp.float32)
    beta = 0.1 * jax.random.normal(be_key, (cout,), jnp.float32)
    running_mean = jnp.zeros((cout,), jnp.float32)
    running_var = jnp.ones((cout,), jnp.float32)
    scale = gamma / jnp.sqrt(running_var + 1e-5)
    w_folded = w * scale                                   # fold BN scale into W
    bias = beta + scale * (b_conv - running_mean)          # folded bias
    return w_folded, bias


def _pad2d(a, rows, cols):
    r, c = a.shape
    return jnp.pad(a, ((0, rows - r), (0, cols - c)))


def _prep_conv0(w_folded, bias):
    kh, kw, cin, cout = w_folded.shape
    w2d = w_folded.reshape(kh * kw * cin, cout)            # rows ordered (di,dj,c)
    wp = _pad2d(w2d, 128, 128).astype(jnp.bfloat16)
    bp = jnp.pad(bias, (0, 128 - cout)).reshape(1, 128)
    return wp, bp


def _prep_dense(w_folded, bias, cin_pad, cout_pad):
    w2d = w_folded.reshape(w_folded.shape[2], w_folded.shape[3])
    wp = _pad2d(w2d, cin_pad, cout_pad).astype(jnp.bfloat16)
    bp = jnp.pad(bias, (0, cout_pad - bias.shape[0])).reshape(1, cout_pad)
    return wp, bp


def _prep_conv3x3(w_folded, bias, cin_pad, cout_pad):
    kh, kw, cin, cout = w_folded.shape
    blocks = [_pad2d(w_folded[di, dj], cin_pad, cout_pad)
              for di in range(kh) for dj in range(kw)]
    wp = jnp.concatenate(blocks, axis=0).astype(jnp.bfloat16)   # (9*cin_pad, cout_pad)
    bp = jnp.pad(bias, (0, cout_pad - cout)).reshape(1, cout_pad)
    return wp, bp


def _prep_conv_rel6(w_folded, bias):
    # 3x3 stride-2 pad-1 conv on a 2x2 map: only taps (1,1),(1,2),(2,1),(2,2).
    blocks = [w_folded[i + 1, j + 1] for i in range(2) for j in range(2)]
    wp = jnp.concatenate(blocks, axis=0).astype(jnp.bfloat16)   # (512, 128)
    bp = bias.reshape(1, 128)
    return wp, bp


def _pack_rows(entries, width, dtype):
    """Pack named (rows, w<=width) matrices into one (R, width) slab."""
    slabs, offs, r = [], {}, 0
    for name, a in entries:
        a = jnp.asarray(a, dtype)
        assert a.shape[0] % 8 == 0 and a.shape[1] <= width
        slabs.append(jnp.pad(a, ((0, 0), (0, width - a.shape[1]))))
        offs[name] = r
        r += a.shape[0]
    return jnp.concatenate(slabs, axis=0), offs


def prepare_params(key, in_channels, n_params):
    assert 25 * in_channels <= 128, "in-kernel im2col needs 25*C <= 128 lanes"
    layer_defs = [
        (in_channels, 64, 5),     # conv_rel_max1
        (64, 32, 3),              # conv_rel1
        (32, 64, 1),              # conv_rel2
        (64, 32, 3),              # conv_rel3
        (32, 64, 1),              # conv_rel4
        (64, 256, 3),             # conv_rel_max2
        (256, 128, 1),            # conv_rel5
        (128, 128, 3),            # conv_rel6 (stride 2)
        (128, 128, 1),            # conv_rel7
        (128, 128, 1),            # conv_rel8
        (128, 128, 1),            # conv_rel9
        (128, n_params * 3 * N_BOITES * N_BOITES, 1),  # conv1
    ]
    keys = jax.random.split(key, len(layer_defs))
    raw = [make_conv_bn_params(k_, cin, cout, kk)
           for k_, (cin, cout, kk) in zip(keys, layer_defs)]

    w0, b0 = _prep_conv0(*raw[0])
    w1, b1 = _prep_conv3x3(*raw[1], cin_pad=128, cout_pad=128)
    w2, b2 = _prep_dense(*raw[2], cin_pad=128, cout_pad=128)
    w3, b3 = _prep_conv3x3(*raw[3], cin_pad=128, cout_pad=128)
    w4, b4 = _prep_dense(*raw[4], cin_pad=128, cout_pad=128)
    w5, b5 = _prep_conv3x3(*raw[5], cin_pad=128, cout_pad=256)
    w6, b6 = _prep_dense(*raw[6], cin_pad=256, cout_pad=128)
    w7, b7 = _prep_conv_rel6(*raw[7])
    w8, b8 = _prep_dense(*raw[8], cin_pad=128, cout_pad=128)
    w9, b9 = _prep_dense(*raw[9], cin_pad=128, cout_pad=128)
    w10, b10 = _prep_dense(*raw[10], cin_pad=128, cout_pad=128)
    w11, b11 = _prep_dense(*raw[11], cin_pad=128, cout_pad=256)

    slab128, off128 = _pack_rows(
        [("w0", w0), ("w1", w1), ("w2", w2), ("w3", w3), ("w4", w4),
         ("w6", w6), ("w7", w7), ("w8", w8), ("w9", w9), ("w10", w10),
         ("g1", _gather3x3(4, 4)), ("g7", _rowselect4(8)),
         ("s1", _pool_select(8, 8, 16)), ("s2", _pool_select(4, 4, 8))],
        width=128, dtype=jnp.bfloat16)
    slab256, off256 = _pack_rows([("w5", w5), ("w11", w11)],
                                 width=256, dtype=jnp.bfloat16)

    bias_rows = [("b0", b0), ("b1", b1), ("b2", b2), ("b3", b3), ("b4", b4),
                 ("b5", b5), ("b6", b6), ("b7", b7), ("b8", b8), ("b9", b9),
                 ("b10", b10), ("b11", b11)]
    brow = {name: i for i, (name, _) in enumerate(bias_rows)}
    padded = [jnp.pad(b.astype(jnp.float32), ((0, 0), (0, 256 - b.shape[1])))
              for _, b in bias_rows]
    bias_slab = jnp.concatenate(
        padded + [jnp.zeros((16 - len(padded), 256), jnp.float32)], axis=0)

    params = dict(slab128=slab128, slab256=slab256, bias=bias_slab)
    layout = dict(off128=off128, off256=off256, brow=brow)
    return params, layout, raw


# ------------------------------- forward -------------------------------------

def _prep_image(x_nchw, in_channels):
    """NCHW (1,C,8,8) -> (104, 128) f32 slab for in-kernel im2col.

    Rows 2..97 hold the height-padded (12x8) image flattened row-major
    (width 8); the C channels are tiled 25x along lanes (one copy per 5x5 tap
    lane group).  Rows 0..1 / 98..103 and lanes >= 25*C are zero.
    """
    img = jnp.transpose(x_nchw, (0, 2, 3, 1))[0]                  # (8, 8, C)
    img = jnp.pad(img, ((2, 2), (0, 0), (0, 0)))                   # (12, 8, C)
    img = img.reshape(96, in_channels)
    img = jnp.pad(img, ((2, 6), (0, 0)))                            # (104, C)
    img = jnp.tile(img, (1, 25))                                    # (104, 25*C)
    return jnp.pad(img, ((0, 0), (0, 128 - 25 * in_channels))).astype(jnp.float32)


def make_forward(layout, in_channels):
    kernel = _make_kernel(layout["off128"], layout["off256"], layout["brow"],
                          in_channels)

    def vmem():
        return pl.BlockSpec(memory_space=pltpu.MemorySpace.VMEM)

    def forward(x_nchw, slab128, slab256, bias_slab):
        img = _prep_image(x_nchw, in_channels)
        out = pl.pallas_call(
            kernel,
            out_shape=jax.ShapeDtypeStruct((8, 256), jnp.float32),
            in_specs=[vmem(), vmem(), vmem(), vmem()],
            out_specs=vmem(),
        )(img, slab128, slab256, bias_slab)
        # TODO(synk): for batched inference add a grid=(B,) "parallel" axis with
        # constant index_maps on the weight slabs (the module's hard-coded
        # x.view(9, 4, 4) pins batch=1 here, so no grid is used).
        # Row 0, first 144 channels are the real 1x1x144 output; matches x.view(9,4,4).
        return out[0, :144].reshape(9, 4, 4)

    return forward


def reference_forward(x_nchw, raw):
    """Pure-JAX (XLA) reference with the same folded parameters, f32."""
    def conv(x, w, b, stride, pad):
        y = jax.lax.conv_general_dilated(
            x, w, window_strides=(stride, stride),
            padding=[(pad, pad), (pad, pad)],
            dimension_numbers=("NHWC", "HWIO", "NHWC"))
        return y + b

    def leaky(v):
        return jnp.where(v > 0, v, 0.01 * v)

    def pool(v):
        return jax.lax.reduce_window(v, -jnp.inf, jax.lax.max,
                                     (1, 2, 2, 1), (1, 2, 2, 1), "VALID")

    x = jnp.transpose(x_nchw, (0, 2, 3, 1))
    x = pool(leaky(conv(x, raw[0][0], raw[0][1], 1, 2)))
    x = leaky(conv(x, raw[1][0], raw[1][1], 1, 1))
    x = leaky(conv(x, raw[2][0], raw[2][1], 1, 0))
    x = leaky(conv(x, raw[3][0], raw[3][1], 1, 1))
    x = leaky(conv(x, raw[4][0], raw[4][1], 1, 0))
    x = pool(leaky(conv(x, raw[5][0], raw[5][1], 1, 1)))
    x = leaky(conv(x, raw[6][0], raw[6][1], 1, 0))
    x = leaky(conv(x, raw[7][0], raw[7][1], 2, 1))
    x = leaky(conv(x, raw[8][0], raw[8][1], 1, 0))
    x = leaky(conv(x, raw[9][0], raw[9][1], 1, 0))
    x = leaky(conv(x, raw[10][0], raw[10][1], 1, 0))
    x = jax.nn.sigmoid(jnp.maximum(conv(x, raw[11][0], raw[11][1], 1, 0), 0.0))
    return x.reshape(9, 4, 4)


if __name__ == "__main__":
    # Shapes chosen so the hard-coded x.view(9, 4, 4) in forward() is valid:
    # batch=1, n_params=3 (final channels = 3*3*4*4 = 144), 8x8 input so the
    # final spatial size is 1x1 (8 -> pool 4 -> pool 2 -> stride-2 conv 1).
    in_channels = 3
    n_params = 3
    key = jax.random.PRNGKey(0)
    x_key, p_key = jax.random.split(key)

    x = jax.random.normal(x_key, (1, in_channels, 8, 8), jnp.float32)  # NCHW
    params, layout, raw = prepare_params(p_key, in_channels, n_params)

    fwd = jax.jit(make_forward(layout, in_channels))
    out = jax.block_until_ready(
        fwd(x, params["slab128"], params["slab256"], params["bias"]))

    assert out.shape == (9, 4, 4)
    assert bool(jnp.all(jnp.isfinite(out)))
    assert bool(jnp.all((out >= 0.0) & (out <= 1.0)))   # ReLU -> Sigmoid range

    # Correctness vs. f32 XLA reference (bf16 matmul operands, f32 accumulate).
    ref = jax.block_until_ready(reference_forward(x, raw))
    max_err = float(jnp.max(jnp.abs(out - ref)))
    assert max_err < 5e-2, f"max abs error vs reference too large: {max_err}"

    print("KERNEL_OK")
</pallas_src>

<mosaic_0001>
module attributes {stable_mosaic.version = 11 : i64} {
  func.func @kernel(%arg0: memref<104x128xf32, #tpu.memory_space<vmem>>, %arg1: memref<4112x128xbf16, #tpu.memory_space<vmem>>, %arg2: memref<1280x256xbf16, #tpu.memory_space<vmem>>, %arg3: memref<16x256xf32, #tpu.memory_space<vmem>>, %arg4: memref<8x256xf32, #tpu.memory_space<vmem>>) attributes {dimension_semantics = [], scalar_prefetch = 0 : i64, scratch_operands = 0 : i64, tpu.core_type = #tpu.core_type<tc>} {
    %0 = tpu.iota {dimensions = array<i32: 1>} : vector<64x128xi32>
    %1 = tpu.iota {dimensions = array<i32: 0>} : vector<64x128xi32>
    %c7_i32 = arith.constant 7 : i32
    %2 = vector.broadcast %c7_i32 : i32 to vector<64x128xi32>
    %3 = arith.andi %1, %2 : vector<64x128xi32>
    %cst = arith.constant 0.000000e+00 : f32
    %4 = vector.broadcast %cst : f32 to vector<64x128xf32>
    %c0 = arith.constant 0 : index
    %c0_0 = arith.constant 0 : index
    %5 = vector.load %arg0[%c0, %c0_0] : memref<104x128xf32, #tpu.memory_space<vmem>>, vector<64x128xf32>
    %c-2_i32 = arith.constant -2 : i32
    %6 = vector.broadcast %c-2_i32 : i32 to vector<64x128xi32>
    %7 = arith.addi %3, %6 : vector<64x128xi32>
    %c0_i32 = arith.constant 0 : i32
    %8 = vector.broadcast %c0_i32 : i32 to vector<64x128xi32>
    %9 = arith.cmpi sge, %7, %8 : vector<64x128xi32>
    %c-2_i32_1 = arith.constant -2 : i32
    %10 = vector.broadcast %c-2_i32_1 : i32 to vector<64x128xi32>
    %11 = arith.addi %3, %10 : vector<64x128xi32>
    %c7_i32_2 = arith.constant 7 : i32
    %12 = vector.broadcast %c7_i32_2 : i32 to vector<64x128xi32>
    %13 = arith.cmpi sle, %11, %12 : vector<64x128xi32>
    %14 = arith.andi %9, %13 : vector<64x128xi1>
    %c0_i32_3 = arith.constant 0 : i32
    %15 = vector.broadcast %c0_i32_3 : i32 to vector<64x128xi32>
    %16 = arith.cmpi sge, %0, %15 : vector<64x128xi32>
    %17 = arith.andi %14, %16 : vector<64x128xi1>
    %c3_i32 = arith.constant 3 : i32
    %18 = vector.broadcast %c3_i32 : i32 to vector<64x128xi32>
    %19 = arith.cmpi slt, %0, %18 : vector<64x128xi32>
    %20 = arith.andi %17, %19 : vector<64x128xi1>
    %21 = arith.select %20, %5, %4 : vector<64x128xi1>, vector<64x128xf32>
    %c1 = arith.constant 1 : index
    %c0_4 = arith.constant 0 : index
    %22 = vector.load %arg0[%c1, %c0_4] : memref<104x128xf32, #tpu.memory_space<vmem>>, vector<64x128xf32>
    %c-1_i32 = arith.constant -1 : i32
    %23 = vector.broadcast %c-1_i32 : i32 to vector<64x128xi32>
    %24 = arith.addi %3, %23 : vector<64x128xi32>
    %c0_i32_5 = arith.constant 0 : i32
    %25 = vector.broadcast %c0_i32_5 : i32 to vector<64x128xi32>
    %26 = arith.cmpi sge, %24, %25 : vector<64x128xi32>
    %c-1_i32_6 = arith.constant -1 : i32
    %27 = vector.broadcast %c-1_i32_6 : i32 to vector<64x128xi32>
    %28 = arith.addi %3, %27 : vector<64x128xi32>
    %c7_i32_7 = arith.constant 7 : i32
    %29 = vector.broadcast %c7_i32_7 : i32 to vector<64x128xi32>
    %30 = arith.cmpi sle, %28, %29 : vector<64x128xi32>
    %31 = arith.andi %26, %30 : vector<64x128xi1>
    %c3_i32_8 = arith.constant 3 : i32
    %32 = vector.broadcast %c3_i32_8 : i32 to vector<64x128xi32>
    %33 = arith.cmpi sge, %0, %32 : vector<64x128xi32>
    %34 = arith.andi %31, %33 : vector<64x128xi1>
    %c6_i32 = arith.constant 6 : i32
    %35 = vector.broadcast %c6_i32 : i32 to vector<64x128xi32>
    %36 = arith.cmpi slt, %0, %35 : vector<64x128xi32>
    %37 = arith.andi %34, %36 : vector<64x128xi1>
    %38 = arith.select %37, %22, %21 : vector<64x128xi1>, vector<64x128xf32>
    %c2 = arith.constant 2 : index
    %c0_9 = arith.constant 0 : index
    %39 = vector.load %arg0[%c2, %c0_9] : memref<104x128xf32, #tpu.memory_space<vmem>>, vector<64x128xf32>
    %c0_i32_10 = arith.constant 0 : i32
    %40 = vector.broadcast %c0_i32_10 : i32 to vector<64x128xi32>
    %41 = arith.addi %3, %40 : vector<64x128xi32>
    %c0_i32_11 = arith.constant 0 : i32
    %42 = vector.broadcast %c0_i32_11 : i32 to vector<64x128xi32>
    %43 = arith.cmpi sge, %41, %42 : vector<64x128xi32>
    %c0_i32_12 = arith.constant 0 : i32
    %44 = vector.broadcast %c0_i32_12 : i32 to vector<64x128xi32>
    %45 = arith.addi %3, %44 : vector<64x128xi32>
    %c7_i32_13 = arith.constant 7 : i32
    %46 = vector.broadcast %c7_i32_13 : i32 to vector<64x128xi32>
    %47 = arith.cmpi sle, %45, %46 : vector<64x128xi32>
    %48 = arith.andi %43, %47 : vector<64x128xi1>
    %c6_i32_14 = arith.constant 6 : i32
    %49 = vector.broadcast %c6_i32_14 : i32 to vector<64x128xi32>
    %50 = arith.cmpi sge, %0, %49 : vector<64x128xi32>
    %51 = arith.andi %48, %50 : vector<64x128xi1>
    %c9_i32 = arith.constant 9 : i32
    %52 = vector.broadcast %c9_i32 : i32 to vector<64x128xi32>
    %53 = arith.cmpi slt, %0, %52 : vector<64x128xi32>
    %54 = arith.andi %51, %53 : vector<64x128xi1>
    %55 = arith.select %54, %39, %38 : vector<64x128xi1>, vector<64x128xf32>
    %c3 = arith.constant 3 : index
    %c0_15 = arith.constant 0 : index
    %56 = vector.load %arg0[%c3, %c0_15] : memref<104x128xf32, #tpu.memory_space<vmem>>, vector<64x128xf32>
    %c1_i32 = arith.constant 1 : i32
    %57 = vector.broadcast %c1_i32 : i32 to vector<64x128xi32>
    %58 = arith.addi %3, %57 : vector<64x128xi32>
    %c0_i32_16 = arith.constant 0 : i32
    %59 = vector.broadcast %c0_i32_16 : i32 to vector<64x128xi32>
    %60 = arith.cmpi sge, %58, %59 : vector<64x128xi32>
    %c1_i32_17 = arith.constant 1 : i32
    %61 = vector.broadcast %c1_i32_17 : i32 to vector<64x128xi32>
    %62 = arith.addi %3, %61 : vector<64x128xi32>
    %c7_i32_18 = arith.constant 7 : i32
    %63 = vector.broadcast %c7_i32_18 : i32 to vector<64x128xi32>
    %64 = arith.cmpi sle, %62, %63 : vector<64x128xi32>
    %65 = arith.andi %60, %64 : vector<64x128xi1>
    %c9_i32_19 = arith.constant 9 : i32
    %66 = vector.broadcast %c9_i32_19 : i32 to vector<64x128xi32>
    %67 = arith.cmpi sge, %0, %66 : vector<64x128xi32>
    %68 = arith.andi %65, %67 : vector<64x128xi1>
    %c12_i32 = arith.constant 12 : i32
    %69 = vector.broadcast %c12_i32 : i32 to vector<64x128xi32>
    %70 = arith.cmpi slt, %0, %69 : vector<64x128xi32>
    %71 = arith.andi %68, %70 : vector<64x128xi1>
    %72 = arith.select %71, %56, %55 : vector<64x128xi1>, vector<64x128xf32>
    %c4 = arith.constant 4 : index
    %c0_20 = arith.constant 0 : index
    %73 = vector.load %arg0[%c4, %c0_20] : memref<104x128xf32, #tpu.memory_space<vmem>>, vector<64x128xf32>
    %c2_i32 = arith.constant 2 : i32
    %74 = vector.broadcast %c2_i32 : i32 to vector<64x128xi32>
    %75 = arith.addi %3, %74 : vector<64x128xi32>
    %c0_i32_21 = arith.constant 0 : i32
    %76 = vector.broadcast %c0_i32_21 : i32 to vector<64x128xi32>
    %77 = arith.cmpi sge, %75, %76 : vector<64x128xi32>
    %c2_i32_22 = arith.constant 2 : i32
    %78 = vector.broadcast %c2_i32_22 : i32 to vector<64x128xi32>
    %79 = arith.addi %3, %78 : vector<64x128xi32>
    %c7_i32_23 = arith.constant 7 : i32
    %80 = vector.broadcast %c7_i32_23 : i32 to vector<64x128xi32>
    %81 = arith.cmpi sle, %79, %80 : vector<64x128xi32>
    %82 = arith.andi %77, %81 : vector<64x128xi1>
    %c12_i32_24 = arith.constant 12 : i32
    %83 = vector.broadcast %c12_i32_24 : i32 to vector<64x128xi32>
    %84 = arith.cmpi sge, %0, %83 : vector<64x128xi32>
    %85 = arith.andi %82, %84 : vector<64x128xi1>
    %c15_i32 = arith.constant 15 : i32
    %86 = vector.broadcast %c15_i32 : i32 to vector<64x128xi32>
    %87 = arith.cmpi slt, %0, %86 : vector<64x128xi32>
    %88 = arith.andi %85, %87 : vector<64x128xi1>
    %89 = arith.select %88, %73, %72 : vector<64x128xi1>, vector<64x128xf32>
    %c8 = arith.constant 8 : index
    %c0_25 = arith.constant 0 : index
    %90 = vector.load %arg0[%c8, %c0_25] : memref<104x128xf32, #tpu.memory_space<vmem>>, vector<64x128xf32>
    %c-2_i32_26 = arith.constant -2 : i32
    %91 = vector.broadcast %c-2_i32_26 : i32 to vector<64x128xi32>
    %92 = arith.addi %3, %91 : vector<64x128xi32>
    %c0_i32_27 = arith.constant 0 : i32
    %93 = vector.broadcast %c0_i32_27 : i32 to vector<64x128xi32>
    %94 = arith.cmpi sge, %92, %93 : vector<64x128xi32>
    %c-2_i32_28 = arith.constant -2 : i32
    %95 = vector.broadcast %c-2_i32_28 : i32 to vector<64x128xi32>
    %96 = arith.addi %3, %95 : vector<64x128xi32>
    %c7_i32_29 = arith.constant 7 : i32
    %97 = vector.broadcast %c7_i32_29 : i32 to vector<64x128xi32>
    %98 = arith.cmpi sle, %96, %97 : vector<64x128xi32>
    %99 = arith.andi %94, %98 : vector<64x128xi1>
    %c15_i32_30 = arith.constant 15 : i32
    %100 = vector.broadcast %c15_i32_30 : i32 to vector<64x128xi32>
    %101 = arith.cmpi sge, %0, %100 : vector<64x128xi32>
    %102 = arith.andi %99, %101 : vector<64x128xi1>
    %c18_i32 = arith.constant 18 : i32
    %103 = vector.broadcast %c18_i32 : i32 to vector<64x128xi32>
    %104 = arith.cmpi slt, %0, %103 : vector<64x128xi32>
    %105 = arith.andi %102, %104 : vector<64x128xi1>
    %106 = arith.select %105, %90, %89 : vector<64x128xi1>, vector<64x128xf32>
    %c9 = arith.constant 9 : index
    %c0_31 = arith.constant 0 : index
    %107 = vector.load %arg0[%c9, %c0_31] : memref<104x128xf32, #tpu.memory_space<vmem>>, vector<64x128xf32>
    %c-1_i32_32 = arith.constant -1 : i32
    %108 = vector.broadcast %c-1_i32_32 : i32 to vector<64x128xi32>
    %109 = arith.addi %3, %108 : vector<64x128xi32>
    %c0_i32_33 = arith.constant 0 : i32
    %110 = vector.broadcast %c0_i32_33 : i32 to vector<64x128xi32>
    %111 = arith.cmpi sge, %109, %110 : vector<64x128xi32>
    %c-1_i32_34 = arith.constant -1 : i32
    %112 = vector.broadcast %c-1_i32_34 : i32 to vector<64x128xi32>
    %113 = arith.addi %3, %112 : vector<64x128xi32>
    %c7_i32_35 = arith.constant 7 : i32
    %114 = vector.broadcast %c7_i32_35 : i32 to vector<64x128xi32>
    %115 = arith.cmpi sle, %113, %114 : vector<64x128xi32>
    %116 = arith.andi %111, %115 : vector<64x128xi1>
    %c18_i32_36 = arith.constant 18 : i32
    %117 = vector.broadcast %c18_i32_36 : i32 to vector<64x128xi32>
    %118 = arith.cmpi sge, %0, %117 : vector<64x128xi32>
    %119 = arith.andi %116, %118 : vector<64x128xi1>
    %c21_i32 = arith.constant 21 : i32
    %120 = vector.broadcast %c21_i32 : i32 to vector<64x128xi32>
    %121 = arith.cmpi slt, %0, %120 : vector<64x128xi32>
    %122 = arith.andi %119, %121 : vector<64x128xi1>
    %123 = arith.select %122, %107, %106 : vector<64x128xi1>, vector<64x128xf32>
    %c10 = arith.constant 10 : index
    %c0_37 = arith.constant 0 : index
    %124 = vector.load %arg0[%c10, %c0_37] : memref<104x128xf32, #tpu.memory_space<vmem>>, vector<64x128xf32>
    %c0_i32_38 = arith.constant 0 : i32
    %125 = vector.broadcast %c0_i32_38 : i32 to vector<64x128xi32>
    %126 = arith.addi %3, %125 : vector<64x128xi32>
    %c0_i32_39 = arith.constant 0 : i32
    %127 = vector.broadcast %c0_i32_39 : i32 to vector<64x128xi32>
    %128 = arith.cmpi sge, %126, %127 : vector<64x128xi32>
    %c0_i32_40 = arith.constant 0 : i32
    %129 = vector.broadcast %c0_i32_40 : i32 to vector<64x128xi32>
    %130 = arith.addi %3, %129 : vector<64x128xi32>
    %c7_i32_41 = arith.constant 7 : i32
    %131 = vector.broadcast %c7_i32_41 : i32 to vector<64x128xi32>
    %132 = arith.cmpi sle, %130, %131 : vector<64x128xi32>
    %133 = arith.andi %128, %132 : vector<64x128xi1>
    %c21_i32_42 = arith.constant 21 : i32
    %134 = vector.broadcast %c21_i32_42 : i32 to vector<64x128xi32>
    %135 = arith.cmpi sge, %0, %134 : vector<64x128xi32>
    %136 = arith.andi %133, %135 : vector<64x128xi1>
    %c24_i32 = arith.constant 24 : i32
    %137 = vector.broadcast %c24_i32 : i32 to vector<64x128xi32>
    %138 = arith.cmpi slt, %0, %137 : vector<64x128xi32>
    %139 = arith.andi %136, %138 : vector<64x128xi1>
    %140 = arith.select %139, %124, %123 : vector<64x128xi1>, vector<64x128xf32>
    %c11 = arith.constant 11 : index
    %c0_43 = arith.constant 0 : index
    %141 = vector.load %arg0[%c11, %c0_43] : memref<104x128xf32, #tpu.memory_space<vmem>>, vector<64x128xf32>
    %c1_i32_44 = arith.constant 1 : i32
    %142 = vector.broadcast %c1_i32_44 : i32 to vector<64x128xi32>
    %143 = arith.addi %3, %142 : vector<64x128xi32>
    %c0_i32_45 = arith.constant 0 : i32
    %144 = vector.broadcast %c0_i32_45 : i32 to vector<64x128xi32>
    %145 = arith.cmpi sge, %143, %144 : vector<64x128xi32>
    %c1_i32_46 = arith.constant 1 : i32
    %146 = vector.broadcast %c1_i32_46 : i32 to vector<64x128xi32>
    %147 = arith.addi %3, %146 : vector<64x128xi32>
    %c7_i32_47 = arith.constant 7 : i32
    %148 = vector.broadcast %c7_i32_47 : i32 to vector<64x128xi32>
    %149 = arith.cmpi sle, %147, %148 : vector<64x128xi32>
    %150 = arith.andi %145, %149 : vector<64x128xi1>
    %c24_i32_48 = arith.constant 24 : i32
    %151 = vector.broadcast %c24_i32_48 : i32 to vector<64x128xi32>
    %152 = arith.cmpi sge, %0, %151 : vector<64x128xi32>
    %153 = arith.andi %150, %152 : vector<64x128xi1>
    %c27_i32 = arith.constant 27 : i32
    %154 = vector.broadcast %c27_i32 : i32 to vector<64x128xi32>
    %155 = arith.cmpi slt, %0, %154 : vector<64x128xi32>
    %156 = arith.andi %153, %155 : vector<64x128xi1>
    %157 = arith.select %156, %141, %140 : vector<64x128xi1>, vector<64x128xf32>
    %c12 = arith.constant 12 : index
    %c0_49 = arith.constant 0 : index
    %158 = vector.load %arg0[%c12, %c0_49] : memref<104x128xf32, #tpu.memory_space<vmem>>, vector<64x128xf32>
    %c2_i32_50 = arith.constant 2 : i32
    %159 = vector.broadcast %c2_i32_50 : i32 to vector<64x128xi32>
    %160 = arith.addi %3, %159 : vector<64x128xi32>
    %c0_i32_51 = arith.constant 0 : i32
    %161 = vector.broadcast %c0_i32_51 : i32 to vector<64x128xi32>
    %162 = arith.cmpi sge, %160, %161 : vector<64x128xi32>
    %c2_i32_52 = arith.constant 2 : i32
    %163 = vector.broadcast %c2_i32_52 : i32 to vector<64x128xi32>
    %164 = arith.addi %3, %163 : vector<64x128xi32>
    %c7_i32_53 = arith.constant 7 : i32
    %165 = vector.broadcast %c7_i32_53 : i32 to vector<64x128xi32>
    %166 = arith.cmpi sle, %164, %165 : vector<64x128xi32>
    %167 = arith.andi %162, %166 : vector<64x128xi1>
    %c27_i32_54 = arith.constant 27 : i32
    %168 = vector.broadcast %c27_i32_54 : i32 to vector<64x128xi32>
    %169 = arith.cmpi sge, %0, %168 : vector<64x128xi32>
    %170 = arith.andi %167, %169 : vector<64x128xi1>
    %c30_i32 = arith.constant 30 : i32
    %171 = vector.broadcast %c30_i32 : i32 to vector<64x128xi32>
    %172 = arith.cmpi slt, %0, %171 : vector<64x128xi32>
    %173 = arith.andi %170, %172 : vector<64x128xi1>
    %174 = arith.select %173, %158, %157 : vector<64x128xi1>, vector<64x128xf32>
    %c16 = arith.constant 16 : index
    %c0_55 = arith.constant 0 : index
    %175 = vector.load %arg0[%c16, %c0_55] : memref<104x128xf32, #tpu.memory_space<vmem>>, vector<64x128xf32>
    %c-2_i32_56 = arith.constant -2 : i32
    %176 = vector.broadcast %c-2_i32_56 : i32 to vector<64x128xi32>
    %177 = arith.addi %3, %176 : vector<64x128xi32>
    %c0_i32_57 = arith.constant 0 : i32
    %178 = vector.broadcast %c0_i32_57 : i32 to vector<64x128xi32>
    %179 = arith.cmpi sge, %177, %178 : vector<64x128xi32>
    %c-2_i32_58 = arith.constant -2 : i32
    %180 = vector.broadcast %c-2_i32_58 : i32 to vector<64x128xi32>
    %181 = arith.addi %3, %180 : vector<64x128xi32>
    %c7_i32_59 = arith.constant 7 : i32
    %182 = vector.broadcast %c7_i32_59 : i32 to vector<64x128xi32>
    %183 = arith.cmpi sle, %181, %182 : vector<64x128xi32>
    %184 = arith.andi %179, %183 : vector<64x128xi1>
    %c30_i32_60 = arith.constant 30 : i32
    %185 = vector.broadcast %c30_i32_60 : i32 to vector<64x128xi32>
    %186 = arith.cmpi sge, %0, %185 : vector<64x128xi32>
    %187 = arith.andi %184, %186 : vector<64x128xi1>
    %c33_i32 = arith.constant 33 : i32
    %188 = vector.broadcast %c33_i32 : i32 to vector<64x128xi32>
    %189 = arith.cmpi slt, %0, %188 : vector<64x128xi32>
    %190 = arith.andi %187, %189 : vector<64x128xi1>
    %191 = arith.select %190, %175, %174 : vector<64x128xi1>, vector<64x128xf32>
    %c17 = arith.constant 17 : index
    %c0_61 = arith.constant 0 : index
    %192 = vector.load %arg0[%c17, %c0_61] : memref<104x128xf32, #tpu.memory_space<vmem>>, vector<64x128xf32>
    %c-1_i32_62 = arith.constant -1 : i32
    %193 = vector.broadcast %c-1_i32_62 : i32 to vector<64x128xi32>
    %194 = arith.addi %3, %193 : vector<64x128xi32>
    %c0_i32_63 = arith.constant 0 : i32
    %195 = vector.broadcast %c0_i32_63 : i32 to vector<64x128xi32>
    %196 = arith.cmpi sge, %194, %195 : vector<64x128xi32>
    %c-1_i32_64 = arith.constant -1 : i32
    %197 = vector.broadcast %c-1_i32_64 : i32 to vector<64x128xi32>
    %198 = arith.addi %3, %197 : vector<64x128xi32>
    %c7_i32_65 = arith.constant 7 : i32
    %199 = vector.broadcast %c7_i32_65 : i32 to vector<64x128xi32>
    %200 = arith.cmpi sle, %198, %199 : vector<64x128xi32>
    %201 = arith.andi %196, %200 : vector<64x128xi1>
    %c33_i32_66 = arith.constant 33 : i32
    %202 = vector.broadcast %c33_i32_66 : i32 to vector<64x128xi32>
    %203 = arith.cmpi sge, %0, %202 : vector<64x128xi32>
    %204 = arith.andi %201, %203 : vector<64x128xi1>
    %c36_i32 = arith.constant 36 : i32
    %205 = vector.broadcast %c36_i32 : i32 to vector<64x128xi32>
    %206 = arith.cmpi slt, %0, %205 : vector<64x128xi32>
    %207 = arith.andi %204, %206 : vector<64x128xi1>
    %208 = arith.select %207, %192, %191 : vector<64x128xi1>, vector<64x128xf32>
    %c18 = arith.constant 18 : index
    %c0_67 = arith.constant 0 : index
    %209 = vector.load %arg0[%c18, %c0_67] : memref<104x128xf32, #tpu.memory_space<vmem>>, vector<64x128xf32>
    %c0_i32_68 = arith.constant 0 : i32
    %210 = vector.broadcast %c0_i32_68 : i32 to vector<64x128xi32>
    %211 = arith.addi %3, %210 : vector<64x128xi32>
    %c0_i32_69 = arith.constant 0 : i32
    %212 = vector.broadcast %c0_i32_69 : i32 to vector<64x128xi32>
    %213 = arith.cmpi sge, %211, %212 : vector<64x128xi32>
    %c0_i32_70 = arith.constant 0 : i32
    %214 = vector.broadcast %c0_i32_70 : i32 to vector<64x128xi32>
    %215 = arith.addi %3, %214 : vector<64x128xi32>
    %c7_i32_71 = arith.constant 7 : i32
    %216 = vector.broadcast %c7_i32_71 : i32 to vector<64x128xi32>
    %217 = arith.cmpi sle, %215, %216 : vector<64x128xi32>
    %218 = arith.andi %213, %217 : vector<64x128xi1>
    %c36_i32_72 = arith.constant 36 : i32
    %219 = vector.broadcast %c36_i32_72 : i32 to vector<64x128xi32>
    %220 = arith.cmpi sge, %0, %219 : vector<64x128xi32>
    %221 = arith.andi %218, %220 : vector<64x128xi1>
    %c39_i32 = arith.constant 39 : i32
    %222 = vector.broadcast %c39_i32 : i32 to vector<64x128xi32>
    %223 = arith.cmpi slt, %0, %222 : vector<64x128xi32>
    %224 = arith.andi %221, %223 : vector<64x128xi1>
    %225 = arith.select %224, %209, %208 : vector<64x128xi1>, vector<64x128xf32>
    %c19 = arith.constant 19 : index
    %c0_73 = arith.constant 0 : index
    %226 = vector.load %arg0[%c19, %c0_73] : memref<104x128xf32, #tpu.memory_space<vmem>>, vector<64x128xf32>
    %c1_i32_74 = arith.constant 1 : i32
    %227 = vector.broadcast %c1_i32_74 : i32 to vector<64x128xi32>
    %228 = arith.addi %3, %227 : vector<64x128xi32>
    %c0_i32_75 = arith.constant 0 : i32
    %229 = vector.broadcast %c0_i32_75 : i32 to vector<64x128xi32>
    %230 = arith.cmpi sge, %228, %229 : vector<64x128xi32>
    %c1_i32_76 = arith.constant 1 : i32
    %231 = vector.broadcast %c1_i32_76 : i32 to vector<64x128xi32>
    %232 = arith.addi %3, %231 : vector<64x128xi32>
    %c7_i32_77 = arith.constant 7 : i32
    %233 = vector.broadcast %c7_i32_77 : i32 to vector<64x128xi32>
    %234 = arith.cmpi sle, %232, %233 : vector<64x128xi32>
    %235 = arith.andi %230, %234 : vector<64x128xi1>
    %c39_i32_78 = arith.constant 39 : i32
    %236 = vector.broadcast %c39_i32_78 : i32 to vector<64x128xi32>
    %237 = arith.cmpi sge, %0, %236 : vector<64x128xi32>
    %238 = arith.andi %235, %237 : vector<64x128xi1>
    %c42_i32 = arith.constant 42 : i32
    %239 = vector.broadcast %c42_i32 : i32 to vector<64x128xi32>
    %240 = arith.cmpi slt, %0, %239 : vector<64x128xi32>
    %241 = arith.andi %238, %240 : vector<64x128xi1>
    %242 = arith.select %241, %226, %225 : vector<64x128xi1>, vector<64x128xf32>
    %c20 = arith.constant 20 : index
    %c0_79 = arith.constant 0 : index
    %243 = vector.load %arg0[%c20, %c0_79] : memref<104x128xf32, #tpu.memory_space<vmem>>, vector<64x128xf32>
    %c2_i32_80 = arith.constant 2 : i32
    %244 = vector.broadcast %c2_i32_80 : i32 to vector<64x128xi32>
    %245 = arith.addi %3, %244 : vector<64x128xi32>
    %c0_i32_81 = arith.constant 0 : i32
    %246 = vector.broadcast %c0_i32_81 : i32 to vector<64x128xi32>
    %247 = arith.cmpi sge, %245, %246 : vector<64x128xi32>
    %c2_i32_82 = arith.constant 2 : i32
    %248 = vector.broadcast %c2_i32_82 : i32 to vector<64x128xi32>
    %249 = arith.addi %3, %248 : vector<64x128xi32>
    %c7_i32_83 = arith.constant 7 : i32
    %250 = vector.broadcast %c7_i32_83 : i32 to vector<64x128xi32>
    %251 = arith.cmpi sle, %249, %250 : vector<64x128xi32>
    %252 = arith.andi %247, %251 : vector<64x128xi1>
    %c42_i32_84 = arith.constant 42 : i32
    %253 = vector.broadcast %c42_i32_84 : i32 to vector<64x128xi32>
    %254 = arith.cmpi sge, %0, %253 : vector<64x128xi32>
    %255 = arith.andi %252, %254 : vector<64x128xi1>
    %c45_i32 = arith.constant 45 : i32
    %256 = vector.broadcast %c45_i32 : i32 to vector<64x128xi32>
    %257 = arith.cmpi slt, %0, %256 : vector<64x128xi32>
    %258 = arith.andi %255, %257 : vector<64x128xi1>
    %259 = arith.select %258, %243, %242 : vector<64x128xi1>, vector<64x128xf32>
    %c24 = arith.constant 24 : index
    %c0_85 = arith.constant 0 : index
    %260 = vector.load %arg0[%c24, %c0_85] : memref<104x128xf32, #tpu.memory_space<vmem>>, vector<64x128xf32>
    %c-2_i32_86 = arith.constant -2 : i32
    %261 = vector.broadcast %c-2_i32_86 : i32 to vector<64x128xi32>
    %262 = arith.addi %3, %261 : vector<64x128xi32>
    %c0_i32_87 = arith.constant 0 : i32
    %263 = vector.broadcast %c0_i32_87 : i32 to vector<64x128xi32>
    %264 = arith.cmpi sge, %262, %263 : vector<64x128xi32>
    %c-2_i32_88 = arith.constant -2 : i32
    %265 = vector.broadcast %c-2_i32_88 : i32 to vector<64x128xi32>
    %266 = arith.addi %3, %265 : vector<64x128xi32>
    %c7_i32_89 = arith.constant 7 : i32
    %267 = vector.broadcast %c7_i32_89 : i32 to vector<64x128xi32>
    %268 = arith.cmpi sle, %266, %267 : vector<64x128xi32>
    %269 = arith.andi %264, %268 : vector<64x128xi1>
    %c45_i32_90 = arith.constant 45 : i32
    %270 = vector.broadcast %c45_i32_90 : i32 to vector<64x128xi32>
    %271 = arith.cmpi sge, %0, %270 : vector<64x128xi32>
    %272 = arith.andi %269, %271 : vector<64x128xi1>
    %c48_i32 = arith.constant 48 : i32
    %273 = vector.broadcast %c48_i32 : i32 to vector<64x128xi32>
    %274 = arith.cmpi slt, %0, %273 : vector<64x128xi32>
    %275 = arith.andi %272, %274 : vector<64x128xi1>
    %276 = arith.select %275, %260, %259 : vector<64x128xi1>, vector<64x128xf32>
    %c25 = arith.constant 25 : index
    %c0_91 = arith.constant 0 : index
    %277 = vector.load %arg0[%c25, %c0_91] : memref<104x128xf32, #tpu.memory_space<vmem>>, vector<64x128xf32>
    %c-1_i32_92 = arith.constant -1 : i32
    %278 = vector.broadcast %c-1_i32_92 : i32 to vector<64x128xi32>
    %279 = arith.addi %3, %278 : vector<64x128xi32>
    %c0_i32_93 = arith.constant 0 : i32
    %280 = vector.broadcast %c0_i32_93 : i32 to vector<64x128xi32>
    %281 = arith.cmpi sge, %279, %280 : vector<64x128xi32>
    %c-1_i32_94 = arith.constant -1 : i32
    %282 = vector.broadcast %c-1_i32_94 : i32 to vector<64x128xi32>
    %283 = arith.addi %3, %282 : vector<64x128xi32>
    %c7_i32_95 = arith.constant 7 : i32
    %284 = vector.broadcast %c7_i32_95 : i32 to vector<64x128xi32>
    %285 = arith.cmpi sle, %283, %284 : vector<64x128xi32>
    %286 = arith.andi %281, %285 : vector<64x128xi1>
    %c48_i32_96 = arith.constant 48 : i32
    %287 = vector.broadcast %c48_i32_96 : i32 to vector<64x128xi32>
    %288 = arith.cmpi sge, %0, %287 : vector<64x128xi32>
    %289 = arith.andi %286, %288 : vector<64x128xi1>
    %c51_i32 = arith.constant 51 : i32
    %290 = vector.broadcast %c51_i32 : i32 to vector<64x128xi32>
    %291 = arith.cmpi slt, %0, %290 : vector<64x128xi32>
    %292 = arith.andi %289, %291 : vector<64x128xi1>
    %293 = arith.select %292, %277, %276 : vector<64x128xi1>, vector<64x128xf32>
    %c26 = arith.constant 26 : index
    %c0_97 = arith.constant 0 : index
    %294 = vector.load %arg0[%c26, %c0_97] : memref<104x128xf32, #tpu.memory_space<vmem>>, vector<64x128xf32>
    %c0_i32_98 = arith.constant 0 : i32
    %295 = vector.broadcast %c0_i32_98 : i32 to vector<64x128xi32>
    %296 = arith.addi %3, %295 : vector<64x128xi32>
    %c0_i32_99 = arith.constant 0 : i32
    %297 = vector.broadcast %c0_i32_99 : i32 to vector<64x128xi32>
    %298 = arith.cmpi sge, %296, %297 : vector<64x128xi32>
    %c0_i32_100 = arith.constant 0 : i32
    %299 = vector.broadcast %c0_i32_100 : i32 to vector<64x128xi32>
    %300 = arith.addi %3, %299 : vector<64x128xi32>
    %c7_i32_101 = arith.constant 7 : i32
    %301 = vector.broadcast %c7_i32_101 : i32 to vector<64x128xi32>
    %302 = arith.cmpi sle, %300, %301 : vector<64x128xi32>
    %303 = arith.andi %298, %302 : vector<64x128xi1>
    %c51_i32_102 = arith.constant 51 : i32
    %304 = vector.broadcast %c51_i32_102 : i32 to vector<64x128xi32>
    %305 = arith.cmpi sge, %0, %304 : vector<64x128xi32>
    %306 = arith.andi %303, %305 : vector<64x128xi1>
    %c54_i32 = arith.constant 54 : i32
    %307 = vector.broadcast %c54_i32 : i32 to vector<64x128xi32>
    %308 = arith.cmpi slt, %0, %307 : vector<64x128xi32>
    %309 = arith.andi %306, %308 : vector<64x128xi1>
    %310 = arith.select %309, %294, %293 : vector<64x128xi1>, vector<64x128xf32>
    %c27 = arith.constant 27 : index
    %c0_103 = arith.constant 0 : index
    %311 = vector.load %arg0[%c27, %c0_103] : memref<104x128xf32, #tpu.memory_space<vmem>>, vector<64x128xf32>
    %c1_i32_104 = arith.constant 1 : i32
    %312 = vector.broadcast %c1_i32_104 : i32 to vector<64x128xi32>
    %313 = arith.addi %3, %312 : vector<64x128xi32>
    %c0_i32_105 = arith.constant 0 : i32
    %314 = vector.broadcast %c0_i32_105 : i32 to vector<64x128xi32>
    %315 = arith.cmpi sge, %313, %314 : vector<64x128xi32>
    %c1_i32_106 = arith.constant 1 : i32
    %316 = vector.broadcast %c1_i32_106 : i32 to vector<64x128xi32>
    %317 = arith.addi %3, %316 : vector<64x128xi32>
    %c7_i32_107 = arith.constant 7 : i32
    %318 = vector.broadcast %c7_i32_107 : i32 to vector<64x128xi32>
    %319 = arith.cmpi sle, %317, %318 : vector<64x128xi32>
    %320 = arith.andi %315, %319 : vector<64x128xi1>
    %c54_i32_108 = arith.constant 54 : i32
    %321 = vector.broadcast %c54_i32_108 : i32 to vector<64x128xi32>
    %322 = arith.cmpi sge, %0, %321 : vector<64x128xi32>
    %323 = arith.andi %320, %322 : vector<64x128xi1>
    %c57_i32 = arith.constant 57 : i32
    %324 = vector.broadcast %c57_i32 : i32 to vector<64x128xi32>
    %325 = arith.cmpi slt, %0, %324 : vector<64x128xi32>
    %326 = arith.andi %323, %325 : vector<64x128xi1>
    %327 = arith.select %326, %311, %310 : vector<64x128xi1>, vector<64x128xf32>
    %c28 = arith.constant 28 : index
    %c0_109 = arith.constant 0 : index
    %328 = vector.load %arg0[%c28, %c0_109] : memref<104x128xf32, #tpu.memory_space<vmem>>, vector<64x128xf32>
    %c2_i32_110 = arith.constant 2 : i32
    %329 = vector.broadcast %c2_i32_110 : i32 to vector<64x128xi32>
    %330 = arith.addi %3, %329 : vector<64x128xi32>
    %c0_i32_111 = arith.constant 0 : i32
    %331 = vector.broadcast %c0_i32_111 : i32 to vector<64x128xi32>
    %332 = arith.cmpi sge, %330, %331 : vector<64x128xi32>
    %c2_i32_112 = arith.constant 2 : i32
    %333 = vector.broadcast %c2_i32_112 : i32 to vector<64x128xi32>
    %334 = arith.addi %3, %333 : vector<64x128xi32>
    %c7_i32_113 = arith.constant 7 : i32
    %335 = vector.broadcast %c7_i32_113 : i32 to vector<64x128xi32>
    %336 = arith.cmpi sle, %334, %335 : vector<64x128xi32>
    %337 = arith.andi %332, %336 : vector<64x128xi1>
    %c57_i32_114 = arith.constant 57 : i32
    %338 = vector.broadcast %c57_i32_114 : i32 to vector<64x128xi32>
    %339 = arith.cmpi sge, %0, %338 : vector<64x128xi32>
    %340 = arith.andi %337, %339 : vector<64x128xi1>
    %c60_i32 = arith.constant 60 : i32
    %341 = vector.broadcast %c60_i32 : i32 to vector<64x128xi32>
    %342 = arith.cmpi slt, %0, %341 : vector<64x128xi32>
    %343 = arith.andi %340, %342 : vector<64x128xi1>
    %344 = arith.select %343, %328, %327 : vector<64x128xi1>, vector<64x128xf32>
    %c32 = arith.constant 32 : index
    %c0_115 = arith.constant 0 : index
    %345 = vector.load %arg0[%c32, %c0_115] : memref<104x128xf32, #tpu.memory_space<vmem>>, vector<64x128xf32>
    %c-2_i32_116 = arith.constant -2 : i32
    %346 = vector.broadcast %c-2_i32_116 : i32 to vector<64x128xi32>
    %347 = arith.addi %3, %346 : vector<64x128xi32>
    %c0_i32_117 = arith.constant 0 : i32
    %348 = vector.broadcast %c0_i32_117 : i32 to vector<64x128xi32>
    %349 = arith.cmpi sge, %347, %348 : vector<64x128xi32>
    %c-2_i32_118 = arith.constant -2 : i32
    %350 = vector.broadcast %c-2_i32_118 : i32 to vector<64x128xi32>
    %351 = arith.addi %3, %350 : vector<64x128xi32>
    %c7_i32_119 = arith.constant 7 : i32
    %352 = vector.broadcast %c7_i32_119 : i32 to vector<64x128xi32>
    %353 = arith.cmpi sle, %351, %352 : vector<64x128xi32>
    %354 = arith.andi %349, %353 : vector<64x128xi1>
    %c60_i32_120 = arith.constant 60 : i32
    %355 = vector.broadcast %c60_i32_120 : i32 to vector<64x128xi32>
    %356 = arith.cmpi sge, %0, %355 : vector<64x128xi32>
    %357 = arith.andi %354, %356 : vector<64x128xi1>
    %c63_i32 = arith.constant 63 : i32
    %358 = vector.broadcast %c63_i32 : i32 to vector<64x128xi32>
    %359 = arith.cmpi slt, %0, %358 : vector<64x128xi32>
    %360 = arith.andi %357, %359 : vector<64x128xi1>
    %361 = arith.select %360, %345, %344 : vector<64x128xi1>, vector<64x128xf32>
    %c33 = arith.constant 33 : index
    %c0_121 = arith.constant 0 : index
    %362 = vector.load %arg0[%c33, %c0_121] : memref<104x128xf32, #tpu.memory_space<vmem>>, vector<64x128xf32>
    %c-1_i32_122 = arith.constant -1 : i32
    %363 = vector.broadcast %c-1_i32_122 : i32 to vector<64x128xi32>
    %364 = arith.addi %3, %363 : vector<64x128xi32>
    %c0_i32_123 = arith.constant 0 : i32
    %365 = vector.broadcast %c0_i32_123 : i32 to vector<64x128xi32>
    %366 = arith.cmpi sge, %364, %365 : vector<64x128xi32>
    %c-1_i32_124 = arith.constant -1 : i32
    %367 = vector.broadcast %c-1_i32_124 : i32 to vector<64x128xi32>
    %368 = arith.addi %3, %367 : vector<64x128xi32>
    %c7_i32_125 = arith.constant 7 : i32
    %369 = vector.broadcast %c7_i32_125 : i32 to vector<64x128xi32>
    %370 = arith.cmpi sle, %368, %369 : vector<64x128xi32>
    %371 = arith.andi %366, %370 : vector<64x128xi1>
    %c63_i32_126 = arith.constant 63 : i32
    %372 = vector.broadcast %c63_i32_126 : i32 to vector<64x128xi32>
    %373 = arith.cmpi sge, %0, %372 : vector<64x128xi32>
    %374 = arith.andi %371, %373 : vector<64x128xi1>
    %c66_i32 = arith.constant 66 : i32
    %375 = vector.broadcast %c66_i32 : i32 to vector<64x128xi32>
    %376 = arith.cmpi slt, %0, %375 : vector<64x128xi32>
    %377 = arith.andi %374, %376 : vector<64x128xi1>
    %378 = arith.select %377, %362, %361 : vector<64x128xi1>, vector<64x128xf32>
    %c34 = arith.constant 34 : index
    %c0_127 = arith.constant 0 : index
    %379 = vector.load %arg0[%c34, %c0_127] : memref<104x128xf32, #tpu.memory_space<vmem>>, vector<64x128xf32>
    %c0_i32_128 = arith.constant 0 : i32
    %380 = vector.broadcast %c0_i32_128 : i32 to vector<64x128xi32>
    %381 = arith.addi %3, %380 : vector<64x128xi32>
    %c0_i32_129 = arith.constant 0 : i32
    %382 = vector.broadcast %c0_i32_129 : i32 to vector<64x128xi32>
    %383 = arith.cmpi sge, %381, %382 : vector<64x128xi32>
    %c0_i32_130 = arith.constant 0 : i32
    %384 = vector.broadcast %c0_i32_130 : i32 to vector<64x128xi32>
    %385 = arith.addi %3, %384 : vector<64x128xi32>
    %c7_i32_131 = arith.constant 7 : i32
    %386 = vector.broadcast %c7_i32_131 : i32 to vector<64x128xi32>
    %387 = arith.cmpi sle, %385, %386 : vector<64x128xi32>
    %388 = arith.andi %383, %387 : vector<64x128xi1>
    %c66_i32_132 = arith.constant 66 : i32
    %389 = vector.broadcast %c66_i32_132 : i32 to vector<64x128xi32>
    %390 = arith.cmpi sge, %0, %389 : vector<64x128xi32>
    %391 = arith.andi %388, %390 : vector<64x128xi1>
    %c69_i32 = arith.constant 69 : i32
    %392 = vector.broadcast %c69_i32 : i32 to vector<64x128xi32>
    %393 = arith.cmpi slt, %0, %392 : vector<64x128xi32>
    %394 = arith.andi %391, %393 : vector<64x128xi1>
    %395 = arith.select %394, %379, %378 : vector<64x128xi1>, vector<64x128xf32>
    %c35 = arith.constant 35 : index
    %c0_133 = arith.constant 0 : index
    %396 = vector.load %arg0[%c35, %c0_133] : memref<104x128xf32, #tpu.memory_space<vmem>>, vector<64x128xf32>
    %c1_i32_134 = arith.constant 1 : i32
    %397 = vector.broadcast %c1_i32_134 : i32 to vector<64x128xi32>
    %398 = arith.addi %3, %397 : vector<64x128xi32>
    %c0_i32_135 = arith.constant 0 : i32
    %399 = vector.broadcast %c0_i32_135 : i32 to vector<64x128xi32>
    %400 = arith.cmpi sge, %398, %399 : vector<64x128xi32>
    %c1_i32_136 = arith.constant 1 : i32
    %401 = vector.broadcast %c1_i32_136 : i32 to vector<64x128xi32>
    %402 = arith.addi %3, %401 : vector<64x128xi32>
    %c7_i32_137 = arith.constant 7 : i32
    %403 = vector.broadcast %c7_i32_137 : i32 to vector<64x128xi32>
    %404 = arith.cmpi sle, %402, %403 : vector<64x128xi32>
    %405 = arith.andi %400, %404 : vector<64x128xi1>
    %c69_i32_138 = arith.constant 69 : i32
    %406 = vector.broadcast %c69_i32_138 : i32 to vector<64x128xi32>
    %407 = arith.cmpi sge, %0, %406 : vector<64x128xi32>
    %408 = arith.andi %405, %407 : vector<64x128xi1>
    %c72_i32 = arith.constant 72 : i32
    %409 = vector.broadcast %c72_i32 : i32 to vector<64x128xi32>
    %410 = arith.cmpi slt, %0, %409 : vector<64x128xi32>
    %411 = arith.andi %408, %410 : vector<64x128xi1>
    %412 = arith.select %411, %396, %395 : vector<64x128xi1>, vector<64x128xf32>
    %c36 = arith.constant 36 : index
    %c0_139 = arith.constant 0 : index
    %413 = vector.load %arg0[%c36, %c0_139] : memref<104x128xf32, #tpu.memory_space<vmem>>, vector<64x128xf32>
    %c2_i32_140 = arith.constant 2 : i32
    %414 = vector.broadcast %c2_i32_140 : i32 to vector<64x128xi32>
    %415 = arith.addi %3, %414 : vector<64x128xi32>
    %c0_i32_141 = arith.constant 0 : i32
    %416 = vector.broadcast %c0_i32_141 : i32 to vector<64x128xi32>
    %417 = arith.cmpi sge, %415, %416 : vector<64x128xi32>
    %c2_i32_142 = arith.constant 2 : i32
    %418 = vector.broadcast %c2_i32_142 : i32 to vector<64x128xi32>
    %419 = arith.addi %3, %418 : vector<64x128xi32>
    %c7_i32_143 = arith.constant 7 : i32
    %420 = vector.broadcast %c7_i32_143 : i32 to vector<64x128xi32>
    %421 = arith.cmpi sle, %419, %420 : vector<64x128xi32>
    %422 = arith.andi %417, %421 : vector<64x128xi1>
    %c72_i32_144 = arith.constant 72 : i32
    %423 = vector.broadcast %c72_i32_144 : i32 to vector<64x128xi32>
    %424 = arith.cmpi sge, %0, %423 : vector<64x128xi32>
    %425 = arith.andi %422, %424 : vector<64x128xi1>
    %c75_i32 = arith.constant 75 : i32
    %426 = vector.broadcast %c75_i32 : i32 to vector<64x128xi32>
    %427 = arith.cmpi slt, %0, %426 : vector<64x128xi32>
    %428 = arith.andi %425, %427 : vector<64x128xi1>
    %429 = arith.select %428, %413, %412 : vector<64x128xi1>, vector<64x128xf32>
    %430 = arith.truncf %429 : vector<64x128xf32> to vector<64x128xbf16>
    %c0_145 = arith.constant 0 : index
    %c0_146 = arith.constant 0 : index
    %431 = vector.load %arg1[%c0_145, %c0_146] : memref<4112x128xbf16, #tpu.memory_space<vmem>>, vector<128x128xbf16>
    %cst_147 = arith.constant dense<0.000000e+00> : vector<64x128xf32>
    %432 = tpu.matmul %430, %431, %cst_147 {dimension_numbers = #tpu.dot_dimension_numbers<[1], [0], [0], [1], [0, 0, 1, 1], [], []>} : vector<64x128xbf16>, vector<128x128xbf16>, vector<64x128xf32> -> vector<64x128xf32>
    %c0_148 = arith.constant 0 : index
    %c0_149 = arith.constant 0 : index
    %433 = vector.load %arg3[%c0_148, %c0_149] : memref<16x256xf32, #tpu.memory_space<vmem>>, vector<1x128xf32>
    %434 = vector.broadcast %433 : vector<1x128xf32> to vector<64x128xf32>
    %435 = arith.addf %432, %434 : vector<64x128xf32>
    %cst_150 = arith.constant 0.000000e+00 : f32
    %436 = vector.broadcast %cst_150 : f32 to vector<64x128xf32>
    %437 = arith.cmpf ogt, %435, %436 : vector<64x128xf32>
    %cst_151 = arith.constant 0.00999999977 : f32
    %438 = vector.broadcast %cst_151 : f32 to vector<64x128xf32>
    %439 = arith.mulf %438, %435 : vector<64x128xf32>
    %440 = arith.select %437, %435, %439 : vector<64x128xi1>, vector<64x128xf32>
    %c4016 = arith.constant 4016 : index
    %c0_152 = arith.constant 0 : index
    %441 = vector.load %arg1[%c4016, %c0_152] : memref<4112x128xbf16, #tpu.memory_space<vmem>>, vector<64x64xbf16>
    %442 = arith.truncf %440 : vector<64x128xf32> to vector<64x128xbf16>
    %cst_153 = arith.constant dense<0.000000e+00> : vector<64x128xf32>
    %443 = tpu.matmul %441, %442, %cst_153 {dimension_numbers = #tpu.dot_dimension_numbers<[1], [0], [0], [1], [0, 0, 1, 1], [], []>} : vector<64x64xbf16>, vector<64x128xbf16>, vector<64x128xf32> -> vector<64x128xf32>
    %444 = vector.extract_strided_slice %443 {offsets = [0, 0], sizes = [16, 128], strides = [1, 1]} : vector<64x128xf32> to vector<16x128xf32>
    %445 = vector.extract_strided_slice %443 {offsets = [16, 0], sizes = [16, 128], strides = [1, 1]} : vector<64x128xf32> to vector<16x128xf32>
    %446 = arith.maximumf %444, %445 : vector<16x128xf32>
    %447 = vector.extract_strided_slice %443 {offsets = [32, 0], sizes = [16, 128], strides = [1, 1]} : vector<64x128xf32> to vector<16x128xf32>
    %448 = vector.extract_strided_slice %443 {offsets = [48, 0], sizes = [16, 128], strides = [1, 1]} : vector<64x128xf32> to vector<16x128xf32>
    %449 = arith.maximumf %447, %448 : vector<16x128xf32>
    %450 = arith.maximumf %446, %449 : vector<16x128xf32>
    %c3840 = arith.constant 3840 : index
    %c0_154 = arith.constant 0 : index
    %451 = vector.load %arg1[%c3840, %c0_154] : memref<4112x128xbf16, #tpu.memory_space<vmem>>, vector<144x16xbf16>
    %c128 = arith.constant 128 : index
    %c0_155 = arith.constant 0 : index
    %452 = vector.load %arg1[%c128, %c0_155] : memref<4112x128xbf16, #tpu.memory_space<vmem>>, vector<1152x128xbf16>
    %c1_156 = arith.constant 1 : index
    %c0_157 = arith.constant 0 : index
    %453 = vector.load %arg3[%c1_156, %c0_157] : memref<16x256xf32, #tpu.memory_space<vmem>>, vector<1x128xf32>
    %454 = arith.truncf %450 : vector<16x128xf32> to vector<16x128xbf16>
    %cst_158 = arith.constant dense<0.000000e+00> : vector<144x128xf32>
    %455 = tpu.matmul %451, %454, %cst_158 {dimension_numbers = #tpu.dot_dimension_numbers<[1], [0], [0], [1], [0, 0, 1, 1], [], []>} : vector<144x16xbf16>, vector<16x128xbf16>, vector<144x128xf32> -> vector<144x128xf32>
    %456 = arith.truncf %455 : vector<144x128xf32> to vector<144x128xbf16>
    %457 = vector.extract_strided_slice %456 {offsets = [0, 0], sizes = [16, 128], strides = [1, 1]} : vector<144x128xbf16> to vector<16x128xbf16>
    %458 = vector.extract_strided_slice %456 {offsets = [16, 0], sizes = [16, 128], strides = [1, 1]} : vector<144x128xbf16> to vector<16x128xbf16>
    %459 = vector.extract_strided_slice %456 {offsets = [32, 0], sizes = [16, 128], strides = [1, 1]} : vector<144x128xbf16> to vector<16x128xbf16>
    %460 = vector.extract_strided_slice %456 {offsets = [48, 0], sizes = [16, 128], strides = [1, 1]} : vector<144x128xbf16> to vector<16x128xbf16>
    %461 = vector.extract_strided_slice %456 {offsets = [64, 0], sizes = [16, 128], strides = [1, 1]} : vector<144x128xbf16> to vector<16x128xbf16>
    %462 = vector.extract_strided_slice %456 {offsets = [80, 0], sizes = [16, 128], strides = [1, 1]} : vector<144x128xbf16> to vector<16x128xbf16>
    %463 = vector.extract_strided_slice %456 {offsets = [96, 0], sizes = [16, 128], strides = [1, 1]} : vector<144x128xbf16> to vector<16x128xbf16>
    %464 = vector.extract_strided_slice %456 {offsets = [112, 0], sizes = [16, 128], strides = [1, 1]} : vector<144x128xbf16> to vector<16x128xbf16>
    %465 = vector.extract_strided_slice %456 {offsets = [128, 0], sizes = [16, 128], strides = [1, 1]} : vector<144x128xbf16> to vector<16x128xbf16>
    %466 = tpu.concatenate %457, %458, %459, %460, %461, %462, %463, %464, %465 in 1 : vector<16x128xbf16>, vector<16x128xbf16>, vector<16x128xbf16>, vector<16x128xbf16>, vector<16x128xbf16>, vector<16x128xbf16>, vector<16x128xbf16>, vector<16x128xbf16>, vector<16x128xbf16> -> vector<16x1152xbf16>
    %cst_159 = arith.constant dense<0.000000e+00> : vector<16x128xf32>
    %467 = tpu.matmul %466, %452, %cst_159 {dimension_numbers = #tpu.dot_dimension_numbers<[1], [0], [0], [1], [0, 0, 1, 1], [], []>} : vector<16x1152xbf16>, vector<1152x128xbf16>, vector<16x128xf32> -> vector<16x128xf32>
    %468 = vector.broadcast %453 : vector<1x128xf32> to vector<16x128xf32>
    %469 = arith.addf %467, %468 : vector<16x128xf32>
    %cst_160 = arith.constant 0.000000e+00 : f32
    %470 = vector.broadcast %cst_160 : f32 to vector<16x128xf32>
    %471 = arith.cmpf ogt, %469, %470 : vector<16x128xf32>
    %cst_161 = arith.constant 0.00999999977 : f32
    %472 = vector.broadcast %cst_161 : f32 to vector<16x128xf32>
    %473 = arith.mulf %472, %469 : vector<16x128xf32>
    %474 = arith.select %471, %469, %473 : vector<16x128xi1>, vector<16x128xf32>
    %c1280 = arith.constant 1280 : index
    %c0_162 = arith.constant 0 : index
    %475 = vector.load %arg1[%c1280, %c0_162] : memref<4112x128xbf16, #tpu.memory_space<vmem>>, vector<128x128xbf16>
    %c2_163 = arith.constant 2 : index
    %c0_164 = arith.constant 0 : index
    %476 = vector.load %arg3[%c2_163, %c0_164] : memref<16x256xf32, #tpu.memory_space<vmem>>, vector<1x128xf32>
    %477 = arith.truncf %474 : vector<16x128xf32> to vector<16x128xbf16>
    %cst_165 = arith.constant dense<0.000000e+00> : vector<16x128xf32>
    %478 = tpu.matmul %477, %475, %cst_165 {dimension_numbers = #tpu.dot_dimension_numbers<[1], [0], [0], [1], [0, 0, 1, 1], [], []>} : vector<16x128xbf16>, vector<128x128xbf16>, vector<16x128xf32> -> vector<16x128xf32>
    %479 = vector.broadcast %476 : vector<1x128xf32> to vector<16x128xf32>
    %480 = arith.addf %478, %479 : vector<16x128xf32>
    %cst_166 = arith.constant 0.000000e+00 : f32
    %481 = vector.broadcast %cst_166 : f32 to vector<16x128xf32>
    %482 = arith.cmpf ogt, %480, %481 : vector<16x128xf32>
    %cst_167 = arith.constant 0.00999999977 : f32
    %483 = vector.broadcast %cst_167 : f32 to vector<16x128xf32>
    %484 = arith.mulf %483, %480 : vector<16x128xf32>
    %485 = arith.select %482, %480, %484 : vector<16x128xi1>, vector<16x128xf32>
    %c1408 = arith.constant 1408 : index
    %c0_168 = arith.constant 0 : index
    %486 = vector.load %arg1[%c1408, %c0_168] : memref<4112x128xbf16, #tpu.memory_space<vmem>>, vector<1152x128xbf16>
    %c3_169 = arith.constant 3 : index
    %c0_170 = arith.constant 0 : index
    %487 = vector.load %arg3[%c3_169, %c0_170] : memref<16x256xf32, #tpu.memory_space<vmem>>, vector<1x128xf32>
    %488 = arith.truncf %485 : vector<16x128xf32> to vector<16x128xbf16>
    %cst_171 = arith.constant dense<0.000000e+00> : vector<144x128xf32>
    %489 = tpu.matmul %451, %488, %cst_171 {dimension_numbers = #tpu.dot_dimension_numbers<[1], [0], [0], [1], [0, 0, 1, 1], [], []>} : vector<144x16xbf16>, vector<16x128xbf16>, vector<144x128xf32> -> vector<144x128xf32>
    %490 = arith.truncf %489 : vector<144x128xf32> to vector<144x128xbf16>
    %491 = vector.extract_strided_slice %490 {offsets = [0, 0], sizes = [16, 128], strides = [1, 1]} : vector<144x128xbf16> to vector<16x128xbf16>
    %492 = vector.extract_strided_slice %490 {offsets = [16, 0], sizes = [16, 128], strides = [1, 1]} : vector<144x128xbf16> to vector<16x128xbf16>
    %493 = vector.extract_strided_slice %490 {offsets = [32, 0], sizes = [16, 128], strides = [1, 1]} : vector<144x128xbf16> to vector<16x128xbf16>
    %494 = vector.extract_strided_slice %490 {offsets = [48, 0], sizes = [16, 128], strides = [1, 1]} : vector<144x128xbf16> to vector<16x128xbf16>
    %495 = vector.extract_strided_slice %490 {offsets = [64, 0], sizes = [16, 128], strides = [1, 1]} : vector<144x128xbf16> to vector<16x128xbf16>
    %496 = vector.extract_strided_slice %490 {offsets = [80, 0], sizes = [16, 128], strides = [1, 1]} : vector<144x128xbf16> to vector<16x128xbf16>
    %497 = vector.extract_strided_slice %490 {offsets = [96, 0], sizes = [16, 128], strides = [1, 1]} : vector<144x128xbf16> to vector<16x128xbf16>
    %498 = vector.extract_strided_slice %490 {offsets = [112, 0], sizes = [16, 128], strides = [1, 1]} : vector<144x128xbf16> to vector<16x128xbf16>
    %499 = vector.extract_strided_slice %490 {offsets = [128, 0], sizes = [16, 128], strides = [1, 1]} : vector<144x128xbf16> to vector<16x128xbf16>
    %500 = tpu.concatenate %491, %492, %493, %494, %495, %496, %497, %498, %499 in 1 : vector<16x128xbf16>, vector<16x128xbf16>, vector<16x128xbf16>, vector<16x128xbf16>, vector<16x128xbf16>, vector<16x128xbf16>, vector<16x128xbf16>, vector<16x128xbf16>, vector<16x128xbf16> -> vector<16x1152xbf16>
    %cst_172 = arith.constant dense<0.000000e+00> : vector<16x128xf32>
    %501 = tpu.matmul %500, %486, %cst_172 {dimension_numbers = #tpu.dot_dimension_numbers<[1], [0], [0], [1], [0, 0, 1, 1], [], []>} : vector<16x1152xbf16>, vector<1152x128xbf16>, vector<16x128xf32> -> vector<16x128xf32>
    %502 = vector.broadcast %487 : vector<1x128xf32> to vector<16x128xf32>
    %503 = arith.addf %501, %502 : vector<16x128xf32>
    %cst_173 = arith.constant 0.000000e+00 : f32
    %504 = vector.broadcast %cst_173 : f32 to vector<16x128xf32>
    %505 = arith.cmpf ogt, %503, %504 : vector<16x128xf32>
    %cst_174 = arith.constant 0.00999999977 : f32
    %506 = vector.broadcast %cst_174 : f32 to vector<16x128xf32>
    %507 = arith.mulf %506, %503 : vector<16x128xf32>
    %508 = arith.select %505, %503, %507 : vector<16x128xi1>, vector<16x128xf32>
    %c2560 = arith.constant 2560 : index
    %c0_175 = arith.constant 0 : index
    %509 = vector.load %arg1[%c2560, %c0_175] : memref<4112x128xbf16, #tpu.memory_space<vmem>>, vector<128x128xbf16>
    %c4_176 = arith.constant 4 : index
    %c0_177 = arith.constant 0 : index
    %510 = vector.load %arg3[%c4_176, %c0_177] : memref<16x256xf32, #tpu.memory_space<vmem>>, vector<1x128xf32>
    %511 = arith.truncf %508 : vector<16x128xf32> to vector<16x128xbf16>
    %cst_178 = arith.constant dense<0.000000e+00> : vector<16x128xf32>
    %512 = tpu.matmul %511, %509, %cst_178 {dimension_numbers = #tpu.dot_dimension_numbers<[1], [0], [0], [1], [0, 0, 1, 1], [], []>} : vector<16x128xbf16>, vector<128x128xbf16>, vector<16x128xf32> -> vector<16x128xf32>
    %513 = vector.broadcast %510 : vector<1x128xf32> to vector<16x128xf32>
    %514 = arith.addf %512, %513 : vector<16x128xf32>
    %cst_179 = arith.constant 0.000000e+00 : f32
    %515 = vector.broadcast %cst_179 : f32 to vector<16x128xf32>
    %516 = arith.cmpf ogt, %514, %515 : vector<16x128xf32>
    %cst_180 = arith.constant 0.00999999977 : f32
    %517 = vector.broadcast %cst_180 : f32 to vector<16x128xf32>
    %518 = arith.mulf %517, %514 : vector<16x128xf32>
    %519 = arith.select %516, %514, %518 : vector<16x128xi1>, vector<16x128xf32>
    %c0_181 = arith.constant 0 : index
    %c0_182 = arith.constant 0 : index
    %520 = vector.load %arg2[%c0_181, %c0_182] : memref<1280x256xbf16, #tpu.memory_space<vmem>>, vector<1152x256xbf16>
    %c5 = arith.constant 5 : index
    %c0_183 = arith.constant 0 : index
    %521 = vector.load %arg3[%c5, %c0_183] : memref<16x256xf32, #tpu.memory_space<vmem>>, vector<1x256xf32>
    %522 = arith.truncf %519 : vector<16x128xf32> to vector<16x128xbf16>
    %cst_184 = arith.constant dense<0.000000e+00> : vector<144x128xf32>
    %523 = tpu.matmul %451, %522, %cst_184 {dimension_numbers = #tpu.dot_dimension_numbers<[1], [0], [0], [1], [0, 0, 1, 1], [], []>} : vector<144x16xbf16>, vector<16x128xbf16>, vector<144x128xf32> -> vector<144x128xf32>
    %524 = arith.truncf %523 : vector<144x128xf32> to vector<144x128xbf16>
    %525 = vector.extract_strided_slice %524 {offsets = [0, 0], sizes = [16, 128], strides = [1, 1]} : vector<144x128xbf16> to vector<16x128xbf16>
    %526 = vector.extract_strided_slice %524 {offsets = [16, 0], sizes = [16, 128], strides = [1, 1]} : vector<144x128xbf16> to vector<16x128xbf16>
    %527 = vector.extract_strided_slice %524 {offsets = [32, 0], sizes = [16, 128], strides = [1, 1]} : vector<144x128xbf16> to vector<16x128xbf16>
    %528 = vector.extract_strided_slice %524 {offsets = [48, 0], sizes = [16, 128], strides = [1, 1]} : vector<144x128xbf16> to vector<16x128xbf16>
    %529 = vector.extract_strided_slice %524 {offsets = [64, 0], sizes = [16, 128], strides = [1, 1]} : vector<144x128xbf16> to vector<16x128xbf16>
    %530 = vector.extract_strided_slice %524 {offsets = [80, 0], sizes = [16, 128], strides = [1, 1]} : vector<144x128xbf16> to vector<16x128xbf16>
    %531 = vector.extract_strided_slice %524 {offsets = [96, 0], sizes = [16, 128], strides = [1, 1]} : vector<144x128xbf16> to vector<16x128xbf16>
    %532 = vector.extract_strided_slice %524 {offsets = [112, 0], sizes = [16, 128], strides = [1, 1]} : vector<144x128xbf16> to vector<16x128xbf16>
    %533 = vector.extract_strided_slice %524 {offsets = [128, 0], sizes = [16, 128], strides = [1, 1]} : vector<144x128xbf16> to vector<16x128xbf16>
    %534 = tpu.concatenate %525, %526, %527, %528, %529, %530, %531, %532, %533 in 1 : vector<16x128xbf16>, vector<16x128xbf16>, vector<16x128xbf16>, vector<16x128xbf16>, vector<16x128xbf16>, vector<16x128xbf16>, vector<16x128xbf16>, vector<16x128xbf16>, vector<16x128xbf16> -> vector<16x1152xbf16>
    %cst_185 = arith.constant dense<0.000000e+00> : vector<16x256xf32>
    %535 = tpu.matmul %534, %520, %cst_185 {dimension_numbers = #tpu.dot_dimension_numbers<[1], [0], [0], [1], [0, 0, 1, 1], [], []>} : vector<16x1152xbf16>, vector<1152x256xbf16>, vector<16x256xf32> -> vector<16x256xf32>
    %536 = vector.broadcast %521 : vector<1x256xf32> to vector<16x256xf32>
    %537 = arith.addf %535, %536 : vector<16x256xf32>
    %cst_186 = arith.constant 0.000000e+00 : f32
    %538 = vector.broadcast %cst_186 : f32 to vector<16x256xf32>
    %539 = arith.cmpf ogt, %537, %538 : vector<16x256xf32>
    %cst_187 = arith.constant 0.00999999977 : f32
    %540 = vector.broadcast %cst_187 : f32 to vector<16x256xf32>
    %541 = arith.mulf %540, %537 : vector<16x256xf32>
    %542 = arith.select %539, %537, %541 : vector<16x256xi1>, vector<16x256xf32>
    %c4080 = arith.constant 4080 : index
    %c0_188 = arith.constant 0 : index
    %543 = vector.load %arg1[%c4080, %c0_188] : memref<4112x128xbf16, #tpu.memory_space<vmem>>, vector<32x16xbf16>
    %544 = arith.truncf %542 : vector<16x256xf32> to vector<16x256xbf16>
    %cst_189 = arith.constant dense<0.000000e+00> : vector<32x256xf32>
    %545 = tpu.matmul %543, %544, %cst_189 {dimension_numbers = #tpu.dot_dimension_numbers<[1], [0], [0], [1], [0, 0, 1, 1], [], []>} : vector<32x16xbf16>, vector<16x256xbf16>, vector<32x256xf32> -> vector<32x256xf32>
    %546 = vector.extract_strided_slice %545 {offsets = [0, 0], sizes = [8, 256], strides = [1, 1]} : vector<32x256xf32> to vector<8x256xf32>
    %547 = vector.extract_strided_slice %545 {offsets = [8, 0], sizes = [8, 256], strides = [1, 1]} : vector<32x256xf32> to vector<8x256xf32>
    %548 = arith.maximumf %546, %547 : vector<8x256xf32>
    %549 = vector.extract_strided_slice %545 {offsets = [16, 0], sizes = [8, 256], strides = [1, 1]} : vector<32x256xf32> to vector<8x256xf32>
    %550 = vector.extract_strided_slice %545 {offsets = [24, 0], sizes = [8, 256], strides = [1, 1]} : vector<32x256xf32> to vector<8x256xf32>
    %551 = arith.maximumf %549, %550 : vector<8x256xf32>
    %552 = arith.maximumf %548, %551 : vector<8x256xf32>
    %c2688 = arith.constant 2688 : index
    %c0_190 = arith.constant 0 : index
    %553 = vector.load %arg1[%c2688, %c0_190] : memref<4112x128xbf16, #tpu.memory_space<vmem>>, vector<256x128xbf16>
    %c6 = arith.constant 6 : index
    %c0_191 = arith.constant 0 : index
    %554 = vector.load %arg3[%c6, %c0_191] : memref<16x256xf32, #tpu.memory_space<vmem>>, vector<1x128xf32>
    %555 = arith.truncf %552 : vector<8x256xf32> to vector<8x256xbf16>
    %cst_192 = arith.constant dense<0.000000e+00> : vector<8x128xf32>
    %556 = tpu.matmul %555, %553, %cst_192 {dimension_numbers = #tpu.dot_dimension_numbers<[1], [0], [0], [1], [0, 0, 1, 1], [], []>} : vector<8x256xbf16>, vector<256x128xbf16>, vector<8x128xf32> -> vector<8x128xf32>
    %557 = vector.broadcast %554 : vector<1x128xf32> to vector<8x128xf32>
    %558 = arith.addf %556, %557 : vector<8x128xf32>
    %cst_193 = arith.constant 0.000000e+00 : f32
    %559 = vector.broadcast %cst_193 : f32 to vector<8x128xf32>
    %560 = arith.cmpf ogt, %558, %559 : vector<8x128xf32>
    %cst_194 = arith.constant 0.00999999977 : f32
    %561 = vector.broadcast %cst_194 : f32 to vector<8x128xf32>
    %562 = arith.mulf %561, %558 : vector<8x128xf32>
    %563 = arith.select %560, %558, %562 : vector<8x128xi1>, vector<8x128xf32>
    %c3984 = arith.constant 3984 : index
    %c0_195 = arith.constant 0 : index
    %564 = vector.load %arg1[%c3984, %c0_195] : memref<4112x128xbf16, #tpu.memory_space<vmem>>, vector<32x8xbf16>
    %565 = arith.truncf %563 : vector<8x128xf32> to vector<8x128xbf16>
    %cst_196 = arith.constant dense<0.000000e+00> : vector<32x128xf32>
    %566 = tpu.matmul %564, %565, %cst_196 {dimension_numbers = #tpu.dot_dimension_numbers<[1], [0], [0], [1], [0, 0, 1, 1], [], []>} : vector<32x8xbf16>, vector<8x128xbf16>, vector<32x128xf32> -> vector<32x128xf32>
    %567 = arith.truncf %566 : vector<32x128xf32> to vector<32x128xbf16>
    %568 = vector.extract_strided_slice %567 {offsets = [0, 0], sizes = [8, 128], strides = [1, 1]} : vector<32x128xbf16> to vector<8x128xbf16>
    %569 = vector.extract_strided_slice %567 {offsets = [8, 0], sizes = [8, 128], strides = [1, 1]} : vector<32x128xbf16> to vector<8x128xbf16>
    %570 = vector.extract_strided_slice %567 {offsets = [16, 0], sizes = [8, 128], strides = [1, 1]} : vector<32x128xbf16> to vector<8x128xbf16>
    %571 = vector.extract_strided_slice %567 {offsets = [24, 0], sizes = [8, 128], strides = [1, 1]} : vector<32x128xbf16> to vector<8x128xbf16>
    %572 = tpu.concatenate %568, %569, %570, %571 in 1 : vector<8x128xbf16>, vector<8x128xbf16>, vector<8x128xbf16>, vector<8x128xbf16> -> vector<8x512xbf16>
    %c2944 = arith.constant 2944 : index
    %c0_197 = arith.constant 0 : index
    %573 = vector.load %arg1[%c2944, %c0_197] : memref<4112x128xbf16, #tpu.memory_space<vmem>>, vector<512x128xbf16>
    %cst_198 = arith.constant dense<0.000000e+00> : vector<8x128xf32>
    %574 = tpu.matmul %572, %573, %cst_198 {dimension_numbers = #tpu.dot_dimension_numbers<[1], [0], [0], [1], [0, 0, 1, 1], [], []>} : vector<8x512xbf16>, vector<512x128xbf16>, vector<8x128xf32> -> vector<8x128xf32>
    %c7 = arith.constant 7 : index
    %c0_199 = arith.constant 0 : index
    %575 = vector.load %arg3[%c7, %c0_199] : memref<16x256xf32, #tpu.memory_space<vmem>>, vector<1x128xf32>
    %576 = vector.broadcast %575 : vector<1x128xf32> to vector<8x128xf32>
    %577 = arith.addf %574, %576 : vector<8x128xf32>
    %cst_200 = arith.constant 0.000000e+00 : f32
    %578 = vector.broadcast %cst_200 : f32 to vector<8x128xf32>
    %579 = arith.cmpf ogt, %577, %578 : vector<8x128xf32>
    %cst_201 = arith.constant 0.00999999977 : f32
    %580 = vector.broadcast %cst_201 : f32 to vector<8x128xf32>
    %581 = arith.mulf %580, %577 : vector<8x128xf32>
    %582 = arith.select %579, %577, %581 : vector<8x128xi1>, vector<8x128xf32>
    %c3456 = arith.constant 3456 : index
    %c0_202 = arith.constant 0 : index
    %583 = vector.load %arg1[%c3456, %c0_202] : memref<4112x128xbf16, #tpu.memory_space<vmem>>, vector<128x128xbf16>
    %c8_203 = arith.constant 8 : index
    %c0_204 = arith.constant 0 : index
    %584 = vector.load %arg3[%c8_203, %c0_204] : memref<16x256xf32, #tpu.memory_space<vmem>>, vector<1x128xf32>
    %585 = arith.truncf %582 : vector<8x128xf32> to vector<8x128xbf16>
    %cst_205 = arith.constant dense<0.000000e+00> : vector<8x128xf32>
    %586 = tpu.matmul %585, %583, %cst_205 {dimension_numbers = #tpu.dot_dimension_numbers<[1], [0], [0], [1], [0, 0, 1, 1], [], []>} : vector<8x128xbf16>, vector<128x128xbf16>, vector<8x128xf32> -> vector<8x128xf32>
    %587 = vector.broadcast %584 : vector<1x128xf32> to vector<8x128xf32>
    %588 = arith.addf %586, %587 : vector<8x128xf32>
    %cst_206 = arith.constant 0.000000e+00 : f32
    %589 = vector.broadcast %cst_206 : f32 to vector<8x128xf32>
    %590 = arith.cmpf ogt, %588, %589 : vector<8x128xf32>
    %cst_207 = arith.constant 0.00999999977 : f32
    %591 = vector.broadcast %cst_207 : f32 to vector<8x128xf32>
    %592 = arith.mulf %591, %588 : vector<8x128xf32>
    %593 = arith.select %590, %588, %592 : vector<8x128xi1>, vector<8x128xf32>
    %c3584 = arith.constant 3584 : index
    %c0_208 = arith.constant 0 : index
    %594 = vector.load %arg1[%c3584, %c0_208] : memref<4112x128xbf16, #tpu.memory_space<vmem>>, vector<128x128xbf16>
    %c9_209 = arith.constant 9 : index
    %c0_210 = arith.constant 0 : index
    %595 = vector.load %arg3[%c9_209, %c0_210] : memref<16x256xf32, #tpu.memory_space<vmem>>, vector<1x128xf32>
    %596 = arith.truncf %593 : vector<8x128xf32> to vector<8x128xbf16>
    %cst_211 = arith.constant dense<0.000000e+00> : vector<8x128xf32>
    %597 = tpu.matmul %596, %594, %cst_211 {dimension_numbers = #tpu.dot_dimension_numbers<[1], [0], [0], [1], [0, 0, 1, 1], [], []>} : vector<8x128xbf16>, vector<128x128xbf16>, vector<8x128xf32> -> vector<8x128xf32>
    %598 = vector.broadcast %595 : vector<1x128xf32> to vector<8x128xf32>
    %599 = arith.addf %597, %598 : vector<8x128xf32>
    %cst_212 = arith.constant 0.000000e+00 : f32
    %600 = vector.broadcast %cst_212 : f32 to vector<8x128xf32>
    %601 = arith.cmpf ogt, %599, %600 : vector<8x128xf32>
    %cst_213 = arith.constant 0.00999999977 : f32
    %602 = vector.broadcast %cst_213 : f32 to vector<8x128xf32>
    %603 = arith.mulf %602, %599 : vector<8x128xf32>
    %604 = arith.select %601, %599, %603 : vector<8x128xi1>, vector<8x128xf32>
    %c3712 = arith.constant 3712 : index
    %c0_214 = arith.constant 0 : index
    %605 = vector.load %arg1[%c3712, %c0_214] : memref<4112x128xbf16, #tpu.memory_space<vmem>>, vector<128x128xbf16>
    %c10_215 = arith.constant 10 : index
    %c0_216 = arith.constant 0 : index
    %606 = vector.load %arg3[%c10_215, %c0_216] : memref<16x256xf32, #tpu.memory_space<vmem>>, vector<1x128xf32>
    %607 = arith.truncf %604 : vector<8x128xf32> to vector<8x128xbf16>
    %cst_217 = arith.constant dense<0.000000e+00> : vector<8x128xf32>
    %608 = tpu.matmul %607, %605, %cst_217 {dimension_numbers = #tpu.dot_dimension_numbers<[1], [0], [0], [1], [0, 0, 1, 1], [], []>} : vector<8x128xbf16>, vector<128x128xbf16>, vector<8x128xf32> -> vector<8x128xf32>
    %609 = vector.broadcast %606 : vector<1x128xf32> to vector<8x128xf32>
    %610 = arith.addf %608, %609 : vector<8x128xf32>
    %cst_218 = arith.constant 0.000000e+00 : f32
    %611 = vector.broadcast %cst_218 : f32 to vector<8x128xf32>
    %612 = arith.cmpf ogt, %610, %611 : vector<8x128xf32>
    %cst_219 = arith.constant 0.00999999977 : f32
    %613 = vector.broadcast %cst_219 : f32 to vector<8x128xf32>
    %614 = arith.mulf %613, %610 : vector<8x128xf32>
    %615 = arith.select %612, %610, %614 : vector<8x128xi1>, vector<8x128xf32>
    %616 = arith.truncf %615 : vector<8x128xf32> to vector<8x128xbf16>
    %c1152 = arith.constant 1152 : index
    %c0_220 = arith.constant 0 : index
    %617 = vector.load %arg2[%c1152, %c0_220] : memref<1280x256xbf16, #tpu.memory_space<vmem>>, vector<128x256xbf16>
    %cst_221 = arith.constant dense<0.000000e+00> : vector<8x256xf32>
    %618 = tpu.matmul %616, %617, %cst_221 {dimension_numbers = #tpu.dot_dimension_numbers<[1], [0], [0], [1], [0, 0, 1, 1], [], []>} : vector<8x128xbf16>, vector<128x256xbf16>, vector<8x256xf32> -> vector<8x256xf32>
    %c11_222 = arith.constant 11 : index
    %c0_223 = arith.constant 0 : index
    %619 = vector.load %arg3[%c11_222, %c0_223] : memref<16x256xf32, #tpu.memory_space<vmem>>, vector<1x256xf32>
    %620 = vector.broadcast %619 : vector<1x256xf32> to vector<8x256xf32>
    %621 = arith.addf %618, %620 : vector<8x256xf32>
    %cst_224 = arith.constant 0.000000e+00 : f32
    %622 = vector.broadcast %cst_224 : f32 to vector<8x256xf32>
    %623 = arith.maximumf %621, %622 : vector<8x256xf32>
    %cst_225 = arith.constant 0.000000e+00 : f32
    %624 = vector.broadcast %cst_225 : f32 to vector<8x256xf32>
    %625 = arith.subf %624, %623 : vector<8x256xf32>
    %626 = math.exp %625 : vector<8x256xf32>
    %cst_226 = arith.constant 1.000000e+00 : f32
    %627 = vector.broadcast %cst_226 : f32 to vector<8x256xf32>
    %628 = arith.addf %627, %626 : vector<8x256xf32>
    %cst_227 = arith.constant 1.000000e+00 : f32
    %629 = vector.broadcast %cst_227 : f32 to vector<8x256xf32>
    %630 = arith.divf %629, %628 : vector<8x256xf32>
    %c0_228 = arith.constant 0 : index
    %c0_229 = arith.constant 0 : index
    %631 = vector.load %arg4[%c0_228, %c0_229] : memref<8x256xf32, #tpu.memory_space<vmem>>, vector<8x256xf32>
    tpu.vector_store %arg4[%c0_228, %c0_229], %630 {strides = array<i32>} : memref<8x256xf32, #tpu.memory_space<vmem>>, vector<8x256xf32>,
    return
  }
}

</mosaic_0001>

<llo_original>
// kernel: tile.9
$region0: #{tile.9}
  %s0 = inlined_call_operand.vmem [shape: f32[104,25,3], index: 0, kind: input, shape index: {}]
  %s1 = inlined_call_operand.vmem [shape: f32[104,75], index: 1, kind: output, shape index: {}]
  $region1: #{tile.9} parent=0
    #allocation0 [shape = 'u8[102400]{0}', space=vmem, size = 0x19000, scoped, tag = 'scoped mem for input reshape']
    %s3 = sshllo.u32 0, 4
    %s4 = smul.addr 4, 24
    %s5 = scalar_lea.vmem %s0, %s4
    %v6 = vld [vmem:[%s5] sm:%s3]
    %s7 = scalar_lea.vmem [#allocation0], 192
    %8 = vst [vmem:[%s7] sm:%s3] %v6
    %s9 = smul.addr 4, 23
    %s10 = scalar_lea.vmem %s0, %s9
    %v11 = vld [vmem:[%s10] sm:%s3]
    %s12 = scalar_lea.vmem [#allocation0], 184
    %13 = vst [vmem:[%s12] sm:%s3] %v11
    %s14 = smul.addr 4, 22
    %s15 = scalar_lea.vmem %s0, %s14
    %v16 = vld [vmem:[%s15] sm:%s3]
    %s17 = scalar_lea.vmem [#allocation0], 176
    %18 = vst [vmem:[%s17] sm:%s3] %v16
    %s19 = smul.addr 4, 21
    %s20 = scalar_lea.vmem %s0, %s19
    %v21 = vld [vmem:[%s20] sm:%s3]
    %s22 = scalar_lea.vmem [#allocation0], 168
    %23 = vst [vmem:[%s22] sm:%s3] %v21
    %s24 = smul.addr 4, 20
    %s25 = scalar_lea.vmem %s0, %s24
    %v26 = vld [vmem:[%s25] sm:%s3]
    %s27 = scalar_lea.vmem [#allocation0], 160
    %28 = vst [vmem:[%s27] sm:%s3] %v26
    %s29 = smul.addr 4, 19
    %s30 = scalar_lea.vmem %s0, %s29
    %v31 = vld [vmem:[%s30] sm:%s3]
    %s32 = scalar_lea.vmem [#allocation0], 152
    %33 = vst [vmem:[%s32] sm:%s3] %v31
    %s34 = smul.addr 4, 18
    %s35 = scalar_lea.vmem %s0, %s34
    %v36 = vld [vmem:[%s35] sm:%s3]
    %s37 = scalar_lea.vmem [#allocation0], 144
    %38 = vst [vmem:[%s37] sm:%s3] %v36
    %s39 = smul.addr 4, 17
    %s40 = scalar_lea.vmem %s0, %s39
    %v41 = vld [vmem:[%s40] sm:%s3]
    %s42 = scalar_lea.vmem [#allocation0], 136
    %43 = vst [vmem:[%s42] sm:%s3] %v41
    %s44 = smul.addr 4, 16
    %s45 = scalar_lea.vmem %s0, %s44
    %v46 = vld [vmem:[%s45] sm:%s3]
    %s47 = scalar_lea.vmem [#allocation0], 128
    %48 = vst [vmem:[%s47] sm:%s3] %v46
    %s49 = smul.addr 4, 15
    %s50 = scalar_lea.vmem %s0, %s49
    %v51 = vld [vmem:[%s50] sm:%s3]
    %s52 = scalar_lea.vmem [#allocation0], 120
    %53 = vst [vmem:[%s52] sm:%s3] %v51
    %s54 = smul.addr 4, 14
    %s55 = scalar_lea.vmem %s0, %s54
    %v56 = vld [vmem:[%s55] sm:%s3]
    %s57 = scalar_lea.vmem [#allocation0], 112
    %58 = vst [vmem:[%s57] sm:%s3] %v56
    %s59 = smul.addr 4, 13
    %s60 = scalar_lea.vmem %s0, %s59
    %v61 = vld [vmem:[%s60] sm:%s3]
    %s62 = scalar_lea.vmem [#allocation0], 104
    %63 = vst [vmem:[%s62] sm:%s3] %v61
    %s64 = smul.addr 4, 12
    %s65 = scalar_lea.vmem %s0, %s64
    %v66 = vld [vmem:[%s65] sm:%s3]
    %s67 = scalar_lea.vmem [#allocation0], 96
    %68 = vst [vmem:[%s67] sm:%s3] %v66
    %s69 = smul.addr 4, 11
    %s70 = scalar_lea.vmem %s0, %s69
    %v71 = vld [vmem:[%s70] sm:%s3]
    %s72 = scalar_lea.vmem [#allocation0], 88
    %73 = vst [vmem:[%s72] sm:%s3] %v71
    %s74 = smul.addr 4, 10
    %s75 = scalar_lea.vmem %s0, %s74
    %v76 = vld [vmem:[%s75] sm:%s3]
    %s77 = scalar_lea.vmem [#allocation0], 80
    %78 = vst [vmem:[%s77] sm:%s3] %v76
    %s79 = smul.addr 4, 9
    %s80 = scalar_lea.vmem %s0, %s79
    %v81 = vld [vmem:[%s80] sm:%s3]
    %s82 = scalar_lea.vmem [#allocation0], 72
    %83 = vst [vmem:[%s82] sm:%s3] %v81
    %s84 = smul.addr 4, 8
    %s85 = scalar_lea.vmem %s0, %s84
    %v86 = vld [vmem:[%s85] sm:%s3]
    %s87 = scalar_lea.vmem [#allocation0], 64
    %88 = vst [vmem:[%s87] sm:%s3] %v86
    %s89 = smul.addr 4, 7
    %s90 = scalar_lea.vmem %s0, %s89
    %v91 = vld [vmem:[%s90] sm:%s3]
    %s92 = scalar_lea.vmem [#allocation0], 56
    %93 = vst [vmem:[%s92] sm:%s3] %v91
    %s94 = smul.addr 4, 6
    %s95 = scalar_lea.vmem %s0, %s94
    %v96 = vld [vmem:[%s95] sm:%s3]
    %s97 = scalar_lea.vmem [#allocation0], 48
    %98 = vst [vmem:[%s97] sm:%s3] %v96
    %s99 = smul.addr 4, 5
    %s100 = scalar_lea.vmem %s0, %s99
    %v101 = vld [vmem:[%s100] sm:%s3]
    %s102 = scalar_lea.vmem [#allocation0], 40
    %103 = vst [vmem:[%s102] sm:%s3] %v101
    %s104 = smul.addr 4, 4
    %s105 = scalar_lea.vmem %s0, %s104
    %v106 = vld [vmem:[%s105] sm:%s3]
    %s107 = scalar_lea.vmem [#allocation0], 32
    %108 = vst [vmem:[%s107] sm:%s3] %v106
    %s109 = smul.addr 4, 3
    %s110 = scalar_lea.vmem %s0, %s109
    %v111 = vld [vmem:[%s110] sm:%s3]
    %s112 = scalar_lea.vmem [#allocation0], 24
    %113 = vst [vmem:[%s112] sm:%s3] %v111
    %s114 = smul.addr 4, 2
    %s115 = scalar_lea.vmem %s0, %s114
    %v116 = vld [vmem:[%s115] sm:%s3]
    %s117 = scalar_lea.vmem [#allocation0], 16
    %118 = vst [vmem:[%s117] sm:%s3] %v116
    %s119 = scalar_lea.vmem %s0, 4
    %v120 = vld [vmem:[%s119] sm:%s3]
    %s121 = scalar_lea.vmem [#allocation0], 8
    %122 = vst [vmem:[%s121] sm:%s3] %v120
    %v123 = vld [vmem:[%s0] sm:%s3]
    %124 = vst [vmem:[#allocation0] sm:%s3] %v123
    %v125 = vld [vmem:[#allocation0] sm:$0x7]
    %vm126 = vcmask 850944
    %127 = vst.msk [vmem:[%s1] sm:$0x7] %vm126, %v125
    %s128 = scalar_lea.vmem [#allocation0], 8
    %v129 = vld [vmem:[%s128] sm:$0x7]
    %vm130 = vcmask 850944
    %s131 = scalar_lea.vmem %s1, 3
    %132 = vst.msk [vmem:[%s131] sm:$0x7] %vm130, %v129
    %s133 = scalar_lea.vmem [#allocation0], 16
    %v134 = vld [vmem:[%s133] sm:$0x7]
    %vm135 = vcmask 850944
    %s136 = scalar_lea.vmem %s1, 6
    %137 = vst.msk [vmem:[%s136] sm:$0x7] %vm135, %v134
    %s138 = scalar_lea.vmem [#allocation0], 24
    %v139 = vld [vmem:[%s138] sm:$0x7]
    %vm140 = vcmask 850944
    %s141 = scalar_lea.vmem %s1, 9
    %142 = vst.msk [vmem:[%s141] sm:$0x7] %vm140, %v139
    %s143 = scalar_lea.vmem [#allocation0], 32
    %v144 = vld [vmem:[%s143] sm:$0x7]
    %vm145 = vcmask 850944
    %s146 = scalar_lea.vmem %s1, 12
    %147 = vst.msk [vmem:[%s146] sm:$0x7] %vm145, %v144
    %s148 = scalar_lea.vmem [#allocation0], 40
    %v149 = vld [vmem:[%s148] sm:$0x7]
    %vm150 = vcmask 850944
    %s151 = scalar_lea.vmem %s1, 15
    %152 = vst.msk [vmem:[%s151] sm:$0x7] %vm150, %v149
    %s153 = scalar_lea.vmem [#allocation0], 48
    %v154 = vld [vmem:[%s153] sm:$0x7]
    %vm155 = vcmask 850944
    %s156 = scalar_lea.vmem %s1, 18
    %157 = vst.msk [vmem:[%s156] sm:$0x7] %vm155, %v154
    %s158 = scalar_lea.vmem [#allocation0], 56
    %v159 = vld [vmem:[%s158] sm:$0x7]
    %vm160 = vcmask 850944
    %s161 = scalar_lea.vmem %s1, 21
    %162 = vst.msk [vmem:[%s161] sm:$0x7] %vm160, %v159
    %s163 = scalar_lea.vmem [#allocation0], 64
    %v164 = vld [vmem:[%s163] sm:$0x7]
    %vm165 = vcmask 850944
    %s166 = scalar_lea.vmem %s1, 24
    %167 = vst.msk [vmem:[%s166] sm:$0x7] %vm165, %v164
    %s168 = scalar_lea.vmem [#allocation0], 72
    %v169 = vld [vmem:[%s168] sm:$0x7]
    %vm170 = vcmask 850944
    %s171 = scalar_lea.vmem %s1, 27
    %172 = vst.msk [vmem:[%s171] sm:$0x7] %vm170, %v169
    %s173 = scalar_lea.vmem [#allocation0], 80
    %v174 = vld [vmem:[%s173] sm:$0x7]
    %vm175 = vcmask 850944
    %s176 = scalar_lea.vmem %s1, 30
    %177 = vst.msk [vmem:[%s176] sm:$0x7] %vm175, %v174
    %s178 = scalar_lea.vmem [#allocation0], 88
    %v179 = vld [vmem:[%s178] sm:$0x7]
    %vm180 = vcmask 850944
    %s181 = scalar_lea.vmem %s1, 33
    %182 = vst.msk [vmem:[%s181] sm:$0x7] %vm180, %v179
    %s183 = scalar_lea.vmem [#allocation0], 96
    %v184 = vld [vmem:[%s183] sm:$0x7]
    %vm185 = vcmask 850944
    %s186 = scalar_lea.vmem %s1, 36
    %187 = vst.msk [vmem:[%s186] sm:$0x7] %vm185, %v184
    %s188 = scalar_lea.vmem [#allocation0], 104
    %v189 = vld [vmem:[%s188] sm:$0x7]
    %vm190 = vcmask 850944
    %s191 = scalar_lea.vmem %s1, 39
    %192 = vst.msk [vmem:[%s191] sm:$0x7] %vm190, %v189
    %s193 = scalar_lea.vmem [#allocation0], 112
    %v194 = vld [vmem:[%s193] sm:$0x7]
    %vm195 = vcmask 850944
    %s196 = scalar_lea.vmem %s1, 42
    %197 = vst.msk [vmem:[%s196] sm:$0x7] %vm195, %v194
    %s198 = scalar_lea.vmem [#allocation0], 120
    %v199 = vld [vmem:[%s198] sm:$0x7]
    %vm200 = vcmask 850944
    %s201 = scalar_lea.vmem %s1, 45
    %202 = vst.msk [vmem:[%s201] sm:$0x7] %vm200, %v199
    %s203 = scalar_lea.vmem [#allocation0], 128
    %v204 = vld [vmem:[%s203] sm:$0x7]
    %vm205 = vcmask 850944
    %s206 = scalar_lea.vmem %s1, 48
    %207 = vst.msk [vmem:[%s206] sm:$0x7] %vm205, %v204
    %s208 = scalar_lea.vmem [#allocation0], 136
    %v209 = vld [vmem:[%s208] sm:$0x7]
    %vm210 = vcmask 850944
    %s211 = scalar_lea.vmem %s1, 51
    %212 = vst.msk [vmem:[%s211] sm:$0x7] %vm210, %v209
    %s213 = scalar_lea.vmem [#allocation0], 144
    %v214 = vld [vmem:[%s213] sm:$0x7]
    %vm215 = vcmask 850944
    %s216 = scalar_lea.vmem %s1, 54
    %217 = vst.msk [vmem:[%s216] sm:$0x7] %vm215, %v214
    %s218 = scalar_lea.vmem [#allocation0], 152
    %v219 = vld [vmem:[%s218] sm:$0x7]
    %vm220 = vcmask 850944
    %s221 = scalar_lea.vmem %s1, 57
    %222 = vst.msk [vmem:[%s221] sm:$0x7] %vm220, %v219
    %s223 = scalar_lea.vmem [#allocation0], 160
    %v224 = vld [vmem:[%s223] sm:$0x7]
    %vm225 = vcmask 850944
    %s226 = scalar_lea.vmem %s1, 60
    %227 = vst.msk [vmem:[%s226] sm:$0x7] %vm225, %v224
    %s228 = scalar_lea.vmem [#allocation0], 168
    %v229 = vld [vmem:[%s228] sm:$0x7]
    %vm230 = vcmask 850944
    %s231 = scalar_lea.vmem %s1, 63
    %232 = vst.msk [vmem:[%s231] sm:$0x7] %vm230, %v229
    %s233 = scalar_lea.vmem [#allocation0], 176
    %v234 = vld [vmem:[%s233] sm:$0x7]
    %vm235 = vcmask 850944
    %s236 = scalar_lea.vmem %s1, 66
    %237 = vst.msk [vmem:[%s236] sm:$0x7] %vm235, %v234
    %s238 = scalar_lea.vmem [#allocation0], 184
    %v239 = vld [vmem:[%s238] sm:$0x7]
    %vm240 = vcmask 850944
    %s241 = scalar_lea.vmem %s1, 69
    %242 = vst.msk [vmem:[%s241] sm:$0x7] %vm240, %v239
    %s243 = scalar_lea.vmem [#allocation0], 192
    %v244 = vld [vmem:[%s243] sm:$0x7]
    %vm245 = vcmask 850944
    %s246 = scalar_lea.vmem %s1, 72
    %247 = vst.msk [vmem:[%s246] sm:$0x7] %vm245, %v244

// kernel: squeeze.3
$region0: #{squeeze.3}
  %s0 = inlined_call_operand.vmem [shape: f32[144], index: 0, kind: input, shape index: {}]
  %s1 = inlined_call_operand.vmem [shape: f32[9,4,4], index: 1, kind: output, shape index: {}]
  $region1: #{squeeze.3} parent=0
    #allocation0 [shape = 'u8[36864]{0}', space=vmem, size = 0x9000, scoped, tag = 'scoped mem for output reshape']
    #allocation1 [shape = 'u8[4096]{0}', space=vmem, size = 0x1000, scoped, tag = 'scoped mem for input reshape']
    %s3 = sshllo.u32 0, 2
    %v4 = vld [vmem:[%s0] sm:%s3]
    %5 = vst [vmem:[#allocation1] sm:%s3] %v4
    %v6 = vld [vmem:[#allocation1] sm:$0x3]
    %vm7 = vcmask 31744
    %8 = vst.msk [vmem:[#allocation0] sm:$0x1] %vm7, %v6
    %s9 = scalar_lea.vmem [#allocation0], 63
    %10 = vst.msk [vmem:[%s9] sm:$0x2] %vm7, %v6
    %v11 = vld [vmem:[#allocation1] sm:$0x3]
    %12 = vrot.lane.b32.xlu0 %v11, 124
    %v13 = vpop.permute.xlu0 %12
    %vm14 = vcmask 31744
    %s15 = scalar_lea.vmem [#allocation0], 1
    %16 = vst.msk [vmem:[%s15] sm:$0x1] %vm14, %v13
    %s17 = scalar_lea.vmem [#allocation0], 64
    %18 = vst.msk [vmem:[%s17] sm:$0x2] %vm14, %v13
    %v19 = vld [vmem:[#allocation1] sm:$0x3]
    %20 = vrot.lane.b32.xlu0 %v19, 120
    %v21 = vpop.permute.xlu0 %20
    %vm22 = vcmask 31744
    %s23 = scalar_lea.vmem [#allocation0], 2
    %24 = vst.msk [vmem:[%s23] sm:$0x1] %vm22, %v21
    %s25 = scalar_lea.vmem [#allocation0], 65
    %26 = vst.msk [vmem:[%s25] sm:$0x2] %vm22, %v21
    %v27 = vld [vmem:[#allocation1] sm:$0x3]
    %28 = vrot.lane.b32.xlu0 %v27, 116
    %v29 = vpop.permute.xlu0 %28
    %vm30 = vcmask 31744
    %s31 = scalar_lea.vmem [#allocation0], 3
    %32 = vst.msk [vmem:[%s31] sm:$0x1] %vm30, %v29
    %s33 = scalar_lea.vmem [#allocation0], 66
    %34 = vst.msk [vmem:[%s33] sm:$0x2] %vm30, %v29
    %v35 = vld [vmem:[#allocation1] sm:$0x1]
    %36 = vrot.lane.b32.xlu0 %v35, 112
    %v37 = vpop.permute.xlu0 %36
    %vm38 = vcmask 31744
    %s39 = scalar_lea.vmem [#allocation0], 8
    %40 = vst.msk [vmem:[%s39] sm:$0x1] %vm38, %v37
    %v41 = vld [vmem:[#allocation1] sm:$0x1]
    %42 = vrot.lane.b32.xlu0 %v41, 108
    %v43 = vpop.permute.xlu0 %42
    %vm44 = vcmask 31744
    %s45 = scalar_lea.vmem [#allocation0], 9
    %46 = vst.msk [vmem:[%s45] sm:$0x1] %vm44, %v43
    %v47 = vld [vmem:[#allocation1] sm:$0x1]
    %48 = vrot.lane.b32.xlu0 %v47, 104
    %v49 = vpop.permute.xlu0 %48
    %vm50 = vcmask 31744
    %s51 = scalar_lea.vmem [#allocation0], 10
    %52 = vst.msk [vmem:[%s51] sm:$0x1] %vm50, %v49
    %v53 = vld [vmem:[#allocation1] sm:$0x1]
    %54 = vrot.lane.b32.xlu0 %v53, 100
    %v55 = vpop.permute.xlu0 %54
    %vm56 = vcmask 31744
    %s57 = scalar_lea.vmem [#allocation0], 11
    %58 = vst.msk [vmem:[%s57] sm:$0x1] %vm56, %v55
    %v59 = vld [vmem:[#allocation1] sm:$0x1]
    %60 = vrot.lane.b32.xlu0 %v59, 96
    %v61 = vpop.permute.xlu0 %60
    %vm62 = vcmask 31744
    %s63 = scalar_lea.vmem [#allocation0], 16
    %64 = vst.msk [vmem:[%s63] sm:$0x1] %vm62, %v61
    %v65 = vld [vmem:[#allocation1] sm:$0x1]
    %66 = vrot.lane.b32.xlu0 %v65, 92
    %v67 = vpop.permute.xlu0 %66
    %vm68 = vcmask 31744
    %s69 = scalar_lea.vmem [#allocation0], 17
    %70 = vst.msk [vmem:[%s69] sm:$0x1] %vm68, %v67
    %v71 = vld [vmem:[#allocation1] sm:$0x1]
    %72 = vrot.lane.b32.xlu0 %v71, 88
    %v73 = vpop.permute.xlu0 %72
    %vm74 = vcmask 31744
    %s75 = scalar_lea.vmem [#allocation0], 18
    %76 = vst.msk [vmem:[%s75] sm:$0x1] %vm74, %v73
    %v77 = vld [vmem:[#allocation1] sm:$0x1]
    %78 = vrot.lane.b32.xlu0 %v77, 84
    %v79 = vpop.permute.xlu0 %78
    %vm80 = vcmask 31744
    %s81 = scalar_lea.vmem [#allocation0], 19
    %82 = vst.msk [vmem:[%s81] sm:$0x1] %vm80, %v79
    %v83 = vld [vmem:[#allocation1] sm:$0x1]
    %84 = vrot.lane.b32.xlu0 %v83, 80
    %v85 = vpop.permute.xlu0 %84
    %vm86 = vcmask 31744
    %s87 = scalar_lea.vmem [#allocation0], 24
    %88 = vst.msk [vmem:[%s87] sm:$0x1] %vm86, %v85
    %v89 = vld [vmem:[#allocation1] sm:$0x1]
    %90 = vrot.lane.b32.xlu0 %v89, 76
    %v91 = vpop.permute.xlu0 %90
    %vm92 = vcmask 31744
    %s93 = scalar_lea.vmem [#allocation0], 25
    %94 = vst.msk [vmem:[%s93] sm:$0x1] %vm92, %v91
    %v95 = vld [vmem:[#allocation1] sm:$0x1]
    %96 = vrot.lane.b32.xlu0 %v95, 72
    %v97 = vpop.permute.xlu0 %96
    %vm98 = vcmask 31744
    %s99 = scalar_lea.vmem [#allocation0], 26
    %100 = vst.msk [vmem:[%s99] sm:$0x1] %vm98, %v97
    %v101 = vld [vmem:[#allocation1] sm:$0x1]
    %102 = vrot.lane.b32.xlu0 %v101, 68
    %v103 = vpop.permute.xlu0 %102
    %vm104 = vcmask 31744
    %s105 = scalar_lea.vmem [#allocation0], 27
    %106 = vst.msk [vmem:[%s105] sm:$0x1] %vm104, %v103
    %v107 = vld [vmem:[#allocation1] sm:$0x1]
    %108 = vrot.lane.b32.xlu0 %v107, 64
    %v109 = vpop.permute.xlu0 %108
    %vm110 = vcmask 31744
    %s111 = scalar_lea.vmem [#allocation0], 32
    %112 = vst.msk [vmem:[%s111] sm:$0x1] %vm110, %v109
    %v113 = vld [vmem:[#allocation1] sm:$0x1]
    %114 = vrot.lane.b32.xlu0 %v113, 60
    %v115 = vpop.permute.xlu0 %114
    %vm116 = vcmask 31744
    %s117 = scalar_lea.vmem [#allocation0], 33
    %118 = vst.msk [vmem:[%s117] sm:$0x1] %vm116, %v115
    %v119 = vld [vmem:[#allocation1] sm:$0x1]
    %120 = vrot.lane.b32.xlu0 %v119, 56
    %v121 = vpop.permute.xlu0 %120
    %vm122 = vcmask 31744
    %s123 = scalar_lea.vmem [#allocation0], 34
    %124 = vst.msk [vmem:[%s123] sm:$0x1] %vm122, %v121
    %v125 = vld [vmem:[#allocation1] sm:$0x1]
    %126 = vrot.lane.b32.xlu0 %v125, 52
    %v127 = vpop.permute.xlu0 %126
    %vm128 = vcmask 31744
    %s129 = scalar_lea.vmem [#allocation0], 35
    %130 = vst.msk [vmem:[%s129] sm:$0x1] %vm128, %v127
    %v131 = vld [vmem:[#allocation1] sm:$0x1]
    %132 = vrot.lane.b32.xlu0 %v131, 48
    %v133 = vpop.permute.xlu0 %132
    %vm134 = vcmask 31744
    %s135 = scalar_lea.vmem [#allocation0], 40
    %136 = vst.msk [vmem:[%s135] sm:$0x1] %vm134, %v133
    %v137 = vld [vmem:[#allocation1] sm:$0x1]
    %138 = vrot.lane.b32.xlu0 %v137, 44
    %v139 = vpop.permute.xlu0 %138
    %vm140 = vcmask 31744
    %s141 = scalar_lea.vmem [#allocation0], 41
    %142 = vst.msk [vmem:[%s141] sm:$0x1] %vm140, %v139
    %v143 = vld [vmem:[#allocation1] sm:$0x1]
    %144 = vrot.lane.b32.xlu0 %v143, 40
    %v145 = vpop.permute.xlu0 %144
    %vm146 = vcmask 31744
    %s147 = scalar_lea.vmem [#allocation0], 42
    %148 = vst.msk [vmem:[%s147] sm:$0x1] %vm146, %v145
    %v149 = vld [vmem:[#allocation1] sm:$0x1]
    %150 = vrot.lane.b32.xlu0 %v149, 36
    %v151 = vpop.permute.xlu0 %150
    %vm152 = vcmask 31744
    %s153 = scalar_lea.vmem [#allocation0], 43
    %154 = vst.msk [vmem:[%s153] sm:$0x1] %vm152, %v151
    %v155 = vld [vmem:[#allocation1] sm:$0x1]
    %156 = vrot.lane.b32.xlu0 %v155, 32
    %v157 = vpop.permute.xlu0 %156
    %vm158 = vcmask 31744
    %s159 = scalar_lea.vmem [#allocation0], 48
    %160 = vst.msk [vmem:[%s159] sm:$0x1] %vm158, %v157
    %v161 = vld [vmem:[#allocation1] sm:$0x1]
    %162 = vrot.lane.b32.xlu0 %v161, 28
    %v163 = vpop.permute.xlu0 %162
    %vm164 = vcmask 31744
    %s165 = scalar_lea.vmem [#allocation0], 49
    %166 = vst.msk [vmem:[%s165] sm:$0x1] %vm164, %v163
    %v167 = vld [vmem:[#allocation1] sm:$0x1]
    %168 = vrot.lane.b32.xlu0 %v167, 24
    %v169 = vpop.permute.xlu0 %168
    %vm170 = vcmask 31744
    %s171 = scalar_lea.vmem [#allocation0], 50
    %172 = vst.msk [vmem:[%s171] sm:$0x1] %vm170, %v169
    %v173 = vld [vmem:[#allocation1] sm:$0x1]
    %174 = vrot.lane.b32.xlu0 %v173, 20
    %v175 = vpop.permute.xlu0 %174
    %vm176 = vcmask 31744
    %s177 = scalar_lea.vmem [#allocation0], 51
    %178 = vst.msk [vmem:[%s177] sm:$0x1] %vm176, %v175
    %v179 = vld [vmem:[#allocation1] sm:$0x1]
    %180 = vrot.lane.b32.xlu0 %v179, 16
    %v181 = vpop.permute.xlu0 %180
    %vm182 = vcmask 31744
    %s183 = scalar_lea.vmem [#allocation0], 56
    %184 = vst.msk [vmem:[%s183] sm:$0x1] %vm182, %v181
    %v185 = vld [vmem:[#allocation1] sm:$0x1]
    %186 = vrot.lane.b32.xlu0 %v185, 12
    %v187 = vpop.permute.xlu0 %186
    %vm188 = vcmask 31744
    %s189 = scalar_lea.vmem [#allocation0], 57
    %190 = vst.msk [vmem:[%s189] sm:$0x1] %vm188, %v187
    %v191 = vld [vmem:[#allocation1] sm:$0x1]
    %192 = vrot.lane.b32.xlu0 %v191, 8
    %v193 = vpop.permute.xlu0 %192
    %vm194 = vcmask 31744
    %s195 = scalar_lea.vmem [#allocation0], 58
    %196 = vst.msk [vmem:[%s195] sm:$0x1] %vm194, %v193
    %v197 = vld [vmem:[#allocation1] sm:$0x1]
    %198 = vrot.lane.b32.xlu0 %v197, 4
    %v199 = vpop.permute.xlu0 %198
    %vm200 = vcmask 31744
    %s201 = scalar_lea.vmem [#allocation0], 59
    %202 = vst.msk [vmem:[%s201] sm:$0x1] %vm200, %v199
    %s204 = sshllo.u32 0, 4
    %v206 = vld [vmem:[#allocation0] sm:%s204]
    %s207 = sshllo.u32 0, 4
    %208 = vst [vmem:[%s1] sm:%s207] %v206
    %s209 = scalar_lea.vmem [#allocation0], 8
    %v210 = vld [vmem:[%s209] sm:%s204]
    %s211 = sshllo.u32 0, 4
    %s212 = scalar_lea.vmem %s1, 4
    %213 = vst [vmem:[%s212] sm:%s211] %v210
    %s214 = scalar_lea.vmem [#allocation0], 16
    %v215 = vld [vmem:[%s214] sm:%s204]
    %s216 = sshllo.u32 0, 4
    %s217 = smul.addr 4, 2
    %s218 = scalar_lea.vmem %s1, %s217
    %219 = vst [vmem:[%s218] sm:%s216] %v215
    %s220 = scalar_lea.vmem [#allocation0], 24
    %v221 = vld [vmem:[%s220] sm:%s204]
    %s222 = sshllo.u32 0, 4
    %s223 = smul.addr 4, 3
    %s224 = scalar_lea.vmem %s1, %s223
    %225 = vst [vmem:[%s224] sm:%s222] %v221
    %s226 = scalar_lea.vmem [#allocation0], 32
    %v227 = vld [vmem:[%s226] sm:%s204]
    %s228 = sshllo.u32 0, 4
    %s229 = smul.addr 4, 4
    %s230 = scalar_lea.vmem %s1, %s229
    %231 = vst [vmem:[%s230] sm:%s228] %v227
    %s232 = scalar_lea.vmem [#allocation0], 40
    %v233 = vld [vmem:[%s232] sm:%s204]
    %s234 = sshllo.u32 0, 4
    %s235 = smul.addr 4, 5
    %s236 = scalar_lea.vmem %s1, %s235
    %237 = vst [vmem:[%s236] sm:%s234] %v233
    %s238 = scalar_lea.vmem [#allocation0], 48
    %v239 = vld [vmem:[%s238] sm:%s204]
    %s240 = sshllo.u32 0, 4
    %s241 = smul.addr 4, 6
    %s242 = scalar_lea.vmem %s1, %s241
    %243 = vst [vmem:[%s242] sm:%s240] %v239
    %s244 = scalar_lea.vmem [#allocation0], 56
    %v245 = vld [vmem:[%s244] sm:%s204]
    %s246 = sshllo.u32 0, 4
    %s247 = smul.addr 4, 7
    %s248 = scalar_lea.vmem %s1, %s247
    %249 = vst [vmem:[%s248] sm:%s246] %v245
    %s250 = scalar_lea.vmem [#allocation0], 64
    %v251 = vld [vmem:[%s250] sm:%s204]
    %s252 = sshllo.u32 0, 4
    %s253 = smul.addr 4, 8
    %s254 = scalar_lea.vmem %s1, %s253
    %255 = vst [vmem:[%s254] sm:%s252] %v251

// kernel: forward.1
$region0: #{forward.1}
  #allocation0 [shape = 'u32[]', space=smem, size = 0x4, offset = 0x4, fixed_abs, tag = 'smem constant byte address 0x4 - core index']
  #allocation1 [shape = 'u32[144,128]{1,0:T(1,128)}', space=vmem, size = 0x12000, scoped, tag = 'internal scratch']
  %s0 = inlined_call_operand.vmem [shape: f32[104,128], index: 0, kind: input, shape index: {}]
  %s1 = inlined_call_operand.hbm [shape: bf16[4112,128], index: 1, kind: input, shape index: {}]
  %s2 = inlined_call_operand.hbm [shape: bf16[1280,256], index: 2, kind: input, shape index: {}]
  %s3 = inlined_call_operand.hbm [shape: f32[16,256], index: 3, kind: input, shape index: {}]
  %s4 = inlined_call_operand.vmem [shape: f32[8,256], index: 4, kind: output, shape index: {}]
  %s5 = sld [smem:[#allocation0]]
  $region38: #{forward.1} parent=0
    _
  %s7 = ssub.s32 1, %s5
  %s8 = scalar_select 0, %s7, %s5
  $region1: #{forward.1} parent=0
    #allocation2 [shape = 'u8[1052672]{0}', space=vmem, size = 0x101000, scoped, tag = 'input window, operand 1, single buffered']
    #allocation3 [shape = 's32[1]{0}', space=sflag, size = 0x4, scoped, tag = 'scoped memory for forward.1']
    #allocation4 [shape = 'u8[655360]{0}', space=vmem, size = 0xa0000, scoped, tag = 'input window, operand 2, single buffered']
    #allocation5 [shape = 's32[1]{0}', space=sflag, size = 0x4, scoped, tag = 'scoped memory for forward.1']
    #allocation6 [shape = 'u8[16384]{0}', space=vmem, size = 0x4000, scoped, tag = 'input window, operand 3, single buffered']
    %9 = vsyncpa [#allocation3], 0
    %10 = vsyncpa [#allocation5], 0
    // Predicated region
    $region2: #{forward.1} parent=1 // pred_check
      _
    $region3: #{forward.1} parent=1 // pred_check_branch
      %12 = sbr.rel (0) target = $region5
    $region4: #{forward.1} parent=1 // pred_region
      _
    $region5: #{forward.1} parent=1 // pred_fallthru
      _
    // Predicated region
    $region6: #{forward.1} parent=1 // pred_check
      _
    $region7: #{forward.1} parent=1 // pred_check_branch
      %14 = sbr.rel (0) target = $region9
    $region8: #{forward.1} parent=1 // pred_region
      %s16 = ssub.s32 32896, 32896
      %17 = vsyncadd [#allocation3], %s16
      %s18 = sshll.u32 [#allocation2], 4
      %s19 = int_to_ptr.vmem [resolvable:$true] %s18
      %24 = dma.hbm_to_vmem [thread:$0]  %s1, 32896, %s19, [#allocation3], 64, 64, 4
    $region9: #{forward.1} parent=1 // pred_fallthru
      _
    // Predicated region
    $region10: #{forward.1} parent=1 // pred_check
      _
    $region11: #{forward.1} parent=1 // pred_check_branch
      %26 = sbr.rel (0) target = $region13
    $region12: #{forward.1} parent=1 // pred_region
      %s28 = ssub.s32 20480, 20480
      %29 = vsyncadd [#allocation5], %s28
      %s30 = sshll.u32 [#allocation4], 4
      %s31 = int_to_ptr.vmem [resolvable:$true] %s30
      %36 = dma.hbm_to_vmem [thread:$0]  %s2, 20480, %s31, [#allocation5], 128, 128, 8
    $region13: #{forward.1} parent=1 // pred_fallthru
      _
    // Predicated region
    $region14: #{forward.1} parent=1 // pred_check
      _
    $region15: #{forward.1} parent=1 // pred_check_branch
      %38 = sbr.rel (0) target = $region17
    $region16: #{forward.1} parent=1 // pred_region
      %s40 = ssub.s32 512, 512
      %41 = vsyncadd [#allocation5], %s40
      %s42 = sshll.u32 [#allocation6], 4
      %s43 = int_to_ptr.vmem [resolvable:$true] %s42
      %48 = dma.hbm_to_vmem [thread:$0]  %s3, 512, %s43, [#allocation5], 256, 256, 16
    $region17: #{forward.1} parent=1 // pred_fallthru
      _
    // Predicated region
    $region18: #{forward.1} parent=1 // pred_check
      _
    $region19: #{forward.1} parent=1 // pred_check_branch
      %50 = sbr.rel (0) target = $region21
    $region20: #{forward.1} parent=1 // pred_region
      %51 = dma.done [#allocation3], 32896
    $region21: #{forward.1} parent=1 // pred_fallthru
      _
    // Predicated region
    $region22: #{forward.1} parent=1 // pred_check
      _
    $region23: #{forward.1} parent=1 // pred_check_branch
      %53 = sbr.rel (0) target = $region25
    $region24: #{forward.1} parent=1 // pred_region
      %54 = dma.done [#allocation5], 20480
    $region25: #{forward.1} parent=1 // pred_fallthru
      _
    // Predicated region
    $region26: #{forward.1} parent=1 // pred_check
      _
    $region27: #{forward.1} parent=1 // pred_check_branch
      %56 = sbr.rel (0) target = $region29
    $region28: #{forward.1} parent=1 // pred_region
      %57 = dma.done [#allocation5], 512
    $region29: #{forward.1} parent=1 // pred_fallthru
      _
    %v59 = vlaneseq
    %v60 = vand.u32 %v59, 127
    %v61 = vlaneseq
    %v62 = vshrl.u32 %v61, 7
    %v63 = vadd.s32 %v62, 8
    %v64 = vadd.s32 %v62, 16
    %v65 = vadd.s32 %v62, 24
    %v66 = vadd.s32 %v62, 32
    %v67 = vadd.s32 %v62, 40
    %v68 = vadd.s32 %v62, 48
    %v69 = vadd.s32 %v62, 56
    %v70 = vand.u32 %v62, 7
    %v71 = vand.u32 %v63, 7
    %v72 = vand.u32 %v64, 7
    %v73 = vand.u32 %v65, 7
    %v74 = vand.u32 %v66, 7
    %v75 = vand.u32 %v67, 7
    %v76 = vand.u32 %v68, 7
    %v77 = vand.u32 %v69, 7
    %v78 = vld [vmem:[%s0] sm:$0xff]
    %v79 = vld [vmem:[%s0 + $0x8] sm:$0xff]
    %v80 = vld [vmem:[%s0 + $0x10] sm:$0xff]
    %v81 = vld [vmem:[%s0 + $0x18] sm:$0xff]
    %v82 = vld [vmem:[%s0 + $0x20] sm:$0xff]
    %v83 = vld [vmem:[%s0 + $0x28] sm:$0xff]
    %v84 = vld [vmem:[%s0 + $0x30] sm:$0xff]
    %v85 = vld [vmem:[%s0 + $0x38] sm:$0xff]
    %v86 = vadd.s32 %v70, 4294967294
    %v87 = vadd.s32 %v71, 4294967294
    %v88 = vadd.s32 %v72, 4294967294
    %v89 = vadd.s32 %v73, 4294967294
    %v90 = vadd.s32 %v74, 4294967294
    %v91 = vadd.s32 %v75, 4294967294
    %v92 = vadd.s32 %v76, 4294967294
    %v93 = vadd.s32 %v77, 4294967294
    %vm94 = vcmp.ge.s32.totalorder %v86, 0
    %vm95 = vcmp.ge.s32.totalorder %v87, 0
    %vm96 = vcmp.ge.s32.totalorder %v88, 0
    %vm97 = vcmp.ge.s32.totalorder %v89, 0
    %vm98 = vcmp.ge.s32.totalorder %v90, 0
    %vm99 = vcmp.ge.s32.totalorder %v91, 0
    %vm100 = vcmp.ge.s32.totalorder %v92, 0
    %vm101 = vcmp.ge.s32.totalorder %v93, 0
    %vm102 = vcmp.le.s32.totalorder %v86, 7
    %vm103 = vcmp.le.s32.totalorder %v87, 7
    %vm104 = vcmp.le.s32.totalorder %v88, 7
    %vm105 = vcmp.le.s32.totalorder %v89, 7
    %vm106 = vcmp.le.s32.totalorder %v90, 7
    %vm107 = vcmp.le.s32.totalorder %v91, 7
    %vm108 = vcmp.le.s32.totalorder %v92, 7
    %vm109 = vcmp.le.s32.totalorder %v93, 7
    %vm110 = vmand %vm94, %vm102
    %vm111 = vmand %vm95, %vm103
    %vm112 = vmand %vm96, %vm104
    %vm113 = vmand %vm97, %vm105
    %vm114 = vmand %vm98, %vm106
    %vm115 = vmand %vm99, %vm107
    %vm116 = vmand %vm100, %vm108
    %vm117 = vmand %vm101, %vm109
    %vm118 = vcmp.ge.s32.totalorder %v60, 0
    %vm119 = vmand %vm110, %vm118
    %vm120 = vmand %vm111, %vm118
    %vm121 = vmand %vm112, %vm118
    %vm122 = vmand %vm113, %vm118
    %vm123 = vmand %vm114, %vm118
    %vm124 = vmand %vm115, %vm118
    %vm125 = vmand %vm116, %vm118
    %vm126 = vmand %vm117, %vm118
    %vm127 = vcmp.lt.s32.totalorder %v60, 3
    %vm128 = vmand %vm119, %vm127
    %vm129 = vmand %vm120, %vm127
    %vm130 = vmand %vm121, %vm127
    %vm131 = vmand %vm122, %vm127
    %vm132 = vmand %vm123, %vm127
    %vm133 = vmand %vm124, %vm127
    %vm134 = vmand %vm125, %vm127
    %vm135 = vmand %vm126, %vm127
    %v136 = vsel %vm128, %v78, 0.0
    %v137 = vsel %vm129, %v79, 0.0
    %v138 = vsel %vm130, %v80, 0.0
    %v139 = vsel %vm131, %v81, 0.0
    %v140 = vsel %vm132, %v82, 0.0
    %v141 = vsel %vm133, %v83, 0.0
    %v142 = vsel %vm134, %v84, 0.0
    %v143 = vsel %vm135, %v85, 0.0
    %v144 = vld [vmem:[%s0 + $0x1] sm:$0xff]
    %v145 = vld [vmem:[%s0 + $0x9] sm:$0xff]
    %v146 = vld [vmem:[%s0 + $0x11] sm:$0xff]
    %v147 = vld [vmem:[%s0 + $0x19] sm:$0xff]
    %v148 = vld [vmem:[%s0 + $0x21] sm:$0xff]
    %v149 = vld [vmem:[%s0 + $0x29] sm:$0xff]
    %v150 = vld [vmem:[%s0 + $0x31] sm:$0xff]
    %v151 = vld [vmem:[%s0 + $0x39] sm:$0xff]
    %v152 = vadd.s32 %v70, 4294967295
    %v153 = vadd.s32 %v71, 4294967295
    %v154 = vadd.s32 %v72, 4294967295
    %v155 = vadd.s32 %v73, 4294967295
    %v156 = vadd.s32 %v74, 4294967295
    %v157 = vadd.s32 %v75, 4294967295
    %v158 = vadd.s32 %v76, 4294967295
    %v159 = vadd.s32 %v77, 4294967295
    %vm160 = vcmp.ge.s32.totalorder %v152, 0
    %vm161 = vcmp.ge.s32.totalorder %v153, 0
    %vm162 = vcmp.ge.s32.totalorder %v154, 0
    %vm163 = vcmp.ge.s32.totalorder %v155, 0
    %vm164 = vcmp.ge.s32.totalorder %v156, 0
    %vm165 = vcmp.ge.s32.totalorder %v157, 0
    %vm166 = vcmp.ge.s32.totalorder %v158, 0
    %vm167 = vcmp.ge.s32.totalorder %v159, 0
    %vm168 = vcmp.le.s32.totalorder %v152, 7
    %vm169 = vcmp.le.s32.totalorder %v153, 7
    %vm170 = vcmp.le.s32.totalorder %v154, 7
    %vm171 = vcmp.le.s32.totalorder %v155, 7
    %vm172 = vcmp.le.s32.totalorder %v156, 7
    %vm173 = vcmp.le.s32.totalorder %v157, 7
    %vm174 = vcmp.le.s32.totalorder %v158, 7
    %vm175 = vcmp.le.s32.totalorder %v159, 7
    %vm176 = vmand %vm160, %vm168
    %vm177 = vmand %vm161, %vm169
    %vm178 = vmand %vm162, %vm170
    %vm179 = vmand %vm163, %vm171
    %vm180 = vmand %vm164, %vm172
    %vm181 = vmand %vm165, %vm173
    %vm182 = vmand %vm166, %vm174
    %vm183 = vmand %vm167, %vm175
    %vm184 = vcmp.ge.s32.totalorder %v60, 3
    %vm185 = vmand %vm176, %vm184
    %vm186 = vmand %vm177, %vm184
    %vm187 = vmand %vm178, %vm184
    %vm188 = vmand %vm179, %vm184
    %vm189 = vmand %vm180, %vm184
    %vm190 = vmand %vm181, %vm184
    %vm191 = vmand %vm182, %vm184
    %vm192 = vmand %vm183, %vm184
    %vm193 = vcmp.lt.s32.totalorder %v60, 6
    %vm194 = vmand %vm185, %vm193
    %vm195 = vmand %vm186, %vm193
    %vm196 = vmand %vm187, %vm193
    %vm197 = vmand %vm188, %vm193
    %vm198 = vmand %vm189, %vm193
    %vm199 = vmand %vm190, %vm193
    %vm200 = vmand %vm191, %vm193
    %vm201 = vmand %vm192, %vm193
    %v202 = vsel %vm194, %v144, %v136
    %v203 = vsel %vm195, %v145, %v137
    %v204 = vsel %vm196, %v146, %v138
    %v205 = vsel %vm197, %v147, %v139
    %v206 = vsel %vm198, %v148, %v140
    %v207 = vsel %vm199, %v149, %v141
    %v208 = vsel %vm200, %v150, %v142
    %v209 = vsel %vm201, %v151, %v143
    %v210 = vld [vmem:[%s0 + $0x2] sm:$0xff]
    %v211 = vld [vmem:[%s0 + $0xa] sm:$0xff]
    %v212 = vld [vmem:[%s0 + $0x12] sm:$0xff]
    %v213 = vld [vmem:[%s0 + $0x1a] sm:$0xff]
    %v214 = vld [vmem:[%s0 + $0x22] sm:$0xff]
    %v215 = vld [vmem:[%s0 + $0x2a] sm:$0xff]
    %v216 = vld [vmem:[%s0 + $0x32] sm:$0xff]
    %v217 = vld [vmem:[%s0 + $0x3a] sm:$0xff]
    %vm218 = vcmp.ge.s32.totalorder %v70, 0
    %vm219 = vcmp.ge.s32.totalorder %v71, 0
    %vm220 = vcmp.ge.s32.totalorder %v72, 0
    %vm221 = vcmp.ge.s32.totalorder %v73, 0
    %vm222 = vcmp.ge.s32.totalorder %v74, 0
    %vm223 = vcmp.ge.s32.totalorder %v75, 0
    %vm224 = vcmp.ge.s32.totalorder %v76, 0
    %vm225 = vcmp.ge.s32.totalorder %v77, 0
    %vm226 = vcmp.le.s32.totalorder %v70, 7
    %vm227 = vcmp.le.s32.totalorder %v71, 7
    %vm228 = vcmp.le.s32.totalorder %v72, 7
    %vm229 = vcmp.le.s32.totalorder %v73, 7
    %vm230 = vcmp.le.s32.totalorder %v74, 7
    %vm231 = vcmp.le.s32.totalorder %v75, 7
    %vm232 = vcmp.le.s32.totalorder %v76, 7
    %vm233 = vcmp.le.s32.totalorder %v77, 7
    %vm234 = vmand %vm218, %vm226
    %vm235 = vmand %vm219, %vm227
    %vm236 = vmand %vm220, %vm228
    %vm237 = vmand %vm221, %vm229
    %vm238 = vmand %vm222, %vm230
    %vm239 = vmand %vm223, %vm231
    %vm240 = vmand %vm224, %vm232
    %vm241 = vmand %vm225, %vm233
    %vm242 = vcmp.ge.s32.totalorder %v60, 6
    %vm243 = vmand %vm234, %vm242
    %vm244 = vmand %vm235, %vm242
    %vm245 = vmand %vm236, %vm242
    %vm246 = vmand %vm237, %vm242
    %vm247 = vmand %vm238, %vm242
    %vm248 = vmand %vm239, %vm242
    %vm249 = vmand %vm240, %vm242
    %vm250 = vmand %vm241, %vm242
    %vm251 = vcmp.lt.s32.totalorder %v60, 9
    %vm252 = vmand %vm243, %vm251
    %vm253 = vmand %vm244, %vm251
    %vm254 = vmand %vm245, %vm251
    %vm255 = vmand %vm246, %vm251
    %vm256 = vmand %vm247, %vm251
    %vm257 = vmand %vm248, %vm251
    %vm258 = vmand %vm249, %vm251
    %vm259 = vmand %vm250, %vm251
    %v260 = vsel %vm252, %v210, %v202
    %v261 = vsel %vm253, %v211, %v203
    %v262 = vsel %vm254, %v212, %v204
    %v263 = vsel %vm255, %v213, %v205
    %v264 = vsel %vm256, %v214, %v206
    %v265 = vsel %vm257, %v215, %v207
    %v266 = vsel %vm258, %v216, %v208
    %v267 = vsel %vm259, %v217, %v209
    %v268 = vld [vmem:[%s0 + $0x3] sm:$0xff]
    %v269 = vld [vmem:[%s0 + $0xb] sm:$0xff]
    %v270 = vld [vmem:[%s0 + $0x13] sm:$0xff]
    %v271 = vld [vmem:[%s0 + $0x1b] sm:$0xff]
    %v272 = vld [vmem:[%s0 + $0x23] sm:$0xff]
    %v273 = vld [vmem:[%s0 + $0x2b] sm:$0xff]
    %v274 = vld [vmem:[%s0 + $0x33] sm:$0xff]
    %v275 = vld [vmem:[%s0 + $0x3b] sm:$0xff]
    %v276 = vadd.s32 %v70, 1
    %v277 = vadd.s32 %v71, 1
    %v278 = vadd.s32 %v72, 1
    %v279 = vadd.s32 %v73, 1
    %v280 = vadd.s32 %v74, 1
    %v281 = vadd.s32 %v75, 1
    %v282 = vadd.s32 %v76, 1
    %v283 = vadd.s32 %v77, 1
    %vm284 = vcmp.ge.s32.totalorder %v276, 0
    %vm285 = vcmp.ge.s32.totalorder %v277, 0
    %vm286 = vcmp.ge.s32.totalorder %v278, 0
    %vm287 = vcmp.ge.s32.totalorder %v279, 0
    %vm288 = vcmp.ge.s32.totalorder %v280, 0
    %vm289 = vcmp.ge.s32.totalorder %v281, 0
    %vm290 = vcmp.ge.s32.totalorder %v282, 0
    %vm291 = vcmp.ge.s32.totalorder %v283, 0
    %vm292 = vcmp.le.s32.totalorder %v276, 7
    %vm293 = vcmp.le.s32.totalorder %v277, 7
    %vm294 = vcmp.le.s32.totalorder %v278, 7
    %vm295 = vcmp.le.s32.totalorder %v279, 7
    %vm296 = vcmp.le.s32.totalorder %v280, 7
    %vm297 = vcmp.le.s32.totalorder %v281, 7
    %vm298 = vcmp.le.s32.totalorder %v282, 7
    %vm299 = vcmp.le.s32.totalorder %v283, 7
    %vm300 = vmand %vm284, %vm292
    %vm301 = vmand %vm285, %vm293
    %vm302 = vmand %vm286, %vm294
    %vm303 = vmand %vm287, %vm295
    %vm304 = vmand %vm288, %vm296
    %vm305 = vmand %vm289, %vm297
    %vm306 = vmand %vm290, %vm298
    %vm307 = vmand %vm291, %vm299
    %vm308 = vcmp.ge.s32.totalorder %v60, 9
    %vm309 = vmand %vm300, %vm308
    %vm310 = vmand %vm301, %vm308
    %vm311 = vmand %vm302, %vm308
    %vm312 = vmand %vm303, %vm308
    %vm313 = vmand %vm304, %vm308
    %vm314 = vmand %vm305, %vm308
    %vm315 = vmand %vm306, %vm308
    %vm316 = vmand %vm307, %vm308
    %vm317 = vcmp.lt.s32.totalorder %v60, 12
    %vm318 = vmand %vm309, %vm317
    %vm319 = vmand %vm310, %vm317
    %vm320 = vmand %vm311, %vm317
    %vm321 = vmand %vm312, %vm317
    %vm322 = vmand %vm313, %vm317
    %vm323 = vmand %vm314, %vm317
    %vm324 = vmand %vm315, %vm317
    %vm325 = vmand %vm316, %vm317
    %v326 = vsel %vm318, %v268, %v260
    %v327 = vsel %vm319, %v269, %v261
    %v328 = vsel %vm320, %v270, %v262
    %v329 = vsel %vm321, %v271, %v263
    %v330 = vsel %vm322, %v272, %v264
    %v331 = vsel %vm323, %v273, %v265
    %v332 = vsel %vm324, %v274, %v266
    %v333 = vsel %vm325, %v275, %v267
    %v334 = vld [vmem:[%s0 + $0x4] sm:$0xff]
    %v335 = vld [vmem:[%s0 + $0xc] sm:$0xff]
    %v336 = vld [vmem:[%s0 + $0x14] sm:$0xff]
    %v337 = vld [vmem:[%s0 + $0x1c] sm:$0xff]
    %v338 = vld [vmem:[%s0 + $0x24] sm:$0xff]
    %v339 = vld [vmem:[%s0 + $0x2c] sm:$0xff]
    %v340 = vld [vmem:[%s0 + $0x34] sm:$0xff]
    %v341 = vld [vmem:[%s0 + $0x3c] sm:$0xff]
    %v342 = vadd.s32 %v70, 2
    %v343 = vadd.s32 %v71, 2
    %v344 = vadd.s32 %v72, 2
    %v345 = vadd.s32 %v73, 2
    %v346 = vadd.s32 %v74, 2
    %v347 = vadd.s32 %v75, 2
    %v348 = vadd.s32 %v76, 2
    %v349 = vadd.s32 %v77, 2
    %vm350 = vcmp.ge.s32.totalorder %v342, 0
    %vm351 = vcmp.ge.s32.totalorder %v343, 0
    %vm352 = vcmp.ge.s32.totalorder %v344, 0
    %vm353 = vcmp.ge.s32.totalorder %v345, 0
    %vm354 = vcmp.ge.s32.totalorder %v346, 0
    %vm355 = vcmp.ge.s32.totalorder %v347, 0
    %vm356 = vcmp.ge.s32.totalorder %v348, 0
    %vm357 = vcmp.ge.s32.totalorder %v349, 0
    %vm358 = vcmp.le.s32.totalorder %v342, 7
    %vm359 = vcmp.le.s32.totalorder %v343, 7
    %vm360 = vcmp.le.s32.totalorder %v344, 7
    %vm361 = vcmp.le.s32.totalorder %v345, 7
    %vm362 = vcmp.le.s32.totalorder %v346, 7
    %vm363 = vcmp.le.s32.totalorder %v347, 7
    %vm364 = vcmp.le.s32.totalorder %v348, 7
    %vm365 = vcmp.le.s32.totalorder %v349, 7
    %vm366 = vmand %vm350, %vm358
    %vm367 = vmand %vm351, %vm359
    %vm368 = vmand %vm352, %vm360
    %vm369 = vmand %vm353, %vm361
    %vm370 = vmand %vm354, %vm362
    %vm371 = vmand %vm355, %vm363
    %vm372 = vmand %vm356, %vm364
    %vm373 = vmand %vm357, %vm365
    %vm374 = vcmp.ge.s32.totalorder %v60, 12
    %vm375 = vmand %vm366, %vm374
    %vm376 = vmand %vm367, %vm374
    %vm377 = vmand %vm368, %vm374
    %vm378 = vmand %vm369, %vm374
    %vm379 = vmand %vm370, %vm374
    %vm380 = vmand %vm371, %vm374
    %vm381 = vmand %vm372, %vm374
    %vm382 = vmand %vm373, %vm374
    %vm383 = vcmp.lt.s32.totalorder %v60, 15
    %vm384 = vmand %vm375, %vm383
    %vm385 = vmand %vm376, %vm383
    %vm386 = vmand %vm377, %vm383
    %vm387 = vmand %vm378, %vm383
    %vm388 = vmand %vm379, %vm383
    %vm389 = vmand %vm380, %vm383
    %vm390 = vmand %vm381, %vm383
    %vm391 = vmand %vm382, %vm383
    %v392 = vsel %vm384, %v334, %v326
    %v393 = vsel %vm385, %v335, %v327
    %v394 = vsel %vm386, %v336, %v328
    %v395 = vsel %vm387, %v337, %v329
    %v396 = vsel %vm388, %v338, %v330
    %v397 = vsel %vm389, %v339, %v331
    %v398 = vsel %vm390, %v340, %v332
    %v399 = vsel %vm391, %v341, %v333
    %v400 = vld [vmem:[%s0 + $0x40] sm:$0xff]
    %vm401 = vcmp.ge.s32.totalorder %v60, 15
    %vm402 = vmand %vm110, %vm401
    %vm403 = vmand %vm111, %vm401
    %vm404 = vmand %vm112, %vm401
    %vm405 = vmand %vm113, %vm401
    %vm406 = vmand %vm114, %vm401
    %vm407 = vmand %vm115, %vm401
    %vm408 = vmand %vm116, %vm401
    %vm409 = vmand %vm117, %vm401
    %vm410 = vcmp.lt.s32.totalorder %v60, 18
    %vm411 = vmand %vm402, %vm410
    %vm412 = vmand %vm403, %vm410
    %vm413 = vmand %vm404, %vm410
    %vm414 = vmand %vm405, %vm410
    %vm415 = vmand %vm406, %vm410
    %vm416 = vmand %vm407, %vm410
    %vm417 = vmand %vm408, %vm410
    %vm418 = vmand %vm409, %vm410
    %v419 = vsel %vm411, %v79, %v392
    %v420 = vsel %vm412, %v80, %v393
    %v421 = vsel %vm413, %v81, %v394
    %v422 = vsel %vm414, %v82, %v395
    %v423 = vsel %vm415, %v83, %v396
    %v424 = vsel %vm416, %v84, %v397
    %v425 = vsel %vm417, %v85, %v398
    %v426 = vsel %vm418, %v400, %v399
    %v427 = vld [vmem:[%s0 + $0x41] sm:$0xff]
    %vm428 = vcmp.ge.s32.totalorder %v60, 18
    %vm429 = vmand %vm176, %vm428
    %vm430 = vmand %vm177, %vm428
    %vm431 = vmand %vm178, %vm428
    %vm432 = vmand %vm179, %vm428
    %vm433 = vmand %vm180, %vm428
    %vm434 = vmand %vm181, %vm428
    %vm435 = vmand %vm182, %vm428
    %vm436 = vmand %vm183, %vm428
    %vm437 = vcmp.lt.s32.totalorder %v60, 21
    %vm438 = vmand %vm429, %vm437
    %vm439 = vmand %vm430, %vm437
    %vm440 = vmand %vm431, %vm437
    %vm441 = vmand %vm432, %vm437
    %vm442 = vmand %vm433, %vm437
    %vm443 = vmand %vm434, %vm437
    %vm444 = vmand %vm435, %vm437
    %vm445 = vmand %vm436, %vm437
    %v446 = vsel %vm438, %v145, %v419
    %v447 = vsel %vm439, %v146, %v420
    %v448 = vsel %vm440, %v147, %v421
    %v449 = vsel %vm441, %v148, %v422
    %v450 = vsel %vm442, %v149, %v423
    %v451 = vsel %vm443, %v150, %v424
    %v452 = vsel %vm444, %v151, %v425
    %v453 = vsel %vm445, %v427, %v426
    %v454 = vld [vmem:[%s0 + $0x42] sm:$0xff]
    %vm455 = vcmp.ge.s32.totalorder %v60, 21
    %vm456 = vmand %vm234, %vm455
    %vm457 = vmand %vm235, %vm455
    %vm458 = vmand %vm236, %vm455
    %vm459 = vmand %vm237, %vm455
    %vm460 = vmand %vm238, %vm455
    %vm461 = vmand %vm239, %vm455
    %vm462 = vmand %vm240, %vm455
    %vm463 = vmand %vm241, %vm455
    %vm464 = vcmp.lt.s32.totalorder %v60, 24
    %vm465 = vmand %vm456, %vm464
    %vm466 = vmand %vm457, %vm464
    %vm467 = vmand %vm458, %vm464
    %vm468 = vmand %vm459, %vm464
    %vm469 = vmand %vm460, %vm464
    %vm470 = vmand %vm461, %vm464
    %vm471 = vmand %vm462, %vm464
    %vm472 = vmand %vm463, %vm464
    %v473 = vsel %vm465, %v211, %v446
    %v474 = vsel %vm466, %v212, %v447
    %v475 = vsel %vm467, %v213, %v448
    %v476 = vsel %vm468, %v214, %v449
    %v477 = vsel %vm469, %v215, %v450
    %v478 = vsel %vm470, %v216, %v451
    %v479 = vsel %vm471, %v217, %v452
    %v480 = vsel %vm472, %v454, %v453
    %v481 = vld [vmem:[%s0 + $0x43] sm:$0xff]
    %vm482 = vcmp.ge.s32.totalorder %v60, 24
    %vm483 = vmand %vm300, %vm482
    %vm484 = vmand %vm301, %vm482
    %vm485 = vmand %vm302, %vm482
    %vm486 = vmand %vm303, %vm482
    %vm487 = vmand %vm304, %vm482
    %vm488 = vmand %vm305, %vm482
    %vm489 = vmand %vm306, %vm482
    %vm490 = vmand %vm307, %vm482
    %vm491 = vcmp.lt.s32.totalorder %v60, 27
    %vm492 = vmand %vm483, %vm491
    %vm493 = vmand %vm484, %vm491
    %vm494 = vmand %vm485, %vm491
    %vm495 = vmand %vm486, %vm491
    %vm496 = vmand %vm487, %vm491
    %vm497 = vmand %vm488, %vm491
    %vm498 = vmand %vm489, %vm491
    %vm499 = vmand %vm490, %vm491
    %v500 = vsel %vm492, %v269, %v473
    %v501 = vsel %vm493, %v270, %v474
    %v502 = vsel %vm494, %v271, %v475
    %v503 = vsel %vm495, %v272, %v476
    %v504 = vsel %vm496, %v273, %v477
    %v505 = vsel %vm497, %v274, %v478
    %v506 = vsel %vm498, %v275, %v479
    %v507 = vsel %vm499, %v481, %v480
    %v508 = vld [vmem:[%s0 + $0x44] sm:$0xff]
    %vm509 = vcmp.ge.s32.totalorder %v60, 27
    %vm510 = vmand %vm366, %vm509
    %vm511 = vmand %vm367, %vm509
    %vm512 = vmand %vm368, %vm509
    %vm513 = vmand %vm369, %vm509
    %vm514 = vmand %vm370, %vm509
    %vm515 = vmand %vm371, %vm509
    %vm516 = vmand %vm372, %vm509
    %vm517 = vmand %vm373, %vm509
    %vm518 = vcmp.lt.s32.totalorder %v60, 30
    %vm519 = vmand %vm510, %vm518
    %vm520 = vmand %vm511, %vm518
    %vm521 = vmand %vm512, %vm518
    %vm522 = vmand %vm513, %vm518
    %vm523 = vmand %vm514, %vm518
    %vm524 = vmand %vm515, %vm518
    %vm525 = vmand %vm516, %vm518
    %vm526 = vmand %vm517, %vm518
    %v527 = vsel %vm519, %v335, %v500
    %v528 = vsel %vm520, %v336, %v501
    %v529 = vsel %vm521, %v337, %v502
    %v530 = vsel %vm522, %v338, %v503
    %v531 = vsel %vm523, %v339, %v504
    %v532 = vsel %vm524, %v340, %v505
    %v533 = vsel %vm525, %v341, %v506
    %v534 = vsel %vm526, %v508, %v507
    %v535 = vld [vmem:[%s0 + $0x48] sm:$0xff]
    %vm536 = vcmp.ge.s32.totalorder %v60, 30
    %vm537 = vmand %vm110, %vm536
    %vm538 = vmand %vm111, %vm536
    %vm539 = vmand %vm112, %vm536
    %vm540 = vmand %vm113, %vm536
    %vm541 = vmand %vm114, %vm536
    %vm542 = vmand %vm115, %vm536
    %vm543 = vmand %vm116, %vm536
    %vm544 = vmand %vm117, %vm536
    %vm545 = vcmp.lt.s32.totalorder %v60, 33
    %vm546 = vmand %vm537, %vm545
    %vm547 = vmand %vm538, %vm545
    %vm548 = vmand %vm539, %vm545
    %vm549 = vmand %vm540, %vm545
    %vm550 = vmand %vm541, %vm545
    %vm551 = vmand %vm542, %vm545
    %vm552 = vmand %vm543, %vm545
    %vm553 = vmand %vm544, %vm545
    %v554 = vsel %vm546, %v80, %v527
    %v555 = vsel %vm547, %v81, %v528
    %v556 = vsel %vm548, %v82, %v529
    %v557 = vsel %vm549, %v83, %v530
    %v558 = vsel %vm550, %v84, %v531
    %v559 = vsel %vm551, %v85, %v532
    %v560 = vsel %vm552, %v400, %v533
    %v561 = vsel %vm553, %v535, %v534
    %v562 = vld [vmem:[%s0 + $0x49] sm:$0xff]
    %vm563 = vcmp.ge.s32.totalorder %v60, 33
    %vm564 = vmand %vm176, %vm563
    %vm565 = vmand %vm177, %vm563
    %vm566 = vmand %vm178, %vm563
    %vm567 = vmand %vm179, %vm563
    %vm568 = vmand %vm180, %vm563
    %vm569 = vmand %vm181, %vm563
    %vm570 = vmand %vm182, %vm563
    %vm571 = vmand %vm183, %vm563
    %vm572 = vcmp.lt.s32.totalorder %v60, 36
    %vm573 = vmand %vm564, %vm572
    %vm574 = vmand %vm565, %vm572
    %vm575 = vmand %vm566, %vm572
    %vm576 = vmand %vm567, %vm572
    %vm577 = vmand %vm568, %vm572
    %vm578 = vmand %vm569, %vm572
    %vm579 = vmand %vm570, %vm572
    %vm580 = vmand %vm571, %vm572
    %v581 = vsel %vm573, %v146, %v554
    %v582 = vsel %vm574, %v147, %v555
    %v583 = vsel %vm575, %v148, %v556
    %v584 = vsel %vm576, %v149, %v557
    %v585 = vsel %vm577, %v150, %v558
    %v586 = vsel %vm578, %v151, %v559
    %v587 = vsel %vm579, %v427, %v560
    %v588 = vsel %vm580, %v562, %v561
    %v589 = vld [vmem:[%s0 + $0x4a] sm:$0xff]
    %vm590 = vcmp.ge.s32.totalorder %v60, 36
    %vm591 = vmand %vm234, %vm590
    %vm592 = vmand %vm235, %vm590
    %vm593 = vmand %vm236, %vm590
    %vm594 = vmand %vm237, %vm590
    %vm595 = vmand %vm238, %vm590
    %vm596 = vmand %vm239, %vm590
    %vm597 = vmand %vm240, %vm590
    %vm598 = vmand %vm241, %vm590
    %vm599 = vcmp.lt.s32.totalorder %v60, 39
    %vm600 = vmand %vm591, %vm599
    %vm601 = vmand %vm592, %vm599
    %vm602 = vmand %vm593, %vm599
    %vm603 = vmand %vm594, %vm599
    %vm604 = vmand %vm595, %vm599
    %vm605 = vmand %vm596, %vm599
    %vm606 = vmand %vm597, %vm599
    %vm607 = vmand %vm598, %vm599
    %v608 = vsel %vm600, %v212, %v581
    %v609 = vsel %vm601, %v213, %v582
    %v610 = vsel %vm602, %v214, %v583
    %v611 = vsel %vm603, %v215, %v584
    %v612 = vsel %vm604, %v216, %v585
    %v613 = vsel %vm605, %v217, %v586
    %v614 = vsel %vm606, %v454, %v587
    %v615 = vsel %vm607, %v589, %v588
    %v616 = vld [vmem:[%s0 + $0x4b] sm:$0xff]
    %vm617 = vcmp.ge.s32.totalorder %v60, 39
    %vm618 = vmand %vm300, %vm617
    %vm619 = vmand %vm301, %vm617
    %vm620 = vmand %vm302, %vm617
    %vm621 = vmand %vm303, %vm617
    %vm622 = vmand %vm304, %vm617
    %vm623 = vmand %vm305, %vm617
    %vm624 = vmand %vm306, %vm617
    %vm625 = vmand %vm307, %vm617
    %vm626 = vcmp.lt.s32.totalorder %v60, 42
    %vm627 = vmand %vm618, %vm626
    %vm628 = vmand %vm619, %vm626
    %vm629 = vmand %vm620, %vm626
    %vm630 = vmand %vm621, %vm626
    %vm631 = vmand %vm622, %vm626
    %vm632 = vmand %vm623, %vm626
    %vm633 = vmand %vm624, %vm626
    %vm634 = vmand %vm625, %vm626
    %v635 = vsel %vm627, %v270, %v608
    %v636 = vsel %vm628, %v271, %v609
    %v637 = vsel %vm629, %v272, %v610
    %v638 = vsel %vm630, %v273, %v611
    %v639 = vsel %vm631, %v274, %v612
    %v640 = vsel %vm632, %v275, %v613
    %v641 = vsel %vm633, %v481, %v614
    %v642 = vsel %vm634, %v616, %v615
    %v643 = vld [vmem:[%s0 + $0x4c] sm:$0xff]
    %vm644 = vcmp.ge.s32.totalorder %v60, 42
    %vm645 = vmand %vm366, %vm644
    %vm646 = vmand %vm367, %vm644
    %vm647 = vmand %vm368, %vm644
    %vm648 = vmand %vm369, %vm644
    %vm649 = vmand %vm370, %vm644
    %vm650 = vmand %vm371, %vm644
    %vm651 = vmand %vm372, %vm644
    %vm652 = vmand %vm373, %vm644
    %vm653 = vcmp.lt.s32.totalorder %v60, 45
    %vm654 = vmand %vm645, %vm653
    %vm655 = vmand %vm646, %vm653
    %vm656 = vmand %vm647, %vm653
    %vm657 = vmand %vm648, %vm653
    %vm658 = vmand %vm649, %vm653
    %vm659 = vmand %vm650, %vm653
    %vm660 = vmand %vm651, %vm653
    %vm661 = vmand %vm652, %vm653
    %v662 = vsel %vm654, %v336, %v635
    %v663 = vsel %vm655, %v337, %v636
    %v664 = vsel %vm656, %v338, %v637
    %v665 = vsel %vm657, %v339, %v638
    %v666 = vsel %vm658, %v340, %v639
    %v667 = vsel %vm659, %v341, %v640
    %v668 = vsel %vm660, %v508, %v641
    %v669 = vsel %vm661, %v643, %v642
    %v670 = vld [vmem:[%s0 + $0x50] sm:$0xff]
    %vm671 = vcmp.ge.s32.totalorder %v60, 45
    %vm672 = vmand %vm110, %vm671
    %vm673 = vmand %vm111, %vm671
    %vm674 = vmand %vm112, %vm671
    %vm675 = vmand %vm113, %vm671
    %vm676 = vmand %vm114, %vm671
    %vm677 = vmand %vm115, %vm671
    %vm678 = vmand %vm116, %vm671
    %vm679 = vmand %vm117, %vm671
    %vm680 = vcmp.lt.s32.totalorder %v60, 48
    %vm681 = vmand %vm672, %vm680
    %vm682 = vmand %vm673, %vm680
    %vm683 = vmand %vm674, %vm680
    %vm684 = vmand %vm675, %vm680
    %vm685 = vmand %vm676, %vm680
    %vm686 = vmand %vm677, %vm680
    %vm687 = vmand %vm678, %vm680
    %vm688 = vmand %vm679, %vm680
    %v689 = vsel %vm681, %v81, %v662
    %v690 = vsel %vm682, %v82, %v663
    %v691 = vsel %vm683, %v83, %v664
    %v692 = vsel %vm684, %v84, %v665
    %v693 = vsel %vm685, %v85, %v666
    %v694 = vsel %vm686, %v400, %v667
    %v695 = vsel %vm687, %v535, %v668
    %v696 = vsel %vm688, %v670, %v669
    %v697 = vld [vmem:[%s0 + $0x51] sm:$0xff]
    %vm698 = vcmp.ge.s32.totalorder %v60, 48
    %vm699 = vmand %vm176, %vm698
    %vm700 = vmand %vm177, %vm698
    %vm701 = vmand %vm178, %vm698
    %vm702 = vmand %vm179, %vm698
    %vm703 = vmand %vm180, %vm698
    %vm704 = vmand %vm181, %vm698
    %vm705 = vmand %vm182, %vm698
    %vm706 = vmand %vm183, %vm698
    %vm707 = vcmp.lt.s32.totalorder %v60, 51
    %vm708 = vmand %vm699, %vm707
    %vm709 = vmand %vm700, %vm707
    %vm710 = vmand %vm701, %vm707
    %vm711 = vmand %vm702, %vm707
    %vm712 = vmand %vm703, %vm707
    %vm713 = vmand %vm704, %vm707
    %vm714 = vmand %vm705, %vm707
    %vm715 = vmand %vm706, %vm707
    %v716 = vsel %vm708, %v147, %v689
    %v717 = vsel %vm709, %v148, %v690
    %v718 = vsel %vm710, %v149, %v691
    %v719 = vsel %vm711, %v150, %v692
    %v720 = vsel %vm712, %v151, %v693
    %v721 = vsel %vm713, %v427, %v694
    %v722 = vsel %vm714, %v562, %v695
    %v723 = vsel %vm715, %v697, %v696
    %v724 = vld [vmem:[%s0 + $0x52] sm:$0xff]
    %vm725 = vcmp.ge.s32.totalorder %v60, 51
    %vm726 = vmand %vm234, %vm725
    %vm727 = vmand %vm235, %vm725
    %vm728 = vmand %vm236, %vm725
    %vm729 = vmand %vm237, %vm725
    %vm730 = vmand %vm238, %vm725
    %vm731 = vmand %vm239, %vm725
    %vm732 = vmand %vm240, %vm725
    %vm733 = vmand %vm241, %vm725
    %vm734 = vcmp.lt.s32.totalorder %v60, 54
    %vm735 = vmand %vm726, %vm734
    %vm736 = vmand %vm727, %vm734
    %vm737 = vmand %vm728, %vm734
    %vm738 = vmand %vm729, %vm734
    %vm739 = vmand %vm730, %vm734
    %vm740 = vmand %vm731, %vm734
    %vm741 = vmand %vm732, %vm734
    %vm742 = vmand %vm733, %vm734
    %v743 = vsel %vm735, %v213, %v716
    %v744 = vsel %vm736, %v214, %v717
    %v745 = vsel %vm737, %v215, %v718
    %v746 = vsel %vm738, %v216, %v719
    %v747 = vsel %vm739, %v217, %v720
    %v748 = vsel %vm740, %v454, %v721
    %v749 = vsel %vm741, %v589, %v722
    %v750 = vsel %vm742, %v724, %v723
    %v751 = vld [vmem:[%s0 + $0x53] sm:$0xff]
    %vm752 = vcmp.ge.s32.totalorder %v60, 54
    %vm753 = vmand %vm300, %vm752
    %vm754 = vmand %vm301, %vm752
    %vm755 = vmand %vm302, %vm752
    %vm756 = vmand %vm303, %vm752
    %vm757 = vmand %vm304, %vm752
    %vm758 = vmand %vm305, %vm752
    %vm759 = vmand %vm306, %vm752
    %vm760 = vmand %vm307, %vm752
    %vm761 = vcmp.lt.s32.totalorder %v60, 57
    %vm762 = vmand %vm753, %vm761
    %vm763 = vmand %vm754, %vm761
    %vm764 = vmand %vm755, %vm761
    %vm765 = vmand %vm756, %vm761
    %vm766 = vmand %vm757, %vm761
    %vm767 = vmand %vm758, %vm761
    %vm768 = vmand %vm759, %vm761
    %vm769 = vmand %vm760, %vm761
    %v770 = vsel %vm762, %v271, %v743
    %v771 = vsel %vm763, %v272, %v744
    %v772 = vsel %vm764, %v273, %v745
    %v773 = vsel %vm765, %v274, %v746
    %v774 = vsel %vm766, %v275, %v747
    %v775 = vsel %vm767, %v481, %v748
    %v776 = vsel %vm768, %v616, %v749
    %v777 = vsel %vm769, %v751, %v750
    %v778 = vld [vmem:[%s0 + $0x54] sm:$0xff]
    %vm779 = vcmp.ge.s32.totalorder %v60, 57
    %vm780 = vmand %vm366, %vm779
    %vm781 = vmand %vm367, %vm779
    %vm782 = vmand %vm368, %vm779
    %vm783 = vmand %vm369, %vm779
    %vm784 = vmand %vm370, %vm779
    %vm785 = vmand %vm371, %vm779
    %vm786 = vmand %vm372, %vm779
    %vm787 = vmand %vm373, %vm779
    %vm788 = vcmp.lt.s32.totalorder %v60, 60
    %vm789 = vmand %vm780, %vm788
    %vm790 = vmand %vm781, %vm788
    %vm791 = vmand %vm782, %vm788
    %vm792 = vmand %vm783, %vm788
    %vm793 = vmand %vm784, %vm788
    %vm794 = vmand %vm785, %vm788
    %vm795 = vmand %vm786, %vm788
    %vm796 = vmand %vm787, %vm788
    %v797 = vsel %vm789, %v337, %v770
    %v798 = vsel %vm790, %v338, %v771
    %v799 = vsel %vm791, %v339, %v772
    %v800 = vsel %vm792, %v340, %v773
    %v801 = vsel %vm793, %v341, %v774
    %v802 = vsel %vm794, %v508, %v775
    %v803 = vsel %vm795, %v643, %v776
    %v804 = vsel %vm796, %v778, %v777
    %v805 = vld [vmem:[%s0 + $0x58] sm:$0xff]
    %vm806 = vcmp.ge.s32.totalorder %v60, 60
    %vm807 = vmand %vm110, %vm806
    %vm808 = vmand %vm111, %vm806
    %vm809 = vmand %vm112, %vm806
    %vm810 = vmand %vm113, %vm806
    %vm811 = vmand %vm114, %vm806
    %vm812 = vmand %vm115, %vm806
    %vm813 = vmand %vm116, %vm806
    %vm814 = vmand %vm117, %vm806
    %vm815 = vcmp.lt.s32.totalorder %v60, 63
    %vm816 = vmand %vm807, %vm815
    %vm817 = vmand %vm808, %vm815
    %vm818 = vmand %vm809, %vm815
    %vm819 = vmand %vm810, %vm815
    %vm820 = vmand %vm811, %vm815
    %vm821 = vmand %vm812, %vm815
    %vm822 = vmand %vm813, %vm815
    %vm823 = vmand %vm814, %vm815
    %v824 = vsel %vm816, %v82, %v797
    %v825 = vsel %vm817, %v83, %v798
    %v826 = vsel %vm818, %v84, %v799
    %v827 = vsel %vm819, %v85, %v800
    %v828 = vsel %vm820, %v400, %v801
    %v829 = vsel %vm821, %v535, %v802
    %v830 = vsel %vm822, %v670, %v803
    %v831 = vsel %vm823, %v805, %v804
    %v832 = vld [vmem:[%s0 + $0x59] sm:$0xff]
    %vm833 = vcmp.ge.s32.totalorder %v60, 63
    %vm834 = vmand %vm176, %vm833
    %vm835 = vmand %vm177, %vm833
    %vm836 = vmand %vm178, %vm833
    %vm837 = vmand %vm179, %vm833
    %vm838 = vmand %vm180, %vm833
    %vm839 = vmand %vm181, %vm833
    %vm840 = vmand %vm182, %vm833
    %vm841 = vmand %vm183, %vm833
    %vm842 = vcmp.lt.s32.totalorder %v60, 66
    %vm843 = vmand %vm834, %vm842
    %vm844 = vmand %vm835, %vm842
    %vm845 = vmand %vm836, %vm842
    %vm846 = vmand %vm837, %vm842
    %vm847 = vmand %vm838, %vm842
    %vm848 = vmand %vm839, %vm842
    %vm849 = vmand %vm840, %vm842
    %vm850 = vmand %vm841, %vm842
    %v851 = vsel %vm843, %v148, %v824
    %v852 = vsel %vm844, %v149, %v825
    %v853 = vsel %vm845, %v150, %v826
    %v854 = vsel %vm846, %v151, %v827
    %v855 = vsel %vm847, %v427, %v828
    %v856 = vsel %vm848, %v562, %v829
    %v857 = vsel %vm849, %v697, %v830
    %v858 = vsel %vm850, %v832, %v831
    %v859 = vld [vmem:[%s0 + $0x5a] sm:$0xff]
    %vm860 = vcmp.ge.s32.totalorder %v60, 66
    %vm861 = vmand %vm234, %vm860
    %vm862 = vmand %vm235, %vm860
    %vm863 = vmand %vm236, %vm860
    %vm864 = vmand %vm237, %vm860
    %vm865 = vmand %vm238, %vm860
    %vm866 = vmand %vm239, %vm860
    %vm867 = vmand %vm240, %vm860
    %vm868 = vmand %vm241, %vm860
    %vm869 = vcmp.lt.s32.totalorder %v60, 69
    %vm870 = vmand %vm861, %vm869
    %vm871 = vmand %vm862, %vm869
    %vm872 = vmand %vm863, %vm869
    %vm873 = vmand %vm864, %vm869
    %vm874 = vmand %vm865, %vm869
    %vm875 = vmand %vm866, %vm869
    %vm876 = vmand %vm867, %vm869
    %vm877 = vmand %vm868, %vm869
    %v878 = vsel %vm870, %v214, %v851
    %v879 = vsel %vm871, %v215, %v852
    %v880 = vsel %vm872, %v216, %v853
    %v881 = vsel %vm873, %v217, %v854
    %v882 = vsel %vm874, %v454, %v855
    %v883 = vsel %vm875, %v589, %v856
    %v884 = vsel %vm876, %v724, %v857
    %v885 = vsel %vm877, %v859, %v858
    %v886 = vld [vmem:[%s0 + $0x5b] sm:$0xff]
    %vm887 = vcmp.ge.s32.totalorder %v60, 69
    %vm888 = vmand %vm300, %vm887
    %vm889 = vmand %vm301, %vm887
    %vm890 = vmand %vm302, %vm887
    %vm891 = vmand %vm303, %vm887
    %vm892 = vmand %vm304, %vm887
    %vm893 = vmand %vm305, %vm887
    %vm894 = vmand %vm306, %vm887
    %vm895 = vmand %vm307, %vm887
    %vm896 = vcmp.lt.s32.totalorder %v60, 72
    %vm897 = vmand %vm888, %vm896
    %vm898 = vmand %vm889, %vm896
    %vm899 = vmand %vm890, %vm896
    %vm900 = vmand %vm891, %vm896
    %vm901 = vmand %vm892, %vm896
    %vm902 = vmand %vm893, %vm896
    %vm903 = vmand %vm894, %vm896
    %vm904 = vmand %vm895, %vm896
    %v905 = vsel %vm897, %v272, %v878
    %v906 = vsel %vm898, %v273, %v879
    %v907 = vsel %vm899, %v274, %v880
    %v908 = vsel %vm900, %v275, %v881
    %v909 = vsel %vm901, %v481, %v882
    %v910 = vsel %vm902, %v616, %v883
    %v911 = vsel %vm903, %v751, %v884
    %v912 = vsel %vm904, %v886, %v885
    %v913 = vld [vmem:[%s0 + $0x5c] sm:$0xff]
    %vm914 = vcmp.ge.s32.totalorder %v60, 72
    %vm915 = vmand %vm366, %vm914
    %vm916 = vmand %vm367, %vm914
    %vm917 = vmand %vm368, %vm914
    %vm918 = vmand %vm369, %vm914
    %vm919 = vmand %vm370, %vm914
    %vm920 = vmand %vm371, %vm914
    %vm921 = vmand %vm372, %vm914
    %vm922 = vmand %vm373, %vm914
    %vm923 = vcmp.lt.s32.totalorder %v60, 75
    %vm924 = vmand %vm915, %vm923
    %vm925 = vmand %vm916, %vm923
    %vm926 = vmand %vm917, %vm923
    %vm927 = vmand %vm918, %vm923
    %vm928 = vmand %vm919, %vm923
    %vm929 = vmand %vm920, %vm923
    %vm930 = vmand %vm921, %vm923
    %vm931 = vmand %vm922, %vm923
    %v932 = vsel %vm924, %v338, %v905
    %v933 = vsel %vm925, %v339, %v906
    %v934 = vsel %vm926, %v340, %v907
    %v935 = vsel %vm927, %v341, %v908
    %v936 = vsel %vm928, %v508, %v909
    %v937 = vsel %vm929, %v643, %v910
    %v938 = vsel %vm930, %v778, %v911
    %v939 = vsel %vm931, %v913, %v912
    %v940 = vpack.c.bf16 %v933, %v932
    %v941 = vpack.c.bf16 %v935, %v934
    %v942 = vpack.c.bf16 %v937, %v936
    %v943 = vpack.c.bf16 %v939, %v938
    %v944 = vld [vmem:[#allocation2] sm:$0xf]
    %v945 = vld [vmem:[#allocation2 + $0x4] sm:$0xf]
    %v946 = vld [vmem:[#allocation2 + $0x8] sm:$0xf]
    %v947 = vld [vmem:[#allocation2 + $0xc] sm:$0xf]
    %v948 = vld [vmem:[#allocation2 + $0x10] sm:$0xf]
    %v949 = vld [vmem:[#allocation2 + $0x14] sm:$0xf]
    %v950 = vld [vmem:[#allocation2 + $0x18] sm:$0xf]
    %v951 = vld [vmem:[#allocation2 + $0x1c] sm:$0xf]
    %v952 = vld [vmem:[#allocation2 + $0x20] sm:$0xf]
    %v953 = vld [vmem:[#allocation2 + $0x24] sm:$0xf]
    %v954 = vld [vmem:[#allocation2 + $0x28] sm:$0xf]
    %v955 = vld [vmem:[#allocation2 + $0x2c] sm:$0xf]
    %v956 = vld [vmem:[#allocation2 + $0x30] sm:$0xf]
    %v957 = vld [vmem:[#allocation2 + $0x34] sm:$0xf]
    %v958 = vld [vmem:[#allocation2 + $0x38] sm:$0xf]
    %v959 = vld [vmem:[#allocation2 + $0x3c] sm:$0xf]
    %v960 = vld [vmem:[#allocation6] ss:$0 sm:$0xff]
    %v977 = vunpack.c.l.b16 %v944
    %v978 = vunpack.c.l.b16 %v945
    %v979 = vunpack.c.l.b16 %v946
    %v980 = vunpack.c.l.b16 %v947
    %v981 = vunpack.c.l.b16 %v948
    %v982 = vunpack.c.l.b16 %v949
    %v983 = vunpack.c.l.b16 %v950
    %v984 = vunpack.c.l.b16 %v951
    %v985 = vunpack.c.l.b16 %v952
    %v986 = vunpack.c.l.b16 %v953
    %v987 = vunpack.c.l.b16 %v954
    %v988 = vunpack.c.l.b16 %v955
    %v989 = vunpack.c.l.b16 %v956
    %v990 = vunpack.c.l.b16 %v957
    %v991 = vunpack.c.l.b16 %v958
    %v992 = vunpack.c.l.b16 %v959
    %v993 = vpack.c.b16 %v978, %v977
    %v994 = vpack.c.b16 %v980, %v979
    %v995 = vpack.c.b16 %v982, %v981
    %v996 = vpack.c.b16 %v984, %v983
    %v997 = vpack.c.b16 %v986, %v985
    %v998 = vpack.c.b16 %v988, %v987
    %v999 = vpack.c.b16 %v990, %v989
    %v1000 = vpack.c.b16 %v992, %v991
    %1009 = vmatprep.subr.bf16.mxu0 0
    %1010 = vmatpush1.bf16.msra.mxu0 %v993
    %1011 = vmatprep.subr.bf16.mxu0 0
    %1012 = vmatpush1.bf16.msra.mxu0 %v994
    %1013 = vmatprep.subr.bf16.mxu0 0
    %1014 = vmatpush1.bf16.msra.mxu0 %v995
    %1015 = vmatprep.subr.bf16.mxu0 0
    %1016 = vmatpush1.bf16.msra.mxu0 %v996
    %1017 = vmatprep.subr.bf16.mxu0 0
    %1018 = vmatpush1.bf16.msra.mxu0 %v997
    %1019 = vmatprep.subr.bf16.mxu0 0
    %1020 = vmatpush1.bf16.msra.mxu0 %v998
    %1021 = vmatprep.subr.bf16.mxu0 0
    %1022 = vmatpush1.bf16.msra.mxu0 %v999
    %1023 = vmatprep.subr.bf16.mxu0 0
    %1024 = vmatpush1.bf16.msra.mxu0 %v1000
    %1025 = vmatprep.subr.bf16.mxu0 0
    %1026 = vmatpush1.bf16.msra.mxu0 0
    %1027 = vmatprep.subr.bf16.mxu0 0
    %1028 = vmatpush1.bf16.msra.mxu0 0
    %1029 = vmatprep.subr.bf16.mxu0 0
    %1030 = vmatpush1.bf16.msra.mxu0 0
    %1031 = vmatprep.subr.bf16.mxu0 0
    %1032 = vmatpush1.bf16.msra.mxu0 0
    %1033 = vmatprep.subr.bf16.mxu0 0
    %1034 = vmatpush1.bf16.msra.mxu0 0
    %1035 = vmatprep.subr.bf16.mxu0 0
    %1036 = vmatpush1.bf16.msra.mxu0 0
    %1037 = vmatprep.subr.bf16.mxu0 0
    %1038 = vmatpush1.bf16.msra.mxu0 0
    %1039 = vmatprep.subr.bf16.mxu0 0
    %1040 = vmatpush1.bf16.msra.mxu0 0
    %1041 = vmatprep.mubr.bf16.mxu0 0
    %1042 = vmatmul.mubr.bf16.gmra.mrb[0].mxu0 %v940
    %v1043 = vpop.f32.mrb[0].mxu0
    %v1044 = vadd.f32 %v960, %v1043
    %v1045 = vpop.f32.mrb[0].mxu0
    %v1046 = vpop.f32.mrb[0].mxu0
    %v1047 = vadd.f32 %v960, %v1046
    %v1048 = vpop.f32.mrb[0].mxu0
    %1049 = vmatprep.mubr.bf16.mxu0 0
    %1050 = vmatmul.mubr.bf16.gmra.mrb[0].mxu0 %v941
    %v1051 = vpop.f32.mrb[0].mxu0
    %v1052 = vadd.f32 %v960, %v1051
    %v1053 = vpop.f32.mrb[0].mxu0
    %v1054 = vpop.f32.mrb[0].mxu0
    %v1055 = vadd.f32 %v960, %v1054
    %v1056 = vpop.f32.mrb[0].mxu0
    %1057 = vmatprep.mubr.bf16.mxu0 0
    %1058 = vmatmul.mubr.bf16.gmra.mrb[0].mxu0 %v942
    %v1059 = vpop.f32.mrb[0].mxu0
    %v1060 = vadd.f32 %v960, %v1059
    %v1061 = vpop.f32.mrb[0].mxu0
    %v1062 = vpop.f32.mrb[0].mxu0
    %v1063 = vadd.f32 %v960, %v1062
    %v1064 = vpop.f32.mrb[0].mxu0
    %1065 = vmatprep.mubr.bf16.mxu0 0
    %1066 = vmatmul.mubr.bf16.gmra.mrb[0].mxu0 %v943
    %v1067 = vpop.f32.mrb[0].mxu0
    %v1068 = vadd.f32 %v960, %v1067
    %v1069 = vpop.f32.mrb[0].mxu0
    %v1070 = vpop.f32.mrb[0].mxu0
    %v1071 = vadd.f32 %v960, %v1070
    %v1072 = vpop.f32.mrb[0].mxu0
    %1073 = vdwg.mxu0
    %vm1074 = vcmp.gt.f32.partialorder %v1044, 0.0
    %vm1075 = vcmp.gt.f32.partialorder %v1047, 0.0
    %vm1076 = vcmp.gt.f32.partialorder %v1052, 0.0
    %vm1077 = vcmp.gt.f32.partialorder %v1055, 0.0
    %vm1078 = vcmp.gt.f32.partialorder %v1060, 0.0
    %vm1079 = vcmp.gt.f32.partialorder %v1063, 0.0
    %vm1080 = vcmp.gt.f32.partialorder %v1068, 0.0
    %vm1081 = vcmp.gt.f32.partialorder %v1071, 0.0
    %v1082 = vmul.f32 %v1044, 0.01
    %v1083 = vmul.f32 %v1047, 0.01
    %v1084 = vmul.f32 %v1052, 0.01
    %v1085 = vmul.f32 %v1055, 0.01
    %v1086 = vmul.f32 %v1060, 0.01
    %v1087 = vmul.f32 %v1063, 0.01
    %v1088 = vmul.f32 %v1068, 0.01
    %v1089 = vmul.f32 %v1071, 0.01
    %v1090 = vsel %vm1074, %v1044, %v1082
    %v1091 = vsel %vm1075, %v1047, %v1083
    %v1092 = vsel %vm1076, %v1052, %v1084
    %v1093 = vsel %vm1077, %v1055, %v1085
    %v1094 = vsel %vm1078, %v1060, %v1086
    %v1095 = vsel %vm1079, %v1063, %v1087
    %v1096 = vsel %vm1080, %v1068, %v1088
    %v1097 = vsel %vm1081, %v1071, %v1089
    %v1098 = vld [vmem:[#allocation2 + $0x7d8] sm:$0xf]
    %v1099 = vld [vmem:[#allocation2 + $0x7dc] sm:$0xf]
    %v1100 = vld [vmem:[#allocation2 + $0x7e0] sm:$0xf]
    %v1101 = vld [vmem:[#allocation2 + $0x7e4] sm:$0xf]
    %v1102 = vld [vmem:[#allocation2 + $0x7e8] sm:$0xf]
    %v1103 = vld [vmem:[#allocation2 + $0x7ec] sm:$0xf]
    %v1104 = vld [vmem:[#allocation2 + $0x7f0] sm:$0xf]
    %v1105 = vld [vmem:[#allocation2 + $0x7f4] sm:$0xf]
    %v1106 = vpack.c.bf16 %v1091, %v1090
    %v1107 = vpack.c.bf16 %v1093, %v1092
    %v1108 = vpack.c.bf16 %v1095, %v1094
    %v1109 = vpack.c.bf16 %v1097, %v1096
    %v1118 = vunpack.c.l.b16 %v1098
    %v1119 = vunpack.c.l.b16 %v1099
    %v1120 = vunpack.c.l.b16 %v1100
    %v1121 = vunpack.c.l.b16 %v1101
    %v1122 = vunpack.c.l.b16 %v1102
    %v1123 = vunpack.c.l.b16 %v1103
    %v1124 = vunpack.c.l.b16 %v1104
    %v1125 = vunpack.c.l.b16 %v1105
    %v1126 = vpack.c.b16 %v1119, %v1118
    %v1127 = vpack.c.b16 %v1121, %v1120
    %v1128 = vpack.c.b16 %v1123, %v1122
    %v1129 = vpack.c.b16 %v1125, %v1124
    %vm1130 = vcmask 523264
    %v1132 = vsel %vm1130, %v1126, 0
    %v1135 = vsel %vm1130, %v1127, 0
    %v1138 = vsel %vm1130, %v1128, 0
    %v1141 = vsel %vm1130, %v1129, 0
    %1143 = vmatprep.subr.bf16.mxu0 0
    %1144 = vmatpush1.bf16.msra.mxu0 %v1106
    %1145 = vmatprep.subr.bf16.mxu0 0
    %1146 = vmatpush1.bf16.msra.mxu0 %v1107
    %1147 = vmatprep.subr.bf16.mxu0 0
    %1148 = vmatpush1.bf16.msra.mxu0 %v1108
    %1149 = vmatprep.subr.bf16.mxu0 0
    %1150 = vmatpush1.bf16.msra.mxu0 %v1109
    %1151 = vmatprep.subr.bf16.mxu0 0
    %1152 = vmatpush1.bf16.msra.mxu0 0
    %1153 = vmatprep.subr.bf16.mxu0 0
    %1154 = vmatpush1.bf16.msra.mxu0 0
    %1155 = vmatprep.subr.bf16.mxu0 0
    %1156 = vmatpush1.bf16.msra.mxu0 0
    %1157 = vmatprep.subr.bf16.mxu0 0
    %1158 = vmatpush1.bf16.msra.mxu0 0
    %1159 = vmatprep.subr.bf16.mxu0 0
    %1160 = vmatpush1.bf16.msra.mxu0 0
    %1161 = vmatprep.subr.bf16.mxu0 0
    %1162 = vmatpush1.bf16.msra.mxu0 0
    %1163 = vmatprep.subr.bf16.mxu0 0
    %1164 = vmatpush1.bf16.msra.mxu0 0
    %1165 = vmatprep.subr.bf16.mxu0 0
    %1166 = vmatpush1.bf16.msra.mxu0 0
    %1167 = vmatprep.subr.bf16.mxu0 0
    %1168 = vmatpush1.bf16.msra.mxu0 0
    %1169 = vmatprep.subr.bf16.mxu0 0
    %1170 = vmatpush1.bf16.msra.mxu0 0
    %1171 = vmatprep.subr.bf16.mxu0 0
    %1172 = vmatpush1.bf16.msra.mxu0 0
    %1173 = vmatprep.subr.bf16.mxu0 0
    %1174 = vmatpush1.bf16.msra.mxu0 0
    %1175 = vmatprep.mubr.bf16.mxu0 0
    %1176 = vmatmul.mubr.bf16.gmra.mrb[0].mxu0 %v1132
    %v1177 = vpop.f32.mrb[0].mxu0
    %v1178 = vadd.f32 0.0, %v1177
    %v1179 = vpop.f32.mrb[0].mxu0
    %v1180 = vpop.f32.mrb[0].mxu0
    %v1181 = vadd.f32 0.0, %v1180
    %v1182 = vpop.f32.mrb[0].mxu0
    %1183 = vmatprep.mubr.bf16.mxu0 0
    %1184 = vmatmul.mubr.bf16.gmra.mrb[0].mxu0 %v1135
    %v1185 = vpop.f32.mrb[0].mxu0
    %v1186 = vadd.f32 0.0, %v1185
    %v1187 = vpop.f32.mrb[0].mxu0
    %v1188 = vpop.f32.mrb[0].mxu0
    %v1189 = vadd.f32 0.0, %v1188
    %v1190 = vpop.f32.mrb[0].mxu0
    %1191 = vmatprep.mubr.bf16.mxu0 0
    %1192 = vmatmul.mubr.bf16.gmra.mrb[0].mxu0 %v1138
    %v1193 = vpop.f32.mrb[0].mxu0
    %v1194 = vadd.f32 0.0, %v1193
    %v1195 = vpop.f32.mrb[0].mxu0
    %v1196 = vpop.f32.mrb[0].mxu0
    %v1197 = vadd.f32 0.0, %v1196
    %v1198 = vpop.f32.mrb[0].mxu0
    %1199 = vmatprep.mubr.bf16.mxu0 0
    %1200 = vmatmul.mubr.bf16.gmra.mrb[0].mxu0 %v1141
    %v1201 = vpop.f32.mrb[0].mxu0
    %v1202 = vadd.f32 0.0, %v1201
    %v1203 = vpop.f32.mrb[0].mxu0
    %v1204 = vpop.f32.mrb[0].mxu0
    %v1205 = vadd.f32 0.0, %v1204
    %v1206 = vpop.f32.mrb[0].mxu0
    %1207 = vdwg.mxu0
    %v1208 = vmax.f32 %v1178, %v1186
    %v1209 = vmax.f32 %v1181, %v1189
    %v1210 = vmax.f32 %v1194, %v1202
    %v1211 = vmax.f32 %v1197, %v1205
    %v1212 = vmax.f32 %v1208, %v1210
    %v1213 = vmax.f32 %v1209, %v1211
    %v1214 = vld [vmem:[#allocation2 + $0x780] sm:$0xf]
    %v1215 = vld [vmem:[#allocation2 + $0x784] sm:$0xf]
    %v1216 = vld [vmem:[#allocation2 + $0x788] sm:$0xf]
    %v1217 = vld [vmem:[#allocation2 + $0x78c] sm:$0xf]
    %v1218 = vld [vmem:[#allocation2 + $0x790] sm:$0xf]
    %v1219 = vld [vmem:[#allocation2 + $0x794] sm:$0xf]
    %v1220 = vld [vmem:[#allocation2 + $0x798] sm:$0xf]
    %v1221 = vld [vmem:[#allocation2 + $0x79c] sm:$0xf]
    %v1222 = vld [vmem:[#allocation2 + $0x7a0] sm:$0xf]
    %v1223 = vld [vmem:[#allocation2 + $0x7a4] sm:$0xf]
    %v1224 = vld [vmem:[#allocation2 + $0x7a8] sm:$0xf]
    %v1225 = vld [vmem:[#allocation2 + $0x7ac] sm:$0xf]
    %v1226 = vld [vmem:[#allocation2 + $0x7b0] sm:$0xf]
    %v1227 = vld [vmem:[#allocation2 + $0x7b4] sm:$0xf]
    %v1228 = vld [vmem:[#allocation2 + $0x7b8] sm:$0xf]
    %v1229 = vld [vmem:[#allocation2 + $0x7bc] sm:$0xf]
    %v1230 = vld [vmem:[#allocation2 + $0x7c0] sm:$0xf]
    %v1231 = vld [vmem:[#allocation2 + $0x7c4] sm:$0xf]
    %v1232 = vld [vmem:[#allocation2 + $0x40] sm:$0xf]
    %v1233 = vld [vmem:[#allocation2 + $0x44] sm:$0xf]
    %v1234 = vld [vmem:[#allocation2 + $0x48] sm:$0xf]
    %v1235 = vld [vmem:[#allocation2 + $0x4c] sm:$0xf]
    %v1236 = vld [vmem:[#allocation2 + $0x50] sm:$0xf]
    %v1237 = vld [vmem:[#allocation2 + $0x54] sm:$0xf]
    %v1238 = vld [vmem:[#allocation2 + $0x58] sm:$0xf]
    %v1239 = vld [vmem:[#allocation2 + $0x5c] sm:$0xf]
    %v1240 = vld [vmem:[#allocation2 + $0x60] sm:$0xf]
    %v1241 = vld [vmem:[#allocation2 + $0x64] sm:$0xf]
    %v1242 = vld [vmem:[#allocation2 + $0x68] sm:$0xf]
    %v1243 = vld [vmem:[#allocation2 + $0x6c] sm:$0xf]
    %v1244 = vld [vmem:[#allocation2 + $0x70] sm:$0xf]
    %v1245 = vld [vmem:[#allocation2 + $0x74] sm:$0xf]
    %v1246 = vld [vmem:[#allocation2 + $0x78] sm:$0xf]
    %v1247 = vld [vmem:[#allocation2 + $0x7c] sm:$0xf]
    %v1248 = vld [vmem:[#allocation2 + $0x80] sm:$0xf]
    %v1249 = vld [vmem:[#allocation2 + $0x84] sm:$0xf]
    %v1250 = vld [vmem:[#allocation2 + $0x88] sm:$0xf]
    %v1251 = vld [vmem:[#allocation2 + $0x8c] sm:$0xf]
    %v1252 = vld [vmem:[#allocation2 + $0x90] sm:$0xf]
    %v1253 = vld [vmem:[#allocation2 + $0x94] sm:$0xf]
    %v1254 = vld [vmem:[#allocation2 + $0x98] sm:$0xf]
    %v1255 = vld [vmem:[#allocation2 + $0x9c] sm:$0xf]
    %v1256 = vld [vmem:[#allocation2 + $0xa0] sm:$0xf]
    %v1257 = vld [vmem:[#allocation2 + $0xa4] sm:$0xf]
    %v1258 = vld [vmem:[#allocation2 + $0xa8] sm:$0xf]
    %v1259 = vld [vmem:[#allocation2 + $0xac] sm:$0xf]
    %v1260 = vld [vmem:[#allocation2 + $0xb0] sm:$0xf]
    %v1261 = vld [vmem:[#allocation2 + $0xb4] sm:$0xf]
    %v1262 = vld [vmem:[#allocation2 + $0xb8] sm:$0xf]
    %v1263 = vld [vmem:[#allocation2 + $0xbc] sm:$0xf]
    %v1264 = vld [vmem:[#allocation2 + $0xc0] sm:$0xf]
    %v1265 = vld [vmem:[#allocation2 + $0xc4] sm:$0xf]
    %v1266 = vld [vmem:[#allocation2 + $0xc8] sm:$0xf]
    %v1267 = vld [vmem:[#allocation2 + $0xcc] sm:$0xf]
    %v1268 = vld [vmem:[#allocation2 + $0xd0] sm:$0xf]
    %v1269 = vld [vmem:[#allocation2 + $0xd4] sm:$0xf]
    %v1270 = vld [vmem:[#allocation2 + $0xd8] sm:$0xf]
    %v1271 = vld [vmem:[#allocation2 + $0xdc] sm:$0xf]
    %v1272 = vld [vmem:[#allocation2 + $0xe0] sm:$0xf]
    %v1273 = vld [vmem:[#allocation2 + $0xe4] sm:$0xf]
    %v1274 = vld [vmem:[#allocation2 + $0xe8] sm:$0xf]
    %v1275 = vld [vmem:[#allocation2 + $0xec] sm:$0xf]
    %v1276 = vld [vmem:[#allocation2 + $0xf0] sm:$0xf]
    %v1277 = vld [vmem:[#allocation2 + $0xf4] sm:$0xf]
    %v1278 = vld [vmem:[#allocation2 + $0xf8] sm:$0xf]
    %v1279 = vld [vmem:[#allocation2 + $0xfc] sm:$0xf]
    %v1280 = vld [vmem:[#allocation2 + $0x100] sm:$0xf]
    %v1281 = vld [vmem:[#allocation2 + $0x104] sm:$0xf]
    %v1282 = vld [vmem:[#allocation2 + $0x108] sm:$0xf]
    %v1283 = vld [vmem:[#allocation2 + $0x10c] sm:$0xf]
    %v1284 = vld [vmem:[#allocation2 + $0x110] sm:$0xf]
    %v1285 = vld [vmem:[#allocation2 + $0x114] sm:$0xf]
    %v1286 = vld [vmem:[#allocation2 + $0x118] sm:$0xf]
    %v1287 = vld [vmem:[#allocation2 + $0x11c] sm:$0xf]
    %v1288 = vld [vmem:[#allocation2 + $0x120] sm:$0xf]
    %v1289 = vld [vmem:[#allocation2 + $0x124] sm:$0xf]
    %v1290 = vld [vmem:[#allocation2 + $0x128] sm:$0xf]
    %v1291 = vld [vmem:[#allocation2 + $0x12c] sm:$0xf]
    %v1292 = vld [vmem:[#allocation2 + $0x130] sm:$0xf]
    %v1293 = vld [vmem:[#allocation2 + $0x134] sm:$0xf]
    %v1294 = vld [vmem:[#allocation2 + $0x138] sm:$0xf]
    %v1295 = vld [vmem:[#allocation2 + $0x13c] sm:$0xf]
    %v1296 = vld [vmem:[#allocation2 + $0x140] sm:$0xf]
    %v1297 = vld [vmem:[#allocation2 + $0x144] sm:$0xf]
    %v1298 = vld [vmem:[#allocation2 + $0x148] sm:$0xf]
    %v1299 = vld [vmem:[#allocation2 + $0x14c] sm:$0xf]
    %v1300 = vld [vmem:[#allocation2 + $0x150] sm:$0xf]
    %v1301 = vld [vmem:[#allocation2 + $0x154] sm:$0xf]
    %v1302 = vld [vmem:[#allocation2 + $0x158] sm:$0xf]
    %v1303 = vld [vmem:[#allocation2 + $0x15c] sm:$0xf]
    %v1304 = vld [vmem:[#allocation2 + $0x160] sm:$0xf]
    %v1305 = vld [vmem:[#allocation2 + $0x164] sm:$0xf]
    %v1306 = vld [vmem:[#allocation2 + $0x168] sm:$0xf]
    %v1307 = vld [vmem:[#allocation2 + $0x16c] sm:$0xf]
    %v1308 = vld [vmem:[#allocation2 + $0x170] sm:$0xf]
    %v1309 = vld [vmem:[#allocation2 + $0x174] sm:$0xf]
    %v1310 = vld [vmem:[#allocation2 + $0x178] sm:$0xf]
    %v1311 = vld [vmem:[#allocation2 + $0x17c] sm:$0xf]
    %v1312 = vld [vmem:[#allocation2 + $0x180] sm:$0xf]
    %v1313 = vld [vmem:[#allocation2 + $0x184] sm:$0xf]
    %v1314 = vld [vmem:[#allocation2 + $0x188] sm:$0xf]
    %v1315 = vld [vmem:[#allocation2 + $0x18c] sm:$0xf]
    %v1316 = vld [vmem:[#allocation2 + $0x190] sm:$0xf]
    %v1317 = vld [vmem:[#allocation2 + $0x194] sm:$0xf]
    %v1318 = vld [vmem:[#allocation2 + $0x198] sm:$0xf]
    %v1319 = vld [vmem:[#allocation2 + $0x19c] sm:$0xf]
    %v1320 = vld [vmem:[#allocation2 + $0x1a0] sm:$0xf]
    %v1321 = vld [vmem:[#allocation2 + $0x1a4] sm:$0xf]
    %v1322 = vld [vmem:[#allocation2 + $0x1a8] sm:$0xf]
    %v1323 = vld [vmem:[#allocation2 + $0x1ac] sm:$0xf]
    %v1324 = vld [vmem:[#allocation2 + $0x1b0] sm:$0xf]
    %v1325 = vld [vmem:[#allocation2 + $0x1b4] sm:$0xf]
    %v1326 = vld [vmem:[#allocation2 + $0x1b8] sm:$0xf]
    %v1327 = vld [vmem:[#allocation2 + $0x1bc] sm:$0xf]
    %v1328 = vld [vmem:[#allocation2 + $0x1c0] sm:$0xf]
    %v1329 = vld [vmem:[#allocation2 + $0x1c4] sm:$0xf]
    %v1330 = vld [vmem:[#allocation2 + $0x1c8] sm:$0xf]
    %v1331 = vld [vmem:[#allocation2 + $0x1cc] sm:$0xf]
    %v1332 = vld [vmem:[#allocation2 + $0x1d0] sm:$0xf]
    %v1333 = vld [vmem:[#allocation2 + $0x1d4] sm:$0xf]
    %v1334 = vld [vmem:[#allocation2 + $0x1d8] sm:$0xf]
    %v1335 = vld [vmem:[#allocation2 + $0x1dc] sm:$0xf]
    %v1336 = vld [vmem:[#allocation2 + $0x1e0] sm:$0xf]
    %v1337 = vld [vmem:[#allocation2 + $0x1e4] sm:$0xf]
    %v1338 = vld [vmem:[#allocation2 + $0x1e8] sm:$0xf]
    %v1339 = vld [vmem:[#allocation2 + $0x1ec] sm:$0xf]
    %v1340 = vld [vmem:[#allocation2 + $0x1f0] sm:$0xf]
    %v1341 = vld [vmem:[#allocation2 + $0x1f4] sm:$0xf]
    %v1342 = vld [vmem:[#allocation2 + $0x1f8] sm:$0xf]
    %v1343 = vld [vmem:[#allocation2 + $0x1fc] sm:$0xf]
    %v1344 = vld [vmem:[#allocation2 + $0x200] sm:$0xf]
    %v1345 = vld [vmem:[#allocation2 + $0x204] sm:$0xf]
    %v1346 = vld [vmem:[#allocation2 + $0x208] sm:$0xf]
    %v1347 = vld [vmem:[#allocation2 + $0x20c] sm:$0xf]
    %v1348 = vld [vmem:[#allocation2 + $0x210] sm:$0xf]
    %v1349 = vld [vmem:[#allocation2 + $0x214] sm:$0xf]
    %v1350 = vld [vmem:[#allocation2 + $0x218] sm:$0xf]
    %v1351 = vld [vmem:[#allocation2 + $0x21c] sm:$0xf]
    %v1352 = vld [vmem:[#allocation2 + $0x220] sm:$0xf]
    %v1353 = vld [vmem:[#allocation2 + $0x224] sm:$0xf]
    %v1354 = vld [vmem:[#allocation2 + $0x228] sm:$0xf]
    %v1355 = vld [vmem:[#allocation2 + $0x22c] sm:$0xf]
    %v1356 = vld [vmem:[#allocation2 + $0x230] sm:$0xf]
    %v1357 = vld [vmem:[#allocation2 + $0x234] sm:$0xf]
    %v1358 = vld [vmem:[#allocation2 + $0x238] sm:$0xf]
    %v1359 = vld [vmem:[#allocation2 + $0x23c] sm:$0xf]
    %v1360 = vld [vmem:[#allocation2 + $0x240] sm:$0xf]
    %v1361 = vld [vmem:[#allocation2 + $0x244] sm:$0xf]
    %v1362 = vld [vmem:[#allocation2 + $0x248] sm:$0xf]
    %v1363 = vld [vmem:[#allocation2 + $0x24c] sm:$0xf]
    %v1364 = vld [vmem:[#allocation2 + $0x250] sm:$0xf]
    %v1365 = vld [vmem:[#allocation2 + $0x254] sm:$0xf]
    %v1366 = vld [vmem:[#allocation2 + $0x258] sm:$0xf]
    %v1367 = vld [vmem:[#allocation2 + $0x25c] sm:$0xf]
    %v1368 = vld [vmem:[#allocation2 + $0x260] sm:$0xf]
    %v1369 = vld [vmem:[#allocation2 + $0x264] sm:$0xf]
    %v1370 = vld [vmem:[#allocation2 + $0x268] sm:$0xf]
    %v1371 = vld [vmem:[#allocation2 + $0x26c] sm:$0xf]
    %v1372 = vld [vmem:[#allocation2 + $0x270] sm:$0xf]
    %v1373 = vld [vmem:[#allocation2 + $0x274] sm:$0xf]
    %v1374 = vld [vmem:[#allocation2 + $0x278] sm:$0xf]
    %v1375 = vld [vmem:[#allocation2 + $0x27c] sm:$0xf]
    %v1376 = vld [vmem:[#allocation6 + $0x1] ss:$0 sm:$0xff]
    %v1377 = vpack.c.bf16 %v1213, %v1212
    %v1396 = vunpack.c.l.b16 %v1214
    %v1397 = vunpack.c.l.b16 %v1215
    %v1398 = vunpack.c.l.b16 %v1216
    %v1399 = vunpack.c.l.b16 %v1217
    %v1400 = vunpack.c.l.b16 %v1218
    %v1401 = vunpack.c.l.b16 %v1219
    %v1402 = vunpack.c.l.b16 %v1220
    %v1403 = vunpack.c.l.b16 %v1221
    %v1404 = vunpack.c.l.b16 %v1222
    %v1405 = vunpack.c.l.b16 %v1223
    %v1406 = vunpack.c.l.b16 %v1224
    %v1407 = vunpack.c.l.b16 %v1225
    %v1408 = vunpack.c.l.b16 %v1226
    %v1409 = vunpack.c.l.b16 %v1227
    %v1410 = vunpack.c.l.b16 %v1228
    %v1411 = vunpack.c.l.b16 %v1229
    %v1412 = vunpack.c.l.b16 %v1230
    %v1413 = vunpack.c.l.b16 %v1231
    %v1414 = vpack.c.b16 %v1397, %v1396
    %v1415 = vpack.c.b16 %v1399, %v1398
    %v1416 = vpack.c.b16 %v1401, %v1400
    %v1417 = vpack.c.b16 %v1403, %v1402
    %v1418 = vpack.c.b16 %v1405, %v1404
    %v1419 = vpack.c.b16 %v1407, %v1406
    %v1420 = vpack.c.b16 %v1409, %v1408
    %v1421 = vpack.c.b16 %v1411, %v1410
    %v1422 = vpack.c.b16 %v1413, %v1412
    %vm1423 = vcmask 130048
    %v1425 = vsel %vm1423, %v1414, 0
    %v1428 = vsel %vm1423, %v1415, 0
    %v1431 = vsel %vm1423, %v1416, 0
    %v1434 = vsel %vm1423, %v1417, 0
    %v1437 = vsel %vm1423, %v1418, 0
    %v1440 = vsel %vm1423, %v1419, 0
    %v1443 = vsel %vm1423, %v1420, 0
    %v1446 = vsel %vm1423, %v1421, 0
    %v1449 = vsel %vm1423, %v1422, 0
    %1451 = vmatprep.subr.bf16.mxu0 0
    %1452 = vmatpush1.bf16.msra.mxu0 %v1377
    %1453 = vmatprep.subr.bf16.mxu0 0
    %1454 = vmatpush1.bf16.msra.mxu0 0
    %1455 = vmatprep.subr.bf16.mxu0 0
    %1456 = vmatpush1.bf16.msra.mxu0 0
    %1457 = vmatprep.subr.bf16.mxu0 0
    %1458 = vmatpush1.bf16.msra.mxu0 0
    %1459 = vmatprep.subr.bf16.mxu0 0
    %1460 = vmatpush1.bf16.msra.mxu0 0
    %1461 = vmatprep.subr.bf16.mxu0 0
    %1462 = vmatpush1.bf16.msra.mxu0 0
    %1463 = vmatprep.subr.bf16.mxu0 0
    %1464 = vmatpush1.bf16.msra.mxu0 0
    %1465 = vmatprep.subr.bf16.mxu0 0
    %1466 = vmatpush1.bf16.msra.mxu0 0
    %1467 = vmatprep.subr.bf16.mxu0 0
    %1468 = vmatpush1.bf16.msra.mxu0 0
    %1469 = vmatprep.subr.bf16.mxu0 0
    %1470 = vmatpush1.bf16.msra.mxu0 0
    %1471 = vmatprep.subr.bf16.mxu0 0
    %1472 = vmatpush1.bf16.msra.mxu0 0
    %1473 = vmatprep.subr.bf16.mxu0 0
    %1474 = vmatpush1.bf16.msra.mxu0 0
    %1475 = vmatprep.subr.bf16.mxu0 0
    %1476 = vmatpush1.bf16.msra.mxu0 0
    %1477 = vmatprep.subr.bf16.mxu0 0
    %1478 = vmatpush1.bf16.msra.mxu0 0
    %1479 = vmatprep.subr.bf16.mxu0 0
    %1480 = vmatpush1.bf16.msra.mxu0 0
    %1481 = vmatprep.subr.bf16.mxu0 0
    %1482 = vmatpush1.bf16.msra.mxu0 0
    %1483 = vmatprep.mubr.bf16.mxu0 0
    %1484 = vmatmul.mubr.bf16.gmra.mrb[0].mxu0 %v1425
    %v1485 = vpop.f32.mrb[0].mxu0
    %v1486 = vadd.f32 0.0, %v1485
    %v1487 = vpop.f32.mrb[0].mxu0
    %v1488 = vpop.f32.mrb[0].mxu0
    %v1489 = vadd.f32 0.0, %v1488
    %v1490 = vpop.f32.mrb[0].mxu0
    %1491 = vmatprep.mubr.bf16.mxu0 0
    %1492 = vmatmul.mubr.bf16.gmra.mrb[0].mxu0 %v1428
    %v1493 = vpop.f32.mrb[0].mxu0
    %v1494 = vadd.f32 0.0, %v1493
    %v1495 = vpop.f32.mrb[0].mxu0
    %v1496 = vpop.f32.mrb[0].mxu0
    %v1497 = vadd.f32 0.0, %v1496
    %v1498 = vpop.f32.mrb[0].mxu0
    %1499 = vmatprep.mubr.bf16.mxu0 0
    %1500 = vmatmul.mubr.bf16.gmra.mrb[0].mxu0 %v1431
    %v1501 = vpop.f32.mrb[0].mxu0
    %v1502 = vadd.f32 0.0, %v1501
    %v1503 = vpop.f32.mrb[0].mxu0
    %v1504 = vpop.f32.mrb[0].mxu0
    %v1505 = vadd.f32 0.0, %v1504
    %v1506 = vpop.f32.mrb[0].mxu0
    %1507 = vmatprep.mubr.bf16.mxu0 0
    %1508 = vmatmul.mubr.bf16.gmra.mrb[0].mxu0 %v1434
    %v1509 = vpop.f32.mrb[0].mxu0
    %v1510 = vadd.f32 0.0, %v1509
    %v1511 = vpop.f32.mrb[0].mxu0
    %v1512 = vpop.f32.mrb[0].mxu0
    %v1513 = vadd.f32 0.0, %v1512
    %v1514 = vpop.f32.mrb[0].mxu0
    %1515 = vmatprep.mubr.bf16.mxu0 0
    %1516 = vmatmul.mubr.bf16.gmra.mrb[0].mxu0 %v1437
    %v1517 = vpop.f32.mrb[0].mxu0
    %v1518 = vadd.f32 0.0, %v1517
    %v1519 = vpop.f32.mrb[0].mxu0
    %v1520 = vpop.f32.mrb[0].mxu0
    %v1521 = vadd.f32 0.0, %v1520
    %v1522 = vpop.f32.mrb[0].mxu0
    %1523 = vmatprep.mubr.bf16.mxu0 0
    %1524 = vmatmul.mubr.bf16.gmra.mrb[0].mxu0 %v1440
    %v1525 = vpop.f32.mrb[0].mxu0
    %v1526 = vadd.f32 0.0, %v1525
    %v1527 = vpop.f32.mrb[0].mxu0
    %v1528 = vpop.f32.mrb[0].mxu0
    %v1529 = vadd.f32 0.0, %v1528
    %v1530 = vpop.f32.mrb[0].mxu0
    %1531 = vmatprep.mubr.bf16.mxu0 0
    %1532 = vmatmul.mubr.bf16.gmra.mrb[0].mxu0 %v1443
    %v1533 = vpop.f32.mrb[0].mxu0
    %v1534 = vadd.f32 0.0, %v1533
    %v1535 = vpop.f32.mrb[0].mxu0
    %v1536 = vpop.f32.mrb[0].mxu0
    %v1537 = vadd.f32 0.0, %v1536
    %v1538 = vpop.f32.mrb[0].mxu0
    %1539 = vmatprep.mubr.bf16.mxu0 0
    %1540 = vmatmul.mubr.bf16.gmra.mrb[0].mxu0 %v1446
    %v1541 = vpop.f32.mrb[0].mxu0
    %v1542 = vadd.f32 0.0, %v1541
    %v1543 = vpop.f32.mrb[0].mxu0
    %v1544 = vpop.f32.mrb[0].mxu0
    %v1545 = vadd.f32 0.0, %v1544
    %v1546 = vpop.f32.mrb[0].mxu0
    %1547 = vmatprep.mubr.bf16.mxu0 0
    %1548 = vmatmul.mubr.bf16.gmra.mrb[0].mxu0 %v1449
    %v1549 = vpop.f32.mrb[0].mxu0
    %v1550 = vadd.f32 0.0, %v1549
    %v1551 = vpop.f32.mrb[0].mxu0
    %v1552 = vpop.f32.mrb[0].mxu0
    %v1553 = vadd.f32 0.0, %v1552
    %v1554 = vpop.f32.mrb[0].mxu0
    %1555 = vdwg.mxu0
    %v1556 = vpack.c.bf16 %v1489, %v1486
    %v1557 = vpack.c.bf16 %v1497, %v1494
    %v1558 = vpack.c.bf16 %v1505, %v1502
    %v1559 = vpack.c.bf16 %v1513, %v1510
    %v1560 = vpack.c.bf16 %v1521, %v1518
    %v1561 = vpack.c.bf16 %v1529, %v1526
    %v1562 = vpack.c.bf16 %v1537, %v1534
    %v1563 = vpack.c.bf16 %v1545, %v1542
    %v1564 = vpack.c.bf16 %v1553, %v1550
    %v1709 = vunpack.c.l.b16 %v1232
    %v1710 = vunpack.c.l.b16 %v1233
    %v1711 = vunpack.c.l.b16 %v1234
    %v1712 = vunpack.c.l.b16 %v1235
    %v1713 = vunpack.c.l.b16 %v1236
    %v1714 = vunpack.c.l.b16 %v1237
    %v1715 = vunpack.c.l.b16 %v1238
    %v1716 = vunpack.c.l.b16 %v1239
    %v1717 = vunpack.c.l.b16 %v1240
    %v1718 = vunpack.c.l.b16 %v1241
    %v1719 = vunpack.c.l.b16 %v1242
    %v1720 = vunpack.c.l.b16 %v1243
    %v1721 = vunpack.c.l.b16 %v1244
    %v1722 = vunpack.c.l.b16 %v1245
    %v1723 = vunpack.c.l.b16 %v1246
    %v1724 = vunpack.c.l.b16 %v1247
    %v1725 = vunpack.c.l.b16 %v1248
    %v1726 = vunpack.c.l.b16 %v1249
    %v1727 = vunpack.c.l.b16 %v1250
    %v1728 = vunpack.c.l.b16 %v1251
    %v1729 = vunpack.c.l.b16 %v1252
    %v1730 = vunpack.c.l.b16 %v1253
    %v1731 = vunpack.c.l.b16 %v1254
    %v1732 = vunpack.c.l.b16 %v1255
    %v1733 = vunpack.c.l.b16 %v1256
    %v1734 = vunpack.c.l.b16 %v1257
    %v1735 = vunpack.c.l.b16 %v1258
    %v1736 = vunpack.c.l.b16 %v1259
    %v1737 = vunpack.c.l.b16 %v1260
    %v1738 = vunpack.c.l.b16 %v1261
    %v1739 = vunpack.c.l.b16 %v1262
    %v1740 = vunpack.c.l.b16 %v1263
    %v1741 = vunpack.c.l.b16 %v1264
    %v1742 = vunpack.c.l.b16 %v1265
    %v1743 = vunpack.c.l.b16 %v1266
    %v1744 = vunpack.c.l.b16 %v1267
    %v1745 = vunpack.c.l.b16 %v1268
    %v1746 = vunpack.c.l.b16 %v1269
    %v1747 = vunpack.c.l.b16 %v1270
    %v1748 = vunpack.c.l.b16 %v1271
    %v1749 = vunpack.c.l.b16 %v1272
    %v1750 = vunpack.c.l.b16 %v1273
    %v1751 = vunpack.c.l.b16 %v1274
    %v1752 = vunpack.c.l.b16 %v1275
    %v1753 = vunpack.c.l.b16 %v1276
    %v1754 = vunpack.c.l.b16 %v1277
    %v1755 = vunpack.c.l.b16 %v1278
    %v1756 = vunpack.c.l.b16 %v1279
    %v1757 = vunpack.c.l.b16 %v1280
    %v1758 = vunpack.c.l.b16 %v1281
    %v1759 = vunpack.c.l.b16 %v1282
    %v1760 = vunpack.c.l.b16 %v1283
    %v1761 = vunpack.c.l.b16 %v1284
    %v1762 = vunpack.c.l.b16 %v1285
    %v1763 = vunpack.c.l.b16 %v1286
    %v1764 = vunpack.c.l.b16 %v1287
    %v1765 = vunpack.c.l.b16 %v1288
    %v1766 = vunpack.c.l.b16 %v1289
    %v1767 = vunpack.c.l.b16 %v1290
    %v1768 = vunpack.c.l.b16 %v1291
    %v1769 = vunpack.c.l.b16 %v1292
    %v1770 = vunpack.c.l.b16 %v1293
    %v1771 = vunpack.c.l.b16 %v1294
    %v1772 = vunpack.c.l.b16 %v1295
    %v1773 = vunpack.c.l.b16 %v1296
    %v1774 = vunpack.c.l.b16 %v1297
    %v1775 = vunpack.c.l.b16 %v1298
    %v1776 = vunpack.c.l.b16 %v1299
    %v1777 = vunpack.c.l.b16 %v1300
    %v1778 = vunpack.c.l.b16 %v1301
    %v1779 = vunpack.c.l.b16 %v1302
    %v1780 = vunpack.c.l.b16 %v1303
    %v1781 = vunpack.c.l.b16 %v1304
    %v1782 = vunpack.c.l.b16 %v1305
    %v1783 = vunpack.c.l.b16 %v1306
    %v1784 = vunpack.c.l.b16 %v1307
    %v1785 = vunpack.c.l.b16 %v1308
    %v1786 = vunpack.c.l.b16 %v1309
    %v1787 = vunpack.c.l.b16 %v1310
    %v1788 = vunpack.c.l.b16 %v1311
    %v1789 = vunpack.c.l.b16 %v1312
    %v1790 = vunpack.c.l.b16 %v1313
    %v1791 = vunpack.c.l.b16 %v1314
    %v1792 = vunpack.c.l.b16 %v1315
    %v1793 = vunpack.c.l.b16 %v1316
    %v1794 = vunpack.c.l.b16 %v1317
    %v1795 = vunpack.c.l.b16 %v1318
    %v1796 = vunpack.c.l.b16 %v1319
    %v1797 = vunpack.c.l.b16 %v1320
    %v1798 = vunpack.c.l.b16 %v1321
    %v1799 = vunpack.c.l.b16 %v1322
    %v1800 = vunpack.c.l.b16 %v1323
    %v1801 = vunpack.c.l.b16 %v1324
    %v1802 = vunpack.c.l.b16 %v1325
    %v1803 = vunpack.c.l.b16 %v1326
    %v1804 = vunpack.c.l.b16 %v1327
    %v1805 = vunpack.c.l.b16 %v1328
    %v1806 = vunpack.c.l.b16 %v1329
    %v1807 = vunpack.c.l.b16 %v1330
    %v1808 = vunpack.c.l.b16 %v1331
    %v1809 = vunpack.c.l.b16 %v1332
    %v1810 = vunpack.c.l.b16 %v1333
    %v1811 = vunpack.c.l.b16 %v1334
    %v1812 = vunpack.c.l.b16 %v1335
    %v1813 = vunpack.c.l.b16 %v1336
    %v1814 = vunpack.c.l.b16 %v1337
    %v1815 = vunpack.c.l.b16 %v1338
    %v1816 = vunpack.c.l.b16 %v1339
    %v1817 = vunpack.c.l.b16 %v1340
    %v1818 = vunpack.c.l.b16 %v1341
    %v1819 = vunpack.c.l.b16 %v1342
    %v1820 = vunpack.c.l.b16 %v1343
    %v1821 = vunpack.c.l.b16 %v1344
    %v1822 = vunpack.c.l.b16 %v1345
    %v1823 = vunpack.c.l.b16 %v1346
    %v1824 = vunpack.c.l.b16 %v1347
    %v1825 = vunpack.c.l.b16 %v1348
    %v1826 = vunpack.c.l.b16 %v1349
    %v1827 = vunpack.c.l.b16 %v1350
    %v1828 = vunpack.c.l.b16 %v1351
    %v1829 = vunpack.c.l.b16 %v1352
    %v1830 = vunpack.c.l.b16 %v1353
    %v1831 = vunpack.c.l.b16 %v1354
    %v1832 = vunpack.c.l.b16 %v1355
    %v1833 = vunpack.c.l.b16 %v1356
    %v1834 = vunpack.c.l.b16 %v1357
    %v1835 = vunpack.c.l.b16 %v1358
    %v1836 = vunpack.c.l.b16 %v1359
    %v1837 = vunpack.c.l.b16 %v1360
    %v1838 = vunpack.c.l.b16 %v1361
    %v1839 = vunpack.c.l.b16 %v1362
    %v1840 = vunpack.c.l.b16 %v1363
    %v1841 = vunpack.c.l.b16 %v1364
    %v1842 = vunpack.c.l.b16 %v1365
    %v1843 = vunpack.c.l.b16 %v1366
    %v1844 = vunpack.c.l.b16 %v1367
    %v1845 = vunpack.c.l.b16 %v1368
    %v1846 = vunpack.c.l.b16 %v1369
    %v1847 = vunpack.c.l.b16 %v1370
    %v1848 = vunpack.c.l.b16 %v1371
    %v1849 = vunpack.c.l.b16 %v1372
    %v1850 = vunpack.c.l.b16 %v1373
    %v1851 = vunpack.c.l.b16 %v1374
    %v1852 = vunpack.c.l.b16 %v1375
    %v1853 = vpack.c.b16 %v1710, %v1709
    %v1854 = vpack.c.b16 %v1712, %v1711
    %v1855 = vpack.c.b16 %v1714, %v1713
    %v1856 = vpack.c.b16 %v1716, %v1715
    %v1857 = vpack.c.b16 %v1718, %v1717
    %v1858 = vpack.c.b16 %v1720, %v1719
    %v1859 = vpack.c.b16 %v1722, %v1721
    %v1860 = vpack.c.b16 %v1724, %v1723
    %v1861 = vpack.c.b16 %v1726, %v1725
    %v1862 = vpack.c.b16 %v1728, %v1727
    %v1863 = vpack.c.b16 %v1730, %v1729
    %v1864 = vpack.c.b16 %v1732, %v1731
    %v1865 = vpack.c.b16 %v1734, %v1733
    %v1866 = vpack.c.b16 %v1736, %v1735
    %v1867 = vpack.c.b16 %v1738, %v1737
    %v1868 = vpack.c.b16 %v1740, %v1739
    %v1869 = vpack.c.b16 %v1742, %v1741
    %v1870 = vpack.c.b16 %v1744, %v1743
    %v1871 = vpack.c.b16 %v1746, %v1745
    %v1872 = vpack.c.b16 %v1748, %v1747
    %v1873 = vpack.c.b16 %v1750, %v1749
    %v1874 = vpack.c.b16 %v1752, %v1751
    %v1875 = vpack.c.b16 %v1754, %v1753
    %v1876 = vpack.c.b16 %v1756, %v1755
    %v1877 = vpack.c.b16 %v1758, %v1757
    %v1878 = vpack.c.b16 %v1760, %v1759
    %v1879 = vpack.c.b16 %v1762, %v1761
    %v1880 = vpack.c.b16 %v1764, %v1763
    %v1881 = vpack.c.b16 %v1766, %v1765
    %v1882 = vpack.c.b16 %v1768, %v1767
    %v1883 = vpack.c.b16 %v1770, %v1769
    %v1884 = vpack.c.b16 %v1772, %v1771
    %v1885 = vpack.c.b16 %v1774, %v1773
    %v1886 = vpack.c.b16 %v1776, %v1775
    %v1887 = vpack.c.b16 %v1778, %v1777
    %v1888 = vpack.c.b16 %v1780, %v1779
    %v1889 = vpack.c.b16 %v1782, %v1781
    %v1890 = vpack.c.b16 %v1784, %v1783
    %v1891 = vpack.c.b16 %v1786, %v1785
    %v1892 = vpack.c.b16 %v1788, %v1787
    %v1893 = vpack.c.b16 %v1790, %v1789
    %v1894 = vpack.c.b16 %v1792, %v1791
    %v1895 = vpack.c.b16 %v1794, %v1793
    %v1896 = vpack.c.b16 %v1796, %v1795
    %v1897 = vpack.c.b16 %v1798, %v1797
    %v1898 = vpack.c.b16 %v1800, %v1799
    %v1899 = vpack.c.b16 %v1802, %v1801
    %v1900 = vpack.c.b16 %v1804, %v1803
    %v1901 = vpack.c.b16 %v1806, %v1805
    %v1902 = vpack.c.b16 %v1808, %v1807
    %v1903 = vpack.c.b16 %v1810, %v1809
    %v1904 = vpack.c.b16 %v1812, %v1811
    %v1905 = vpack.c.b16 %v1814, %v1813
    %v1906 = vpack.c.b16 %v1816, %v1815
    %v1907 = vpack.c.b16 %v1818, %v1817
    %v1908 = vpack.c.b16 %v1820, %v1819
    %v1909 = vpack.c.b16 %v1822, %v1821
    %v1910 = vpack.c.b16 %v1824, %v1823
    %v1911 = vpack.c.b16 %v1826, %v1825
    %v1912 = vpack.c.b16 %v1828, %v1827
    %v1913 = vpack.c.b16 %v1830, %v1829
    %v1914 = vpack.c.b16 %v1832, %v1831
    %v1915 = vpack.c.b16 %v1834, %v1833
    %v1916 = vpack.c.b16 %v1836, %v1835
    %v1917 = vpack.c.b16 %v1838, %v1837
    %v1918 = vpack.c.b16 %v1840, %v1839
    %v1919 = vpack.c.b16 %v1842, %v1841
    %v1920 = vpack.c.b16 %v1844, %v1843
    %v1921 = vpack.c.b16 %v1846, %v1845
    %v1922 = vpack.c.b16 %v1848, %v1847
    %v1923 = vpack.c.b16 %v1850, %v1849
    %v1924 = vpack.c.b16 %v1852, %v1851
    %1997 = vmatprep.subr.bf16.mxu0 0
    %1998 = vmatpush1.bf16.msra.mxu0 %v1853
    %1999 = vmatprep.subr.bf16.mxu0 0
    %2000 = vmatpush1.bf16.msra.mxu0 %v1854
    %2001 = vmatprep.subr.bf16.mxu0 0
    %2002 = vmatpush1.bf16.msra.mxu0 %v1855
    %2003 = vmatprep.subr.bf16.mxu0 0
    %2004 = vmatpush1.bf16.msra.mxu0 %v1856
    %2005 = vmatprep.subr.bf16.mxu0 0
    %2006 = vmatpush1.bf16.msra.mxu0 %v1857
    %2007 = vmatprep.subr.bf16.mxu0 0
    %2008 = vmatpush1.bf16.msra.mxu0 %v1858
    %2009 = vmatprep.subr.bf16.mxu0 0
    %2010 = vmatpush1.bf16.msra.mxu0 %v1859
    %2011 = vmatprep.subr.bf16.mxu0 0
    %2012 = vmatpush1.bf16.msra.mxu0 %v1860
    %2013 = vmatprep.subr.bf16.mxu0 0
    %2014 = vmatpush1.bf16.msra.mxu0 %v1861
    %2015 = vmatprep.subr.bf16.mxu0 0
    %2016 = vmatpush1.bf16.msra.mxu0 %v1862
    %2017 = vmatprep.subr.bf16.mxu0 0
    %2018 = vmatpush1.bf16.msra.mxu0 %v1863
    %2019 = vmatprep.subr.bf16.mxu0 0
    %2020 = vmatpush1.bf16.msra.mxu0 %v1864
    %2021 = vmatprep.subr.bf16.mxu0 0
    %2022 = vmatpush1.bf16.msra.mxu0 %v1865
    %2023 = vmatprep.subr.bf16.mxu0 0
    %2024 = vmatpush1.bf16.msra.mxu0 %v1866
    %2025 = vmatprep.subr.bf16.mxu0 0
    %2026 = vmatpush1.bf16.msra.mxu0 %v1867
    %2027 = vmatprep.subr.bf16.mxu0 0
    %2028 = vmatpush1.bf16.msra.mxu0 %v1868
    %2029 = vmatprep.mubr.bf16.mxu0 %v1557
    %2030 = vmatmul.mubr.bf16.gmra.mrb[0].mxu0 %v1556
    %v2031 = vpop.f32.mrb[0].mxu0
    %v2032 = vadd.f32 %v1376, %v2031
    %v2033 = vpop.f32.mrb[0].mxu0
    %v2034 = vpop.f32.mrb[0].mxu0
    %v2035 = vadd.f32 %v1376, %v2034
    %v2036 = vpop.f32.mrb[0].mxu0
    %2037 = vdwg.mxu0
    %2038 = vmatprep.subr.bf16.mxu0 0
    %2039 = vmatpush1.bf16.msra.mxu0 %v1869
    %2040 = vmatprep.subr.bf16.mxu0 0
    %2041 = vmatpush1.bf16.msra.mxu0 %v1870
    %2042 = vmatprep.subr.bf16.mxu0 0
    %2043 = vmatpush1.bf16.msra.mxu0 %v1871
    %2044 = vmatprep.subr.bf16.mxu0 0
    %2045 = vmatpush1.bf16.msra.mxu0 %v1872
    %2046 = vmatprep.subr.bf16.mxu0 0
    %2047 = vmatpush1.bf16.msra.mxu0 %v1873
    %2048 = vmatprep.subr.bf16.mxu0 0
    %2049 = vmatpush1.bf16.msra.mxu0 %v1874
    %2050 = vmatprep.subr.bf16.mxu0 0
    %2051 = vmatpush1.bf16.msra.mxu0 %v1875
    %2052 = vmatprep.subr.bf16.mxu0 0
    %2053 = vmatpush1.bf16.msra.mxu0 %v1876
    %2054 = vmatprep.subr.bf16.mxu0 0
    %2055 = vmatpush1.bf16.msra.mxu0 %v1877
    %2056 = vmatprep.subr.bf16.mxu0 0
    %2057 = vmatpush1.bf16.msra.mxu0 %v1878
    %2058 = vmatprep.subr.bf16.mxu0 0
    %2059 = vmatpush1.bf16.msra.mxu0 %v1879
    %2060 = vmatprep.subr.bf16.mxu0 0
    %2061 = vmatpush1.bf16.msra.mxu0 %v1880
    %2062 = vmatprep.subr.bf16.mxu0 0
    %2063 = vmatpush1.bf16.msra.mxu0 %v1881
    %2064 = vmatprep.subr.bf16.mxu0 0
    %2065 = vmatpush1.bf16.msra.mxu0 %v1882
    %2066 = vmatprep.subr.bf16.mxu0 0
    %2067 = vmatpush1.bf16.msra.mxu0 %v1883
    %2068 = vmatprep.subr.bf16.mxu0 0
    %2069 = vmatpush1.bf16.msra.mxu0 %v1884
    %2070 = vmatprep.mubr.bf16.mxu0 %v1559
    %2071 = vmatmul.mubr.bf16.gmra.mrb[0].mxu0 %v1558
    %v2072 = vpop.f32.mrb[0].mxu0
    %v2073 = vadd.f32 %v2032, %v2072
    %v2074 = vpop.f32.mrb[0].mxu0
    %v2075 = vpop.f32.mrb[0].mxu0
    %v2076 = vadd.f32 %v2035, %v2075
    %v2077 = vpop.f32.mrb[0].mxu0
    %2078 = vdwg.mxu0
    %2079 = vmatprep.subr.bf16.mxu0 0
    %2080 = vmatpush1.bf16.msra.mxu0 %v1885
    %2081 = vmatprep.subr.bf16.mxu0 0
    %2082 = vmatpush1.bf16.msra.mxu0 %v1886
    %2083 = vmatprep.subr.bf16.mxu0 0
    %2084 = vmatpush1.bf16.msra.mxu0 %v1887
    %2085 = vmatprep.subr.bf16.mxu0 0
    %2086 = vmatpush1.bf16.msra.mxu0 %v1888
    %2087 = vmatprep.subr.bf16.mxu0 0
    %2088 = vmatpush1.bf16.msra.mxu0 %v1889
    %2089 = vmatprep.subr.bf16.mxu0 0
    %2090 = vmatpush1.bf16.msra.mxu0 %v1890
    %2091 = vmatprep.subr.bf16.mxu0 0
    %2092 = vmatpush1.bf16.msra.mxu0 %v1891
    %2093 = vmatprep.subr.bf16.mxu0 0
    %2094 = vmatpush1.bf16.msra.mxu0 %v1892
    %2095 = vmatprep.subr.bf16.mxu0 0
    %2096 = vmatpush1.bf16.msra.mxu0 %v1893
    %2097 = vmatprep.subr.bf16.mxu0 0
    %2098 = vmatpush1.bf16.msra.mxu0 %v1894
    %2099 = vmatprep.subr.bf16.mxu0 0
    %2100 = vmatpush1.bf16.msra.mxu0 %v1895
    %2101 = vmatprep.subr.bf16.mxu0 0
    %2102 = vmatpush1.bf16.msra.mxu0 %v1896
    %2103 = vmatprep.subr.bf16.mxu0 0
    %2104 = vmatpush1.bf16.msra.mxu0 %v1897
    %2105 = vmatprep.subr.bf16.mxu0 0
    %2106 = vmatpush1.bf16.msra.mxu0 %v1898
    %2107 = vmatprep.subr.bf16.mxu0 0
    %2108 = vmatpush1.bf16.msra.mxu0 %v1899
    %2109 = vmatprep.subr.bf16.mxu0 0
    %2110 = vmatpush1.bf16.msra.mxu0 %v1900
    %2111 = vmatprep.mubr.bf16.mxu0 %v1561
    %2112 = vmatmul.mubr.bf16.gmra.mrb[0].mxu0 %v1560
    %v2113 = vpop.f32.mrb[0].mxu0
    %v2114 = vadd.f32 %v2073, %v2113
    %v2115 = vpop.f32.mrb[0].mxu0
    %v2116 = vpop.f32.mrb[0].mxu0
    %v2117 = vadd.f32 %v2076, %v2116
    %v2118 = vpop.f32.mrb[0].mxu0
    %2119 = vdwg.mxu0
    %2120 = vmatprep.subr.bf16.mxu0 0
    %2121 = vmatpush1.bf16.msra.mxu0 %v1901
    %2122 = vmatprep.subr.bf16.mxu0 0
    %2123 = vmatpush1.bf16.msra.mxu0 %v1902
    %2124 = vmatprep.subr.bf16.mxu0 0
    %2125 = vmatpush1.bf16.msra.mxu0 %v1903
    %2126 = vmatprep.subr.bf16.mxu0 0
    %2127 = vmatpush1.bf16.msra.mxu0 %v1904
    %2128 = vmatprep.subr.bf16.mxu0 0
    %2129 = vmatpush1.bf16.msra.mxu0 %v1905
    %2130 = vmatprep.subr.bf16.mxu0 0
    %2131 = vmatpush1.bf16.msra.mxu0 %v1906
    %2132 = vmatprep.subr.bf16.mxu0 0
    %2133 = vmatpush1.bf16.msra.mxu0 %v1907
    %2134 = vmatprep.subr.bf16.mxu0 0
    %2135 = vmatpush1.bf16.msra.mxu0 %v1908
    %2136 = vmatprep.subr.bf16.mxu0 0
    %2137 = vmatpush1.bf16.msra.mxu0 %v1909
    %2138 = vmatprep.subr.bf16.mxu0 0
    %2139 = vmatpush1.bf16.msra.mxu0 %v1910
    %2140 = vmatprep.subr.bf16.mxu0 0
    %2141 = vmatpush1.bf16.msra.mxu0 %v1911
    %2142 = vmatprep.subr.bf16.mxu0 0
    %2143 = vmatpush1.bf16.msra.mxu0 %v1912
    %2144 = vmatprep.subr.bf16.mxu0 0
    %2145 = vmatpush1.bf16.msra.mxu0 %v1913
    %2146 = vmatprep.subr.bf16.mxu0 0
    %2147 = vmatpush1.bf16.msra.mxu0 %v1914
    %2148 = vmatprep.subr.bf16.mxu0 0
    %2149 = vmatpush1.bf16.msra.mxu0 %v1915
    %2150 = vmatprep.subr.bf16.mxu0 0
    %2151 = vmatpush1.bf16.msra.mxu0 %v1916
    %2152 = vmatprep.mubr.bf16.mxu0 %v1563
    %2153 = vmatmul.mubr.bf16.gmra.mrb[0].mxu0 %v1562
    %v2154 = vpop.f32.mrb[0].mxu0
    %v2155 = vadd.f32 %v2114, %v2154
    %v2156 = vpop.f32.mrb[0].mxu0
    %v2157 = vpop.f32.mrb[0].mxu0
    %v2158 = vadd.f32 %v2117, %v2157
    %v2159 = vpop.f32.mrb[0].mxu0
    %2160 = vdwg.mxu0
    %2161 = vmatprep.subr.bf16.mxu0 0
    %2162 = vmatpush1.bf16.msra.mxu0 %v1917
    %2163 = vmatprep.subr.bf16.mxu0 0
    %2164 = vmatpush1.bf16.msra.mxu0 %v1918
    %2165 = vmatprep.subr.bf16.mxu0 0
    %2166 = vmatpush1.bf16.msra.mxu0 %v1919
    %2167 = vmatprep.subr.bf16.mxu0 0
    %2168 = vmatpush1.bf16.msra.mxu0 %v1920
    %2169 = vmatprep.subr.bf16.mxu0 0
    %2170 = vmatpush1.bf16.msra.mxu0 %v1921
    %2171 = vmatprep.subr.bf16.mxu0 0
    %2172 = vmatpush1.bf16.msra.mxu0 %v1922
    %2173 = vmatprep.subr.bf16.mxu0 0
    %2174 = vmatpush1.bf16.msra.mxu0 %v1923
    %2175 = vmatprep.subr.bf16.mxu0 0
    %2176 = vmatpush1.bf16.msra.mxu0 %v1924
    %2177 = vmatprep.subr.bf16.mxu0 0
    %2178 = vmatpush1.bf16.msra.mxu0 0
    %2179 = vmatprep.subr.bf16.mxu0 0
    %2180 = vmatpush1.bf16.msra.mxu0 0
    %2181 = vmatprep.subr.bf16.mxu0 0
    %2182 = vmatpush1.bf16.msra.mxu0 0
    %2183 = vmatprep.subr.bf16.mxu0 0
    %2184 = vmatpush1.bf16.msra.mxu0 0
    %2185 = vmatprep.subr.bf16.mxu0 0
    %2186 = vmatpush1.bf16.msra.mxu0 0
    %2187 = vmatprep.subr.bf16.mxu0 0
    %2188 = vmatpush1.bf16.msra.mxu0 0
    %2189 = vmatprep.subr.bf16.mxu0 0
    %2190 = vmatpush1.bf16.msra.mxu0 0
    %2191 = vmatprep.subr.bf16.mxu0 0
    %2192 = vmatpush1.bf16.msra.mxu0 0
    %2193 = vmatprep.mubr.bf16.mxu0 0
    %2194 = vmatmul.mubr.bf16.gmra.mrb[0].mxu0 %v1564
    %v2195 = vpop.f32.mrb[0].mxu0
    %v2196 = vadd.f32 %v2155, %v2195
    %v2197 = vpop.f32.mrb[0].mxu0
    %v2198 = vpop.f32.mrb[0].mxu0
    %v2199 = vadd.f32 %v2158, %v2198
    %v2200 = vpop.f32.mrb[0].mxu0
    %2201 = vdwg.mxu0
    %vm2202 = vcmp.gt.f32.partialorder %v2196, 0.0
    %vm2203 = vcmp.gt.f32.partialorder %v2199, 0.0
    %v2204 = vmul.f32 %v2196, 0.01
    %v2205 = vmul.f32 %v2199, 0.01
    %v2206 = vsel %vm2202, %v2196, %v2204
    %v2207 = vsel %vm2203, %v2199, %v2205
    %v2208 = vld [vmem:[#allocation2 + $0x280] sm:$0xf]
    %v2209 = vld [vmem:[#allocation2 + $0x284] sm:$0xf]
    %v2210 = vld [vmem:[#allocation2 + $0x288] sm:$0xf]
    %v2211 = vld [vmem:[#allocation2 + $0x28c] sm:$0xf]
    %v2212 = vld [vmem:[#allocation2 + $0x290] sm:$0xf]
    %v2213 = vld [vmem:[#allocation2 + $0x294] sm:$0xf]
    %v2214 = vld [vmem:[#allocation2 + $0x298] sm:$0xf]
    %v2215 = vld [vmem:[#allocation2 + $0x29c] sm:$0xf]
    %v2216 = vld [vmem:[#allocation2 + $0x2a0] sm:$0xf]
    %v2217 = vld [vmem:[#allocation2 + $0x2a4] sm:$0xf]
    %v2218 = vld [vmem:[#allocation2 + $0x2a8] sm:$0xf]
    %v2219 = vld [vmem:[#allocation2 + $0x2ac] sm:$0xf]
    %v2220 = vld [vmem:[#allocation2 + $0x2b0] sm:$0xf]
    %v2221 = vld [vmem:[#allocation2 + $0x2b4] sm:$0xf]
    %v2222 = vld [vmem:[#allocation2 + $0x2b8] sm:$0xf]
    %v2223 = vld [vmem:[#allocation2 + $0x2bc] sm:$0xf]
    %v2224 = vld [vmem:[#allocation6 + $0x2] ss:$0 sm:$0xff]
    %v2225 = vpack.c.bf16 %v2207, %v2206
    %v2242 = vunpack.c.l.b16 %v2208
    %v2243 = vunpack.c.l.b16 %v2209
    %v2244 = vunpack.c.l.b16 %v2210
    %v2245 = vunpack.c.l.b16 %v2211
    %v2246 = vunpack.c.l.b16 %v2212
    %v2247 = vunpack.c.l.b16 %v2213
    %v2248 = vunpack.c.l.b16 %v2214
    %v2249 = vunpack.c.l.b16 %v2215
    %v2250 = vunpack.c.l.b16 %v2216
    %v2251 = vunpack.c.l.b16 %v2217
    %v2252 = vunpack.c.l.b16 %v2218
    %v2253 = vunpack.c.l.b16 %v2219
    %v2254 = vunpack.c.l.b16 %v2220
    %v2255 = vunpack.c.l.b16 %v2221
    %v2256 = vunpack.c.l.b16 %v2222
    %v2257 = vunpack.c.l.b16 %v2223
    %v2258 = vpack.c.b16 %v2243, %v2242
    %v2259 = vpack.c.b16 %v2245, %v2244
    %v2260 = vpack.c.b16 %v2247, %v2246
    %v2261 = vpack.c.b16 %v2249, %v2248
    %v2262 = vpack.c.b16 %v2251, %v2250
    %v2263 = vpack.c.b16 %v2253, %v2252
    %v2264 = vpack.c.b16 %v2255, %v2254
    %v2265 = vpack.c.b16 %v2257, %v2256
    %2274 = vmatprep.subr.bf16.mxu0 0
    %2275 = vmatpush1.bf16.msra.mxu0 %v2258
    %2276 = vmatprep.subr.bf16.mxu0 0
    %2277 = vmatpush1.bf16.msra.mxu0 %v2259
    %2278 = vmatprep.subr.bf16.mxu0 0
    %2279 = vmatpush1.bf16.msra.mxu0 %v2260
    %2280 = vmatprep.subr.bf16.mxu0 0
    %2281 = vmatpush1.bf16.msra.mxu0 %v2261
    %2282 = vmatprep.subr.bf16.mxu0 0
    %2283 = vmatpush1.bf16.msra.mxu0 %v2262
    %2284 = vmatprep.subr.bf16.mxu0 0
    %2285 = vmatpush1.bf16.msra.mxu0 %v2263
    %2286 = vmatprep.subr.bf16.mxu0 0
    %2287 = vmatpush1.bf16.msra.mxu0 %v2264
    %2288 = vmatprep.subr.bf16.mxu0 0
    %2289 = vmatpush1.bf16.msra.mxu0 %v2265
    %2290 = vmatprep.subr.bf16.mxu0 0
    %2291 = vmatpush1.bf16.msra.mxu0 0
    %2292 = vmatprep.subr.bf16.mxu0 0
    %2293 = vmatpush1.bf16.msra.mxu0 0
    %2294 = vmatprep.subr.bf16.mxu0 0
    %2295 = vmatpush1.bf16.msra.mxu0 0
    %2296 = vmatprep.subr.bf16.mxu0 0
    %2297 = vmatpush1.bf16.msra.mxu0 0
    %2298 = vmatprep.subr.bf16.mxu0 0
    %2299 = vmatpush1.bf16.msra.mxu0 0
    %2300 = vmatprep.subr.bf16.mxu0 0
    %2301 = vmatpush1.bf16.msra.mxu0 0
    %2302 = vmatprep.subr.bf16.mxu0 0
    %2303 = vmatpush1.bf16.msra.mxu0 0
    %2304 = vmatprep.subr.bf16.mxu0 0
    %2305 = vmatpush1.bf16.msra.mxu0 0
    %2306 = vmatprep.mubr.bf16.mxu0 0
    %2307 = vmatmul.mubr.bf16.gmra.mrb[0].mxu0 %v2225
    %v2308 = vpop.f32.mrb[0].mxu0
    %v2309 = vadd.f32 %v2224, %v2308
    %v2310 = vpop.f32.mrb[0].mxu0
    %v2311 = vpop.f32.mrb[0].mxu0
    %v2312 = vadd.f32 %v2224, %v2311
    %v2313 = vpop.f32.mrb[0].mxu0
    %2314 = vdwg.mxu0
    %vm2315 = vcmp.gt.f32.partialorder %v2309, 0.0
    %vm2316 = vcmp.gt.f32.partialorder %v2312, 0.0
    %v2317 = vmul.f32 %v2309, 0.01
    %v2318 = vmul.f32 %v2312, 0.01
    %v2319 = vsel %vm2315, %v2309, %v2317
    %v2320 = vsel %vm2316, %v2312, %v2318
    %v2321 = vld [vmem:[#allocation2 + $0x2c0] sm:$0xf]
    %v2322 = vld [vmem:[#allocation2 + $0x2c4] sm:$0xf]
    %v2323 = vld [vmem:[#allocation2 + $0x2c8] sm:$0xf]
    %v2324 = vld [vmem:[#allocation2 + $0x2cc] sm:$0xf]
    %v2325 = vld [vmem:[#allocation2 + $0x2d0] sm:$0xf]
    %v2326 = vld [vmem:[#allocation2 + $0x2d4] sm:$0xf]
    %v2327 = vld [vmem:[#allocation2 + $0x2d8] sm:$0xf]
    %v2328 = vld [vmem:[#allocation2 + $0x2dc] sm:$0xf]
    %v2329 = vld [vmem:[#allocation2 + $0x2e0] sm:$0xf]
    %v2330 = vld [vmem:[#allocation2 + $0x2e4] sm:$0xf]
    %v2331 = vld [vmem:[#allocation2 + $0x2e8] sm:$0xf]
    %v2332 = vld [vmem:[#allocation2 + $0x2ec] sm:$0xf]
    %v2333 = vld [vmem:[#allocation2 + $0x2f0] sm:$0xf]
    %v2334 = vld [vmem:[#allocation2 + $0x2f4] sm:$0xf]
    %v2335 = vld [vmem:[#allocation2 + $0x2f8] sm:$0xf]
    %v2336 = vld [vmem:[#allocation2 + $0x2fc] sm:$0xf]
    %v2337 = vld [vmem:[#allocation2 + $0x300] sm:$0xf]
    %v2338 = vld [vmem:[#allocation2 + $0x304] sm:$0xf]
    %v2339 = vld [vmem:[#allocation2 + $0x308] sm:$0xf]
    %v2340 = vld [vmem:[#allocation2 + $0x30c] sm:$0xf]
    %v2341 = vld [vmem:[#allocation2 + $0x310] sm:$0xf]
    %v2342 = vld [vmem:[#allocation2 + $0x314] sm:$0xf]
    %v2343 = vld [vmem:[#allocation2 + $0x318] sm:$0xf]
    %v2344 = vld [vmem:[#allocation2 + $0x31c] sm:$0xf]
    %v2345 = vld [vmem:[#allocation2 + $0x320] sm:$0xf]
    %v2346 = vld [vmem:[#allocation2 + $0x324] sm:$0xf]
    %v2347 = vld [vmem:[#allocation2 + $0x328] sm:$0xf]
    %v2348 = vld [vmem:[#allocation2 + $0x32c] sm:$0xf]
    %v2349 = vld [vmem:[#allocation2 + $0x330] sm:$0xf]
    %v2350 = vld [vmem:[#allocation2 + $0x334] sm:$0xf]
    %v2351 = vld [vmem:[#allocation2 + $0x338] sm:$0xf]
    %v2352 = vld [vmem:[#allocation2 + $0x33c] sm:$0xf]
    %v2353 = vld [vmem:[#allocation2 + $0x340] sm:$0xf]
    %v2354 = vld [vmem:[#allocation2 + $0x344] sm:$0xf]
    %v2355 = vld [vmem:[#allocation2 + $0x348] sm:$0xf]
    %v2356 = vld [vmem:[#allocation2 + $0x34c] sm:$0xf]
    %v2357 = vld [vmem:[#allocation2 + $0x350] sm:$0xf]
    %v2358 = vld [vmem:[#allocation2 + $0x354] sm:$0xf]
    %v2359 = vld [vmem:[#allocation2 + $0x358] sm:$0xf]
    %v2360 = vld [vmem:[#allocation2 + $0x35c] sm:$0xf]
    %v2361 = vld [vmem:[#allocation2 + $0x360] sm:$0xf]
    %v2362 = vld [vmem:[#allocation2 + $0x364] sm:$0xf]
    %v2363 = vld [vmem:[#allocation2 + $0x368] sm:$0xf]
    %v2364 = vld [vmem:[#allocation2 + $0x36c] sm:$0xf]
    %v2365 = vld [vmem:[#allocation2 + $0x370] sm:$0xf]
    %v2366 = vld [vmem:[#allocation2 + $0x374] sm:$0xf]
    %v2367 = vld [vmem:[#allocation2 + $0x378] sm:$0xf]
    %v2368 = vld [vmem:[#allocation2 + $0x37c] sm:$0xf]
    %v2369 = vld [vmem:[#allocation2 + $0x380] sm:$0xf]
    %v2370 = vld [vmem:[#allocation2 + $0x384] sm:$0xf]
    %v2371 = vld [vmem:[#allocation2 + $0x388] sm:$0xf]
    %v2372 = vld [vmem:[#allocation2 + $0x38c] sm:$0xf]
    %v2373 = vld [vmem:[#allocation2 + $0x390] sm:$0xf]
    %v2374 = vld [vmem:[#allocation2 + $0x394] sm:$0xf]
    %v2375 = vld [vmem:[#allocation2 + $0x398] sm:$0xf]
    %v2376 = vld [vmem:[#allocation2 + $0x39c] sm:$0xf]
    %v2377 = vld [vmem:[#allocation2 + $0x3a0] sm:$0xf]
    %v2378 = vld [vmem:[#allocation2 + $0x3a4] sm:$0xf]
    %v2379 = vld [vmem:[#allocation2 + $0x3a8] sm:$0xf]
    %v2380 = vld [vmem:[#allocation2 + $0x3ac] sm:$0xf]
    %v2381 = vld [vmem:[#allocation2 + $0x3b0] sm:$0xf]
    %v2382 = vld [vmem:[#allocation2 + $0x3b4] sm:$0xf]
    %v2383 = vld [vmem:[#allocation2 + $0x3b8] sm:$0xf]
    %v2384 = vld [vmem:[#allocation2 + $0x3bc] sm:$0xf]
    %v2385 = vld [vmem:[#allocation2 + $0x3c0] sm:$0xf]
    %v2386 = vld [vmem:[#allocation2 + $0x3c4] sm:$0xf]
    %v2387 = vld [vmem:[#allocation2 + $0x3c8] sm:$0xf]
    %v2388 = vld [vmem:[#allocation2 + $0x3cc] sm:$0xf]
    %v2389 = vld [vmem:[#allocation2 + $0x3d0] sm:$0xf]
    %v2390 = vld [vmem:[#allocation2 + $0x3d4] sm:$0xf]
    %v2391 = vld [vmem:[#allocation2 + $0x3d8] sm:$0xf]
    %v2392 = vld [vmem:[#allocation2 + $0x3dc] sm:$0xf]
    %v2393 = vld [vmem:[#allocation2 + $0x3e0] sm:$0xf]
    %v2394 = vld [vmem:[#allocation2 + $0x3e4] sm:$0xf]
    %v2395 = vld [vmem:[#allocation2 + $0x3e8] sm:$0xf]
    %v2396 = vld [vmem:[#allocation2 + $0x3ec] sm:$0xf]
    %v2397 = vld [vmem:[#allocation2 + $0x3f0] sm:$0xf]
    %v2398 = vld [vmem:[#allocation2 + $0x3f4] sm:$0xf]
    %v2399 = vld [vmem:[#allocation2 + $0x3f8] sm:$0xf]
    %v2400 = vld [vmem:[#allocation2 + $0x3fc] sm:$0xf]
    %v2401 = vld [vmem:[#allocation2 + $0x400] sm:$0xf]
    %v2402 = vld [vmem:[#allocation2 + $0x404] sm:$0xf]
    %v2403 = vld [vmem:[#allocation2 + $0x408] sm:$0xf]
    %v2404 = vld [vmem:[#allocation2 + $0x40c] sm:$0xf]
    %v2405 = vld [vmem:[#allocation2 + $0x410] sm:$0xf]
    %v2406 = vld [vmem:[#allocation2 + $0x414] sm:$0xf]
    %v2407 = vld [vmem:[#allocation2 + $0x418] sm:$0xf]
    %v2408 = vld [vmem:[#allocation2 + $0x41c] sm:$0xf]
    %v2409 = vld [vmem:[#allocation2 + $0x420] sm:$0xf]
    %v2410 = vld [vmem:[#allocation2 + $0x424] sm:$0xf]
    %v2411 = vld [vmem:[#allocation2 + $0x428] sm:$0xf]
    %v2412 = vld [vmem:[#allocation2 + $0x42c] sm:$0xf]
    %v2413 = vld [vmem:[#allocation2 + $0x430] sm:$0xf]
    %v2414 = vld [vmem:[#allocation2 + $0x434] sm:$0xf]
    %v2415 = vld [vmem:[#allocation2 + $0x438] sm:$0xf]
    %v2416 = vld [vmem:[#allocation2 + $0x43c] sm:$0xf]
    %v2417 = vld [vmem:[#allocation2 + $0x440] sm:$0xf]
    %v2418 = vld [vmem:[#allocation2 + $0x444] sm:$0xf]
    %v2419 = vld [vmem:[#allocation2 + $0x448] sm:$0xf]
    %v2420 = vld [vmem:[#allocation2 + $0x44c] sm:$0xf]
    %v2421 = vld [vmem:[#allocation2 + $0x450] sm:$0xf]
    %v2422 = vld [vmem:[#allocation2 + $0x454] sm:$0xf]
    %v2423 = vld [vmem:[#allocation2 + $0x458] sm:$0xf]
    %v2424 = vld [vmem:[#allocation2 + $0x45c] sm:$0xf]
    %v2425 = vld [vmem:[#allocation2 + $0x460] sm:$0xf]
    %v2426 = vld [vmem:[#allocation2 + $0x464] sm:$0xf]
    %v2427 = vld [vmem:[#allocation2 + $0x468] sm:$0xf]
    %v2428 = vld [vmem:[#allocation2 + $0x46c] sm:$0xf]
    %v2429 = vld [vmem:[#allocation2 + $0x470] sm:$0xf]
    %v2430 = vld [vmem:[#allocation2 + $0x474] sm:$0xf]
    %v2431 = vld [vmem:[#allocation2 + $0x478] sm:$0xf]
    %v2432 = vld [vmem:[#allocation2 + $0x47c] sm:$0xf]
    %v2433 = vld [vmem:[#allocation2 + $0x480] sm:$0xf]
    %v2434 = vld [vmem:[#allocation2 + $0x484] sm:$0xf]
    %v2435 = vld [vmem:[#allocation2 + $0x488] sm:$0xf]
    %v2436 = vld [vmem:[#allocation2 + $0x48c] sm:$0xf]
    %v2437 = vld [vmem:[#allocation2 + $0x490] sm:$0xf]
    %v2438 = vld [vmem:[#allocation2 + $0x494] sm:$0xf]
    %v2439 = vld [vmem:[#allocation2 + $0x498] sm:$0xf]
    %v2440 = vld [vmem:[#allocation2 + $0x49c] sm:$0xf]
    %v2441 = vld [vmem:[#allocation2 + $0x4a0] sm:$0xf]
    %v2442 = vld [vmem:[#allocation2 + $0x4a4] sm:$0xf]
    %v2443 = vld [vmem:[#allocation2 + $0x4a8] sm:$0xf]
    %v2444 = vld [vmem:[#allocation2 + $0x4ac] sm:$0xf]
    %v2445 = vld [vmem:[#allocation2 + $0x4b0] sm:$0xf]
    %v2446 = vld [vmem:[#allocation2 + $0x4b4] sm:$0xf]
    %v2447 = vld [vmem:[#allocation2 + $0x4b8] sm:$0xf]
    %v2448 = vld [vmem:[#allocation2 + $0x4bc] sm:$0xf]
    %v2449 = vld [vmem:[#allocation2 + $0x4c0] sm:$0xf]
    %v2450 = vld [vmem:[#allocation2 + $0x4c4] sm:$0xf]
    %v2451 = vld [vmem:[#allocation2 + $0x4c8] sm:$0xf]
    %v2452 = vld [vmem:[#allocation2 + $0x4cc] sm:$0xf]
    %v2453 = vld [vmem:[#allocation2 + $0x4d0] sm:$0xf]
    %v2454 = vld [vmem:[#allocation2 + $0x4d4] sm:$0xf]
    %v2455 = vld [vmem:[#allocation2 + $0x4d8] sm:$0xf]
    %v2456 = vld [vmem:[#allocation2 + $0x4dc] sm:$0xf]
    %v2457 = vld [vmem:[#allocation2 + $0x4e0] sm:$0xf]
    %v2458 = vld [vmem:[#allocation2 + $0x4e4] sm:$0xf]
    %v2459 = vld [vmem:[#allocation2 + $0x4e8] sm:$0xf]
    %v2460 = vld [vmem:[#allocation2 + $0x4ec] sm:$0xf]
    %v2461 = vld [vmem:[#allocation2 + $0x4f0] sm:$0xf]
    %v2462 = vld [vmem:[#allocation2 + $0x4f4] sm:$0xf]
    %v2463 = vld [vmem:[#allocation2 + $0x4f8] sm:$0xf]
    %v2464 = vld [vmem:[#allocation2 + $0x4fc] sm:$0xf]
    %v2465 = vld [vmem:[#allocation6 + $0x3] ss:$0 sm:$0xff]
    %v2466 = vpack.c.bf16 %v2320, %v2319
    %2467 = vmatprep.subr.bf16.mxu0 0
    %2468 = vmatpush1.bf16.msra.mxu0 %v2466
    %2469 = vmatprep.subr.bf16.mxu0 0
    %2470 = vmatpush1.bf16.msra.mxu0 0
    %2471 = vmatprep.subr.bf16.mxu0 0
    %2472 = vmatpush1.bf16.msra.mxu0 0
    %2473 = vmatprep.subr.bf16.mxu0 0
    %2474 = vmatpush1.bf16.msra.mxu0 0
    %2475 = vmatprep.subr.bf16.mxu0 0
    %2476 = vmatpush1.bf16.msra.mxu0 0
    %2477 = vmatprep.subr.bf16.mxu0 0
    %2478 = vmatpush1.bf16.msra.mxu0 0
    %2479 = vmatprep.subr.bf16.mxu0 0
    %2480 = vmatpush1.bf16.msra.mxu0 0
    %2481 = vmatprep.subr.bf16.mxu0 0
    %2482 = vmatpush1.bf16.msra.mxu0 0
    %2483 = vmatprep.subr.bf16.mxu0 0
    %2484 = vmatpush1.bf16.msra.mxu0 0
    %2485 = vmatprep.subr.bf16.mxu0 0
    %2486 = vmatpush1.bf16.msra.mxu0 0
    %2487 = vmatprep.subr.bf16.mxu0 0
    %2488 = vmatpush1.bf16.msra.mxu0 0
    %2489 = vmatprep.subr.bf16.mxu0 0
    %2490 = vmatpush1.bf16.msra.mxu0 0
    %2491 = vmatprep.subr.bf16.mxu0 0
    %2492 = vmatpush1.bf16.msra.mxu0 0
    %2493 = vmatprep.subr.bf16.mxu0 0
    %2494 = vmatpush1.bf16.msra.mxu0 0
    %2495 = vmatprep.subr.bf16.mxu0 0
    %2496 = vmatpush1.bf16.msra.mxu0 0
    %2497 = vmatprep.subr.bf16.mxu0 0
    %2498 = vmatpush1.bf16.msra.mxu0 0
    %2499 = vmatprep.mubr.bf16.mxu0 0
    %2500 = vmatmul.mubr.bf16.gmra.mrb[0].mxu0 %v1425
    %v2501 = vpop.f32.mrb[0].mxu0
    %v2502 = vadd.f32 0.0, %v2501
    %v2503 = vpop.f32.mrb[0].mxu0
    %v2504 = vpop.f32.mrb[0].mxu0
    %v2505 = vadd.f32 0.0, %v2504
    %v2506 = vpop.f32.mrb[0].mxu0
    %2507 = vmatprep.mubr.bf16.mxu0 0
    %2508 = vmatmul.mubr.bf16.gmra.mrb[0].mxu0 %v1428
    %v2509 = vpop.f32.mrb[0].mxu0
    %v2510 = vadd.f32 0.0, %v2509
    %v2511 = vpop.f32.mrb[0].mxu0
    %v2512 = vpop.f32.mrb[0].mxu0
    %v2513 = vadd.f32 0.0, %v2512
    %v2514 = vpop.f32.mrb[0].mxu0
    %2515 = vmatprep.mubr.bf16.mxu0 0
    %2516 = vmatmul.mubr.bf16.gmra.mrb[0].mxu0 %v1431
    %v2517 = vpop.f32.mrb[0].mxu0
    %v2518 = vadd.f32 0.0, %v2517
    %v2519 = vpop.f32.mrb[0].mxu0
    %v2520 = vpop.f32.mrb[0].mxu0
    %v2521 = vadd.f32 0.0, %v2520
    %v2522 = vpop.f32.mrb[0].mxu0
    %2523 = vmatprep.mubr.bf16.mxu0 0
    %2524 = vmatmul.mubr.bf16.gmra.mrb[0].mxu0 %v1434
    %v2525 = vpop.f32.mrb[0].mxu0
    %v2526 = vadd.f32 0.0, %v2525
    %v2527 = vpop.f32.mrb[0].mxu0
    %v2528 = vpop.f32.mrb[0].mxu0
    %v2529 = vadd.f32 0.0, %v2528
    %v2530 = vpop.f32.mrb[0].mxu0
    %2531 = vmatprep.mubr.bf16.mxu0 0
    %2532 = vmatmul.mubr.bf16.gmra.mrb[0].mxu0 %v1437
    %v2533 = vpop.f32.mrb[0].mxu0
    %v2534 = vadd.f32 0.0, %v2533
    %v2535 = vpop.f32.mrb[0].mxu0
    %v2536 = vpop.f32.mrb[0].mxu0
    %v2537 = vadd.f32 0.0, %v2536
    %v2538 = vpop.f32.mrb[0].mxu0
    %2539 = vmatprep.mubr.bf16.mxu0 0
    %2540 = vmatmul.mubr.bf16.gmra.mrb[0].mxu0 %v1440
    %v2541 = vpop.f32.mrb[0].mxu0
    %v2542 = vadd.f32 0.0, %v2541
    %v2543 = vpop.f32.mrb[0].mxu0
    %v2544 = vpop.f32.mrb[0].mxu0
    %v2545 = vadd.f32 0.0, %v2544
    %v2546 = vpop.f32.mrb[0].mxu0
    %2547 = vmatprep.mubr.bf16.mxu0 0
    %2548 = vmatmul.mubr.bf16.gmra.mrb[0].mxu0 %v1443
    %v2549 = vpop.f32.mrb[0].mxu0
    %v2550 = vadd.f32 0.0, %v2549
    %v2551 = vpop.f32.mrb[0].mxu0
    %v2552 = vpop.f32.mrb[0].mxu0
    %v2553 = vadd.f32 0.0, %v2552
    %v2554 = vpop.f32.mrb[0].mxu0
    %2555 = vmatprep.mubr.bf16.mxu0 0
    %2556 = vmatmul.mubr.bf16.gmra.mrb[0].mxu0 %v1446
    %v2557 = vpop.f32.mrb[0].mxu0
    %v2558 = vadd.f32 0.0, %v2557
    %v2559 = vpop.f32.mrb[0].mxu0
    %v2560 = vpop.f32.mrb[0].mxu0
    %v2561 = vadd.f32 0.0, %v2560
    %v2562 = vpop.f32.mrb[0].mxu0
    %2563 = vmatprep.mubr.bf16.mxu0 0
    %2564 = vmatmul.mubr.bf16.gmra.mrb[0].mxu0 %v1449
    %v2565 = vpop.f32.mrb[0].mxu0
    %v2566 = vadd.f32 0.0, %v2565
    %v2567 = vpop.f32.mrb[0].mxu0
    %v2568 = vpop.f32.mrb[0].mxu0
    %v2569 = vadd.f32 0.0, %v2568
    %v2570 = vpop.f32.mrb[0].mxu0
    %2571 = vdwg.mxu0
    %v2572 = vpack.c.bf16 %v2505, %v2502
    %v2573 = vpack.c.bf16 %v2513, %v2510
    %v2574 = vpack.c.bf16 %v2521, %v2518
    %v2575 = vpack.c.bf16 %v2529, %v2526
    %v2576 = vpack.c.bf16 %v2537, %v2534
    %v2577 = vpack.c.bf16 %v2545, %v2542
    %v2578 = vpack.c.bf16 %v2553, %v2550
    %v2579 = vpack.c.bf16 %v2561, %v2558
    %v2580 = vpack.c.bf16 %v2569, %v2566
    %v2725 = vunpack.c.l.b16 %v2321
    %v2726 = vunpack.c.l.b16 %v2322
    %v2727 = vunpack.c.l.b16 %v2323
    %v2728 = vunpack.c.l.b16 %v2324
    %v2729 = vunpack.c.l.b16 %v2325
    %v2730 = vunpack.c.l.b16 %v2326
    %v2731 = vunpack.c.l.b16 %v2327
    %v2732 = vunpack.c.l.b16 %v2328
    %v2733 = vunpack.c.l.b16 %v2329
    %v2734 = vunpack.c.l.b16 %v2330
    %v2735 = vunpack.c.l.b16 %v2331
    %v2736 = vunpack.c.l.b16 %v2332
    %v2737 = vunpack.c.l.b16 %v2333
    %v2738 = vunpack.c.l.b16 %v2334
    %v2739 = vunpack.c.l.b16 %v2335
    %v2740 = vunpack.c.l.b16 %v2336
    %v2741 = vunpack.c.l.b16 %v2337
    %v2742 = vunpack.c.l.b16 %v2338
    %v2743 = vunpack.c.l.b16 %v2339
    %v2744 = vunpack.c.l.b16 %v2340
    %v2745 = vunpack.c.l.b16 %v2341
    %v2746 = vunpack.c.l.b16 %v2342
    %v2747 = vunpack.c.l.b16 %v2343
    %v2748 = vunpack.c.l.b16 %v2344
    %v2749 = vunpack.c.l.b16 %v2345
    %v2750 = vunpack.c.l.b16 %v2346
    %v2751 = vunpack.c.l.b16 %v2347
    %v2752 = vunpack.c.l.b16 %v2348
    %v2753 = vunpack.c.l.b16 %v2349
    %v2754 = vunpack.c.l.b16 %v2350
    %v2755 = vunpack.c.l.b16 %v2351
    %v2756 = vunpack.c.l.b16 %v2352
    %v2757 = vunpack.c.l.b16 %v2353
    %v2758 = vunpack.c.l.b16 %v2354
    %v2759 = vunpack.c.l.b16 %v2355
    %v2760 = vunpack.c.l.b16 %v2356
    %v2761 = vunpack.c.l.b16 %v2357
    %v2762 = vunpack.c.l.b16 %v2358
    %v2763 = vunpack.c.l.b16 %v2359
    %v2764 = vunpack.c.l.b16 %v2360
    %v2765 = vunpack.c.l.b16 %v2361
    %v2766 = vunpack.c.l.b16 %v2362
    %v2767 = vunpack.c.l.b16 %v2363
    %v2768 = vunpack.c.l.b16 %v2364
    %v2769 = vunpack.c.l.b16 %v2365
    %v2770 = vunpack.c.l.b16 %v2366
    %v2771 = vunpack.c.l.b16 %v2367
    %v2772 = vunpack.c.l.b16 %v2368
    %v2773 = vunpack.c.l.b16 %v2369
    %v2774 = vunpack.c.l.b16 %v2370
    %v2775 = vunpack.c.l.b16 %v2371
    %v2776 = vunpack.c.l.b16 %v2372
    %v2777 = vunpack.c.l.b16 %v2373
    %v2778 = vunpack.c.l.b16 %v2374
    %v2779 = vunpack.c.l.b16 %v2375
    %v2780 = vunpack.c.l.b16 %v2376
    %v2781 = vunpack.c.l.b16 %v2377
    %v2782 = vunpack.c.l.b16 %v2378
    %v2783 = vunpack.c.l.b16 %v2379
    %v2784 = vunpack.c.l.b16 %v2380
    %v2785 = vunpack.c.l.b16 %v2381
    %v2786 = vunpack.c.l.b16 %v2382
    %v2787 = vunpack.c.l.b16 %v2383
    %v2788 = vunpack.c.l.b16 %v2384
    %v2789 = vunpack.c.l.b16 %v2385
    %v2790 = vunpack.c.l.b16 %v2386
    %v2791 = vunpack.c.l.b16 %v2387
    %v2792 = vunpack.c.l.b16 %v2388
    %v2793 = vunpack.c.l.b16 %v2389
    %v2794 = vunpack.c.l.b16 %v2390
    %v2795 = vunpack.c.l.b16 %v2391
    %v2796 = vunpack.c.l.b16 %v2392
    %v2797 = vunpack.c.l.b16 %v2393
    %v2798 = vunpack.c.l.b16 %v2394
    %v2799 = vunpack.c.l.b16 %v2395
    %v2800 = vunpack.c.l.b16 %v2396
    %v2801 = vunpack.c.l.b16 %v2397
    %v2802 = vunpack.c.l.b16 %v2398
    %v2803 = vunpack.c.l.b16 %v2399
    %v2804 = vunpack.c.l.b16 %v2400
    %v2805 = vunpack.c.l.b16 %v2401
    %v2806 = vunpack.c.l.b16 %v2402
    %v2807 = vunpack.c.l.b16 %v2403
    %v2808 = vunpack.c.l.b16 %v2404
    %v2809 = vunpack.c.l.b16 %v2405
    %v2810 = vunpack.c.l.b16 %v2406
    %v2811 = vunpack.c.l.b16 %v2407
    %v2812 = vunpack.c.l.b16 %v2408
    %v2813 = vunpack.c.l.b16 %v2409
    %v2814 = vunpack.c.l.b16 %v2410
    %v2815 = vunpack.c.l.b16 %v2411
    %v2816 = vunpack.c.l.b16 %v2412
    %v2817 = vunpack.c.l.b16 %v2413
    %v2818 = vunpack.c.l.b16 %v2414
    %v2819 = vunpack.c.l.b16 %v2415
    %v2820 = vunpack.c.l.b16 %v2416
    %v2821 = vunpack.c.l.b16 %v2417
    %v2822 = vunpack.c.l.b16 %v2418
    %v2823 = vunpack.c.l.b16 %v2419
    %v2824 = vunpack.c.l.b16 %v2420
    %v2825 = vunpack.c.l.b16 %v2421
    %v2826 = vunpack.c.l.b16 %v2422
    %v2827 = vunpack.c.l.b16 %v2423
    %v2828 = vunpack.c.l.b16 %v2424
    %v2829 = vunpack.c.l.b16 %v2425
    %v2830 = vunpack.c.l.b16 %v2426
    %v2831 = vunpack.c.l.b16 %v2427
    %v2832 = vunpack.c.l.b16 %v2428
    %v2833 = vunpack.c.l.b16 %v2429
    %v2834 = vunpack.c.l.b16 %v2430
    %v2835 = vunpack.c.l.b16 %v2431
    %v2836 = vunpack.c.l.b16 %v2432
    %v2837 = vunpack.c.l.b16 %v2433
    %v2838 = vunpack.c.l.b16 %v2434
    %v2839 = vunpack.c.l.b16 %v2435
    %v2840 = vunpack.c.l.b16 %v2436
    %v2841 = vunpack.c.l.b16 %v2437
    %v2842 = vunpack.c.l.b16 %v2438
    %v2843 = vunpack.c.l.b16 %v2439
    %v2844 = vunpack.c.l.b16 %v2440
    %v2845 = vunpack.c.l.b16 %v2441
    %v2846 = vunpack.c.l.b16 %v2442
    %v2847 = vunpack.c.l.b16 %v2443
    %v2848 = vunpack.c.l.b16 %v2444
    %v2849 = vunpack.c.l.b16 %v2445
    %v2850 = vunpack.c.l.b16 %v2446
    %v2851 = vunpack.c.l.b16 %v2447
    %v2852 = vunpack.c.l.b16 %v2448
    %v2853 = vunpack.c.l.b16 %v2449
    %v2854 = vunpack.c.l.b16 %v2450
    %v2855 = vunpack.c.l.b16 %v2451
    %v2856 = vunpack.c.l.b16 %v2452
    %v2857 = vunpack.c.l.b16 %v2453
    %v2858 = vunpack.c.l.b16 %v2454
    %v2859 = vunpack.c.l.b16 %v2455
    %v2860 = vunpack.c.l.b16 %v2456
    %v2861 = vunpack.c.l.b16 %v2457
    %v2862 = vunpack.c.l.b16 %v2458
    %v2863 = vunpack.c.l.b16 %v2459
    %v2864 = vunpack.c.l.b16 %v2460
    %v2865 = vunpack.c.l.b16 %v2461
    %v2866 = vunpack.c.l.b16 %v2462
    %v2867 = vunpack.c.l.b16 %v2463
    %v2868 = vunpack.c.l.b16 %v2464
    %v2869 = vpack.c.b16 %v2726, %v2725
    %v2870 = vpack.c.b16 %v2728, %v2727
    %v2871 = vpack.c.b16 %v2730, %v2729
    %v2872 = vpack.c.b16 %v2732, %v2731
    %v2873 = vpack.c.b16 %v2734, %v2733
    %v2874 = vpack.c.b16 %v2736, %v2735
    %v2875 = vpack.c.b16 %v2738, %v2737
    %v2876 = vpack.c.b16 %v2740, %v2739
    %v2877 = vpack.c.b16 %v2742, %v2741
    %v2878 = vpack.c.b16 %v2744, %v2743
    %v2879 = vpack.c.b16 %v2746, %v2745
    %v2880 = vpack.c.b16 %v2748, %v2747
    %v2881 = vpack.c.b16 %v2750, %v2749
    %v2882 = vpack.c.b16 %v2752, %v2751
    %v2883 = vpack.c.b16 %v2754, %v2753
    %v2884 = vpack.c.b16 %v2756, %v2755
    %v2885 = vpack.c.b16 %v2758, %v2757
    %v2886 = vpack.c.b16 %v2760, %v2759
    %v2887 = vpack.c.b16 %v2762, %v2761
    %v2888 = vpack.c.b16 %v2764, %v2763
    %v2889 = vpack.c.b16 %v2766, %v2765
    %v2890 = vpack.c.b16 %v2768, %v2767
    %v2891 = vpack.c.b16 %v2770, %v2769
    %v2892 = vpack.c.b16 %v2772, %v2771
    %v2893 = vpack.c.b16 %v2774, %v2773
    %v2894 = vpack.c.b16 %v2776, %v2775
    %v2895 = vpack.c.b16 %v2778, %v2777
    %v2896 = vpack.c.b16 %v2780, %v2779
    %v2897 = vpack.c.b16 %v2782, %v2781
    %v2898 = vpack.c.b16 %v2784, %v2783
    %v2899 = vpack.c.b16 %v2786, %v2785
    %v2900 = vpack.c.b16 %v2788, %v2787
    %v2901 = vpack.c.b16 %v2790, %v2789
    %v2902 = vpack.c.b16 %v2792, %v2791
    %v2903 = vpack.c.b16 %v2794, %v2793
    %v2904 = vpack.c.b16 %v2796, %v2795
    %v2905 = vpack.c.b16 %v2798, %v2797
    %v2906 = vpack.c.b16 %v2800, %v2799
    %v2907 = vpack.c.b16 %v2802, %v2801
    %v2908 = vpack.c.b16 %v2804, %v2803
    %v2909 = vpack.c.b16 %v2806, %v2805
    %v2910 = vpack.c.b16 %v2808, %v2807
    %v2911 = vpack.c.b16 %v2810, %v2809
    %v2912 = vpack.c.b16 %v2812, %v2811
    %v2913 = vpack.c.b16 %v2814, %v2813
    %v2914 = vpack.c.b16 %v2816, %v2815
    %v2915 = vpack.c.b16 %v2818, %v2817
    %v2916 = vpack.c.b16 %v2820, %v2819
    %v2917 = vpack.c.b16 %v2822, %v2821
    %v2918 = vpack.c.b16 %v2824, %v2823
    %v2919 = vpack.c.b16 %v2826, %v2825
    %v2920 = vpack.c.b16 %v2828, %v2827
    %v2921 = vpack.c.b16 %v2830, %v2829
    %v2922 = vpack.c.b16 %v2832, %v2831
    %v2923 = vpack.c.b16 %v2834, %v2833
    %v2924 = vpack.c.b16 %v2836, %v2835
    %v2925 = vpack.c.b16 %v2838, %v2837
    %v2926 = vpack.c.b16 %v2840, %v2839
    %v2927 = vpack.c.b16 %v2842, %v2841
    %v2928 = vpack.c.b16 %v2844, %v2843
    %v2929 = vpack.c.b16 %v2846, %v2845
    %v2930 = vpack.c.b16 %v2848, %v2847
    %v2931 = vpack.c.b16 %v2850, %v2849
    %v2932 = vpack.c.b16 %v2852, %v2851
    %v2933 = vpack.c.b16 %v2854, %v2853
    %v2934 = vpack.c.b16 %v2856, %v2855
    %v2935 = vpack.c.b16 %v2858, %v2857
    %v2936 = vpack.c.b16 %v2860, %v2859
    %v2937 = vpack.c.b16 %v2862, %v2861
    %v2938 = vpack.c.b16 %v2864, %v2863
    %v2939 = vpack.c.b16 %v2866, %v2865
    %v2940 = vpack.c.b16 %v2868, %v2867
    %3013 = vmatprep.subr.bf16.mxu0 0
    %3014 = vmatpush1.bf16.msra.mxu0 %v2869
    %3015 = vmatprep.subr.bf16.mxu0 0
    %3016 = vmatpush1.bf16.msra.mxu0 %v2870
    %3017 = vmatprep.subr.bf16.mxu0 0
    %3018 = vmatpush1.bf16.msra.mxu0 %v2871
    %3019 = vmatprep.subr.bf16.mxu0 0
    %3020 = vmatpush1.bf16.msra.mxu0 %v2872
    %3021 = vmatprep.subr.bf16.mxu0 0
    %3022 = vmatpush1.bf16.msra.mxu0 %v2873
    %3023 = vmatprep.subr.bf16.mxu0 0
    %3024 = vmatpush1.bf16.msra.mxu0 %v2874
    %3025 = vmatprep.subr.bf16.mxu0 0
    %3026 = vmatpush1.bf16.msra.mxu0 %v2875
    %3027 = vmatprep.subr.bf16.mxu0 0
    %3028 = vmatpush1.bf16.msra.mxu0 %v2876
    %3029 = vmatprep.subr.bf16.mxu0 0
    %3030 = vmatpush1.bf16.msra.mxu0 %v2877
    %3031 = vmatprep.subr.bf16.mxu0 0
    %3032 = vmatpush1.bf16.msra.mxu0 %v2878
    %3033 = vmatprep.subr.bf16.mxu0 0
    %3034 = vmatpush1.bf16.msra.mxu0 %v2879
    %3035 = vmatprep.subr.bf16.mxu0 0
    %3036 = vmatpush1.bf16.msra.mxu0 %v2880
    %3037 = vmatprep.subr.bf16.mxu0 0
    %3038 = vmatpush1.bf16.msra.mxu0 %v2881
    %3039 = vmatprep.subr.bf16.mxu0 0
    %3040 = vmatpush1.bf16.msra.mxu0 %v2882
    %3041 = vmatprep.subr.bf16.mxu0 0
    %3042 = vmatpush1.bf16.msra.mxu0 %v2883
    %3043 = vmatprep.subr.bf16.mxu0 0
    %3044 = vmatpush1.bf16.msra.mxu0 %v2884
    %3045 = vmatprep.mubr.bf16.mxu0 %v2573
    %3046 = vmatmul.mubr.bf16.gmra.mrb[0].mxu0 %v2572
    %v3047 = vpop.f32.mrb[0].mxu0
    %v3048 = vadd.f32 %v2465, %v3047
    %v3049 = vpop.f32.mrb[0].mxu0
    %v3050 = vpop.f32.mrb[0].mxu0
    %v3051 = vadd.f32 %v2465, %v3050
    %v3052 = vpop.f32.mrb[0].mxu0
    %3053 = vdwg.mxu0
    %3054 = vmatprep.subr.bf16.mxu0 0
    %3055 = vmatpush1.bf16.msra.mxu0 %v2885
    %3056 = vmatprep.subr.bf16.mxu0 0
    %3057 = vmatpush1.bf16.msra.mxu0 %v2886
    %3058 = vmatprep.subr.bf16.mxu0 0
    %3059 = vmatpush1.bf16.msra.mxu0 %v2887
    %3060 = vmatprep.subr.bf16.mxu0 0
    %3061 = vmatpush1.bf16.msra.mxu0 %v2888
    %3062 = vmatprep.subr.bf16.mxu0 0
    %3063 = vmatpush1.bf16.msra.mxu0 %v2889
    %3064 = vmatprep.subr.bf16.mxu0 0
    %3065 = vmatpush1.bf16.msra.mxu0 %v2890
    %3066 = vmatprep.subr.bf16.mxu0 0
    %3067 = vmatpush1.bf16.msra.mxu0 %v2891
    %3068 = vmatprep.subr.bf16.mxu0 0
    %3069 = vmatpush1.bf16.msra.mxu0 %v2892
    %3070 = vmatprep.subr.bf16.mxu0 0
    %3071 = vmatpush1.bf16.msra.mxu0 %v2893
    %3072 = vmatprep.subr.bf16.mxu0 0
    %3073 = vmatpush1.bf16.msra.mxu0 %v2894
    %3074 = vmatprep.subr.bf16.mxu0 0
    %3075 = vmatpush1.bf16.msra.mxu0 %v2895
    %3076 = vmatprep.subr.bf16.mxu0 0
    %3077 = vmatpush1.bf16.msra.mxu0 %v2896
    %3078 = vmatprep.subr.bf16.mxu0 0
    %3079 = vmatpush1.bf16.msra.mxu0 %v2897
    %3080 = vmatprep.subr.bf16.mxu0 0
    %3081 = vmatpush1.bf16.msra.mxu0 %v2898
    %3082 = vmatprep.subr.bf16.mxu0 0
    %3083 = vmatpush1.bf16.msra.mxu0 %v2899
    %3084 = vmatprep.subr.bf16.mxu0 0
    %3085 = vmatpush1.bf16.msra.mxu0 %v2900
    %3086 = vmatprep.mubr.bf16.mxu0 %v2575
    %3087 = vmatmul.mubr.bf16.gmra.mrb[0].mxu0 %v2574
    %v3088 = vpop.f32.mrb[0].mxu0
    %v3089 = vadd.f32 %v3048, %v3088
    %v3090 = vpop.f32.mrb[0].mxu0
    %v3091 = vpop.f32.mrb[0].mxu0
    %v3092 = vadd.f32 %v3051, %v3091
    %v3093 = vpop.f32.mrb[0].mxu0
    %3094 = vdwg.mxu0
    %3095 = vmatprep.subr.bf16.mxu0 0
    %3096 = vmatpush1.bf16.msra.mxu0 %v2901
    %3097 = vmatprep.subr.bf16.mxu0 0
    %3098 = vmatpush1.bf16.msra.mxu0 %v2902
    %3099 = vmatprep.subr.bf16.mxu0 0
    %3100 = vmatpush1.bf16.msra.mxu0 %v2903
    %3101 = vmatprep.subr.bf16.mxu0 0
    %3102 = vmatpush1.bf16.msra.mxu0 %v2904
    %3103 = vmatprep.subr.bf16.mxu0 0
    %3104 = vmatpush1.bf16.msra.mxu0 %v2905
    %3105 = vmatprep.subr.bf16.mxu0 0
    %3106 = vmatpush1.bf16.msra.mxu0 %v2906
    %3107 = vmatprep.subr.bf16.mxu0 0
    %3108 = vmatpush1.bf16.msra.mxu0 %v2907
    %3109 = vmatprep.subr.bf16.mxu0 0
    %3110 = vmatpush1.bf16.msra.mxu0 %v2908
    %3111 = vmatprep.subr.bf16.mxu0 0
    %3112 = vmatpush1.bf16.msra.mxu0 %v2909
    %3113 = vmatprep.subr.bf16.mxu0 0
    %3114 = vmatpush1.bf16.msra.mxu0 %v2910
    %3115 = vmatprep.subr.bf16.mxu0 0
    %3116 = vmatpush1.bf16.msra.mxu0 %v2911
    %3117 = vmatprep.subr.bf16.mxu0 0
    %3118 = vmatpush1.bf16.msra.mxu0 %v2912
    %3119 = vmatprep.subr.bf16.mxu0 0
    %3120 = vmatpush1.bf16.msra.mxu0 %v2913
    %3121 = vmatprep.subr.bf16.mxu0 0
    %3122 = vmatpush1.bf16.msra.mxu0 %v2914
    %3123 = vmatprep.subr.bf16.mxu0 0
    %3124 = vmatpush1.bf16.msra.mxu0 %v2915
    %3125 = vmatprep.subr.bf16.mxu0 0
    %3126 = vmatpush1.bf16.msra.mxu0 %v2916
    %3127 = vmatprep.mubr.bf16.mxu0 %v2577
    %3128 = vmatmul.mubr.bf16.gmra.mrb[0].mxu0 %v2576
    %v3129 = vpop.f32.mrb[0].mxu0
    %v3130 = vadd.f32 %v3089, %v3129
    %v3131 = vpop.f32.mrb[0].mxu0
    %v3132 = vpop.f32.mrb[0].mxu0
    %v3133 = vadd.f32 %v3092, %v3132
    %v3134 = vpop.f32.mrb[0].mxu0
    %3135 = vdwg.mxu0
    %3136 = vmatprep.subr.bf16.mxu0 0
    %3137 = vmatpush1.bf16.msra.mxu0 %v2917
    %3138 = vmatprep.subr.bf16.mxu0 0
    %3139 = vmatpush1.bf16.msra.mxu0 %v2918
    %3140 = vmatprep.subr.bf16.mxu0 0
    %3141 = vmatpush1.bf16.msra.mxu0 %v2919
    %3142 = vmatprep.subr.bf16.mxu0 0
    %3143 = vmatpush1.bf16.msra.mxu0 %v2920
    %3144 = vmatprep.subr.bf16.mxu0 0
    %3145 = vmatpush1.bf16.msra.mxu0 %v2921
    %3146 = vmatprep.subr.bf16.mxu0 0
    %3147 = vmatpush1.bf16.msra.mxu0 %v2922
    %3148 = vmatprep.subr.bf16.mxu0 0
    %3149 = vmatpush1.bf16.msra.mxu0 %v2923
    %3150 = vmatprep.subr.bf16.mxu0 0
    %3151 = vmatpush1.bf16.msra.mxu0 %v2924
    %3152 = vmatprep.subr.bf16.mxu0 0
    %3153 = vmatpush1.bf16.msra.mxu0 %v2925
    %3154 = vmatprep.subr.bf16.mxu0 0
    %3155 = vmatpush1.bf16.msra.mxu0 %v2926
    %3156 = vmatprep.subr.bf16.mxu0 0
    %3157 = vmatpush1.bf16.msra.mxu0 %v2927
    %3158 = vmatprep.subr.bf16.mxu0 0
    %3159 = vmatpush1.bf16.msra.mxu0 %v2928
    %3160 = vmatprep.subr.bf16.mxu0 0
    %3161 = vmatpush1.bf16.msra.mxu0 %v2929
    %3162 = vmatprep.subr.bf16.mxu0 0
    %3163 = vmatpush1.bf16.msra.mxu0 %v2930
    %3164 = vmatprep.subr.bf16.mxu0 0
    %3165 = vmatpush1.bf16.msra.mxu0 %v2931
    %3166 = vmatprep.subr.bf16.mxu0 0
    %3167 = vmatpush1.bf16.msra.mxu0 %v2932
    %3168 = vmatprep.mubr.bf16.mxu0 %v2579
    %3169 = vmatmul.mubr.bf16.gmra.mrb[0].mxu0 %v2578
    %v3170 = vpop.f32.mrb[0].mxu0
    %v3171 = vadd.f32 %v3130, %v3170
    %v3172 = vpop.f32.mrb[0].mxu0
    %v3173 = vpop.f32.mrb[0].mxu0
    %v3174 = vadd.f32 %v3133, %v3173
    %v3175 = vpop.f32.mrb[0].mxu0
    %3176 = vdwg.mxu0
    %3177 = vmatprep.subr.bf16.mxu0 0
    %3178 = vmatpush1.bf16.msra.mxu0 %v2933
    %3179 = vmatprep.subr.bf16.mxu0 0
    %3180 = vmatpush1.bf16.msra.mxu0 %v2934
    %3181 = vmatprep.subr.bf16.mxu0 0
    %3182 = vmatpush1.bf16.msra.mxu0 %v2935
    %3183 = vmatprep.subr.bf16.mxu0 0
    %3184 = vmatpush1.bf16.msra.mxu0 %v2936
    %3185 = vmatprep.subr.bf16.mxu0 0
    %3186 = vmatpush1.bf16.msra.mxu0 %v2937
    %3187 = vmatprep.subr.bf16.mxu0 0
    %3188 = vmatpush1.bf16.msra.mxu0 %v2938
    %3189 = vmatprep.subr.bf16.mxu0 0
    %3190 = vmatpush1.bf16.msra.mxu0 %v2939
    %3191 = vmatprep.subr.bf16.mxu0 0
    %3192 = vmatpush1.bf16.msra.mxu0 %v2940
    %3193 = vmatprep.subr.bf16.mxu0 0
    %3194 = vmatpush1.bf16.msra.mxu0 0
    %3195 = vmatprep.subr.bf16.mxu0 0
    %3196 = vmatpush1.bf16.msra.mxu0 0
    %3197 = vmatprep.subr.bf16.mxu0 0
    %3198 = vmatpush1.bf16.msra.mxu0 0
    %3199 = vmatprep.subr.bf16.mxu0 0
    %3200 = vmatpush1.bf16.msra.mxu0 0
    %3201 = vmatprep.subr.bf16.mxu0 0
    %3202 = vmatpush1.bf16.msra.mxu0 0
    %3203 = vmatprep.subr.bf16.mxu0 0
    %3204 = vmatpush1.bf16.msra.mxu0 0
    %3205 = vmatprep.subr.bf16.mxu0 0
    %3206 = vmatpush1.bf16.msra.mxu0 0
    %3207 = vmatprep.subr.bf16.mxu0 0
    %3208 = vmatpush1.bf16.msra.mxu0 0
    %3209 = vmatprep.mubr.bf16.mxu0 0
    %3210 = vmatmul.mubr.bf16.gmra.mrb[0].mxu0 %v2580
    %v3211 = vpop.f32.mrb[0].mxu0
    %v3212 = vadd.f32 %v3171, %v3211
    %v3213 = vpop.f32.mrb[0].mxu0
    %v3214 = vpop.f32.mrb[0].mxu0
    %v3215 = vadd.f32 %v3174, %v3214
    %v3216 = vpop.f32.mrb[0].mxu0
    %3217 = vdwg.mxu0
    %vm3218 = vcmp.gt.f32.partialorder %v3212, 0.0
    %vm3219 = vcmp.gt.f32.partialorder %v3215, 0.0
    %v3220 = vmul.f32 %v3212, 0.01
    %v3221 = vmul.f32 %v3215, 0.01
    %v3222 = vsel %vm3218, %v3212, %v3220
    %v3223 = vsel %vm3219, %v3215, %v3221
    %v3224 = vld [vmem:[#allocation2 + $0x500] sm:$0xf]
    %v3225 = vld [vmem:[#allocation2 + $0x504] sm:$0xf]
    %v3226 = vld [vmem:[#allocation2 + $0x508] sm:$0xf]
    %v3227 = vld [vmem:[#allocation2 + $0x50c] sm:$0xf]
    %v3228 = vld [vmem:[#allocation2 + $0x510] sm:$0xf]
    %v3229 = vld [vmem:[#allocation2 + $0x514] sm:$0xf]
    %v3230 = vld [vmem:[#allocation2 + $0x518] sm:$0xf]
    %v3231 = vld [vmem:[#allocation2 + $0x51c] sm:$0xf]
    %v3232 = vld [vmem:[#allocation2 + $0x520] sm:$0xf]
    %v3233 = vld [vmem:[#allocation2 + $0x524] sm:$0xf]
    %v3234 = vld [vmem:[#allocation2 + $0x528] sm:$0xf]
    %v3235 = vld [vmem:[#allocation2 + $0x52c] sm:$0xf]
    %v3236 = vld [vmem:[#allocation2 + $0x530] sm:$0xf]
    %v3237 = vld [vmem:[#allocation2 + $0x534] sm:$0xf]
    %v3238 = vld [vmem:[#allocation2 + $0x538] sm:$0xf]
    %v3239 = vld [vmem:[#allocation2 + $0x53c] sm:$0xf]
    %v3240 = vld [vmem:[#allocation6 + $0x4] ss:$0 sm:$0xff]
    %v3241 = vpack.c.bf16 %v3223, %v3222
    %v3258 = vunpack.c.l.b16 %v3224
    %v3259 = vunpack.c.l.b16 %v3225
    %v3260 = vunpack.c.l.b16 %v3226
    %v3261 = vunpack.c.l.b16 %v3227
    %v3262 = vunpack.c.l.b16 %v3228
    %v3263 = vunpack.c.l.b16 %v3229
    %v3264 = vunpack.c.l.b16 %v3230
    %v3265 = vunpack.c.l.b16 %v3231
    %v3266 = vunpack.c.l.b16 %v3232
    %v3267 = vunpack.c.l.b16 %v3233
    %v3268 = vunpack.c.l.b16 %v3234
    %v3269 = vunpack.c.l.b16 %v3235
    %v3270 = vunpack.c.l.b16 %v3236
    %v3271 = vunpack.c.l.b16 %v3237
    %v3272 = vunpack.c.l.b16 %v3238
    %v3273 = vunpack.c.l.b16 %v3239
    %v3274 = vpack.c.b16 %v3259, %v3258
    %v3275 = vpack.c.b16 %v3261, %v3260
    %v3276 = vpack.c.b16 %v3263, %v3262
    %v3277 = vpack.c.b16 %v3265, %v3264
    %v3278 = vpack.c.b16 %v3267, %v3266
    %v3279 = vpack.c.b16 %v3269, %v3268
    %v3280 = vpack.c.b16 %v3271, %v3270
    %v3281 = vpack.c.b16 %v3273, %v3272
    %3290 = vmatprep.subr.bf16.mxu0 0
    %3291 = vmatpush1.bf16.msra.mxu0 %v3274
    %3292 = vmatprep.subr.bf16.mxu0 0
    %3293 = vmatpush1.bf16.msra.mxu0 %v3275
    %3294 = vmatprep.subr.bf16.mxu0 0
    %3295 = vmatpush1.bf16.msra.mxu0 %v3276
    %3296 = vmatprep.subr.bf16.mxu0 0
    %3297 = vmatpush1.bf16.msra.mxu0 %v3277
    %3298 = vmatprep.subr.bf16.mxu0 0
    %3299 = vmatpush1.bf16.msra.mxu0 %v3278
    %3300 = vmatprep.subr.bf16.mxu0 0
    %3301 = vmatpush1.bf16.msra.mxu0 %v3279
    %3302 = vmatprep.subr.bf16.mxu0 0
    %3303 = vmatpush1.bf16.msra.mxu0 %v3280
    %3304 = vmatprep.subr.bf16.mxu0 0
    %3305 = vmatpush1.bf16.msra.mxu0 %v3281
    %3306 = vmatprep.subr.bf16.mxu0 0
    %3307 = vmatpush1.bf16.msra.mxu0 0
    %3308 = vmatprep.subr.bf16.mxu0 0
    %3309 = vmatpush1.bf16.msra.mxu0 0
    %3310 = vmatprep.subr.bf16.mxu0 0
    %3311 = vmatpush1.bf16.msra.mxu0 0
    %3312 = vmatprep.subr.bf16.mxu0 0
    %3313 = vmatpush1.bf16.msra.mxu0 0
    %3314 = vmatprep.subr.bf16.mxu0 0
    %3315 = vmatpush1.bf16.msra.mxu0 0
    %3316 = vmatprep.subr.bf16.mxu0 0
    %3317 = vmatpush1.bf16.msra.mxu0 0
    %3318 = vmatprep.subr.bf16.mxu0 0
    %3319 = vmatpush1.bf16.msra.mxu0 0
    %3320 = vmatprep.subr.bf16.mxu0 0
    %3321 = vmatpush1.bf16.msra.mxu0 0
    %3322 = vmatprep.mubr.bf16.mxu0 0
    %3323 = vmatmul.mubr.bf16.gmra.mrb[0].mxu0 %v3241
    %v3324 = vpop.f32.mrb[0].mxu0
    %v3325 = vadd.f32 %v3240, %v3324
    %v3326 = vpop.f32.mrb[0].mxu0
    %v3327 = vpop.f32.mrb[0].mxu0
    %v3328 = vadd.f32 %v3240, %v3327
    %v3329 = vpop.f32.mrb[0].mxu0
    %3330 = vdwg.mxu0
    %vm3331 = vcmp.gt.f32.partialorder %v3325, 0.0
    %vm3332 = vcmp.gt.f32.partialorder %v3328, 0.0
    %v3333 = vmul.f32 %v3325, 0.01
    %v3334 = vmul.f32 %v3328, 0.01
    %v3335 = vsel %vm3331, %v3325, %v3333
    %v3336 = vsel %vm3332, %v3328, %v3334
    %v3337 = vld [vmem:[#allocation4] sm:$0xff]
    %v3338 = vld [vmem:[#allocation4 + $0x8] sm:$0xff]
    %v3339 = vld [vmem:[#allocation4 + $0x10] sm:$0xff]
    %v3340 = vld [vmem:[#allocation4 + $0x18] sm:$0xff]
    %v3341 = vld [vmem:[#allocation4 + $0x20] sm:$0xff]
    %v3342 = vld [vmem:[#allocation4 + $0x28] sm:$0xff]
    %v3343 = vld [vmem:[#allocation4 + $0x30] sm:$0xff]
    %v3344 = vld [vmem:[#allocation4 + $0x38] sm:$0xff]
    %v3345 = vld [vmem:[#allocation4 + $0x40] sm:$0xff]
    %v3346 = vld [vmem:[#allocation4 + $0x48] sm:$0xff]
    %v3347 = vld [vmem:[#allocation4 + $0x50] sm:$0xff]
    %v3348 = vld [vmem:[#allocation4 + $0x58] sm:$0xff]
    %v3349 = vld [vmem:[#allocation4 + $0x60] sm:$0xff]
    %v3350 = vld [vmem:[#allocation4 + $0x68] sm:$0xff]
    %v3351 = vld [vmem:[#allocation4 + $0x70] sm:$0xff]
    %v3352 = vld [vmem:[#allocation4 + $0x78] sm:$0xff]
    %v3353 = vld [vmem:[#allocation4 + $0x80] sm:$0xff]
    %v3354 = vld [vmem:[#allocation4 + $0x88] sm:$0xff]
    %v3355 = vld [vmem:[#allocation4 + $0x90] sm:$0xff]
    %v3356 = vld [vmem:[#allocation4 + $0x98] sm:$0xff]
    %v3357 = vld [vmem:[#allocation4 + $0xa0] sm:$0xff]
    %v3358 = vld [vmem:[#allocation4 + $0xa8] sm:$0xff]
    %v3359 = vld [vmem:[#allocation4 + $0xb0] sm:$0xff]
    %v3360 = vld [vmem:[#allocation4 + $0xb8] sm:$0xff]
    %v3361 = vld [vmem:[#allocation4 + $0xc0] sm:$0xff]
    %v3362 = vld [vmem:[#allocation4 + $0xc8] sm:$0xff]
    %v3363 = vld [vmem:[#allocation4 + $0xd0] sm:$0xff]
    %v3364 = vld [vmem:[#allocation4 + $0xd8] sm:$0xff]
    %v3365 = vld [vmem:[#allocation4 + $0xe0] sm:$0xff]
    %v3366 = vld [vmem:[#allocation4 + $0xe8] sm:$0xff]
    %v3367 = vld [vmem:[#allocation4 + $0xf0] sm:$0xff]
    %v3368 = vld [vmem:[#allocation4 + $0xf8] sm:$0xff]
    %v3369 = vld [vmem:[#allocation4 + $0x100] sm:$0xff]
    %v3370 = vld [vmem:[#allocation4 + $0x108] sm:$0xff]
    %v3371 = vld [vmem:[#allocation4 + $0x110] sm:$0xff]
    %v3372 = vld [vmem:[#allocation4 + $0x118] sm:$0xff]
    %v3373 = vld [vmem:[#allocation4 + $0x120] sm:$0xff]
    %v3374 = vld [vmem:[#allocation4 + $0x128] sm:$0xff]
    %v3375 = vld [vmem:[#allocation4 + $0x130] sm:$0xff]
    %v3376 = vld [vmem:[#allocation4 + $0x138] sm:$0xff]
    %v3377 = vld [vmem:[#allocation4 + $0x140] sm:$0xff]
    %v3378 = vld [vmem:[#allocation4 + $0x148] sm:$0xff]
    %v3379 = vld [vmem:[#allocation4 + $0x150] sm:$0xff]
    %v3380 = vld [vmem:[#allocation4 + $0x158] sm:$0xff]
    %v3381 = vld [vmem:[#allocation4 + $0x160] sm:$0xff]
    %v3382 = vld [vmem:[#allocation4 + $0x168] sm:$0xff]
    %v3383 = vld [vmem:[#allocation4 + $0x170] sm:$0xff]
    %v3384 = vld [vmem:[#allocation4 + $0x178] sm:$0xff]
    %v3385 = vld [vmem:[#allocation4 + $0x180] sm:$0xff]
    %v3386 = vld [vmem:[#allocation4 + $0x188] sm:$0xff]
    %v3387 = vld [vmem:[#allocation4 + $0x190] sm:$0xff]
    %v3388 = vld [vmem:[#allocation4 + $0x198] sm:$0xff]
    %v3389 = vld [vmem:[#allocation4 + $0x1a0] sm:$0xff]
    %v3390 = vld [vmem:[#allocation4 + $0x1a8] sm:$0xff]
    %v3391 = vld [vmem:[#allocation4 + $0x1b0] sm:$0xff]
    %v3392 = vld [vmem:[#allocation4 + $0x1b8] sm:$0xff]
    %v3393 = vld [vmem:[#allocation4 + $0x1c0] sm:$0xff]
    %v3394 = vld [vmem:[#allocation4 + $0x1c8] sm:$0xff]
    %v3395 = vld [vmem:[#allocation4 + $0x1d0] sm:$0xff]
    %v3396 = vld [vmem:[#allocation4 + $0x1d8] sm:$0xff]
    %v3397 = vld [vmem:[#allocation4 + $0x1e0] sm:$0xff]
    %v3398 = vld [vmem:[#allocation4 + $0x1e8] sm:$0xff]
    %v3399 = vld [vmem:[#allocation4 + $0x1f0] sm:$0xff]
    %v3400 = vld [vmem:[#allocation4 + $0x1f8] sm:$0xff]
    %v3401 = vld [vmem:[#allocation4 + $0x200] sm:$0xff]
    %v3402 = vld [vmem:[#allocation4 + $0x208] sm:$0xff]
    %v3403 = vld [vmem:[#allocation4 + $0x210] sm:$0xff]
    %v3404 = vld [vmem:[#allocation4 + $0x218] sm:$0xff]
    %v3405 = vld [vmem:[#allocation4 + $0x220] sm:$0xff]
    %v3406 = vld [vmem:[#allocation4 + $0x228] sm:$0xff]
    %v3407 = vld [vmem:[#allocation4 + $0x230] sm:$0xff]
    %v3408 = vld [vmem:[#allocation4 + $0x238] sm:$0xff]
    %v3409 = vld [vmem:[#allocation4 + $0x240] sm:$0xff]
    %v3410 = vld [vmem:[#allocation4 + $0x248] sm:$0xff]
    %v3411 = vld [vmem:[#allocation4 + $0x250] sm:$0xff]
    %v3412 = vld [vmem:[#allocation4 + $0x258] sm:$0xff]
    %v3413 = vld [vmem:[#allocation4 + $0x260] sm:$0xff]
    %v3414 = vld [vmem:[#allocation4 + $0x268] sm:$0xff]
    %v3415 = vld [vmem:[#allocation4 + $0x270] sm:$0xff]
    %v3416 = vld [vmem:[#allocation4 + $0x278] sm:$0xff]
    %v3417 = vld [vmem:[#allocation4 + $0x280] sm:$0xff]
    %v3418 = vld [vmem:[#allocation4 + $0x288] sm:$0xff]
    %v3419 = vld [vmem:[#allocation4 + $0x290] sm:$0xff]
    %v3420 = vld [vmem:[#allocation4 + $0x298] sm:$0xff]
    %v3421 = vld [vmem:[#allocation4 + $0x2a0] sm:$0xff]
    %v3422 = vld [vmem:[#allocation4 + $0x2a8] sm:$0xff]
    %v3423 = vld [vmem:[#allocation4 + $0x2b0] sm:$0xff]
    %v3424 = vld [vmem:[#allocation4 + $0x2b8] sm:$0xff]
    %v3425 = vld [vmem:[#allocation4 + $0x2c0] sm:$0xff]
    %v3426 = vld [vmem:[#allocation4 + $0x2c8] sm:$0xff]
    %v3427 = vld [vmem:[#allocation4 + $0x2d0] sm:$0xff]
    %v3428 = vld [vmem:[#allocation4 + $0x2d8] sm:$0xff]
    %v3429 = vld [vmem:[#allocation4 + $0x2e0] sm:$0xff]
    %v3430 = vld [vmem:[#allocation4 + $0x2e8] sm:$0xff]
    %v3431 = vld [vmem:[#allocation4 + $0x2f0] sm:$0xff]
    %v3432 = vld [vmem:[#allocation4 + $0x2f8] sm:$0xff]
    %v3433 = vld [vmem:[#allocation4 + $0x300] sm:$0xff]
    %v3434 = vld [vmem:[#allocation4 + $0x308] sm:$0xff]
    %v3435 = vld [vmem:[#allocation4 + $0x310] sm:$0xff]
    %v3436 = vld [vmem:[#allocation4 + $0x318] sm:$0xff]
    %v3437 = vld [vmem:[#allocation4 + $0x320] sm:$0xff]
    %v3438 = vld [vmem:[#allocation4 + $0x328] sm:$0xff]
    %v3439 = vld [vmem:[#allocation4 + $0x330] sm:$0xff]
    %v3440 = vld [vmem:[#allocation4 + $0x338] sm:$0xff]
    %v3441 = vld [vmem:[#allocation4 + $0x340] sm:$0xff]
    %v3442 = vld [vmem:[#allocation4 + $0x348] sm:$0xff]
    %v3443 = vld [vmem:[#allocation4 + $0x350] sm:$0xff]
    %v3444 = vld [vmem:[#allocation4 + $0x358] sm:$0xff]
    %v3445 = vld [vmem:[#allocation4 + $0x360] sm:$0xff]
    %v3446 = vld [vmem:[#allocation4 + $0x368] sm:$0xff]
    %v3447 = vld [vmem:[#allocation4 + $0x370] sm:$0xff]
    %v3448 = vld [vmem:[#allocation4 + $0x378] sm:$0xff]
    %v3449 = vld [vmem:[#allocation4 + $0x380] sm:$0xff]
    %v3450 = vld [vmem:[#allocation4 + $0x388] sm:$0xff]
    %v3451 = vld [vmem:[#allocation4 + $0x390] sm:$0xff]
    %v3452 = vld [vmem:[#allocation4 + $0x398] sm:$0xff]
    %v3453 = vld [vmem:[#allocation4 + $0x3a0] sm:$0xff]
    %v3454 = vld [vmem:[#allocation4 + $0x3a8] sm:$0xff]
    %v3455 = vld [vmem:[#allocation4 + $0x3b0] sm:$0xff]
    %v3456 = vld [vmem:[#allocation4 + $0x3b8] sm:$0xff]
    %v3457 = vld [vmem:[#allocation4 + $0x3c0] sm:$0xff]
    %v3458 = vld [vmem:[#allocation4 + $0x3c8] sm:$0xff]
    %v3459 = vld [vmem:[#allocation4 + $0x3d0] sm:$0xff]
    %v3460 = vld [vmem:[#allocation4 + $0x3d8] sm:$0xff]
    %v3461 = vld [vmem:[#allocation4 + $0x3e0] sm:$0xff]
    %v3462 = vld [vmem:[#allocation4 + $0x3e8] sm:$0xff]
    %v3463 = vld [vmem:[#allocation4 + $0x3f0] sm:$0xff]
    %v3464 = vld [vmem:[#allocation4 + $0x3f8] sm:$0xff]
    %v3465 = vld [vmem:[#allocation4 + $0x400] sm:$0xff]
    %v3466 = vld [vmem:[#allocation4 + $0x408] sm:$0xff]
    %v3467 = vld [vmem:[#allocation4 + $0x410] sm:$0xff]
    %v3468 = vld [vmem:[#allocation4 + $0x418] sm:$0xff]
    %v3469 = vld [vmem:[#allocation4 + $0x420] sm:$0xff]
    %v3470 = vld [vmem:[#allocation4 + $0x428] sm:$0xff]
    %v3471 = vld [vmem:[#allocation4 + $0x430] sm:$0xff]
    %v3472 = vld [vmem:[#allocation4 + $0x438] sm:$0xff]
    %v3473 = vld [vmem:[#allocation4 + $0x440] sm:$0xff]
    %v3474 = vld [vmem:[#allocation4 + $0x448] sm:$0xff]
    %v3475 = vld [vmem:[#allocation4 + $0x450] sm:$0xff]
    %v3476 = vld [vmem:[#allocation4 + $0x458] sm:$0xff]
    %v3477 = vld [vmem:[#allocation4 + $0x460] sm:$0xff]
    %v3478 = vld [vmem:[#allocation4 + $0x468] sm:$0xff]
    %v3479 = vld [vmem:[#allocation4 + $0x470] sm:$0xff]
    %v3480 = vld [vmem:[#allocation4 + $0x478] sm:$0xff]
    %s3481 = scalar_lea.vmem [#allocation6], 5
    %v3482 = vld [vmem:[%s3481] ss:$8 sm:$0x3]
    %v3483 = vpack.c.bf16 %v3336, %v3335
    %3484 = vmatprep.subr.bf16.mxu0 0
    %3485 = vmatpush1.bf16.msra.mxu0 %v3483
    %3486 = vmatprep.subr.bf16.mxu0 0
    %3487 = vmatpush1.bf16.msra.mxu0 0
    %3488 = vmatprep.subr.bf16.mxu0 0
    %3489 = vmatpush1.bf16.msra.mxu0 0
    %3490 = vmatprep.subr.bf16.mxu0 0
    %3491 = vmatpush1.bf16.msra.mxu0 0
    %3492 = vmatprep.subr.bf16.mxu0 0
    %3493 = vmatpush1.bf16.msra.mxu0 0
    %3494 = vmatprep.subr.bf16.mxu0 0
    %3495 = vmatpush1.bf16.msra.mxu0 0
    %3496 = vmatprep.subr.bf16.mxu0 0
    %3497 = vmatpush1.bf16.msra.mxu0 0
    %3498 = vmatprep.subr.bf16.mxu0 0
    %3499 = vmatpush1.bf16.msra.mxu0 0
    %3500 = vmatprep.subr.bf16.mxu0 0
    %3501 = vmatpush1.bf16.msra.mxu0 0
    %3502 = vmatprep.subr.bf16.mxu0 0
    %3503 = vmatpush1.bf16.msra.mxu0 0
    %3504 = vmatprep.subr.bf16.mxu0 0
    %3505 = vmatpush1.bf16.msra.mxu0 0
    %3506 = vmatprep.subr.bf16.mxu0 0
    %3507 = vmatpush1.bf16.msra.mxu0 0
    %3508 = vmatprep.subr.bf16.mxu0 0
    %3509 = vmatpush1.bf16.msra.mxu0 0
    %3510 = vmatprep.subr.bf16.mxu0 0
    %3511 = vmatpush1.bf16.msra.mxu0 0
    %3512 = vmatprep.subr.bf16.mxu0 0
    %3513 = vmatpush1.bf16.msra.mxu0 0
    %3514 = vmatprep.subr.bf16.mxu0 0
    %3515 = vmatpush1.bf16.msra.mxu0 0
    %3516 = vmatprep.mubr.bf16.mxu0 0
    %3517 = vmatmul.mubr.bf16.gmra.mrb[0].mxu0 %v1425
    %v3518 = vpop.f32.mrb[0].mxu0
    %v3519 = vadd.f32 0.0, %v3518
    %v3520 = vpop.f32.mrb[0].mxu0
    %v3521 = vpop.f32.mrb[0].mxu0
    %v3522 = vadd.f32 0.0, %v3521
    %v3523 = vpop.f32.mrb[0].mxu0
    %3524 = vmatprep.mubr.bf16.mxu0 0
    %3525 = vmatmul.mubr.bf16.gmra.mrb[0].mxu0 %v1428
    %v3526 = vpop.f32.mrb[0].mxu0
    %v3527 = vadd.f32 0.0, %v3526
    %v3528 = vpop.f32.mrb[0].mxu0
    %v3529 = vpop.f32.mrb[0].mxu0
    %v3530 = vadd.f32 0.0, %v3529
    %v3531 = vpop.f32.mrb[0].mxu0
    %3532 = vmatprep.mubr.bf16.mxu0 0
    %3533 = vmatmul.mubr.bf16.gmra.mrb[0].mxu0 %v1431
    %v3534 = vpop.f32.mrb[0].mxu0
    %v3535 = vadd.f32 0.0, %v3534
    %v3536 = vpop.f32.mrb[0].mxu0
    %v3537 = vpop.f32.mrb[0].mxu0
    %v3538 = vadd.f32 0.0, %v3537
    %v3539 = vpop.f32.mrb[0].mxu0
    %3540 = vmatprep.mubr.bf16.mxu0 0
    %3541 = vmatmul.mubr.bf16.gmra.mrb[0].mxu0 %v1434
    %v3542 = vpop.f32.mrb[0].mxu0
    %v3543 = vadd.f32 0.0, %v3542
    %v3544 = vpop.f32.mrb[0].mxu0
    %v3545 = vpop.f32.mrb[0].mxu0
    %v3546 = vadd.f32 0.0, %v3545
    %v3547 = vpop.f32.mrb[0].mxu0
    %3548 = vmatprep.mubr.bf16.mxu0 0
    %3549 = vmatmul.mubr.bf16.gmra.mrb[0].mxu0 %v1437
    %v3550 = vpop.f32.mrb[0].mxu0
    %v3551 = vadd.f32 0.0, %v3550
    %v3552 = vpop.f32.mrb[0].mxu0
    %v3553 = vpop.f32.mrb[0].mxu0
    %v3554 = vadd.f32 0.0, %v3553
    %v3555 = vpop.f32.mrb[0].mxu0
    %3556 = vmatprep.mubr.bf16.mxu0 0
    %3557 = vmatmul.mubr.bf16.gmra.mrb[0].mxu0 %v1440
    %v3558 = vpop.f32.mrb[0].mxu0
    %v3559 = vadd.f32 0.0, %v3558
    %v3560 = vpop.f32.mrb[0].mxu0
    %v3561 = vpop.f32.mrb[0].mxu0
    %v3562 = vadd.f32 0.0, %v3561
    %v3563 = vpop.f32.mrb[0].mxu0
    %3564 = vmatprep.mubr.bf16.mxu0 0
    %3565 = vmatmul.mubr.bf16.gmra.mrb[0].mxu0 %v1443
    %v3566 = vpop.f32.mrb[0].mxu0
    %v3567 = vadd.f32 0.0, %v3566
    %v3568 = vpop.f32.mrb[0].mxu0
    %v3569 = vpop.f32.mrb[0].mxu0
    %v3570 = vadd.f32 0.0, %v3569
    %v3571 = vpop.f32.mrb[0].mxu0
    %3572 = vmatprep.mubr.bf16.mxu0 0
    %3573 = vmatmul.mubr.bf16.gmra.mrb[0].mxu0 %v1446
    %v3574 = vpop.f32.mrb[0].mxu0
    %v3575 = vadd.f32 0.0, %v3574
    %v3576 = vpop.f32.mrb[0].mxu0
    %v3577 = vpop.f32.mrb[0].mxu0
    %v3578 = vadd.f32 0.0, %v3577
    %v3579 = vpop.f32.mrb[0].mxu0
    %3580 = vmatprep.mubr.bf16.mxu0 0
    %3581 = vmatmul.mubr.bf16.gmra.mrb[0].mxu0 %v1449
    %v3582 = vpop.f32.mrb[0].mxu0
    %v3583 = vadd.f32 0.0, %v3582
    %v3584 = vpop.f32.mrb[0].mxu0
    %v3585 = vpop.f32.mrb[0].mxu0
    %v3586 = vadd.f32 0.0, %v3585
    %v3587 = vpop.f32.mrb[0].mxu0
    %3588 = vdwg.mxu0
    %v3589 = vpack.c.bf16 %v3522, %v3519
    %v3590 = vpack.c.bf16 %v3530, %v3527
    %v3591 = vpack.c.bf16 %v3538, %v3535
    %v3592 = vpack.c.bf16 %v3546, %v3543
    %v3593 = vpack.c.bf16 %v3554, %v3551
    %v3594 = vpack.c.bf16 %v3562, %v3559
    %v3595 = vpack.c.bf16 %v3570, %v3567
    %v3596 = vpack.c.bf16 %v3578, %v3575
    %v3597 = vpack.c.bf16 %v3586, %v3583
    %v3599 = vlaneseq
    %v3600 = vshrl.u32 %v3599, 7
    %v3601 = vsub.s32 0, %v3600
    %v3602 = vrot.slane %v3482, %v3601
    %v3603 = vlaneseq
    %v3604 = vshrl.u32 %v3603, 7
    %v3605 = vsub.s32 1, %v3604
    %v3606 = vrot.slane %v3482, %v3605
    %v3753 = vunpack.c.l.b16 %v3337
    %v3754 = vunpack.c.h.b16 %v3337
    %v3755 = vunpack.c.l.b16 %v3338
    %v3756 = vunpack.c.h.b16 %v3338
    %v3757 = vunpack.c.l.b16 %v3339
    %v3758 = vunpack.c.h.b16 %v3339
    %v3759 = vunpack.c.l.b16 %v3340
    %v3760 = vunpack.c.h.b16 %v3340
    %v3761 = vunpack.c.l.b16 %v3341
    %v3762 = vunpack.c.h.b16 %v3341
    %v3763 = vunpack.c.l.b16 %v3342
    %v3764 = vunpack.c.h.b16 %v3342
    %v3765 = vunpack.c.l.b16 %v3343
    %v3766 = vunpack.c.h.b16 %v3343
    %v3767 = vunpack.c.l.b16 %v3344
    %v3768 = vunpack.c.h.b16 %v3344
    %v3769 = vunpack.c.l.b16 %v3345
    %v3770 = vunpack.c.h.b16 %v3345
    %v3771 = vunpack.c.l.b16 %v3346
    %v3772 = vunpack.c.h.b16 %v3346
    %v3773 = vunpack.c.l.b16 %v3347
    %v3774 = vunpack.c.h.b16 %v3347
    %v3775 = vunpack.c.l.b16 %v3348
    %v3776 = vunpack.c.h.b16 %v3348
    %v3777 = vunpack.c.l.b16 %v3349
    %v3778 = vunpack.c.h.b16 %v3349
    %v3779 = vunpack.c.l.b16 %v3350
    %v3780 = vunpack.c.h.b16 %v3350
    %v3781 = vunpack.c.l.b16 %v3351
    %v3782 = vunpack.c.h.b16 %v3351
    %v3783 = vunpack.c.l.b16 %v3352
    %v3784 = vunpack.c.h.b16 %v3352
    %v3785 = vunpack.c.l.b16 %v3353
    %v3786 = vunpack.c.h.b16 %v3353
    %v3787 = vunpack.c.l.b16 %v3354
    %v3788 = vunpack.c.h.b16 %v3354
    %v3789 = vunpack.c.l.b16 %v3355
    %v3790 = vunpack.c.h.b16 %v3355
    %v3791 = vunpack.c.l.b16 %v3356
    %v3792 = vunpack.c.h.b16 %v3356
    %v3793 = vunpack.c.l.b16 %v3357
    %v3794 = vunpack.c.h.b16 %v3357
    %v3795 = vunpack.c.l.b16 %v3358
    %v3796 = vunpack.c.h.b16 %v3358
    %v3797 = vunpack.c.l.b16 %v3359
    %v3798 = vunpack.c.h.b16 %v3359
    %v3799 = vunpack.c.l.b16 %v3360
    %v3800 = vunpack.c.h.b16 %v3360
    %v3801 = vunpack.c.l.b16 %v3361
    %v3802 = vunpack.c.h.b16 %v3361
    %v3803 = vunpack.c.l.b16 %v3362
    %v3804 = vunpack.c.h.b16 %v3362
    %v3805 = vunpack.c.l.b16 %v3363
    %v3806 = vunpack.c.h.b16 %v3363
    %v3807 = vunpack.c.l.b16 %v3364
    %v3808 = vunpack.c.h.b16 %v3364
    %v3809 = vunpack.c.l.b16 %v3365
    %v3810 = vunpack.c.h.b16 %v3365
    %v3811 = vunpack.c.l.b16 %v3366
    %v3812 = vunpack.c.h.b16 %v3366
    %v3813 = vunpack.c.l.b16 %v3367
    %v3814 = vunpack.c.h.b16 %v3367
    %v3815 = vunpack.c.l.b16 %v3368
    %v3816 = vunpack.c.h.b16 %v3368
    %v3817 = vunpack.c.l.b16 %v3369
    %v3818 = vunpack.c.h.b16 %v3369
    %v3819 = vunpack.c.l.b16 %v3370
    %v3820 = vunpack.c.h.b16 %v3370
    %v3821 = vunpack.c.l.b16 %v3371
    %v3822 = vunpack.c.h.b16 %v3371
    %v3823 = vunpack.c.l.b16 %v3372
    %v3824 = vunpack.c.h.b16 %v3372
    %v3825 = vunpack.c.l.b16 %v3373
    %v3826 = vunpack.c.h.b16 %v3373
    %v3827 = vunpack.c.l.b16 %v3374
    %v3828 = vunpack.c.h.b16 %v3374
    %v3829 = vunpack.c.l.b16 %v3375
    %v3830 = vunpack.c.h.b16 %v3375
    %v3831 = vunpack.c.l.b16 %v3376
    %v3832 = vunpack.c.h.b16 %v3376
    %v3833 = vunpack.c.l.b16 %v3377
    %v3834 = vunpack.c.h.b16 %v3377
    %v3835 = vunpack.c.l.b16 %v3378
    %v3836 = vunpack.c.h.b16 %v3378
    %v3837 = vunpack.c.l.b16 %v3379
    %v3838 = vunpack.c.h.b16 %v3379
    %v3839 = vunpack.c.l.b16 %v3380
    %v3840 = vunpack.c.h.b16 %v3380
    %v3841 = vunpack.c.l.b16 %v3381
    %v3842 = vunpack.c.h.b16 %v3381
    %v3843 = vunpack.c.l.b16 %v3382
    %v3844 = vunpack.c.h.b16 %v3382
    %v3845 = vunpack.c.l.b16 %v3383
    %v3846 = vunpack.c.h.b16 %v3383
    %v3847 = vunpack.c.l.b16 %v3384
    %v3848 = vunpack.c.h.b16 %v3384
    %v3849 = vunpack.c.l.b16 %v3385
    %v3850 = vunpack.c.h.b16 %v3385
    %v3851 = vunpack.c.l.b16 %v3386
    %v3852 = vunpack.c.h.b16 %v3386
    %v3853 = vunpack.c.l.b16 %v3387
    %v3854 = vunpack.c.h.b16 %v3387
    %v3855 = vunpack.c.l.b16 %v3388
    %v3856 = vunpack.c.h.b16 %v3388
    %v3857 = vunpack.c.l.b16 %v3389
    %v3858 = vunpack.c.h.b16 %v3389
    %v3859 = vunpack.c.l.b16 %v3390
    %v3860 = vunpack.c.h.b16 %v3390
    %v3861 = vunpack.c.l.b16 %v3391
    %v3862 = vunpack.c.h.b16 %v3391
    %v3863 = vunpack.c.l.b16 %v3392
    %v3864 = vunpack.c.h.b16 %v3392
    %v3865 = vunpack.c.l.b16 %v3393
    %v3866 = vunpack.c.h.b16 %v3393
    %v3867 = vunpack.c.l.b16 %v3394
    %v3868 = vunpack.c.h.b16 %v3394
    %v3869 = vunpack.c.l.b16 %v3395
    %v3870 = vunpack.c.h.b16 %v3395
    %v3871 = vunpack.c.l.b16 %v3396
    %v3872 = vunpack.c.h.b16 %v3396
    %v3873 = vunpack.c.l.b16 %v3397
    %v3874 = vunpack.c.h.b16 %v3397
    %v3875 = vunpack.c.l.b16 %v3398
    %v3876 = vunpack.c.h.b16 %v3398
    %v3877 = vunpack.c.l.b16 %v3399
    %v3878 = vunpack.c.h.b16 %v3399
    %v3879 = vunpack.c.l.b16 %v3400
    %v3880 = vunpack.c.h.b16 %v3400
    %v3881 = vunpack.c.l.b16 %v3401
    %v3882 = vunpack.c.h.b16 %v3401
    %v3883 = vunpack.c.l.b16 %v3402
    %v3884 = vunpack.c.h.b16 %v3402
    %v3885 = vunpack.c.l.b16 %v3403
    %v3886 = vunpack.c.h.b16 %v3403
    %v3887 = vunpack.c.l.b16 %v3404
    %v3888 = vunpack.c.h.b16 %v3404
    %v3889 = vunpack.c.l.b16 %v3405
    %v3890 = vunpack.c.h.b16 %v3405
    %v3891 = vunpack.c.l.b16 %v3406
    %v3892 = vunpack.c.h.b16 %v3406
    %v3893 = vunpack.c.l.b16 %v3407
    %v3894 = vunpack.c.h.b16 %v3407
    %v3895 = vunpack.c.l.b16 %v3408
    %v3896 = vunpack.c.h.b16 %v3408
    %v3897 = vunpack.c.l.b16 %v3409
    %v3898 = vunpack.c.h.b16 %v3409
    %v3899 = vunpack.c.l.b16 %v3410
    %v3900 = vunpack.c.h.b16 %v3410
    %v3901 = vunpack.c.l.b16 %v3411
    %v3902 = vunpack.c.h.b16 %v3411
    %v3903 = vunpack.c.l.b16 %v3412
    %v3904 = vunpack.c.h.b16 %v3412
    %v3905 = vunpack.c.l.b16 %v3413
    %v3906 = vunpack.c.h.b16 %v3413
    %v3907 = vunpack.c.l.b16 %v3414
    %v3908 = vunpack.c.h.b16 %v3414
    %v3909 = vunpack.c.l.b16 %v3415
    %v3910 = vunpack.c.h.b16 %v3415
    %v3911 = vunpack.c.l.b16 %v3416
    %v3912 = vunpack.c.h.b16 %v3416
    %v3913 = vunpack.c.l.b16 %v3417
    %v3914 = vunpack.c.h.b16 %v3417
    %v3915 = vunpack.c.l.b16 %v3418
    %v3916 = vunpack.c.h.b16 %v3418
    %v3917 = vunpack.c.l.b16 %v3419
    %v3918 = vunpack.c.h.b16 %v3419
    %v3919 = vunpack.c.l.b16 %v3420
    %v3920 = vunpack.c.h.b16 %v3420
    %v3921 = vunpack.c.l.b16 %v3421
    %v3922 = vunpack.c.h.b16 %v3421
    %v3923 = vunpack.c.l.b16 %v3422
    %v3924 = vunpack.c.h.b16 %v3422
    %v3925 = vunpack.c.l.b16 %v3423
    %v3926 = vunpack.c.h.b16 %v3423
    %v3927 = vunpack.c.l.b16 %v3424
    %v3928 = vunpack.c.h.b16 %v3424
    %v3929 = vunpack.c.l.b16 %v3425
    %v3930 = vunpack.c.h.b16 %v3425
    %v3931 = vunpack.c.l.b16 %v3426
    %v3932 = vunpack.c.h.b16 %v3426
    %v3933 = vunpack.c.l.b16 %v3427
    %v3934 = vunpack.c.h.b16 %v3427
    %v3935 = vunpack.c.l.b16 %v3428
    %v3936 = vunpack.c.h.b16 %v3428
    %v3937 = vunpack.c.l.b16 %v3429
    %v3938 = vunpack.c.h.b16 %v3429
    %v3939 = vunpack.c.l.b16 %v3430
    %v3940 = vunpack.c.h.b16 %v3430
    %v3941 = vunpack.c.l.b16 %v3431
    %v3942 = vunpack.c.h.b16 %v3431
    %v3943 = vunpack.c.l.b16 %v3432
    %v3944 = vunpack.c.h.b16 %v3432
    %v3945 = vunpack.c.l.b16 %v3433
    %v3946 = vunpack.c.h.b16 %v3433
    %v3947 = vunpack.c.l.b16 %v3434
    %v3948 = vunpack.c.h.b16 %v3434
    %v3949 = vunpack.c.l.b16 %v3435
    %v3950 = vunpack.c.h.b16 %v3435
    %v3951 = vunpack.c.l.b16 %v3436
    %v3952 = vunpack.c.h.b16 %v3436
    %v3953 = vunpack.c.l.b16 %v3437
    %v3954 = vunpack.c.h.b16 %v3437
    %v3955 = vunpack.c.l.b16 %v3438
    %v3956 = vunpack.c.h.b16 %v3438
    %v3957 = vunpack.c.l.b16 %v3439
    %v3958 = vunpack.c.h.b16 %v3439
    %v3959 = vunpack.c.l.b16 %v3440
    %v3960 = vunpack.c.h.b16 %v3440
    %v3961 = vunpack.c.l.b16 %v3441
    %v3962 = vunpack.c.h.b16 %v3441
    %v3963 = vunpack.c.l.b16 %v3442
    %v3964 = vunpack.c.h.b16 %v3442
    %v3965 = vunpack.c.l.b16 %v3443
    %v3966 = vunpack.c.h.b16 %v3443
    %v3967 = vunpack.c.l.b16 %v3444
    %v3968 = vunpack.c.h.b16 %v3444
    %v3969 = vunpack.c.l.b16 %v3445
    %v3970 = vunpack.c.h.b16 %v3445
    %v3971 = vunpack.c.l.b16 %v3446
    %v3972 = vunpack.c.h.b16 %v3446
    %v3973 = vunpack.c.l.b16 %v3447
    %v3974 = vunpack.c.h.b16 %v3447
    %v3975 = vunpack.c.l.b16 %v3448
    %v3976 = vunpack.c.h.b16 %v3448
    %v3977 = vunpack.c.l.b16 %v3449
    %v3978 = vunpack.c.h.b16 %v3449
    %v3979 = vunpack.c.l.b16 %v3450
    %v3980 = vunpack.c.h.b16 %v3450
    %v3981 = vunpack.c.l.b16 %v3451
    %v3982 = vunpack.c.h.b16 %v3451
    %v3983 = vunpack.c.l.b16 %v3452
    %v3984 = vunpack.c.h.b16 %v3452
    %v3985 = vunpack.c.l.b16 %v3453
    %v3986 = vunpack.c.h.b16 %v3453
    %v3987 = vunpack.c.l.b16 %v3454
    %v3988 = vunpack.c.h.b16 %v3454
    %v3989 = vunpack.c.l.b16 %v3455
    %v3990 = vunpack.c.h.b16 %v3455
    %v3991 = vunpack.c.l.b16 %v3456
    %v3992 = vunpack.c.h.b16 %v3456
    %v3993 = vunpack.c.l.b16 %v3457
    %v3994 = vunpack.c.h.b16 %v3457
    %v3995 = vunpack.c.l.b16 %v3458
    %v3996 = vunpack.c.h.b16 %v3458
    %v3997 = vunpack.c.l.b16 %v3459
    %v3998 = vunpack.c.h.b16 %v3459
    %v3999 = vunpack.c.l.b16 %v3460
    %v4000 = vunpack.c.h.b16 %v3460
    %v4001 = vunpack.c.l.b16 %v3461
    %v4002 = vunpack.c.h.b16 %v3461
    %v4003 = vunpack.c.l.b16 %v3462
    %v4004 = vunpack.c.h.b16 %v3462
    %v4005 = vunpack.c.l.b16 %v3463
    %v4006 = vunpack.c.h.b16 %v3463
    %v4007 = vunpack.c.l.b16 %v3464
    %v4008 = vunpack.c.h.b16 %v3464
    %v4009 = vunpack.c.l.b16 %v3465
    %v4010 = vunpack.c.h.b16 %v3465
    %v4011 = vunpack.c.l.b16 %v3466
    %v4012 = vunpack.c.h.b16 %v3466
    %v4013 = vunpack.c.l.b16 %v3467
    %v4014 = vunpack.c.h.b16 %v3467
    %v4015 = vunpack.c.l.b16 %v3468
    %v4016 = vunpack.c.h.b16 %v3468
    %v4017 = vunpack.c.l.b16 %v3469
    %v4018 = vunpack.c.h.b16 %v3469
    %v4019 = vunpack.c.l.b16 %v3470
    %v4020 = vunpack.c.h.b16 %v3470
    %v4021 = vunpack.c.l.b16 %v3471
    %v4022 = vunpack.c.h.b16 %v3471
    %v4023 = vunpack.c.l.b16 %v3472
    %v4024 = vunpack.c.h.b16 %v3472
    %v4025 = vunpack.c.l.b16 %v3473
    %v4026 = vunpack.c.h.b16 %v3473
    %v4027 = vunpack.c.l.b16 %v3474
    %v4028 = vunpack.c.h.b16 %v3474
    %v4029 = vunpack.c.l.b16 %v3475
    %v4030 = vunpack.c.h.b16 %v3475
    %v4031 = vunpack.c.l.b16 %v3476
    %v4032 = vunpack.c.h.b16 %v3476
    %v4033 = vunpack.c.l.b16 %v3477
    %v4034 = vunpack.c.h.b16 %v3477
    %v4035 = vunpack.c.l.b16 %v3478
    %v4036 = vunpack.c.h.b16 %v3478
    %v4037 = vunpack.c.l.b16 %v3479
    %v4038 = vunpack.c.h.b16 %v3479
    %v4039 = vunpack.c.l.b16 %v3480
    %v4040 = vunpack.c.h.b16 %v3480
    %v4041 = vpack.c.b16 %v3755, %v3753
    %v4042 = vpack.c.b16 %v3756, %v3754
    %v4043 = vpack.c.b16 %v3759, %v3757
    %v4044 = vpack.c.b16 %v3760, %v3758
    %v4045 = vpack.c.b16 %v3763, %v3761
    %v4046 = vpack.c.b16 %v3764, %v3762
    %v4047 = vpack.c.b16 %v3767, %v3765
    %v4048 = vpack.c.b16 %v3768, %v3766
    %v4049 = vpack.c.b16 %v3771, %v3769
    %v4050 = vpack.c.b16 %v3772, %v3770
    %v4051 = vpack.c.b16 %v3775, %v3773
    %v4052 = vpack.c.b16 %v3776, %v3774
    %v4053 = vpack.c.b16 %v3779, %v3777
    %v4054 = vpack.c.b16 %v3780, %v3778
    %v4055 = vpack.c.b16 %v3783, %v3781
    %v4056 = vpack.c.b16 %v3784, %v3782
    %v4057 = vpack.c.b16 %v3787, %v3785
    %v4058 = vpack.c.b16 %v3788, %v3786
    %v4059 = vpack.c.b16 %v3791, %v3789
    %v4060 = vpack.c.b16 %v3792, %v3790
    %v4061 = vpack.c.b16 %v3795, %v3793
    %v4062 = vpack.c.b16 %v3796, %v3794
    %v4063 = vpack.c.b16 %v3799, %v3797
    %v4064 = vpack.c.b16 %v3800, %v3798
    %v4065 = vpack.c.b16 %v3803, %v3801
    %v4066 = vpack.c.b16 %v3804, %v3802
    %v4067 = vpack.c.b16 %v3807, %v3805
    %v4068 = vpack.c.b16 %v3808, %v3806
    %v4069 = vpack.c.b16 %v3811, %v3809
    %v4070 = vpack.c.b16 %v3812, %v3810
    %v4071 = vpack.c.b16 %v3815, %v3813
    %v4072 = vpack.c.b16 %v3816, %v3814
    %v4073 = vpack.c.b16 %v3819, %v3817
    %v4074 = vpack.c.b16 %v3820, %v3818
    %v4075 = vpack.c.b16 %v3823, %v3821
    %v4076 = vpack.c.b16 %v3824, %v3822
    %v4077 = vpack.c.b16 %v3827, %v3825
    %v4078 = vpack.c.b16 %v3828, %v3826
    %v4079 = vpack.c.b16 %v3831, %v3829
    %v4080 = vpack.c.b16 %v3832, %v3830
    %v4081 = vpack.c.b16 %v3835, %v3833
    %v4082 = vpack.c.b16 %v3836, %v3834
    %v4083 = vpack.c.b16 %v3839, %v3837
    %v4084 = vpack.c.b16 %v3840, %v3838
    %v4085 = vpack.c.b16 %v3843, %v3841
    %v4086 = vpack.c.b16 %v3844, %v3842
    %v4087 = vpack.c.b16 %v3847, %v3845
    %v4088 = vpack.c.b16 %v3848, %v3846
    %v4089 = vpack.c.b16 %v3851, %v3849
    %v4090 = vpack.c.b16 %v3852, %v3850
    %v4091 = vpack.c.b16 %v3855, %v3853
    %v4092 = vpack.c.b16 %v3856, %v3854
    %v4093 = vpack.c.b16 %v3859, %v3857
    %v4094 = vpack.c.b16 %v3860, %v3858
    %v4095 = vpack.c.b16 %v3863, %v3861
    %v4096 = vpack.c.b16 %v3864, %v3862
    %v4097 = vpack.c.b16 %v3867, %v3865
    %v4098 = vpack.c.b16 %v3868, %v3866
    %v4099 = vpack.c.b16 %v3871, %v3869
    %v4100 = vpack.c.b16 %v3872, %v3870
    %v4101 = vpack.c.b16 %v3875, %v3873
    %v4102 = vpack.c.b16 %v3876, %v3874
    %v4103 = vpack.c.b16 %v3879, %v3877
    %v4104 = vpack.c.b16 %v3880, %v3878
    %v4105 = vpack.c.b16 %v3883, %v3881
    %v4106 = vpack.c.b16 %v3884, %v3882
    %v4107 = vpack.c.b16 %v3887, %v3885
    %v4108 = vpack.c.b16 %v3888, %v3886
    %v4109 = vpack.c.b16 %v3891, %v3889
    %v4110 = vpack.c.b16 %v3892, %v3890
    %v4111 = vpack.c.b16 %v3895, %v3893
    %v4112 = vpack.c.b16 %v3896, %v3894
    %v4113 = vpack.c.b16 %v3899, %v3897
    %v4114 = vpack.c.b16 %v3900, %v3898
    %v4115 = vpack.c.b16 %v3903, %v3901
    %v4116 = vpack.c.b16 %v3904, %v3902
    %v4117 = vpack.c.b16 %v3907, %v3905
    %v4118 = vpack.c.b16 %v3908, %v3906
    %v4119 = vpack.c.b16 %v3911, %v3909
    %v4120 = vpack.c.b16 %v3912, %v3910
    %v4121 = vpack.c.b16 %v3915, %v3913
    %v4122 = vpack.c.b16 %v3916, %v3914
    %v4123 = vpack.c.b16 %v3919, %v3917
    %v4124 = vpack.c.b16 %v3920, %v3918
    %v4125 = vpack.c.b16 %v3923, %v3921
    %v4126 = vpack.c.b16 %v3924, %v3922
    %v4127 = vpack.c.b16 %v3927, %v3925
    %v4128 = vpack.c.b16 %v3928, %v3926
    %v4129 = vpack.c.b16 %v3931, %v3929
    %v4130 = vpack.c.b16 %v3932, %v3930
    %v4131 = vpack.c.b16 %v3935, %v3933
    %v4132 = vpack.c.b16 %v3936, %v3934
    %v4133 = vpack.c.b16 %v3939, %v3937
    %v4134 = vpack.c.b16 %v3940, %v3938
    %v4135 = vpack.c.b16 %v3943, %v3941
    %v4136 = vpack.c.b16 %v3944, %v3942
    %v4137 = vpack.c.b16 %v3947, %v3945
    %v4138 = vpack.c.b16 %v3948, %v3946
    %v4139 = vpack.c.b16 %v3951, %v3949
    %v4140 = vpack.c.b16 %v3952, %v3950
    %v4141 = vpack.c.b16 %v3955, %v3953
    %v4142 = vpack.c.b16 %v3956, %v3954
    %v4143 = vpack.c.b16 %v3959, %v3957
    %v4144 = vpack.c.b16 %v3960, %v3958
    %v4145 = vpack.c.b16 %v3963, %v3961
    %v4146 = vpack.c.b16 %v3964, %v3962
    %v4147 = vpack.c.b16 %v3967, %v3965
    %v4148 = vpack.c.b16 %v3968, %v3966
    %v4149 = vpack.c.b16 %v3971, %v3969
    %v4150 = vpack.c.b16 %v3972, %v3970
    %v4151 = vpack.c.b16 %v3975, %v3973
    %v4152 = vpack.c.b16 %v3976, %v3974
    %v4153 = vpack.c.b16 %v3979, %v3977
    %v4154 = vpack.c.b16 %v3980, %v3978
    %v4155 = vpack.c.b16 %v3983, %v3981
    %v4156 = vpack.c.b16 %v3984, %v3982
    %v4157 = vpack.c.b16 %v3987, %v3985
    %v4158 = vpack.c.b16 %v3988, %v3986
    %v4159 = vpack.c.b16 %v3991, %v3989
    %v4160 = vpack.c.b16 %v3992, %v3990
    %v4161 = vpack.c.b16 %v3995, %v3993
    %v4162 = vpack.c.b16 %v3996, %v3994
    %v4163 = vpack.c.b16 %v3999, %v3997
    %v4164 = vpack.c.b16 %v4000, %v3998
    %v4165 = vpack.c.b16 %v4003, %v4001
    %v4166 = vpack.c.b16 %v4004, %v4002
    %v4167 = vpack.c.b16 %v4007, %v4005
    %v4168 = vpack.c.b16 %v4008, %v4006
    %v4169 = vpack.c.b16 %v4011, %v4009
    %v4170 = vpack.c.b16 %v4012, %v4010
    %v4171 = vpack.c.b16 %v4015, %v4013
    %v4172 = vpack.c.b16 %v4016, %v4014
    %v4173 = vpack.c.b16 %v4019, %v4017
    %v4174 = vpack.c.b16 %v4020, %v4018
    %v4175 = vpack.c.b16 %v4023, %v4021
    %v4176 = vpack.c.b16 %v4024, %v4022
    %v4177 = vpack.c.b16 %v4027, %v4025
    %v4178 = vpack.c.b16 %v4028, %v4026
    %v4179 = vpack.c.b16 %v4031, %v4029
    %v4180 = vpack.c.b16 %v4032, %v4030
    %v4181 = vpack.c.b16 %v4035, %v4033
    %v4182 = vpack.c.b16 %v4036, %v4034
    %v4183 = vpack.c.b16 %v4039, %v4037
    %v4184 = vpack.c.b16 %v4040, %v4038
    %4329 = vmatprep.subr.bf16.mxu0 %v4042
    %4330 = vmatpush1.bf16.msra.mxu0 %v4041
    %4331 = vmatprep.subr.bf16.mxu0 %v4044
    %4332 = vmatpush1.bf16.msra.mxu0 %v4043
    %4333 = vmatprep.subr.bf16.mxu0 %v4046
    %4334 = vmatpush1.bf16.msra.mxu0 %v4045
    %4335 = vmatprep.subr.bf16.mxu0 %v4048
    %4336 = vmatpush1.bf16.msra.mxu0 %v4047
    %4337 = vmatprep.subr.bf16.mxu0 %v4050
    %4338 = vmatpush1.bf16.msra.mxu0 %v4049
    %4339 = vmatprep.subr.bf16.mxu0 %v4052
    %4340 = vmatpush1.bf16.msra.mxu0 %v4051
    %4341 = vmatprep.subr.bf16.mxu0 %v4054
    %4342 = vmatpush1.bf16.msra.mxu0 %v4053
    %4343 = vmatprep.subr.bf16.mxu0 %v4056
    %4344 = vmatpush1.bf16.msra.mxu0 %v4055
    %4345 = vmatprep.subr.bf16.mxu0 %v4058
    %4346 = vmatpush1.bf16.msra.mxu0 %v4057
    %4347 = vmatprep.subr.bf16.mxu0 %v4060
    %4348 = vmatpush1.bf16.msra.mxu0 %v4059
    %4349 = vmatprep.subr.bf16.mxu0 %v4062
    %4350 = vmatpush1.bf16.msra.mxu0 %v4061
    %4351 = vmatprep.subr.bf16.mxu0 %v4064
    %4352 = vmatpush1.bf16.msra.mxu0 %v4063
    %4353 = vmatprep.subr.bf16.mxu0 %v4066
    %4354 = vmatpush1.bf16.msra.mxu0 %v4065
    %4355 = vmatprep.subr.bf16.mxu0 %v4068
    %4356 = vmatpush1.bf16.msra.mxu0 %v4067
    %4357 = vmatprep.subr.bf16.mxu0 %v4070
    %4358 = vmatpush1.bf16.msra.mxu0 %v4069
    %4359 = vmatprep.subr.bf16.mxu0 %v4072
    %4360 = vmatpush1.bf16.msra.mxu0 %v4071
    %4361 = vmatprep.mubr.bf16.mxu0 %v3590
    %4362 = vmatmul.mubr.bf16.gmra.mrb[0].mxu0 %v3589
    %v4363 = vpop.f32.mrb[0].mxu0
    %v4364 = vadd.f32 %v3602, %v4363
    %v4365 = vpop.f32.mrb[0].mxu0
    %v4366 = vadd.f32 %v3606, %v4365
    %v4367 = vpop.f32.mrb[0].mxu0
    %v4368 = vadd.f32 %v3602, %v4367
    %v4369 = vpop.f32.mrb[0].mxu0
    %v4370 = vadd.f32 %v3606, %v4369
    %4371 = vdwg.mxu0
    %4372 = vmatprep.subr.bf16.mxu0 %v4074
    %4373 = vmatpush1.bf16.msra.mxu0 %v4073
    %4374 = vmatprep.subr.bf16.mxu0 %v4076
    %4375 = vmatpush1.bf16.msra.mxu0 %v4075
    %4376 = vmatprep.subr.bf16.mxu0 %v4078
    %4377 = vmatpush1.bf16.msra.mxu0 %v4077
    %4378 = vmatprep.subr.bf16.mxu0 %v4080
    %4379 = vmatpush1.bf16.msra.mxu0 %v4079
    %4380 = vmatprep.subr.bf16.mxu0 %v4082
    %4381 = vmatpush1.bf16.msra.mxu0 %v4081
    %4382 = vmatprep.subr.bf16.mxu0 %v4084
    %4383 = vmatpush1.bf16.msra.mxu0 %v4083
    %4384 = vmatprep.subr.bf16.mxu0 %v4086
    %4385 = vmatpush1.bf16.msra.mxu0 %v4085
    %4386 = vmatprep.subr.bf16.mxu0 %v4088
    %4387 = vmatpush1.bf16.msra.mxu0 %v4087
    %4388 = vmatprep.subr.bf16.mxu0 %v4090
    %4389 = vmatpush1.bf16.msra.mxu0 %v4089
    %4390 = vmatprep.subr.bf16.mxu0 %v4092
    %4391 = vmatpush1.bf16.msra.mxu0 %v4091
    %4392 = vmatprep.subr.bf16.mxu0 %v4094
    %4393 = vmatpush1.bf16.msra.mxu0 %v4093
    %4394 = vmatprep.subr.bf16.mxu0 %v4096
    %4395 = vmatpush1.bf16.msra.mxu0 %v4095
    %4396 = vmatprep.subr.bf16.mxu0 %v4098
    %4397 = vmatpush1.bf16.msra.mxu0 %v4097
    %4398 = vmatprep.subr.bf16.mxu0 %v4100
    %4399 = vmatpush1.bf16.msra.mxu0 %v4099
    %4400 = vmatprep.subr.bf16.mxu0 %v4102
    %4401 = vmatpush1.bf16.msra.mxu0 %v4101
    %4402 = vmatprep.subr.bf16.mxu0 %v4104
    %4403 = vmatpush1.bf16.msra.mxu0 %v4103
    %4404 = vmatprep.mubr.bf16.mxu0 %v3592
    %4405 = vmatmul.mubr.bf16.gmra.mrb[0].mxu0 %v3591
    %v4406 = vpop.f32.mrb[0].mxu0
    %v4407 = vadd.f32 %v4364, %v4406
    %v4408 = vpop.f32.mrb[0].mxu0
    %v4409 = vadd.f32 %v4366, %v4408
    %v4410 = vpop.f32.mrb[0].mxu0
    %v4411 = vadd.f32 %v4368, %v4410
    %v4412 = vpop.f32.mrb[0].mxu0
    %v4413 = vadd.f32 %v4370, %v4412
    %4414 = vdwg.mxu0
    %4415 = vmatprep.subr.bf16.mxu0 %v4106
    %4416 = vmatpush1.bf16.msra.mxu0 %v4105
    %4417 = vmatprep.subr.bf16.mxu0 %v4108
    %4418 = vmatpush1.bf16.msra.mxu0 %v4107
    %4419 = vmatprep.subr.bf16.mxu0 %v4110
    %4420 = vmatpush1.bf16.msra.mxu0 %v4109
    %4421 = vmatprep.subr.bf16.mxu0 %v4112
    %4422 = vmatpush1.bf16.msra.mxu0 %v4111
    %4423 = vmatprep.subr.bf16.mxu0 %v4114
    %4424 = vmatpush1.bf16.msra.mxu0 %v4113
    %4425 = vmatprep.subr.bf16.mxu0 %v4116
    %4426 = vmatpush1.bf16.msra.mxu0 %v4115
    %4427 = vmatprep.subr.bf16.mxu0 %v4118
    %4428 = vmatpush1.bf16.msra.mxu0 %v4117
    %4429 = vmatprep.subr.bf16.mxu0 %v4120
    %4430 = vmatpush1.bf16.msra.mxu0 %v4119
    %4431 = vmatprep.subr.bf16.mxu0 %v4122
    %4432 = vmatpush1.bf16.msra.mxu0 %v4121
    %4433 = vmatprep.subr.bf16.mxu0 %v4124
    %4434 = vmatpush1.bf16.msra.mxu0 %v4123
    %4435 = vmatprep.subr.bf16.mxu0 %v4126
    %4436 = vmatpush1.bf16.msra.mxu0 %v4125
    %4437 = vmatprep.subr.bf16.mxu0 %v4128
    %4438 = vmatpush1.bf16.msra.mxu0 %v4127
    %4439 = vmatprep.subr.bf16.mxu0 %v4130
    %4440 = vmatpush1.bf16.msra.mxu0 %v4129
    %4441 = vmatprep.subr.bf16.mxu0 %v4132
    %4442 = vmatpush1.bf16.msra.mxu0 %v4131
    %4443 = vmatprep.subr.bf16.mxu0 %v4134
    %4444 = vmatpush1.bf16.msra.mxu0 %v4133
    %4445 = vmatprep.subr.bf16.mxu0 %v4136
    %4446 = vmatpush1.bf16.msra.mxu0 %v4135
    %4447 = vmatprep.mubr.bf16.mxu0 %v3594
    %4448 = vmatmul.mubr.bf16.gmra.mrb[0].mxu0 %v3593
    %v4449 = vpop.f32.mrb[0].mxu0
    %v4450 = vadd.f32 %v4407, %v4449
    %v4451 = vpop.f32.mrb[0].mxu0
    %v4452 = vadd.f32 %v4409, %v4451
    %v4453 = vpop.f32.mrb[0].mxu0
    %v4454 = vadd.f32 %v4411, %v4453
    %v4455 = vpop.f32.mrb[0].mxu0
    %v4456 = vadd.f32 %v4413, %v4455
    %4457 = vdwg.mxu0
    %4458 = vmatprep.subr.bf16.mxu0 %v4138
    %4459 = vmatpush1.bf16.msra.mxu0 %v4137
    %4460 = vmatprep.subr.bf16.mxu0 %v4140
    %4461 = vmatpush1.bf16.msra.mxu0 %v4139
    %4462 = vmatprep.subr.bf16.mxu0 %v4142
    %4463 = vmatpush1.bf16.msra.mxu0 %v4141
    %4464 = vmatprep.subr.bf16.mxu0 %v4144
    %4465 = vmatpush1.bf16.msra.mxu0 %v4143
    %4466 = vmatprep.subr.bf16.mxu0 %v4146
    %4467 = vmatpush1.bf16.msra.mxu0 %v4145
    %4468 = vmatprep.subr.bf16.mxu0 %v4148
    %4469 = vmatpush1.bf16.msra.mxu0 %v4147
    %4470 = vmatprep.subr.bf16.mxu0 %v4150
    %4471 = vmatpush1.bf16.msra.mxu0 %v4149
    %4472 = vmatprep.subr.bf16.mxu0 %v4152
    %4473 = vmatpush1.bf16.msra.mxu0 %v4151
    %4474 = vmatprep.subr.bf16.mxu0 %v4154
    %4475 = vmatpush1.bf16.msra.mxu0 %v4153
    %4476 = vmatprep.subr.bf16.mxu0 %v4156
    %4477 = vmatpush1.bf16.msra.mxu0 %v4155
    %4478 = vmatprep.subr.bf16.mxu0 %v4158
    %4479 = vmatpush1.bf16.msra.mxu0 %v4157
    %4480 = vmatprep.subr.bf16.mxu0 %v4160
    %4481 = vmatpush1.bf16.msra.mxu0 %v4159
    %4482 = vmatprep.subr.bf16.mxu0 %v4162
    %4483 = vmatpush1.bf16.msra.mxu0 %v4161
    %4484 = vmatprep.subr.bf16.mxu0 %v4164
    %4485 = vmatpush1.bf16.msra.mxu0 %v4163
    %4486 = vmatprep.subr.bf16.mxu0 %v4166
    %4487 = vmatpush1.bf16.msra.mxu0 %v4165
    %4488 = vmatprep.subr.bf16.mxu0 %v4168
    %4489 = vmatpush1.bf16.msra.mxu0 %v4167
    %4490 = vmatprep.mubr.bf16.mxu0 %v3596
    %4491 = vmatmul.mubr.bf16.gmra.mrb[0].mxu0 %v3595
    %v4492 = vpop.f32.mrb[0].mxu0
    %v4493 = vadd.f32 %v4450, %v4492
    %v4494 = vpop.f32.mrb[0].mxu0
    %v4495 = vadd.f32 %v4452, %v4494
    %v4496 = vpop.f32.mrb[0].mxu0
    %v4497 = vadd.f32 %v4454, %v4496
    %v4498 = vpop.f32.mrb[0].mxu0
    %v4499 = vadd.f32 %v4456, %v4498
    %4500 = vdwg.mxu0
    %4501 = vmatprep.subr.bf16.mxu0 %v4170
    %4502 = vmatpush1.bf16.msra.mxu0 %v4169
    %4503 = vmatprep.subr.bf16.mxu0 %v4172
    %4504 = vmatpush1.bf16.msra.mxu0 %v4171
    %4505 = vmatprep.subr.bf16.mxu0 %v4174
    %4506 = vmatpush1.bf16.msra.mxu0 %v4173
    %4507 = vmatprep.subr.bf16.mxu0 %v4176
    %4508 = vmatpush1.bf16.msra.mxu0 %v4175
    %4509 = vmatprep.subr.bf16.mxu0 %v4178
    %4510 = vmatpush1.bf16.msra.mxu0 %v4177
    %4511 = vmatprep.subr.bf16.mxu0 %v4180
    %4512 = vmatpush1.bf16.msra.mxu0 %v4179
    %4513 = vmatprep.subr.bf16.mxu0 %v4182
    %4514 = vmatpush1.bf16.msra.mxu0 %v4181
    %4515 = vmatprep.subr.bf16.mxu0 %v4184
    %4516 = vmatpush1.bf16.msra.mxu0 %v4183
    %4517 = vmatprep.subr.bf16.mxu0 0
    %4518 = vmatpush1.bf16.msra.mxu0 0
    %4519 = vmatprep.subr.bf16.mxu0 0
    %4520 = vmatpush1.bf16.msra.mxu0 0
    %4521 = vmatprep.subr.bf16.mxu0 0
    %4522 = vmatpush1.bf16.msra.mxu0 0
    %4523 = vmatprep.subr.bf16.mxu0 0
    %4524 = vmatpush1.bf16.msra.mxu0 0
    %4525 = vmatprep.subr.bf16.mxu0 0
    %4526 = vmatpush1.bf16.msra.mxu0 0
    %4527 = vmatprep.subr.bf16.mxu0 0
    %4528 = vmatpush1.bf16.msra.mxu0 0
    %4529 = vmatprep.subr.bf16.mxu0 0
    %4530 = vmatpush1.bf16.msra.mxu0 0
    %4531 = vmatprep.subr.bf16.mxu0 0
    %4532 = vmatpush1.bf16.msra.mxu0 0
    %4533 = vmatprep.mubr.bf16.mxu0 0
    %4534 = vmatmul.mubr.bf16.gmra.mrb[0].mxu0 %v3597
    %v4535 = vpop.f32.mrb[0].mxu0
    %v4536 = vadd.f32 %v4493, %v4535
    %v4537 = vpop.f32.mrb[0].mxu0
    %v4538 = vadd.f32 %v4495, %v4537
    %v4539 = vpop.f32.mrb[0].mxu0
    %v4540 = vadd.f32 %v4497, %v4539
    %v4541 = vpop.f32.mrb[0].mxu0
    %v4542 = vadd.f32 %v4499, %v4541
    %4543 = vdwg.mxu0
    %vm4544 = vcmp.gt.f32.partialorder %v4536, 0.0
    %vm4545 = vcmp.gt.f32.partialorder %v4538, 0.0
    %vm4546 = vcmp.gt.f32.partialorder %v4540, 0.0
    %vm4547 = vcmp.gt.f32.partialorder %v4542, 0.0
    %v4548 = vmul.f32 %v4536, 0.01
    %v4549 = vmul.f32 %v4538, 0.01
    %v4550 = vmul.f32 %v4540, 0.01
    %v4551 = vmul.f32 %v4542, 0.01
    %v4552 = vsel %vm4544, %v4536, %v4548
    %v4553 = vsel %vm4545, %v4538, %v4549
    %v4554 = vsel %vm4546, %v4540, %v4550
    %v4555 = vsel %vm4547, %v4542, %v4551
    %v4556 = vld [vmem:[#allocation2 + $0x7f8] sm:$0xf]
    %v4557 = vld [vmem:[#allocation2 + $0x7fc] sm:$0xf]
    %v4558 = vld [vmem:[#allocation2 + $0x800] sm:$0xf]
    %v4559 = vld [vmem:[#allocation2 + $0x804] sm:$0xf]
    %v4560 = vpack.c.bf16 %v4554, %v4552
    %v4561 = vpack.c.bf16 %v4555, %v4553
    %v4566 = vunpack.c.l.b16 %v4556
    %v4567 = vunpack.c.l.b16 %v4557
    %v4568 = vunpack.c.l.b16 %v4558
    %v4569 = vunpack.c.l.b16 %v4559
    %v4570 = vpack.c.b16 %v4567, %v4566
    %v4571 = vpack.c.b16 %v4569, %v4568
    %v4573 = vsel %vm1423, %v4570, 0
    %v4576 = vsel %vm1423, %v4571, 0
    %4578 = vmatprep.subr.bf16.mxu0 %v4561
    %4579 = vmatpush1.bf16.msra.mxu0 %v4560
    %4580 = vmatprep.subr.bf16.mxu0 0
    %4581 = vmatpush1.bf16.msra.mxu0 0
    %4582 = vmatprep.subr.bf16.mxu0 0
    %4583 = vmatpush1.bf16.msra.mxu0 0
    %4584 = vmatprep.subr.bf16.mxu0 0
    %4585 = vmatpush1.bf16.msra.mxu0 0
    %4586 = vmatprep.subr.bf16.mxu0 0
    %4587 = vmatpush1.bf16.msra.mxu0 0
    %4588 = vmatprep.subr.bf16.mxu0 0
    %4589 = vmatpush1.bf16.msra.mxu0 0
    %4590 = vmatprep.subr.bf16.mxu0 0
    %4591 = vmatpush1.bf16.msra.mxu0 0
    %4592 = vmatprep.subr.bf16.mxu0 0
    %4593 = vmatpush1.bf16.msra.mxu0 0
    %4594 = vmatprep.subr.bf16.mxu0 0
    %4595 = vmatpush1.bf16.msra.mxu0 0
    %4596 = vmatprep.subr.bf16.mxu0 0
    %4597 = vmatpush1.bf16.msra.mxu0 0
    %4598 = vmatprep.subr.bf16.mxu0 0
    %4599 = vmatpush1.bf16.msra.mxu0 0
    %4600 = vmatprep.subr.bf16.mxu0 0
    %4601 = vmatpush1.bf16.msra.mxu0 0
    %4602 = vmatprep.subr.bf16.mxu0 0
    %4603 = vmatpush1.bf16.msra.mxu0 0
    %4604 = vmatprep.subr.bf16.mxu0 0
    %4605 = vmatpush1.bf16.msra.mxu0 0
    %4606 = vmatprep.subr.bf16.mxu0 0
    %4607 = vmatpush1.bf16.msra.mxu0 0
    %4608 = vmatprep.subr.bf16.mxu0 0
    %4609 = vmatpush1.bf16.msra.mxu0 0
    %4610 = vmatprep.mubr.bf16.mxu0 0
    %4611 = vmatmul.mubr.bf16.gmra.mrb[0].mxu0 %v4573
    %v4612 = vpop.f32.mrb[0].mxu0
    %v4613 = vadd.f32 0.0, %v4612
    %v4614 = vpop.f32.mrb[0].mxu0
    %v4615 = vadd.f32 0.0, %v4614
    %v4616 = vpop.f32.mrb[0].mxu0
    %v4617 = vadd.f32 0.0, %v4616
    %v4618 = vpop.f32.mrb[0].mxu0
    %v4619 = vadd.f32 0.0, %v4618
    %4620 = vmatprep.mubr.bf16.mxu0 0
    %4621 = vmatmul.mubr.bf16.gmra.mrb[0].mxu0 %v4576
    %v4622 = vpop.f32.mrb[0].mxu0
    %v4623 = vadd.f32 0.0, %v4622
    %v4624 = vpop.f32.mrb[0].mxu0
    %v4625 = vadd.f32 0.0, %v4624
    %v4626 = vpop.f32.mrb[0].mxu0
    %v4627 = vadd.f32 0.0, %v4626
    %v4628 = vpop.f32.mrb[0].mxu0
    %v4629 = vadd.f32 0.0, %v4628
    %4630 = vdwg.mxu0
    %v4631 = vmax.f32 %v4613, %v4617
    %v4632 = vmax.f32 %v4615, %v4619
    %v4633 = vmax.f32 %v4623, %v4627
    %v4634 = vmax.f32 %v4625, %v4629
    %v4635 = vmax.f32 %v4631, %v4633
    %v4636 = vmax.f32 %v4632, %v4634
    %v4637 = vld [vmem:[#allocation2 + $0x540] sm:$0xf]
    %v4638 = vld [vmem:[#allocation2 + $0x544] sm:$0xf]
    %v4639 = vld [vmem:[#allocation2 + $0x548] sm:$0xf]
    %v4640 = vld [vmem:[#allocation2 + $0x54c] sm:$0xf]
    %v4641 = vld [vmem:[#allocation2 + $0x550] sm:$0xf]
    %v4642 = vld [vmem:[#allocation2 + $0x554] sm:$0xf]
    %v4643 = vld [vmem:[#allocation2 + $0x558] sm:$0xf]
    %v4644 = vld [vmem:[#allocation2 + $0x55c] sm:$0xf]
    %v4645 = vld [vmem:[#allocation2 + $0x560] sm:$0xf]
    %v4646 = vld [vmem:[#allocation2 + $0x564] sm:$0xf]
    %v4647 = vld [vmem:[#allocation2 + $0x568] sm:$0xf]
    %v4648 = vld [vmem:[#allocation2 + $0x56c] sm:$0xf]
    %v4649 = vld [vmem:[#allocation2 + $0x570] sm:$0xf]
    %v4650 = vld [vmem:[#allocation2 + $0x574] sm:$0xf]
    %v4651 = vld [vmem:[#allocation2 + $0x578] sm:$0xf]
    %v4652 = vld [vmem:[#allocation2 + $0x57c] sm:$0xf]
    %v4653 = vld [vmem:[#allocation2 + $0x580] sm:$0xf]
    %v4654 = vld [vmem:[#allocation2 + $0x584] sm:$0xf]
    %v4655 = vld [vmem:[#allocation2 + $0x588] sm:$0xf]
    %v4656 = vld [vmem:[#allocation2 + $0x58c] sm:$0xf]
    %v4657 = vld [vmem:[#allocation2 + $0x590] sm:$0xf]
    %v4658 = vld [vmem:[#allocation2 + $0x594] sm:$0xf]
    %v4659 = vld [vmem:[#allocation2 + $0x598] sm:$0xf]
    %v4660 = vld [vmem:[#allocation2 + $0x59c] sm:$0xf]
    %v4661 = vld [vmem:[#allocation2 + $0x5a0] sm:$0xf]
    %v4662 = vld [vmem:[#allocation2 + $0x5a4] sm:$0xf]
    %v4663 = vld [vmem:[#allocation2 + $0x5a8] sm:$0xf]
    %v4664 = vld [vmem:[#allocation2 + $0x5ac] sm:$0xf]
    %v4665 = vld [vmem:[#allocation2 + $0x5b0] sm:$0xf]
    %v4666 = vld [vmem:[#allocation2 + $0x5b4] sm:$0xf]
    %v4667 = vld [vmem:[#allocation2 + $0x5b8] sm:$0xf]
    %v4668 = vld [vmem:[#allocation2 + $0x5bc] sm:$0xf]
    %v4669 = vld [vmem:[#allocation6 + $0x6] ss:$0 sm:$0xff]
    %v4670 = vpack.c.bf16 %v4635, %v4635
    %v4671 = vpack.c.bf16 %v4636, %v4636
    %v4704 = vunpack.c.l.b16 %v4637
    %v4705 = vunpack.c.l.b16 %v4638
    %v4706 = vunpack.c.l.b16 %v4639
    %v4707 = vunpack.c.l.b16 %v4640
    %v4708 = vunpack.c.l.b16 %v4641
    %v4709 = vunpack.c.l.b16 %v4642
    %v4710 = vunpack.c.l.b16 %v4643
    %v4711 = vunpack.c.l.b16 %v4644
    %v4712 = vunpack.c.l.b16 %v4645
    %v4713 = vunpack.c.l.b16 %v4646
    %v4714 = vunpack.c.l.b16 %v4647
    %v4715 = vunpack.c.l.b16 %v4648
    %v4716 = vunpack.c.l.b16 %v4649
    %v4717 = vunpack.c.l.b16 %v4650
    %v4718 = vunpack.c.l.b16 %v4651
    %v4719 = vunpack.c.l.b16 %v4652
    %v4720 = vunpack.c.l.b16 %v4653
    %v4721 = vunpack.c.l.b16 %v4654
    %v4722 = vunpack.c.l.b16 %v4655
    %v4723 = vunpack.c.l.b16 %v4656
    %v4724 = vunpack.c.l.b16 %v4657
    %v4725 = vunpack.c.l.b16 %v4658
    %v4726 = vunpack.c.l.b16 %v4659
    %v4727 = vunpack.c.l.b16 %v4660
    %v4728 = vunpack.c.l.b16 %v4661
    %v4729 = vunpack.c.l.b16 %v4662
    %v4730 = vunpack.c.l.b16 %v4663
    %v4731 = vunpack.c.l.b16 %v4664
    %v4732 = vunpack.c.l.b16 %v4665
    %v4733 = vunpack.c.l.b16 %v4666
    %v4734 = vunpack.c.l.b16 %v4667
    %v4735 = vunpack.c.l.b16 %v4668
    %v4736 = vpack.c.b16 %v4705, %v4704
    %v4737 = vpack.c.b16 %v4707, %v4706
    %v4738 = vpack.c.b16 %v4709, %v4708
    %v4739 = vpack.c.b16 %v4711, %v4710
    %v4740 = vpack.c.b16 %v4713, %v4712
    %v4741 = vpack.c.b16 %v4715, %v4714
    %v4742 = vpack.c.b16 %v4717, %v4716
    %v4743 = vpack.c.b16 %v4719, %v4718
    %v4744 = vpack.c.b16 %v4721, %v4720
    %v4745 = vpack.c.b16 %v4723, %v4722
    %v4746 = vpack.c.b16 %v4725, %v4724
    %v4747 = vpack.c.b16 %v4727, %v4726
    %v4748 = vpack.c.b16 %v4729, %v4728
    %v4749 = vpack.c.b16 %v4731, %v4730
    %v4750 = vpack.c.b16 %v4733, %v4732
    %v4751 = vpack.c.b16 %v4735, %v4734
    %4768 = vmatprep.subr.bf16.mxu0 0
    %4769 = vmatpush1.bf16.msra.mxu0 %v4736
    %4770 = vmatprep.subr.bf16.mxu0 0
    %4771 = vmatpush1.bf16.msra.mxu0 %v4737
    %4772 = vmatprep.subr.bf16.mxu0 0
    %4773 = vmatpush1.bf16.msra.mxu0 %v4738
    %4774 = vmatprep.subr.bf16.mxu0 0
    %4775 = vmatpush1.bf16.msra.mxu0 %v4739
    %4776 = vmatprep.subr.bf16.mxu0 0
    %4777 = vmatpush1.bf16.msra.mxu0 %v4740
    %4778 = vmatprep.subr.bf16.mxu0 0
    %4779 = vmatpush1.bf16.msra.mxu0 %v4741
    %4780 = vmatprep.subr.bf16.mxu0 0
    %4781 = vmatpush1.bf16.msra.mxu0 %v4742
    %4782 = vmatprep.subr.bf16.mxu0 0
    %4783 = vmatpush1.bf16.msra.mxu0 %v4743
    %4784 = vmatprep.subr.bf16.mxu0 0
    %4785 = vmatpush1.bf16.msra.mxu0 %v4744
    %4786 = vmatprep.subr.bf16.mxu0 0
    %4787 = vmatpush1.bf16.msra.mxu0 %v4745
    %4788 = vmatprep.subr.bf16.mxu0 0
    %4789 = vmatpush1.bf16.msra.mxu0 %v4746
    %4790 = vmatprep.subr.bf16.mxu0 0
    %4791 = vmatpush1.bf16.msra.mxu0 %v4747
    %4792 = vmatprep.subr.bf16.mxu0 0
    %4793 = vmatpush1.bf16.msra.mxu0 %v4748
    %4794 = vmatprep.subr.bf16.mxu0 0
    %4795 = vmatpush1.bf16.msra.mxu0 %v4749
    %4796 = vmatprep.subr.bf16.mxu0 0
    %4797 = vmatpush1.bf16.msra.mxu0 %v4750
    %4798 = vmatprep.subr.bf16.mxu0 0
    %4799 = vmatpush1.bf16.msra.mxu0 %v4751
    %4800 = vmatprep.mubr.bf16.mxu0 %v4671
    %4801 = vmatmul.mubr.bf16.gmra.mrb[0].mxu0 %v4670
    %v4802 = vpop.f32.mrb[0].mxu0
    %v4803 = vadd.f32 %v4669, %v4802
    %v4804 = vpop.f32.mrb[0].mxu0
    %v4805 = vpop.f32.mrb[0].mxu0
    %v4806 = vpop.f32.mrb[0].mxu0
    %4807 = vdwg.mxu0
    %vm4808 = vcmp.gt.f32.partialorder %v4803, 0.0
    %v4809 = vmul.f32 %v4803, 0.01
    %v4810 = vsel %vm4808, %v4803, %v4809
    %v4811 = vld [vmem:[#allocation2 + $0x7c8] sm:$0xf]
    %v4812 = vld [vmem:[#allocation2 + $0x7cc] sm:$0xf]
    %v4813 = vld [vmem:[#allocation2 + $0x7d0] sm:$0xf]
    %v4814 = vld [vmem:[#allocation2 + $0x7d4] sm:$0xf]
    %v4815 = vpack.c.bf16 %v4810, %v4810
    %v4820 = vunpack.c.l.b16 %v4811
    %v4821 = vunpack.c.l.b16 %v4812
    %v4822 = vunpack.c.l.b16 %v4813
    %v4823 = vunpack.c.l.b16 %v4814
    %v4824 = vpack.c.b16 %v4821, %v4820
    %v4825 = vpack.c.b16 %v4823, %v4822
    %vm4826 = vcmask 64512
    %v4828 = vsel %vm4826, %v4824, 0
    %v4831 = vsel %vm4826, %v4825, 0
    %vm4833 = vcmask 1043456
    %v4835 = vsel %vm4833, %v4815, 0
    %4837 = vmatprep.subr.bf16.mxu0 0
    %4838 = vmatpush1.bf16.msra.mxu0 %v4835
    %4839 = vmatprep.subr.bf16.mxu0 0
    %4840 = vmatpush1.bf16.msra.mxu0 0
    %4841 = vmatprep.subr.bf16.mxu0 0
    %4842 = vmatpush1.bf16.msra.mxu0 0
    %4843 = vmatprep.subr.bf16.mxu0 0
    %4844 = vmatpush1.bf16.msra.mxu0 0
    %4845 = vmatprep.subr.bf16.mxu0 0
    %4846 = vmatpush1.bf16.msra.mxu0 0
    %4847 = vmatprep.subr.bf16.mxu0 0
    %4848 = vmatpush1.bf16.msra.mxu0 0
    %4849 = vmatprep.subr.bf16.mxu0 0
    %4850 = vmatpush1.bf16.msra.mxu0 0
    %4851 = vmatprep.subr.bf16.mxu0 0
    %4852 = vmatpush1.bf16.msra.mxu0 0
    %4853 = vmatprep.subr.bf16.mxu0 0
    %4854 = vmatpush1.bf16.msra.mxu0 0
    %4855 = vmatprep.subr.bf16.mxu0 0
    %4856 = vmatpush1.bf16.msra.mxu0 0
    %4857 = vmatprep.subr.bf16.mxu0 0
    %4858 = vmatpush1.bf16.msra.mxu0 0
    %4859 = vmatprep.subr.bf16.mxu0 0
    %4860 = vmatpush1.bf16.msra.mxu0 0
    %4861 = vmatprep.subr.bf16.mxu0 0
    %4862 = vmatpush1.bf16.msra.mxu0 0
    %4863 = vmatprep.subr.bf16.mxu0 0
    %4864 = vmatpush1.bf16.msra.mxu0 0
    %4865 = vmatprep.subr.bf16.mxu0 0
    %4866 = vmatpush1.bf16.msra.mxu0 0
    %4867 = vmatprep.subr.bf16.mxu0 0
    %4868 = vmatpush1.bf16.msra.mxu0 0
    %4869 = vmatprep.mubr.bf16.mxu0 0
    %4870 = vmatmul.mubr.bf16.gmra.mrb[0].mxu0 %v4828
    %v4871 = vpop.f32.mrb[0].mxu0
    %v4872 = vadd.f32 0.0, %v4871
    %v4873 = vpop.f32.mrb[0].mxu0
    %v4874 = vpop.f32.mrb[0].mxu0
    %v4875 = vadd.f32 0.0, %v4874
    %v4876 = vpop.f32.mrb[0].mxu0
    %4877 = vmatprep.mubr.bf16.mxu0 0
    %4878 = vmatmul.mubr.bf16.gmra.mrb[0].mxu0 %v4831
    %v4879 = vpop.f32.mrb[0].mxu0
    %v4880 = vadd.f32 0.0, %v4879
    %v4881 = vpop.f32.mrb[0].mxu0
    %v4882 = vpop.f32.mrb[0].mxu0
    %v4883 = vadd.f32 0.0, %v4882
    %v4884 = vpop.f32.mrb[0].mxu0
    %4885 = vdwg.mxu0
    %v4886 = vpack.c.bf16 %v4875, %v4872
    %v4887 = vpack.c.bf16 %v4883, %v4880
    %v4889 = vrot.slane %v4886, 4
    %v4892 = vrot.slane %v4887, 4
    %v4894 = vld [vmem:[#allocation2 + $0x5c0] sm:$0xf]
    %v4895 = vld [vmem:[#allocation2 + $0x5c4] sm:$0xf]
    %v4896 = vld [vmem:[#allocation2 + $0x5c8] sm:$0xf]
    %v4897 = vld [vmem:[#allocation2 + $0x5cc] sm:$0xf]
    %v4898 = vld [vmem:[#allocation2 + $0x5d0] sm:$0xf]
    %v4899 = vld [vmem:[#allocation2 + $0x5d4] sm:$0xf]
    %v4900 = vld [vmem:[#allocation2 + $0x5d8] sm:$0xf]
    %v4901 = vld [vmem:[#allocation2 + $0x5dc] sm:$0xf]
    %v4902 = vld [vmem:[#allocation2 + $0x5e0] sm:$0xf]
    %v4903 = vld [vmem:[#allocation2 + $0x5e4] sm:$0xf]
    %v4904 = vld [vmem:[#allocation2 + $0x5e8] sm:$0xf]
    %v4905 = vld [vmem:[#allocation2 + $0x5ec] sm:$0xf]
    %v4906 = vld [vmem:[#allocation2 + $0x5f0] sm:$0xf]
    %v4907 = vld [vmem:[#allocation2 + $0x5f4] sm:$0xf]
    %v4908 = vld [vmem:[#allocation2 + $0x5f8] sm:$0xf]
    %v4909 = vld [vmem:[#allocation2 + $0x5fc] sm:$0xf]
    %v4910 = vld [vmem:[#allocation2 + $0x600] sm:$0xf]
    %v4911 = vld [vmem:[#allocation2 + $0x604] sm:$0xf]
    %v4912 = vld [vmem:[#allocation2 + $0x608] sm:$0xf]
    %v4913 = vld [vmem:[#allocation2 + $0x60c] sm:$0xf]
    %v4914 = vld [vmem:[#allocation2 + $0x610] sm:$0xf]
    %v4915 = vld [vmem:[#allocation2 + $0x614] sm:$0xf]
    %v4916 = vld [vmem:[#allocation2 + $0x618] sm:$0xf]
    %v4917 = vld [vmem:[#allocation2 + $0x61c] sm:$0xf]
    %v4918 = vld [vmem:[#allocation2 + $0x620] sm:$0xf]
    %v4919 = vld [vmem:[#allocation2 + $0x624] sm:$0xf]
    %v4920 = vld [vmem:[#allocation2 + $0x628] sm:$0xf]
    %v4921 = vld [vmem:[#allocation2 + $0x62c] sm:$0xf]
    %v4922 = vld [vmem:[#allocation2 + $0x630] sm:$0xf]
    %v4923 = vld [vmem:[#allocation2 + $0x634] sm:$0xf]
    %v4924 = vld [vmem:[#allocation2 + $0x638] sm:$0xf]
    %v4925 = vld [vmem:[#allocation2 + $0x63c] sm:$0xf]
    %v4926 = vld [vmem:[#allocation2 + $0x640] sm:$0xf]
    %v4927 = vld [vmem:[#allocation2 + $0x644] sm:$0xf]
    %v4928 = vld [vmem:[#allocation2 + $0x648] sm:$0xf]
    %v4929 = vld [vmem:[#allocation2 + $0x64c] sm:$0xf]
    %v4930 = vld [vmem:[#allocation2 + $0x650] sm:$0xf]
    %v4931 = vld [vmem:[#allocation2 + $0x654] sm:$0xf]
    %v4932 = vld [vmem:[#allocation2 + $0x658] sm:$0xf]
    %v4933 = vld [vmem:[#allocation2 + $0x65c] sm:$0xf]
    %v4934 = vld [vmem:[#allocation2 + $0x660] sm:$0xf]
    %v4935 = vld [vmem:[#allocation2 + $0x664] sm:$0xf]
    %v4936 = vld [vmem:[#allocation2 + $0x668] sm:$0xf]
    %v4937 = vld [vmem:[#allocation2 + $0x66c] sm:$0xf]
    %v4938 = vld [vmem:[#allocation2 + $0x670] sm:$0xf]
    %v4939 = vld [vmem:[#allocation2 + $0x674] sm:$0xf]
    %v4940 = vld [vmem:[#allocation2 + $0x678] sm:$0xf]
    %v4941 = vld [vmem:[#allocation2 + $0x67c] sm:$0xf]
    %v4942 = vld [vmem:[#allocation2 + $0x680] sm:$0xf]
    %v4943 = vld [vmem:[#allocation2 + $0x684] sm:$0xf]
    %v4944 = vld [vmem:[#allocation2 + $0x688] sm:$0xf]
    %v4945 = vld [vmem:[#allocation2 + $0x68c] sm:$0xf]
    %v4946 = vld [vmem:[#allocation2 + $0x690] sm:$0xf]
    %v4947 = vld [vmem:[#allocation2 + $0x694] sm:$0xf]
    %v4948 = vld [vmem:[#allocation2 + $0x698] sm:$0xf]
    %v4949 = vld [vmem:[#allocation2 + $0x69c] sm:$0xf]
    %v4950 = vld [vmem:[#allocation2 + $0x6a0] sm:$0xf]
    %v4951 = vld [vmem:[#allocation2 + $0x6a4] sm:$0xf]
    %v4952 = vld [vmem:[#allocation2 + $0x6a8] sm:$0xf]
    %v4953 = vld [vmem:[#allocation2 + $0x6ac] sm:$0xf]
    %v4954 = vld [vmem:[#allocation2 + $0x6b0] sm:$0xf]
    %v4955 = vld [vmem:[#allocation2 + $0x6b4] sm:$0xf]
    %v4956 = vld [vmem:[#allocation2 + $0x6b8] sm:$0xf]
    %v4957 = vld [vmem:[#allocation2 + $0x6bc] sm:$0xf]
    %v4958 = vld [vmem:[#allocation6 + $0x7] ss:$0 sm:$0xff]
    %v5023 = vunpack.c.l.b16 %v4894
    %v5024 = vunpack.c.l.b16 %v4895
    %v5025 = vunpack.c.l.b16 %v4896
    %v5026 = vunpack.c.l.b16 %v4897
    %v5027 = vunpack.c.l.b16 %v4898
    %v5028 = vunpack.c.l.b16 %v4899
    %v5029 = vunpack.c.l.b16 %v4900
    %v5030 = vunpack.c.l.b16 %v4901
    %v5031 = vunpack.c.l.b16 %v4902
    %v5032 = vunpack.c.l.b16 %v4903
    %v5033 = vunpack.c.l.b16 %v4904
    %v5034 = vunpack.c.l.b16 %v4905
    %v5035 = vunpack.c.l.b16 %v4906
    %v5036 = vunpack.c.l.b16 %v4907
    %v5037 = vunpack.c.l.b16 %v4908
    %v5038 = vunpack.c.l.b16 %v4909
    %v5039 = vunpack.c.l.b16 %v4910
    %v5040 = vunpack.c.l.b16 %v4911
    %v5041 = vunpack.c.l.b16 %v4912
    %v5042 = vunpack.c.l.b16 %v4913
    %v5043 = vunpack.c.l.b16 %v4914
    %v5044 = vunpack.c.l.b16 %v4915
    %v5045 = vunpack.c.l.b16 %v4916
    %v5046 = vunpack.c.l.b16 %v4917
    %v5047 = vunpack.c.l.b16 %v4918
    %v5048 = vunpack.c.l.b16 %v4919
    %v5049 = vunpack.c.l.b16 %v4920
    %v5050 = vunpack.c.l.b16 %v4921
    %v5051 = vunpack.c.l.b16 %v4922
    %v5052 = vunpack.c.l.b16 %v4923
    %v5053 = vunpack.c.l.b16 %v4924
    %v5054 = vunpack.c.l.b16 %v4925
    %v5055 = vunpack.c.l.b16 %v4926
    %v5056 = vunpack.c.l.b16 %v4927
    %v5057 = vunpack.c.l.b16 %v4928
    %v5058 = vunpack.c.l.b16 %v4929
    %v5059 = vunpack.c.l.b16 %v4930
    %v5060 = vunpack.c.l.b16 %v4931
    %v5061 = vunpack.c.l.b16 %v4932
    %v5062 = vunpack.c.l.b16 %v4933
    %v5063 = vunpack.c.l.b16 %v4934
    %v5064 = vunpack.c.l.b16 %v4935
    %v5065 = vunpack.c.l.b16 %v4936
    %v5066 = vunpack.c.l.b16 %v4937
    %v5067 = vunpack.c.l.b16 %v4938
    %v5068 = vunpack.c.l.b16 %v4939
    %v5069 = vunpack.c.l.b16 %v4940
    %v5070 = vunpack.c.l.b16 %v4941
    %v5071 = vunpack.c.l.b16 %v4942
    %v5072 = vunpack.c.l.b16 %v4943
    %v5073 = vunpack.c.l.b16 %v4944
    %v5074 = vunpack.c.l.b16 %v4945
    %v5075 = vunpack.c.l.b16 %v4946
    %v5076 = vunpack.c.l.b16 %v4947
    %v5077 = vunpack.c.l.b16 %v4948
    %v5078 = vunpack.c.l.b16 %v4949
    %v5079 = vunpack.c.l.b16 %v4950
    %v5080 = vunpack.c.l.b16 %v4951
    %v5081 = vunpack.c.l.b16 %v4952
    %v5082 = vunpack.c.l.b16 %v4953
    %v5083 = vunpack.c.l.b16 %v4954
    %v5084 = vunpack.c.l.b16 %v4955
    %v5085 = vunpack.c.l.b16 %v4956
    %v5086 = vunpack.c.l.b16 %v4957
    %v5087 = vpack.c.b16 %v5024, %v5023
    %v5088 = vpack.c.b16 %v5026, %v5025
    %v5089 = vpack.c.b16 %v5028, %v5027
    %v5090 = vpack.c.b16 %v5030, %v5029
    %v5091 = vpack.c.b16 %v5032, %v5031
    %v5092 = vpack.c.b16 %v5034, %v5033
    %v5093 = vpack.c.b16 %v5036, %v5035
    %v5094 = vpack.c.b16 %v5038, %v5037
    %v5095 = vpack.c.b16 %v5040, %v5039
    %v5096 = vpack.c.b16 %v5042, %v5041
    %v5097 = vpack.c.b16 %v5044, %v5043
    %v5098 = vpack.c.b16 %v5046, %v5045
    %v5099 = vpack.c.b16 %v5048, %v5047
    %v5100 = vpack.c.b16 %v5050, %v5049
    %v5101 = vpack.c.b16 %v5052, %v5051
    %v5102 = vpack.c.b16 %v5054, %v5053
    %v5103 = vpack.c.b16 %v5056, %v5055
    %v5104 = vpack.c.b16 %v5058, %v5057
    %v5105 = vpack.c.b16 %v5060, %v5059
    %v5106 = vpack.c.b16 %v5062, %v5061
    %v5107 = vpack.c.b16 %v5064, %v5063
    %v5108 = vpack.c.b16 %v5066, %v5065
    %v5109 = vpack.c.b16 %v5068, %v5067
    %v5110 = vpack.c.b16 %v5070, %v5069
    %v5111 = vpack.c.b16 %v5072, %v5071
    %v5112 = vpack.c.b16 %v5074, %v5073
    %v5113 = vpack.c.b16 %v5076, %v5075
    %v5114 = vpack.c.b16 %v5078, %v5077
    %v5115 = vpack.c.b16 %v5080, %v5079
    %v5116 = vpack.c.b16 %v5082, %v5081
    %v5117 = vpack.c.b16 %v5084, %v5083
    %v5118 = vpack.c.b16 %v5086, %v5085
    %5151 = vmatprep.subr.bf16.mxu0 0
    %5152 = vmatpush1.bf16.msra.mxu0 %v5087
    %5153 = vmatprep.subr.bf16.mxu0 0
    %5154 = vmatpush1.bf16.msra.mxu0 %v5088
    %5155 = vmatprep.subr.bf16.mxu0 0
    %5156 = vmatpush1.bf16.msra.mxu0 %v5089
    %5157 = vmatprep.subr.bf16.mxu0 0
    %5158 = vmatpush1.bf16.msra.mxu0 %v5090
    %5159 = vmatprep.subr.bf16.mxu0 0
    %5160 = vmatpush1.bf16.msra.mxu0 %v5091
    %5161 = vmatprep.subr.bf16.mxu0 0
    %5162 = vmatpush1.bf16.msra.mxu0 %v5092
    %5163 = vmatprep.subr.bf16.mxu0 0
    %5164 = vmatpush1.bf16.msra.mxu0 %v5093
    %5165 = vmatprep.subr.bf16.mxu0 0
    %5166 = vmatpush1.bf16.msra.mxu0 %v5094
    %5167 = vmatprep.subr.bf16.mxu0 0
    %5168 = vmatpush1.bf16.msra.mxu0 %v5095
    %5169 = vmatprep.subr.bf16.mxu0 0
    %5170 = vmatpush1.bf16.msra.mxu0 %v5096
    %5171 = vmatprep.subr.bf16.mxu0 0
    %5172 = vmatpush1.bf16.msra.mxu0 %v5097
    %5173 = vmatprep.subr.bf16.mxu0 0
    %5174 = vmatpush1.bf16.msra.mxu0 %v5098
    %5175 = vmatprep.subr.bf16.mxu0 0
    %5176 = vmatpush1.bf16.msra.mxu0 %v5099
    %5177 = vmatprep.subr.bf16.mxu0 0
    %5178 = vmatpush1.bf16.msra.mxu0 %v5100
    %5179 = vmatprep.subr.bf16.mxu0 0
    %5180 = vmatpush1.bf16.msra.mxu0 %v5101
    %5181 = vmatprep.subr.bf16.mxu0 0
    %5182 = vmatpush1.bf16.msra.mxu0 %v5102
    %5183 = vmatprep.mubr.bf16.mxu0 %v4889
    %5184 = vmatmul.mubr.bf16.gmra.mrb[0].mxu0 %v4886
    %v5185 = vpop.f32.mrb[0].mxu0
    %v5186 = vadd.f32 %v4958, %v5185
    %v5187 = vpop.f32.mrb[0].mxu0
    %v5188 = vpop.f32.mrb[0].mxu0
    %v5189 = vpop.f32.mrb[0].mxu0
    %5190 = vdwg.mxu0
    %5191 = vmatprep.subr.bf16.mxu0 0
    %5192 = vmatpush1.bf16.msra.mxu0 %v5103
    %5193 = vmatprep.subr.bf16.mxu0 0
    %5194 = vmatpush1.bf16.msra.mxu0 %v5104
    %5195 = vmatprep.subr.bf16.mxu0 0
    %5196 = vmatpush1.bf16.msra.mxu0 %v5105
    %5197 = vmatprep.subr.bf16.mxu0 0
    %5198 = vmatpush1.bf16.msra.mxu0 %v5106
    %5199 = vmatprep.subr.bf16.mxu0 0
    %5200 = vmatpush1.bf16.msra.mxu0 %v5107
    %5201 = vmatprep.subr.bf16.mxu0 0
    %5202 = vmatpush1.bf16.msra.mxu0 %v5108
    %5203 = vmatprep.subr.bf16.mxu0 0
    %5204 = vmatpush1.bf16.msra.mxu0 %v5109
    %5205 = vmatprep.subr.bf16.mxu0 0
    %5206 = vmatpush1.bf16.msra.mxu0 %v5110
    %5207 = vmatprep.subr.bf16.mxu0 0
    %5208 = vmatpush1.bf16.msra.mxu0 %v5111
    %5209 = vmatprep.subr.bf16.mxu0 0
    %5210 = vmatpush1.bf16.msra.mxu0 %v5112
    %5211 = vmatprep.subr.bf16.mxu0 0
    %5212 = vmatpush1.bf16.msra.mxu0 %v5113
    %5213 = vmatprep.subr.bf16.mxu0 0
    %5214 = vmatpush1.bf16.msra.mxu0 %v5114
    %5215 = vmatprep.subr.bf16.mxu0 0
    %5216 = vmatpush1.bf16.msra.mxu0 %v5115
    %5217 = vmatprep.subr.bf16.mxu0 0
    %5218 = vmatpush1.bf16.msra.mxu0 %v5116
    %5219 = vmatprep.subr.bf16.mxu0 0
    %5220 = vmatpush1.bf16.msra.mxu0 %v5117
    %5221 = vmatprep.subr.bf16.mxu0 0
    %5222 = vmatpush1.bf16.msra.mxu0 %v5118
    %5223 = vmatprep.mubr.bf16.mxu0 %v4892
    %5224 = vmatmul.mubr.bf16.gmra.mrb[0].mxu0 %v4887
    %v5225 = vpop.f32.mrb[0].mxu0
    %v5226 = vadd.f32 %v5186, %v5225
    %v5227 = vpop.f32.mrb[0].mxu0
    %v5228 = vpop.f32.mrb[0].mxu0
    %v5229 = vpop.f32.mrb[0].mxu0
    %5230 = vdwg.mxu0
    %vm5231 = vcmp.gt.f32.partialorder %v5226, 0.0
    %v5232 = vmul.f32 %v5226, 0.01
    %v5233 = vsel %vm5231, %v5226, %v5232
    %v5234 = vld [vmem:[#allocation2 + $0x6c0] sm:$0xf]
    %v5235 = vld [vmem:[#allocation2 + $0x6c4] sm:$0xf]
    %v5236 = vld [vmem:[#allocation2 + $0x6c8] sm:$0xf]
    %v5237 = vld [vmem:[#allocation2 + $0x6cc] sm:$0xf]
    %v5238 = vld [vmem:[#allocation2 + $0x6d0] sm:$0xf]
    %v5239 = vld [vmem:[#allocation2 + $0x6d4] sm:$0xf]
    %v5240 = vld [vmem:[#allocation2 + $0x6d8] sm:$0xf]
    %v5241 = vld [vmem:[#allocation2 + $0x6dc] sm:$0xf]
    %v5242 = vld [vmem:[#allocation2 + $0x6e0] sm:$0xf]
    %v5243 = vld [vmem:[#allocation2 + $0x6e4] sm:$0xf]
    %v5244 = vld [vmem:[#allocation2 + $0x6e8] sm:$0xf]
    %v5245 = vld [vmem:[#allocation2 + $0x6ec] sm:$0xf]
    %v5246 = vld [vmem:[#allocation2 + $0x6f0] sm:$0xf]
    %v5247 = vld [vmem:[#allocation2 + $0x6f4] sm:$0xf]
    %v5248 = vld [vmem:[#allocation2 + $0x6f8] sm:$0xf]
    %v5249 = vld [vmem:[#allocation2 + $0x6fc] sm:$0xf]
    %v5250 = vld [vmem:[#allocation6 + $0x10] ss:$0 sm:$0xff]
    %v5251 = vpack.c.bf16 %v5233, %v5233
    %v5268 = vunpack.c.l.b16 %v5234
    %v5269 = vunpack.c.l.b16 %v5235
    %v5270 = vunpack.c.l.b16 %v5236
    %v5271 = vunpack.c.l.b16 %v5237
    %v5272 = vunpack.c.l.b16 %v5238
    %v5273 = vunpack.c.l.b16 %v5239
    %v5274 = vunpack.c.l.b16 %v5240
    %v5275 = vunpack.c.l.b16 %v5241
    %v5276 = vunpack.c.l.b16 %v5242
    %v5277 = vunpack.c.l.b16 %v5243
    %v5278 = vunpack.c.l.b16 %v5244
    %v5279 = vunpack.c.l.b16 %v5245
    %v5280 = vunpack.c.l.b16 %v5246
    %v5281 = vunpack.c.l.b16 %v5247
    %v5282 = vunpack.c.l.b16 %v5248
    %v5283 = vunpack.c.l.b16 %v5249
    %v5284 = vpack.c.b16 %v5269, %v5268
    %v5285 = vpack.c.b16 %v5271, %v5270
    %v5286 = vpack.c.b16 %v5273, %v5272
    %v5287 = vpack.c.b16 %v5275, %v5274
    %v5288 = vpack.c.b16 %v5277, %v5276
    %v5289 = vpack.c.b16 %v5279, %v5278
    %v5290 = vpack.c.b16 %v5281, %v5280
    %v5291 = vpack.c.b16 %v5283, %v5282
    %5300 = vmatprep.subr.bf16.mxu0 0
    %5301 = vmatpush1.bf16.msra.mxu0 %v5284
    %5302 = vmatprep.subr.bf16.mxu0 0
    %5303 = vmatpush1.bf16.msra.mxu0 %v5285
    %5304 = vmatprep.subr.bf16.mxu0 0
    %5305 = vmatpush1.bf16.msra.mxu0 %v5286
    %5306 = vmatprep.subr.bf16.mxu0 0
    %5307 = vmatpush1.bf16.msra.mxu0 %v5287
    %5308 = vmatprep.subr.bf16.mxu0 0
    %5309 = vmatpush1.bf16.msra.mxu0 %v5288
    %5310 = vmatprep.subr.bf16.mxu0 0
    %5311 = vmatpush1.bf16.msra.mxu0 %v5289
    %5312 = vmatprep.subr.bf16.mxu0 0
    %5313 = vmatpush1.bf16.msra.mxu0 %v5290
    %5314 = vmatprep.subr.bf16.mxu0 0
    %5315 = vmatpush1.bf16.msra.mxu0 %v5291
    %5316 = vmatprep.subr.bf16.mxu0 0
    %5317 = vmatpush1.bf16.msra.mxu0 0
    %5318 = vmatprep.subr.bf16.mxu0 0
    %5319 = vmatpush1.bf16.msra.mxu0 0
    %5320 = vmatprep.subr.bf16.mxu0 0
    %5321 = vmatpush1.bf16.msra.mxu0 0
    %5322 = vmatprep.subr.bf16.mxu0 0
    %5323 = vmatpush1.bf16.msra.mxu0 0
    %5324 = vmatprep.subr.bf16.mxu0 0
    %5325 = vmatpush1.bf16.msra.mxu0 0
    %5326 = vmatprep.subr.bf16.mxu0 0
    %5327 = vmatpush1.bf16.msra.mxu0 0
    %5328 = vmatprep.subr.bf16.mxu0 0
    %5329 = vmatpush1.bf16.msra.mxu0 0
    %5330 = vmatprep.subr.bf16.mxu0 0
    %5331 = vmatpush1.bf16.msra.mxu0 0
    %5332 = vmatprep.mubr.bf16.mxu0 0
    %5333 = vmatmul.mubr.bf16.gmra.mrb[0].mxu0 %v5251
    %v5334 = vpop.f32.mrb[0].mxu0
    %v5335 = vadd.f32 %v5250, %v5334
    %v5336 = vpop.f32.mrb[0].mxu0
    %v5337 = vpop.f32.mrb[0].mxu0
    %v5338 = vpop.f32.mrb[0].mxu0
    %5339 = vdwg.mxu0
    %vm5340 = vcmp.gt.f32.partialorder %v5335, 0.0
    %v5341 = vmul.f32 %v5335, 0.01
    %v5342 = vsel %vm5340, %v5335, %v5341
    %v5343 = vld [vmem:[#allocation2 + $0x700] sm:$0xf]
    %v5344 = vld [vmem:[#allocation2 + $0x704] sm:$0xf]
    %v5345 = vld [vmem:[#allocation2 + $0x708] sm:$0xf]
    %v5346 = vld [vmem:[#allocation2 + $0x70c] sm:$0xf]
    %v5347 = vld [vmem:[#allocation2 + $0x710] sm:$0xf]
    %v5348 = vld [vmem:[#allocation2 + $0x714] sm:$0xf]
    %v5349 = vld [vmem:[#allocation2 + $0x718] sm:$0xf]
    %v5350 = vld [vmem:[#allocation2 + $0x71c] sm:$0xf]
    %v5351 = vld [vmem:[#allocation2 + $0x720] sm:$0xf]
    %v5352 = vld [vmem:[#allocation2 + $0x724] sm:$0xf]
    %v5353 = vld [vmem:[#allocation2 + $0x728] sm:$0xf]
    %v5354 = vld [vmem:[#allocation2 + $0x72c] sm:$0xf]
    %v5355 = vld [vmem:[#allocation2 + $0x730] sm:$0xf]
    %v5356 = vld [vmem:[#allocation2 + $0x734] sm:$0xf]
    %v5357 = vld [vmem:[#allocation2 + $0x738] sm:$0xf]
    %v5358 = vld [vmem:[#allocation2 + $0x73c] sm:$0xf]
    %v5359 = vld [vmem:[#allocation6 + $0x11] ss:$0 sm:$0xff]
    %v5360 = vpack.c.bf16 %v5342, %v5342
    %v5377 = vunpack.c.l.b16 %v5343
    %v5378 = vunpack.c.l.b16 %v5344
    %v5379 = vunpack.c.l.b16 %v5345
    %v5380 = vunpack.c.l.b16 %v5346
    %v5381 = vunpack.c.l.b16 %v5347
    %v5382 = vunpack.c.l.b16 %v5348
    %v5383 = vunpack.c.l.b16 %v5349
    %v5384 = vunpack.c.l.b16 %v5350
    %v5385 = vunpack.c.l.b16 %v5351
    %v5386 = vunpack.c.l.b16 %v5352
    %v5387 = vunpack.c.l.b16 %v5353
    %v5388 = vunpack.c.l.b16 %v5354
    %v5389 = vunpack.c.l.b16 %v5355
    %v5390 = vunpack.c.l.b16 %v5356
    %v5391 = vunpack.c.l.b16 %v5357
    %v5392 = vunpack.c.l.b16 %v5358
    %v5393 = vpack.c.b16 %v5378, %v5377
    %v5394 = vpack.c.b16 %v5380, %v5379
    %v5395 = vpack.c.b16 %v5382, %v5381
    %v5396 = vpack.c.b16 %v5384, %v5383
    %v5397 = vpack.c.b16 %v5386, %v5385
    %v5398 = vpack.c.b16 %v5388, %v5387
    %v5399 = vpack.c.b16 %v5390, %v5389
    %v5400 = vpack.c.b16 %v5392, %v5391
    %5409 = vmatprep.subr.bf16.mxu0 0
    %5410 = vmatpush1.bf16.msra.mxu0 %v5393
    %5411 = vmatprep.subr.bf16.mxu0 0
    %5412 = vmatpush1.bf16.msra.mxu0 %v5394
    %5413 = vmatprep.subr.bf16.mxu0 0
    %5414 = vmatpush1.bf16.msra.mxu0 %v5395
    %5415 = vmatprep.subr.bf16.mxu0 0
    %5416 = vmatpush1.bf16.msra.mxu0 %v5396
    %5417 = vmatprep.subr.bf16.mxu0 0
    %5418 = vmatpush1.bf16.msra.mxu0 %v5397
    %5419 = vmatprep.subr.bf16.mxu0 0
    %5420 = vmatpush1.bf16.msra.mxu0 %v5398
    %5421 = vmatprep.subr.bf16.mxu0 0
    %5422 = vmatpush1.bf16.msra.mxu0 %v5399
    %5423 = vmatprep.subr.bf16.mxu0 0
    %5424 = vmatpush1.bf16.msra.mxu0 %v5400
    %5425 = vmatprep.subr.bf16.mxu0 0
    %5426 = vmatpush1.bf16.msra.mxu0 0
    %5427 = vmatprep.subr.bf16.mxu0 0
    %5428 = vmatpush1.bf16.msra.mxu0 0
    %5429 = vmatprep.subr.bf16.mxu0 0
    %5430 = vmatpush1.bf16.msra.mxu0 0
    %5431 = vmatprep.subr.bf16.mxu0 0
    %5432 = vmatpush1.bf16.msra.mxu0 0
    %5433 = vmatprep.subr.bf16.mxu0 0
    %5434 = vmatpush1.bf16.msra.mxu0 0
    %5435 = vmatprep.subr.bf16.mxu0 0
    %5436 = vmatpush1.bf16.msra.mxu0 0
    %5437 = vmatprep.subr.bf16.mxu0 0
    %5438 = vmatpush1.bf16.msra.mxu0 0
    %5439 = vmatprep.subr.bf16.mxu0 0
    %5440 = vmatpush1.bf16.msra.mxu0 0
    %5441 = vmatprep.mubr.bf16.mxu0 0
    %5442 = vmatmul.mubr.bf16.gmra.mrb[0].mxu0 %v5360
    %v5443 = vpop.f32.mrb[0].mxu0
    %v5444 = vadd.f32 %v5359, %v5443
    %v5445 = vpop.f32.mrb[0].mxu0
    %v5446 = vpop.f32.mrb[0].mxu0
    %v5447 = vpop.f32.mrb[0].mxu0
    %5448 = vdwg.mxu0
    %vm5449 = vcmp.gt.f32.partialorder %v5444, 0.0
    %v5450 = vmul.f32 %v5444, 0.01
    %v5451 = vsel %vm5449, %v5444, %v5450
    %v5452 = vld [vmem:[#allocation2 + $0x740] sm:$0xf]
    %v5453 = vld [vmem:[#allocation2 + $0x744] sm:$0xf]
    %v5454 = vld [vmem:[#allocation2 + $0x748] sm:$0xf]
    %v5455 = vld [vmem:[#allocation2 + $0x74c] sm:$0xf]
    %v5456 = vld [vmem:[#allocation2 + $0x750] sm:$0xf]
    %v5457 = vld [vmem:[#allocation2 + $0x754] sm:$0xf]
    %v5458 = vld [vmem:[#allocation2 + $0x758] sm:$0xf]
    %v5459 = vld [vmem:[#allocation2 + $0x75c] sm:$0xf]
    %v5460 = vld [vmem:[#allocation2 + $0x760] sm:$0xf]
    %v5461 = vld [vmem:[#allocation2 + $0x764] sm:$0xf]
    %v5462 = vld [vmem:[#allocation2 + $0x768] sm:$0xf]
    %v5463 = vld [vmem:[#allocation2 + $0x76c] sm:$0xf]
    %v5464 = vld [vmem:[#allocation2 + $0x770] sm:$0xf]
    %v5465 = vld [vmem:[#allocation2 + $0x774] sm:$0xf]
    %v5466 = vld [vmem:[#allocation2 + $0x778] sm:$0xf]
    %v5467 = vld [vmem:[#allocation2 + $0x77c] sm:$0xf]
    %v5468 = vld [vmem:[#allocation6 + $0x12] ss:$0 sm:$0xff]
    %v5469 = vpack.c.bf16 %v5451, %v5451
    %v5486 = vunpack.c.l.b16 %v5452
    %v5487 = vunpack.c.l.b16 %v5453
    %v5488 = vunpack.c.l.b16 %v5454
    %v5489 = vunpack.c.l.b16 %v5455
    %v5490 = vunpack.c.l.b16 %v5456
    %v5491 = vunpack.c.l.b16 %v5457
    %v5492 = vunpack.c.l.b16 %v5458
    %v5493 = vunpack.c.l.b16 %v5459
    %v5494 = vunpack.c.l.b16 %v5460
    %v5495 = vunpack.c.l.b16 %v5461
    %v5496 = vunpack.c.l.b16 %v5462
    %v5497 = vunpack.c.l.b16 %v5463
    %v5498 = vunpack.c.l.b16 %v5464
    %v5499 = vunpack.c.l.b16 %v5465
    %v5500 = vunpack.c.l.b16 %v5466
    %v5501 = vunpack.c.l.b16 %v5467
    %v5502 = vpack.c.b16 %v5487, %v5486
    %v5503 = vpack.c.b16 %v5489, %v5488
    %v5504 = vpack.c.b16 %v5491, %v5490
    %v5505 = vpack.c.b16 %v5493, %v5492
    %v5506 = vpack.c.b16 %v5495, %v5494
    %v5507 = vpack.c.b16 %v5497, %v5496
    %v5508 = vpack.c.b16 %v5499, %v5498
    %v5509 = vpack.c.b16 %v5501, %v5500
    %5518 = vmatprep.subr.bf16.mxu0 0
    %5519 = vmatpush1.bf16.msra.mxu0 %v5502
    %5520 = vmatprep.subr.bf16.mxu0 0
    %5521 = vmatpush1.bf16.msra.mxu0 %v5503
    %5522 = vmatprep.subr.bf16.mxu0 0
    %5523 = vmatpush1.bf16.msra.mxu0 %v5504
    %5524 = vmatprep.subr.bf16.mxu0 0
    %5525 = vmatpush1.bf16.msra.mxu0 %v5505
    %5526 = vmatprep.subr.bf16.mxu0 0
    %5527 = vmatpush1.bf16.msra.mxu0 %v5506
    %5528 = vmatprep.subr.bf16.mxu0 0
    %5529 = vmatpush1.bf16.msra.mxu0 %v5507
    %5530 = vmatprep.subr.bf16.mxu0 0
    %5531 = vmatpush1.bf16.msra.mxu0 %v5508
    %5532 = vmatprep.subr.bf16.mxu0 0
    %5533 = vmatpush1.bf16.msra.mxu0 %v5509
    %5534 = vmatprep.subr.bf16.mxu0 0
    %5535 = vmatpush1.bf16.msra.mxu0 0
    %5536 = vmatprep.subr.bf16.mxu0 0
    %5537 = vmatpush1.bf16.msra.mxu0 0
    %5538 = vmatprep.subr.bf16.mxu0 0
    %5539 = vmatpush1.bf16.msra.mxu0 0
    %5540 = vmatprep.subr.bf16.mxu0 0
    %5541 = vmatpush1.bf16.msra.mxu0 0
    %5542 = vmatprep.subr.bf16.mxu0 0
    %5543 = vmatpush1.bf16.msra.mxu0 0
    %5544 = vmatprep.subr.bf16.mxu0 0
    %5545 = vmatpush1.bf16.msra.mxu0 0
    %5546 = vmatprep.subr.bf16.mxu0 0
    %5547 = vmatpush1.bf16.msra.mxu0 0
    %5548 = vmatprep.subr.bf16.mxu0 0
    %5549 = vmatpush1.bf16.msra.mxu0 0
    %5550 = vmatprep.mubr.bf16.mxu0 0
    %5551 = vmatmul.mubr.bf16.gmra.mrb[0].mxu0 %v5469
    %v5552 = vpop.f32.mrb[0].mxu0
    %v5553 = vadd.f32 %v5468, %v5552
    %v5554 = vpop.f32.mrb[0].mxu0
    %v5555 = vpop.f32.mrb[0].mxu0
    %v5556 = vpop.f32.mrb[0].mxu0
    %5557 = vdwg.mxu0
    %vm5558 = vcmp.gt.f32.partialorder %v5553, 0.0
    %v5559 = vmul.f32 %v5553, 0.01
    %v5560 = vsel %vm5558, %v5553, %v5559
    %v5561 = vpack.c.bf16 %v5560, %v5560
    %v5562 = vld [vmem:[#allocation4 + $0x480] sm:$0xff]
    %v5563 = vld [vmem:[#allocation4 + $0x488] sm:$0xff]
    %v5564 = vld [vmem:[#allocation4 + $0x490] sm:$0xff]
    %v5565 = vld [vmem:[#allocation4 + $0x498] sm:$0xff]
    %v5566 = vld [vmem:[#allocation4 + $0x4a0] sm:$0xff]
    %v5567 = vld [vmem:[#allocation4 + $0x4a8] sm:$0xff]
    %v5568 = vld [vmem:[#allocation4 + $0x4b0] sm:$0xff]
    %v5569 = vld [vmem:[#allocation4 + $0x4b8] sm:$0xff]
    %v5570 = vld [vmem:[#allocation4 + $0x4c0] sm:$0xff]
    %v5571 = vld [vmem:[#allocation4 + $0x4c8] sm:$0xff]
    %v5572 = vld [vmem:[#allocation4 + $0x4d0] sm:$0xff]
    %v5573 = vld [vmem:[#allocation4 + $0x4d8] sm:$0xff]
    %v5574 = vld [vmem:[#allocation4 + $0x4e0] sm:$0xff]
    %v5575 = vld [vmem:[#allocation4 + $0x4e8] sm:$0xff]
    %v5576 = vld [vmem:[#allocation4 + $0x4f0] sm:$0xff]
    %v5577 = vld [vmem:[#allocation4 + $0x4f8] sm:$0xff]
    %s5578 = scalar_lea.vmem [#allocation6], 19
    %v5579 = vld [vmem:[%s5578] ss:$8 sm:$0x3]
    %v5581 = vlaneseq
    %v5582 = vshrl.u32 %v5581, 7
    %v5583 = vsub.s32 0, %v5582
    %v5584 = vrot.slane %v5579, %v5583
    %v5585 = vlaneseq
    %v5586 = vshrl.u32 %v5585, 7
    %v5587 = vsub.s32 1, %v5586
    %v5588 = vrot.slane %v5579, %v5587
    %v5607 = vunpack.c.l.b16 %v5562
    %v5608 = vunpack.c.h.b16 %v5562
    %v5609 = vunpack.c.l.b16 %v5563
    %v5610 = vunpack.c.h.b16 %v5563
    %v5611 = vunpack.c.l.b16 %v5564
    %v5612 = vunpack.c.h.b16 %v5564
    %v5613 = vunpack.c.l.b16 %v5565
    %v5614 = vunpack.c.h.b16 %v5565
    %v5615 = vunpack.c.l.b16 %v5566
    %v5616 = vunpack.c.h.b16 %v5566
    %v5617 = vunpack.c.l.b16 %v5567
    %v5618 = vunpack.c.h.b16 %v5567
    %v5619 = vunpack.c.l.b16 %v5568
    %v5620 = vunpack.c.h.b16 %v5568
    %v5621 = vunpack.c.l.b16 %v5569
    %v5622 = vunpack.c.h.b16 %v5569
    %v5623 = vunpack.c.l.b16 %v5570
    %v5624 = vunpack.c.h.b16 %v5570
    %v5625 = vunpack.c.l.b16 %v5571
    %v5626 = vunpack.c.h.b16 %v5571
    %v5627 = vunpack.c.l.b16 %v5572
    %v5628 = vunpack.c.h.b16 %v5572
    %v5629 = vunpack.c.l.b16 %v5573
    %v5630 = vunpack.c.h.b16 %v5573
    %v5631 = vunpack.c.l.b16 %v5574
    %v5632 = vunpack.c.h.b16 %v5574
    %v5633 = vunpack.c.l.b16 %v5575
    %v5634 = vunpack.c.h.b16 %v5575
    %v5635 = vunpack.c.l.b16 %v5576
    %v5636 = vunpack.c.h.b16 %v5576
    %v5637 = vunpack.c.l.b16 %v5577
    %v5638 = vunpack.c.h.b16 %v5577
    %v5639 = vpack.c.b16 %v5609, %v5607
    %v5640 = vpack.c.b16 %v5610, %v5608
    %v5641 = vpack.c.b16 %v5613, %v5611
    %v5642 = vpack.c.b16 %v5614, %v5612
    %v5643 = vpack.c.b16 %v5617, %v5615
    %v5644 = vpack.c.b16 %v5618, %v5616
    %v5645 = vpack.c.b16 %v5621, %v5619
    %v5646 = vpack.c.b16 %v5622, %v5620
    %v5647 = vpack.c.b16 %v5625, %v5623
    %v5648 = vpack.c.b16 %v5626, %v5624
    %v5649 = vpack.c.b16 %v5629, %v5627
    %v5650 = vpack.c.b16 %v5630, %v5628
    %v5651 = vpack.c.b16 %v5633, %v5631
    %v5652 = vpack.c.b16 %v5634, %v5632
    %v5653 = vpack.c.b16 %v5637, %v5635
    %v5654 = vpack.c.b16 %v5638, %v5636
    %5671 = vmatprep.subr.bf16.mxu0 %v5640
    %5672 = vmatpush1.bf16.msra.mxu0 %v5639
    %5673 = vmatprep.subr.bf16.mxu0 %v5642
    %5674 = vmatpush1.bf16.msra.mxu0 %v5641
    %5675 = vmatprep.subr.bf16.mxu0 %v5644
    %5676 = vmatpush1.bf16.msra.mxu0 %v5643
    %5677 = vmatprep.subr.bf16.mxu0 %v5646
    %5678 = vmatpush1.bf16.msra.mxu0 %v5645
    %5679 = vmatprep.subr.bf16.mxu0 %v5648
    %5680 = vmatpush1.bf16.msra.mxu0 %v5647
    %5681 = vmatprep.subr.bf16.mxu0 %v5650
    %5682 = vmatpush1.bf16.msra.mxu0 %v5649
    %5683 = vmatprep.subr.bf16.mxu0 %v5652
    %5684 = vmatpush1.bf16.msra.mxu0 %v5651
    %5685 = vmatprep.subr.bf16.mxu0 %v5654
    %5686 = vmatpush1.bf16.msra.mxu0 %v5653
    %5687 = vmatprep.subr.bf16.mxu0 0
    %5688 = vmatpush1.bf16.msra.mxu0 0
    %5689 = vmatprep.subr.bf16.mxu0 0
    %5690 = vmatpush1.bf16.msra.mxu0 0
    %5691 = vmatprep.subr.bf16.mxu0 0
    %5692 = vmatpush1.bf16.msra.mxu0 0
    %5693 = vmatprep.subr.bf16.mxu0 0
    %5694 = vmatpush1.bf16.msra.mxu0 0
    %5695 = vmatprep.subr.bf16.mxu0 0
    %5696 = vmatpush1.bf16.msra.mxu0 0
    %5697 = vmatprep.subr.bf16.mxu0 0
    %5698 = vmatpush1.bf16.msra.mxu0 0
    %5699 = vmatprep.subr.bf16.mxu0 0
    %5700 = vmatpush1.bf16.msra.mxu0 0
    %5701 = vmatprep.subr.bf16.mxu0 0
    %5702 = vmatpush1.bf16.msra.mxu0 0
    %5703 = vmatprep.mubr.bf16.mxu0 0
    %5704 = vmatmul.mubr.bf16.gmra.mrb[0].mxu0 %v5561
    %v5705 = vpop.f32.mrb[0].mxu0
    %v5706 = vadd.f32 %v5584, %v5705
    %v5707 = vpop.f32.mrb[0].mxu0
    %v5708 = vadd.f32 %v5588, %v5707
    %v5709 = vpop.f32.mrb[0].mxu0
    %v5710 = vpop.f32.mrb[0].mxu0
    %5711 = vdwg.mxu0
    %v5712 = vmax.f32 %v5706, 0.0
    %v5713 = vmax.f32 %v5708, 0.0
    %v5714 = vsub.f32 0.0, %v5712
    %v5715 = vsub.f32 0.0, %v5713
    %v5716 = vmul.f32 %v5714, 1.442695
    %v5717 = vpow.pop %v5716
    %v5718 = vmul.f32 %v5715, 1.442695
    %v5719 = vpow.pop %v5718
    %v5720 = vadd.f32 %v5717, 1.0
    %v5721 = vadd.f32 %v5719, 1.0
    %v5722 = vrcp.pop %v5720
    %v5723 = vmul.f32 1.0, %v5722
    %v5724 = vrcp.pop %v5721
    %v5725 = vmul.f32 1.0, %v5724
    %5726 = vst [vmem:[%s4] sm:$0xff] %v5723
    %5727 = vst [vmem:[%s4 + $0x8] sm:$0xff] %v5725
    // Predicated region
    $region30: #{forward.1} parent=1 // pred_check
      _
    $region31: #{forward.1} parent=1 // pred_check_branch
      %5729 = sbr.rel (0) target = $region33
    $region32: #{forward.1} parent=1 // pred_region
      _
    $region33: #{forward.1} parent=1 // pred_fallthru
      _
    // Predicated region
    $region34: #{forward.1} parent=1 // pred_check
      _
    $region35: #{forward.1} parent=1 // pred_check_branch
      %5731 = sbr.rel (0) target = $region37
    $region36: #{forward.1} parent=1 // pred_region
      _
    $region37: #{forward.1} parent=1 // pred_fallthru
      _
    %5732 = vsyncpa [#allocation3], 1
    %5733 = vsyncpa [#allocation5], 1

</llo_original>
